<compile_context>
chip_gen: v7x
topology: tpu7x:2x2x1
jax: 0.10.0
libtpu: 0.0.40
codegen_flags: <defaults>
</compile_context>

<pallas_src>
import functools
from typing import NamedTuple

import jax
import jax.numpy as jnp
from jax.experimental import pallas as pl
from jax.experimental.pallas import tpu as pltpu

LRELU_SLOPE = 0.1
PERIODS = (2, 3, 5, 7, 11)
KERNEL_SIZE = 5
STRIDE = 3


def _round_up(x, m):
    return ((x + m - 1) // m) * m


class ConvMeta(NamedTuple):
    """Static (hashable) per-conv configuration; kept out of the jit pytree."""
    k: int        # kernel height
    stride: int
    pad: int
    n: int        # Cout (unpadded)
    kd: int       # K * Cin (unpadded reduction dim)
    tk: int       # K tile (multiple of 128, divides padded K)
    tn: int       # N tile (multiple of 128, divides padded N)


# ----------------------------------------------------------------------------
# Pallas kernel: tiled matmul + bias + (optional) leaky-relu epilogue.
# ----------------------------------------------------------------------------
def _matmul_bias_act_kernel(x_ref, w_ref, b_ref, o_ref, acc_ref, *, act_slope):
    k = pl.program_id(2)

    @pl.when(k == 0)
    def _():
        acc_ref[...] = jnp.zeros_like(acc_ref)

    acc_ref[...] += jnp.dot(x_ref[...], w_ref[...],
                            preferred_element_type=jnp.float32)

    @pl.when(k == pl.num_programs(2) - 1)
    def _():
        out = acc_ref[...] + b_ref[...]
        if act_slope is not None:
            out = jnp.where(out >= 0, out, act_slope * out)
        o_ref[...] = out.astype(o_ref.dtype)


def matmul_bias_act(x, wm, bias, meta, act_slope):
    """(M, Kd) @ pre-packed bf16 weight (Kp, Np) + bias, optional leaky-relu."""
    M, Kd = x.shape
    Kp, Np = wm.shape
    assert Kd == meta.kd
    tk, tn = meta.tk, meta.tn

    tm = min(128, _round_up(max(M, 1), 16))   # real-M tile (bf16 sublane packing)
    Mp = _round_up(M, tm)
    xp = jnp.pad(x.astype(jnp.bfloat16), ((0, Mp - M), (0, Kp - Kd)))

    grid = (Mp // tm, Np // tn, Kp // tk)
    out = pl.pallas_call(
        functools.partial(_matmul_bias_act_kernel, act_slope=act_slope),
        out_shape=jax.ShapeDtypeStruct((Mp, Np), jnp.float32),
        grid_spec=pltpu.PrefetchScalarGridSpec(
            num_scalar_prefetch=0,
            grid=grid,
            in_specs=[
                pl.BlockSpec((tm, tk), lambda i, j, k: (i, k)),
                pl.BlockSpec((tk, tn), lambda i, j, k: (k, j)),
                pl.BlockSpec((1, tn), lambda i, j, k: (0, j)),
            ],
            out_specs=pl.BlockSpec((tm, tn), lambda i, j, k: (i, j)),
            scratch_shapes=[pltpu.VMEM((tm, tn), jnp.float32)],
        ),
        compiler_params=pltpu.CompilerParams(
            dimension_semantics=("parallel", "parallel", "arbitrary")),
    )(xp, wm, bias)
    return out[:M, :meta.n]


# ----------------------------------------------------------------------------
# (k,1) conv == 1-D conv along H per width column, via im2col + Pallas matmul.
# ----------------------------------------------------------------------------
def conv2d_kx1_pallas(x, wm, bias, meta, act_slope):
    """x: NCHW (B,Cin,H,W).  Zero padding along H (torch Conv2d semantics)."""
    B, Cin, H, Wd = x.shape
    K, stride, pad = meta.k, meta.stride, meta.pad

    xt = jnp.transpose(x, (0, 3, 2, 1))                       # (B, W, H, Cin)
    xt = jnp.pad(xt, ((0, 0), (0, 0), (pad, pad), (0, 0)))
    Hp = H + 2 * pad
    Ho = (Hp - K) // stride + 1
    # K static strided slices instead of a gather.
    cols = [xt[:, :, k:k + (Ho - 1) * stride + 1:stride, :] for k in range(K)]
    xcol = jnp.stack(cols, axis=3)                             # (B, W, Ho, K, Cin)
    xcol = xcol.reshape(B * Wd * Ho, K * Cin)                  # K outer, Cin inner

    y = matmul_bias_act(xcol, wm, bias, meta, act_slope)       # Pallas hot path
    y = y.reshape(B, Wd, Ho, meta.n)
    return jnp.transpose(y, (0, 3, 2, 1))                      # (B, Cout, Ho, W)


# Tiny convs kept as plain XLA ops (padding them to 128-wide tiles is wasteful).
def h2r_conv(x, w, b):
    """Conv2d(1,4,(3,1),1,padding=(1,0)).  x: (B,1,H,W), w: (4,1,3,1)."""
    H = x.shape[2]
    xpad = jnp.pad(x, ((0, 0), (0, 0), (1, 1), (0, 0)))
    y = sum(w[:, 0, k, 0][None, :, None, None] * xpad[:, :, k:k + H, :]
            for k in range(3))
    return y + b[None, :, None, None]


def post_conv(x, w, b):
    """Conv2d(1048,1,(3,1),1,padding=(1,0)).  x: (B,1048,H,W), w: (1,1048,3,1)."""
    H = x.shape[2]
    xpad = jnp.pad(x, ((0, 0), (0, 0), (1, 1), (0, 0)))
    y = sum(jnp.einsum("bchw,c->bhw", xpad[:, :, k:k + H, :], w[0, :, k, 0])
            for k in range(3))
    return y[:, None] + b[0]


# ----------------------------------------------------------------------------
# Parameter initialization + one-time weight packing (deterministic, synthetic).
# ----------------------------------------------------------------------------
def _quaternion_conv_weight(key, in_ch, out_ch, k):
    """Hamilton-product block weight of a QuaternionConv2d with (k,1) kernel."""
    qin, qout = in_ch // 4, out_ch // 4
    kr, ki, kj, kk = jax.random.split(key, 4)
    shape = (qout, qin, k, 1)
    r = 0.1 * jax.random.normal(kr, shape, jnp.float32)
    i = 0.1 * jax.random.normal(ki, shape, jnp.float32)
    j = 0.1 * jax.random.normal(kj, shape, jnp.float32)
    q = 0.1 * jax.random.normal(kk, shape, jnp.float32)
    row_r = jnp.concatenate([r, -i, -j, -q], axis=1)
    row_i = jnp.concatenate([i, r, -q, j], axis=1)
    row_j = jnp.concatenate([j, q, r, -i], axis=1)
    row_k = jnp.concatenate([q, -j, i, r], axis=1)
    # TODO(synk): Qspectral_norm normalization is folded into these synthetic weights.
    return jnp.concatenate([row_r, row_i, row_j, row_k], axis=0)  # (out,in,k,1)


def _plain_conv_weight(key, in_ch, out_ch, k):
    return 0.1 * jax.random.normal(key, (out_ch, in_ch, k, 1), jnp.float32)


def _choose_tn(np_padded):
    if np_padded <= 2048:               # whole N in one lane-dense tile
        return np_padded
    for cand in (1024, 512, 256, 128):
        if np_padded % cand == 0:
            return cand
    return 128


def _pack_conv(w, b, stride, pad):
    """Pre-pack a (Cout,Cin,K,1) conv into a padded bf16 (Kp,Np) matmul slab."""
    Cout, Cin, K, _ = w.shape
    Kd = K * Cin
    wm = jnp.transpose(w[:, :, :, 0], (2, 1, 0)).reshape(Kd, Cout)  # (K*Cin, Cout)
    Np = _round_up(Cout, 128)
    if Kd <= 1536:
        Kp = _round_up(Kd, 128)
        tk = Kp                          # single reduction step (slab fits VMEM)
    else:
        tk = 512
        Kp = _round_up(Kd, tk)
    tn = _choose_tn(Np)
    wm = jnp.pad(wm, ((0, Kp - Kd), (0, Np - Cout))).astype(jnp.bfloat16)
    bias = jnp.pad(b.astype(jnp.float32), (0, Np - Cout)).reshape(1, Np)
    meta = ConvMeta(k=K, stride=stride, pad=pad, n=Cout, kd=Kd, tk=tk, tn=tn)
    return wm, bias, meta


def init_discriminator_params(key):
    ks = jax.random.split(key, 14)
    arrays = {
        "h2r_w": _plain_conv_weight(ks[0], 1, 4, 3),
        "h2r_b": 0.01 * jax.random.normal(ks[1], (4,), jnp.float32),
        "post_w": _plain_conv_weight(ks[2], 1048, 1, 3),
        "post_b": 0.01 * jax.random.normal(ks[3], (1,), jnp.float32),
    }
    chans = [(4, 32), (32, 128), (128, 512), (512, 1048), (1048, 1048)]
    strides = [STRIDE, STRIDE, STRIDE, STRIDE, 1]
    conv_wm, conv_bias, metas = [], [], []
    for li, ((ci, co), s) in enumerate(zip(chans, strides)):
        w = _quaternion_conv_weight(ks[4 + 2 * li], ci, co, KERNEL_SIZE)
        bvec = 0.01 * jax.random.normal(ks[5 + 2 * li], (co,), jnp.float32)
        wm, bias, meta = _pack_conv(w, bvec, stride=s, pad=2)
        conv_wm.append(wm)
        conv_bias.append(bias)
        metas.append(meta)
    arrays["conv_wm"] = tuple(conv_wm)
    arrays["conv_bias"] = tuple(conv_bias)
    return arrays, tuple(metas)


# ----------------------------------------------------------------------------
# QDiscriminatorP / QMultiPeriodDiscriminator forward
# ----------------------------------------------------------------------------
@functools.partial(jax.jit, static_argnums=(2, 3))
def qdiscriminator_p_forward(x, arrays, metas, period):
    b, c, t = x.shape
    if t % period != 0:
        n_pad = period - t % period
        x = jnp.pad(x, ((0, 0), (0, 0), (0, n_pad)), mode="reflect")
        t = t + n_pad
    x = x.reshape(b, c, t // period, period)  # (B, 1, t//p, p)

    fmap = []
    # h2r: Conv2d(1,4,(3,1),(1,1),padding=(1,0))  (no activation afterwards)
    x = h2r_conv(x, arrays["h2r_w"], arrays["h2r_b"])
    # quaternion conv stack; leaky-relu fused into the Pallas epilogue
    for wm, bias, meta in zip(arrays["conv_wm"], arrays["conv_bias"], metas):
        x = conv2d_kx1_pallas(x, wm, bias, meta, act_slope=LRELU_SLOPE)
        fmap.append(x)
    # conv_post: Conv2d(1048,1,(3,1),1,padding=(1,0))
    x = post_conv(x, arrays["post_w"], arrays["post_b"])
    fmap.append(x)
    x = x.reshape(b, -1)  # torch.flatten(x, 1, -1)
    return x, fmap


def qmulti_period_discriminator_forward(y, y_hat, all_params):
    """y/y_hat share each period's weights: run them stacked on the batch axis so
    every weight slab is streamed from HBM once per period (halves weight DMA)."""
    B = y.shape[0]
    x = jnp.concatenate([y, y_hat], axis=0)  # (2B, 1, T)
    y_d_rs, y_d_gs, fmap_rs, fmap_gs = [], [], [], []
    for period, (arrays, metas) in zip(PERIODS, all_params):
        out, fmap = qdiscriminator_p_forward(x, arrays, metas, period)
        y_d_rs.append(out[:B])
        y_d_gs.append(out[B:])
        fmap_rs.append([f[:B] for f in fmap])
        fmap_gs.append([f[B:] for f in fmap])
    return y_d_rs, y_d_gs, fmap_rs, fmap_gs


if __name__ == "__main__":
    root = jax.random.PRNGKey(0)
    k_params, k_y, k_yh = jax.random.split(root, 3)

    # One set of parameters per period-discriminator (deterministic, pre-packed).
    param_keys = jax.random.split(k_params, len(PERIODS))
    all_params = [init_discriminator_params(k) for k in param_keys]

    # Small audio inputs: (batch=2, channels=1, time=64)
    B, C, T = 2, 1, 64
    y = jax.random.normal(k_y, (B, C, T), jnp.float32)
    y_hat = jax.random.normal(k_yh, (B, C, T), jnp.float32)

    y_d_rs, y_d_gs, fmap_rs, fmap_gs = qmulti_period_discriminator_forward(
        y, y_hat, all_params)

    # Block on all results.
    jax.block_until_ready((y_d_rs, y_d_gs, fmap_rs, fmap_gs))

    # Light sanity checks on structure.
    assert len(y_d_rs) == len(PERIODS) and len(fmap_rs) == len(PERIODS)
    assert all(len(f) == 6 for f in fmap_rs) and all(len(f) == 6 for f in fmap_gs)
    assert all(o.shape[0] == B for o in y_d_rs + y_d_gs)
    assert all(f.shape[0] == B for fl in fmap_rs + fmap_gs for f in fl)

    print("KERNEL_OK")
</pallas_src>

<mosaic_0001>
module attributes {stable_mosaic.version = 11 : i64} {
  func.func @_matmul_bias_act_kernel(%arg0: i32, %arg1: i32, %arg2: i32, %arg3: memref<96x128xbf16, #tpu.memory_space<vmem>>, %arg4: memref<128x128xbf16, #tpu.memory_space<vmem>>, %arg5: memref<1x128xf32, #tpu.memory_space<vmem>>, %arg6: memref<96x128xf32, #tpu.memory_space<vmem>>, %arg7: memref<96x128xf32, #tpu.memory_space<vmem>>) attributes {dimension_semantics = [#tpu.dimension_semantics<parallel>, #tpu.dimension_semantics<parallel>, #tpu.dimension_semantics<arbitrary>], iteration_bounds = array<i64: 1, 1, 1>, scalar_prefetch = 0 : i64, scratch_operands = 1 : i64, tpu.core_type = #tpu.core_type<tc>, window_params = [{transform_indices = @transform_0, window_bounds = array<i64: 96, 128>}, {transform_indices = @transform_1, window_bounds = array<i64: 128, 128>}, {transform_indices = @transform_2, window_bounds = array<i64: 1, 128>}, {transform_indices = @transform_3, window_bounds = array<i64: 96, 128>}]} {
    %c0_i32 = arith.constant 0 : i32
    %0 = arith.cmpi eq, %arg2, %c0_i32 : i32
    %1 = arith.extui %0 : i1 to i32
    %c0_i32_0 = arith.constant 0 : i32
    %2 = arith.cmpi ne, %1, %c0_i32_0 : i32
    scf.if %2 {
      %cst_10 = arith.constant 0.000000e+00 : f32
      %12 = vector.broadcast %cst_10 : f32 to vector<96x128xf32>
      %c0_11 = arith.constant 0 : index
      %c0_12 = arith.constant 0 : index
      %13 = vector.load %arg7[%c0_11, %c0_12] : memref<96x128xf32, #tpu.memory_space<vmem>>, vector<96x128xf32>
      tpu.vector_store %arg7[%c0_11, %c0_12], %12 {strides = array<i32>} : memref<96x128xf32, #tpu.memory_space<vmem>>, vector<96x128xf32>,
    } else {
    }
    %c0 = arith.constant 0 : index
    %c0_1 = arith.constant 0 : index
    %3 = vector.load %arg7[%c0, %c0_1] : memref<96x128xf32, #tpu.memory_space<vmem>>, vector<96x128xf32>
    %c0_2 = arith.constant 0 : index
    %c0_3 = arith.constant 0 : index
    %4 = vector.load %arg3[%c0_2, %c0_3] : memref<96x128xbf16, #tpu.memory_space<vmem>>, vector<96x128xbf16>
    %c0_4 = arith.constant 0 : index
    %c0_5 = arith.constant 0 : index
    %5 = vector.load %arg4[%c0_4, %c0_5] : memref<128x128xbf16, #tpu.memory_space<vmem>>, vector<128x128xbf16>
    %cst = arith.constant dense<0.000000e+00> : vector<96x128xf32>
    %6 = tpu.matmul %4, %5, %cst {dimension_numbers = #tpu.dot_dimension_numbers<[1], [0], [0], [1], [0, 0, 1, 1], [], []>} : vector<96x128xbf16>, vector<128x128xbf16>, vector<96x128xf32> -> vector<96x128xf32>
    %7 = arith.addf %3, %6 : vector<96x128xf32>
    %c0_6 = arith.constant 0 : index
    %c0_7 = arith.constant 0 : index
    %8 = vector.load %arg7[%c0_6, %c0_7] : memref<96x128xf32, #tpu.memory_space<vmem>>, vector<96x128xf32>
    tpu.vector_store %arg7[%c0_6, %c0_7], %7 {strides = array<i32>} : memref<96x128xf32, #tpu.memory_space<vmem>>, vector<96x128xf32>,
    %c0_i32_8 = arith.constant 0 : i32
    %9 = arith.cmpi eq, %arg2, %c0_i32_8 : i32
    %10 = arith.extui %9 : i1 to i32
    %c0_i32_9 = arith.constant 0 : i32
    %11 = arith.cmpi ne, %10, %c0_i32_9 : i32
    scf.if %11 {
      %c0_10 = arith.constant 0 : index
      %c0_11 = arith.constant 0 : index
      %12 = vector.load %arg7[%c0_10, %c0_11] : memref<96x128xf32, #tpu.memory_space<vmem>>, vector<96x128xf32>
      %c0_12 = arith.constant 0 : index
      %c0_13 = arith.constant 0 : index
      %13 = vector.load %arg5[%c0_12, %c0_13] : memref<1x128xf32, #tpu.memory_space<vmem>>, vector<1x128xf32>
      %14 = vector.broadcast %13 : vector<1x128xf32> to vector<96x128xf32>
      %15 = arith.addf %12, %14 : vector<96x128xf32>
      %cst_14 = arith.constant 0.000000e+00 : f32
      %16 = vector.broadcast %cst_14 : f32 to vector<96x128xf32>
      %17 = arith.cmpf oge, %15, %16 : vector<96x128xf32>
      %cst_15 = arith.constant 1.000000e-01 : f32
      %18 = vector.broadcast %cst_15 : f32 to vector<96x128xf32>
      %19 = arith.mulf %18, %15 : vector<96x128xf32>
      %20 = arith.select %17, %15, %19 : vector<96x128xi1>, vector<96x128xf32>
      %c0_16 = arith.constant 0 : index
      %c0_17 = arith.constant 0 : index
      %21 = vector.load %arg6[%c0_16, %c0_17] : memref<96x128xf32, #tpu.memory_space<vmem>>, vector<96x128xf32>
      tpu.vector_store %arg6[%c0_16, %c0_17], %20 {strides = array<i32>} : memref<96x128xf32, #tpu.memory_space<vmem>>, vector<96x128xf32>,
    } else {
    }
    return
  }
  func.func @transform_0(%arg0: i32, %arg1: i32, %arg2: i32) -> (i32, i32) {
    %c0_i32 = arith.constant 0 : i32
    return %arg0, %arg2 : i32, i32
  }
  func.func @transform_1(%arg0: i32, %arg1: i32, %arg2: i32) -> (i32, i32) {
    %c0_i32 = arith.constant 0 : i32
    return %arg2, %arg1 : i32, i32
  }
  func.func @transform_2(%arg0: i32, %arg1: i32, %arg2: i32) -> (i32, i32) {
    %c0_i32 = arith.constant 0 : i32
    %c0_i32_0 = arith.constant 0 : i32
    return %c0_i32, %arg1 : i32, i32
  }
  func.func @transform_3(%arg0: i32, %arg1: i32, %arg2: i32) -> (i32, i32) {
    %c0_i32 = arith.constant 0 : i32
    return %arg0, %arg1 : i32, i32
  }
}

module attributes {stable_mosaic.version = 11 : i64} {
  func.func @_matmul_bias_act_kernel(%arg0: i32, %arg1: i32, %arg2: i32, %arg3: memref<32x256xbf16, #tpu.memory_space<vmem>>, %arg4: memref<256x128xbf16, #tpu.memory_space<vmem>>, %arg5: memref<1x128xf32, #tpu.memory_space<vmem>>, %arg6: memref<32x128xf32, #tpu.memory_space<vmem>>, %arg7: memref<32x128xf32, #tpu.memory_space<vmem>>) attributes {dimension_semantics = [#tpu.dimension_semantics<parallel>, #tpu.dimension_semantics<parallel>, #tpu.dimension_semantics<arbitrary>], iteration_bounds = array<i64: 1, 1, 1>, scalar_prefetch = 0 : i64, scratch_operands = 1 : i64, tpu.core_type = #tpu.core_type<tc>, window_params = [{transform_indices = @transform_0, window_bounds = array<i64: 32, 256>}, {transform_indices = @transform_1, window_bounds = array<i64: 256, 128>}, {transform_indices = @transform_2, window_bounds = array<i64: 1, 128>}, {transform_indices = @transform_3, window_bounds = array<i64: 32, 128>}]} {
    %c0_i32 = arith.constant 0 : i32
    %0 = arith.cmpi eq, %arg2, %c0_i32 : i32
    %1 = arith.extui %0 : i1 to i32
    %c0_i32_0 = arith.constant 0 : i32
    %2 = arith.cmpi ne, %1, %c0_i32_0 : i32
    scf.if %2 {
      %cst_10 = arith.constant 0.000000e+00 : f32
      %12 = vector.broadcast %cst_10 : f32 to vector<32x128xf32>
      %c0_11 = arith.constant 0 : index
      %c0_12 = arith.constant 0 : index
      %13 = vector.load %arg7[%c0_11, %c0_12] : memref<32x128xf32, #tpu.memory_space<vmem>>, vector<32x128xf32>
      tpu.vector_store %arg7[%c0_11, %c0_12], %12 {strides = array<i32>} : memref<32x128xf32, #tpu.memory_space<vmem>>, vector<32x128xf32>,
    } else {
    }
    %c0 = arith.constant 0 : index
    %c0_1 = arith.constant 0 : index
    %3 = vector.load %arg7[%c0, %c0_1] : memref<32x128xf32, #tpu.memory_space<vmem>>, vector<32x128xf32>
    %c0_2 = arith.constant 0 : index
    %c0_3 = arith.constant 0 : index
    %4 = vector.load %arg3[%c0_2, %c0_3] : memref<32x256xbf16, #tpu.memory_space<vmem>>, vector<32x256xbf16>
    %c0_4 = arith.constant 0 : index
    %c0_5 = arith.constant 0 : index
    %5 = vector.load %arg4[%c0_4, %c0_5] : memref<256x128xbf16, #tpu.memory_space<vmem>>, vector<256x128xbf16>
    %cst = arith.constant dense<0.000000e+00> : vector<32x128xf32>
    %6 = tpu.matmul %4, %5, %cst {dimension_numbers = #tpu.dot_dimension_numbers<[1], [0], [0], [1], [0, 0, 1, 1], [], []>} : vector<32x256xbf16>, vector<256x128xbf16>, vector<32x128xf32> -> vector<32x128xf32>
    %7 = arith.addf %3, %6 : vector<32x128xf32>
    %c0_6 = arith.constant 0 : index
    %c0_7 = arith.constant 0 : index
    %8 = vector.load %arg7[%c0_6, %c0_7] : memref<32x128xf32, #tpu.memory_space<vmem>>, vector<32x128xf32>
    tpu.vector_store %arg7[%c0_6, %c0_7], %7 {strides = array<i32>} : memref<32x128xf32, #tpu.memory_space<vmem>>, vector<32x128xf32>,
    %c0_i32_8 = arith.constant 0 : i32
    %9 = arith.cmpi eq, %arg2, %c0_i32_8 : i32
    %10 = arith.extui %9 : i1 to i32
    %c0_i32_9 = arith.constant 0 : i32
    %11 = arith.cmpi ne, %10, %c0_i32_9 : i32
    scf.if %11 {
      %c0_10 = arith.constant 0 : index
      %c0_11 = arith.constant 0 : index
      %12 = vector.load %arg7[%c0_10, %c0_11] : memref<32x128xf32, #tpu.memory_space<vmem>>, vector<32x128xf32>
      %c0_12 = arith.constant 0 : index
      %c0_13 = arith.constant 0 : index
      %13 = vector.load %arg5[%c0_12, %c0_13] : memref<1x128xf32, #tpu.memory_space<vmem>>, vector<1x128xf32>
      %14 = vector.broadcast %13 : vector<1x128xf32> to vector<32x128xf32>
      %15 = arith.addf %12, %14 : vector<32x128xf32>
      %cst_14 = arith.constant 0.000000e+00 : f32
      %16 = vector.broadcast %cst_14 : f32 to vector<32x128xf32>
      %17 = arith.cmpf oge, %15, %16 : vector<32x128xf32>
      %cst_15 = arith.constant 1.000000e-01 : f32
      %18 = vector.broadcast %cst_15 : f32 to vector<32x128xf32>
      %19 = arith.mulf %18, %15 : vector<32x128xf32>
      %20 = arith.select %17, %15, %19 : vector<32x128xi1>, vector<32x128xf32>
      %c0_16 = arith.constant 0 : index
      %c0_17 = arith.constant 0 : index
      %21 = vector.load %arg6[%c0_16, %c0_17] : memref<32x128xf32, #tpu.memory_space<vmem>>, vector<32x128xf32>
      tpu.vector_store %arg6[%c0_16, %c0_17], %20 {strides = array<i32>} : memref<32x128xf32, #tpu.memory_space<vmem>>, vector<32x128xf32>,
    } else {
    }
    return
  }
  func.func @transform_0(%arg0: i32, %arg1: i32, %arg2: i32) -> (i32, i32) {
    %c0_i32 = arith.constant 0 : i32
    return %arg0, %arg2 : i32, i32
  }
  func.func @transform_1(%arg0: i32, %arg1: i32, %arg2: i32) -> (i32, i32) {
    %c0_i32 = arith.constant 0 : i32
    return %arg2, %arg1 : i32, i32
  }
  func.func @transform_2(%arg0: i32, %arg1: i32, %arg2: i32) -> (i32, i32) {
    %c0_i32 = arith.constant 0 : i32
    %c0_i32_0 = arith.constant 0 : i32
    return %c0_i32, %arg1 : i32, i32
  }
  func.func @transform_3(%arg0: i32, %arg1: i32, %arg2: i32) -> (i32, i32) {
    %c0_i32 = arith.constant 0 : i32
    return %arg0, %arg1 : i32, i32
  }
}

module attributes {stable_mosaic.version = 11 : i64} {
  func.func @_matmul_bias_act_kernel(%arg0: i32, %arg1: i32, %arg2: i32, %arg3: memref<16x640xbf16, #tpu.memory_space<vmem>>, %arg4: memref<640x512xbf16, #tpu.memory_space<vmem>>, %arg5: memref<1x512xf32, #tpu.memory_space<vmem>>, %arg6: memref<16x512xf32, #tpu.memory_space<vmem>>, %arg7: memref<16x512xf32, #tpu.memory_space<vmem>>) attributes {dimension_semantics = [#tpu.dimension_semantics<parallel>, #tpu.dimension_semantics<parallel>, #tpu.dimension_semantics<arbitrary>], iteration_bounds = array<i64: 1, 1, 1>, scalar_prefetch = 0 : i64, scratch_operands = 1 : i64, tpu.core_type = #tpu.core_type<tc>, window_params = [{transform_indices = @transform_0, window_bounds = array<i64: 16, 640>}, {transform_indices = @transform_1, window_bounds = array<i64: 640, 512>}, {transform_indices = @transform_2, window_bounds = array<i64: 1, 512>}, {transform_indices = @transform_3, window_bounds = array<i64: 16, 512>}]} {
    %c0_i32 = arith.constant 0 : i32
    %0 = arith.cmpi eq, %arg2, %c0_i32 : i32
    %1 = arith.extui %0 : i1 to i32
    %c0_i32_0 = arith.constant 0 : i32
    %2 = arith.cmpi ne, %1, %c0_i32_0 : i32
    scf.if %2 {
      %cst_10 = arith.constant 0.000000e+00 : f32
      %12 = vector.broadcast %cst_10 : f32 to vector<16x512xf32>
      %c0_11 = arith.constant 0 : index
      %c0_12 = arith.constant 0 : index
      %13 = vector.load %arg7[%c0_11, %c0_12] : memref<16x512xf32, #tpu.memory_space<vmem>>, vector<16x512xf32>
      tpu.vector_store %arg7[%c0_11, %c0_12], %12 {strides = array<i32>} : memref<16x512xf32, #tpu.memory_space<vmem>>, vector<16x512xf32>,
    } else {
    }
    %c0 = arith.constant 0 : index
    %c0_1 = arith.constant 0 : index
    %3 = vector.load %arg7[%c0, %c0_1] : memref<16x512xf32, #tpu.memory_space<vmem>>, vector<16x512xf32>
    %c0_2 = arith.constant 0 : index
    %c0_3 = arith.constant 0 : index
    %4 = vector.load %arg3[%c0_2, %c0_3] : memref<16x640xbf16, #tpu.memory_space<vmem>>, vector<16x640xbf16>
    %c0_4 = arith.constant 0 : index
    %c0_5 = arith.constant 0 : index
    %5 = vector.load %arg4[%c0_4, %c0_5] : memref<640x512xbf16, #tpu.memory_space<vmem>>, vector<640x512xbf16>
    %cst = arith.constant dense<0.000000e+00> : vector<16x512xf32>
    %6 = tpu.matmul %4, %5, %cst {dimension_numbers = #tpu.dot_dimension_numbers<[1], [0], [0], [1], [0, 0, 1, 1], [], []>} : vector<16x640xbf16>, vector<640x512xbf16>, vector<16x512xf32> -> vector<16x512xf32>
    %7 = arith.addf %3, %6 : vector<16x512xf32>
    %c0_6 = arith.constant 0 : index
    %c0_7 = arith.constant 0 : index
    %8 = vector.load %arg7[%c0_6, %c0_7] : memref<16x512xf32, #tpu.memory_space<vmem>>, vector<16x512xf32>
    tpu.vector_store %arg7[%c0_6, %c0_7], %7 {strides = array<i32>} : memref<16x512xf32, #tpu.memory_space<vmem>>, vector<16x512xf32>,
    %c0_i32_8 = arith.constant 0 : i32
    %9 = arith.cmpi eq, %arg2, %c0_i32_8 : i32
    %10 = arith.extui %9 : i1 to i32
    %c0_i32_9 = arith.constant 0 : i32
    %11 = arith.cmpi ne, %10, %c0_i32_9 : i32
    scf.if %11 {
      %c0_10 = arith.constant 0 : index
      %c0_11 = arith.constant 0 : index
      %12 = vector.load %arg7[%c0_10, %c0_11] : memref<16x512xf32, #tpu.memory_space<vmem>>, vector<16x512xf32>
      %c0_12 = arith.constant 0 : index
      %c0_13 = arith.constant 0 : index
      %13 = vector.load %arg5[%c0_12, %c0_13] : memref<1x512xf32, #tpu.memory_space<vmem>>, vector<1x512xf32>
      %14 = vector.broadcast %13 : vector<1x512xf32> to vector<16x512xf32>
      %15 = arith.addf %12, %14 : vector<16x512xf32>
      %cst_14 = arith.constant 0.000000e+00 : f32
      %16 = vector.broadcast %cst_14 : f32 to vector<16x512xf32>
      %17 = arith.cmpf oge, %15, %16 : vector<16x512xf32>
      %cst_15 = arith.constant 1.000000e-01 : f32
      %18 = vector.broadcast %cst_15 : f32 to vector<16x512xf32>
      %19 = arith.mulf %18, %15 : vector<16x512xf32>
      %20 = arith.select %17, %15, %19 : vector<16x512xi1>, vector<16x512xf32>
      %c0_16 = arith.constant 0 : index
      %c0_17 = arith.constant 0 : index
      %21 = vector.load %arg6[%c0_16, %c0_17] : memref<16x512xf32, #tpu.memory_space<vmem>>, vector<16x512xf32>
      tpu.vector_store %arg6[%c0_16, %c0_17], %20 {strides = array<i32>} : memref<16x512xf32, #tpu.memory_space<vmem>>, vector<16x512xf32>,
    } else {
    }
    return
  }
  func.func @transform_0(%arg0: i32, %arg1: i32, %arg2: i32) -> (i32, i32) {
    %c0_i32 = arith.constant 0 : i32
    return %arg0, %arg2 : i32, i32
  }
  func.func @transform_1(%arg0: i32, %arg1: i32, %arg2: i32) -> (i32, i32) {
    %c0_i32 = arith.constant 0 : i32
    return %arg2, %arg1 : i32, i32
  }
  func.func @transform_2(%arg0: i32, %arg1: i32, %arg2: i32) -> (i32, i32) {
    %c0_i32 = arith.constant 0 : i32
    %c0_i32_0 = arith.constant 0 : i32
    return %c0_i32, %arg1 : i32, i32
  }
  func.func @transform_3(%arg0: i32, %arg1: i32, %arg2: i32) -> (i32, i32) {
    %c0_i32 = arith.constant 0 : i32
    return %arg0, %arg1 : i32, i32
  }
}

module attributes {stable_mosaic.version = 11 : i64} {
  func.func @_matmul_bias_act_kernel(%arg0: i32, %arg1: i32, %arg2: i32, %arg3: memref<16x512xbf16, #tpu.memory_space<vmem>>, %arg4: memref<512x1152xbf16, #tpu.memory_space<vmem>>, %arg5: memref<1x1152xf32, #tpu.memory_space<vmem>>, %arg6: memref<16x1152xf32, #tpu.memory_space<vmem>>, %arg7: memref<16x1152xf32, #tpu.memory_space<vmem>>) attributes {dimension_semantics = [#tpu.dimension_semantics<parallel>, #tpu.dimension_semantics<parallel>, #tpu.dimension_semantics<arbitrary>], iteration_bounds = array<i64: 1, 1, 5>, scalar_prefetch = 0 : i64, scratch_operands = 1 : i64, tpu.core_type = #tpu.core_type<tc>, window_params = [{transform_indices = @transform_0, window_bounds = array<i64: 16, 512>}, {transform_indices = @transform_1, window_bounds = array<i64: 512, 1152>}, {transform_indices = @transform_2, window_bounds = array<i64: 1, 1152>}, {transform_indices = @transform_3, window_bounds = array<i64: 16, 1152>}]} {
    %c0_i32 = arith.constant 0 : i32
    %0 = arith.cmpi eq, %arg2, %c0_i32 : i32
    %1 = arith.extui %0 : i1 to i32
    %c0_i32_0 = arith.constant 0 : i32
    %2 = arith.cmpi ne, %1, %c0_i32_0 : i32
    scf.if %2 {
      %cst_9 = arith.constant 0.000000e+00 : f32
      %12 = vector.broadcast %cst_9 : f32 to vector<16x1152xf32>
      %c0_10 = arith.constant 0 : index
      %c0_11 = arith.constant 0 : index
      %13 = vector.load %arg7[%c0_10, %c0_11] : memref<16x1152xf32, #tpu.memory_space<vmem>>, vector<16x1152xf32>
      tpu.vector_store %arg7[%c0_10, %c0_11], %12 {strides = array<i32>} : memref<16x1152xf32, #tpu.memory_space<vmem>>, vector<16x1152xf32>,
    } else {
    }
    %c0 = arith.constant 0 : index
    %c0_1 = arith.constant 0 : index
    %3 = vector.load %arg7[%c0, %c0_1] : memref<16x1152xf32, #tpu.memory_space<vmem>>, vector<16x1152xf32>
    %c0_2 = arith.constant 0 : index
    %c0_3 = arith.constant 0 : index
    %4 = vector.load %arg3[%c0_2, %c0_3] : memref<16x512xbf16, #tpu.memory_space<vmem>>, vector<16x512xbf16>
    %c0_4 = arith.constant 0 : index
    %c0_5 = arith.constant 0 : index
    %5 = vector.load %arg4[%c0_4, %c0_5] : memref<512x1152xbf16, #tpu.memory_space<vmem>>, vector<512x1152xbf16>
    %cst = arith.constant dense<0.000000e+00> : vector<16x1152xf32>
    %6 = tpu.matmul %4, %5, %cst {dimension_numbers = #tpu.dot_dimension_numbers<[1], [0], [0], [1], [0, 0, 1, 1], [], []>} : vector<16x512xbf16>, vector<512x1152xbf16>, vector<16x1152xf32> -> vector<16x1152xf32>
    %7 = arith.addf %3, %6 : vector<16x1152xf32>
    %c0_6 = arith.constant 0 : index
    %c0_7 = arith.constant 0 : index
    %8 = vector.load %arg7[%c0_6, %c0_7] : memref<16x1152xf32, #tpu.memory_space<vmem>>, vector<16x1152xf32>
    tpu.vector_store %arg7[%c0_6, %c0_7], %7 {strides = array<i32>} : memref<16x1152xf32, #tpu.memory_space<vmem>>, vector<16x1152xf32>,
    %c4_i32 = arith.constant 4 : i32
    %9 = arith.cmpi eq, %arg2, %c4_i32 : i32
    %10 = arith.extui %9 : i1 to i32
    %c0_i32_8 = arith.constant 0 : i32
    %11 = arith.cmpi ne, %10, %c0_i32_8 : i32
    scf.if %11 {
      %c0_9 = arith.constant 0 : index
      %c0_10 = arith.constant 0 : index
      %12 = vector.load %arg7[%c0_9, %c0_10] : memref<16x1152xf32, #tpu.memory_space<vmem>>, vector<16x1152xf32>
      %c0_11 = arith.constant 0 : index
      %c0_12 = arith.constant 0 : index
      %13 = vector.load %arg5[%c0_11, %c0_12] : memref<1x1152xf32, #tpu.memory_space<vmem>>, vector<1x1152xf32>
      %14 = vector.broadcast %13 : vector<1x1152xf32> to vector<16x1152xf32>
      %15 = arith.addf %12, %14 : vector<16x1152xf32>
      %cst_13 = arith.constant 0.000000e+00 : f32
      %16 = vector.broadcast %cst_13 : f32 to vector<16x1152xf32>
      %17 = arith.cmpf oge, %15, %16 : vector<16x1152xf32>
      %cst_14 = arith.constant 1.000000e-01 : f32
      %18 = vector.broadcast %cst_14 : f32 to vector<16x1152xf32>
      %19 = arith.mulf %18, %15 : vector<16x1152xf32>
      %20 = arith.select %17, %15, %19 : vector<16x1152xi1>, vector<16x1152xf32>
      %c0_15 = arith.constant 0 : index
      %c0_16 = arith.constant 0 : index
      %21 = vector.load %arg6[%c0_15, %c0_16] : memref<16x1152xf32, #tpu.memory_space<vmem>>, vector<16x1152xf32>
      tpu.vector_store %arg6[%c0_15, %c0_16], %20 {strides = array<i32>} : memref<16x1152xf32, #tpu.memory_space<vmem>>, vector<16x1152xf32>,
    } else {
    }
    return
  }
  func.func @transform_0(%arg0: i32, %arg1: i32, %arg2: i32) -> (i32, i32) {
    %c0_i32 = arith.constant 0 : i32
    return %arg0, %arg2 : i32, i32
  }
  func.func @transform_1(%arg0: i32, %arg1: i32, %arg2: i32) -> (i32, i32) {
    %c0_i32 = arith.constant 0 : i32
    return %arg2, %arg1 : i32, i32
  }
  func.func @transform_2(%arg0: i32, %arg1: i32, %arg2: i32) -> (i32, i32) {
    %c0_i32 = arith.constant 0 : i32
    %c0_i32_0 = arith.constant 0 : i32
    return %c0_i32, %arg1 : i32, i32
  }
  func.func @transform_3(%arg0: i32, %arg1: i32, %arg2: i32) -> (i32, i32) {
    %c0_i32 = arith.constant 0 : i32
    return %arg0, %arg1 : i32, i32
  }
}

module attributes {stable_mosaic.version = 11 : i64} {
  func.func @_matmul_bias_act_kernel(%arg0: i32, %arg1: i32, %arg2: i32, %arg3: memref<16x512xbf16, #tpu.memory_space<vmem>>, %arg4: memref<512x1152xbf16, #tpu.memory_space<vmem>>, %arg5: memref<1x1152xf32, #tpu.memory_space<vmem>>, %arg6: memref<16x1152xf32, #tpu.memory_space<vmem>>, %arg7: memref<16x1152xf32, #tpu.memory_space<vmem>>) attributes {dimension_semantics = [#tpu.dimension_semantics<parallel>, #tpu.dimension_semantics<parallel>, #tpu.dimension_semantics<arbitrary>], iteration_bounds = array<i64: 1, 1, 11>, scalar_prefetch = 0 : i64, scratch_operands = 1 : i64, tpu.core_type = #tpu.core_type<tc>, window_params = [{transform_indices = @transform_0, window_bounds = array<i64: 16, 512>}, {transform_indices = @transform_1, window_bounds = array<i64: 512, 1152>}, {transform_indices = @transform_2, window_bounds = array<i64: 1, 1152>}, {transform_indices = @transform_3, window_bounds = array<i64: 16, 1152>}]} {
    %c0_i32 = arith.constant 0 : i32
    %0 = arith.cmpi eq, %arg2, %c0_i32 : i32
    %1 = arith.extui %0 : i1 to i32
    %c0_i32_0 = arith.constant 0 : i32
    %2 = arith.cmpi ne, %1, %c0_i32_0 : i32
    scf.if %2 {
      %cst_9 = arith.constant 0.000000e+00 : f32
      %12 = vector.broadcast %cst_9 : f32 to vector<16x1152xf32>
      %c0_10 = arith.constant 0 : index
      %c0_11 = arith.constant 0 : index
      %13 = vector.load %arg7[%c0_10, %c0_11] : memref<16x1152xf32, #tpu.memory_space<vmem>>, vector<16x1152xf32>
      tpu.vector_store %arg7[%c0_10, %c0_11], %12 {strides = array<i32>} : memref<16x1152xf32, #tpu.memory_space<vmem>>, vector<16x1152xf32>,
    } else {
    }
    %c0 = arith.constant 0 : index
    %c0_1 = arith.constant 0 : index
    %3 = vector.load %arg7[%c0, %c0_1] : memref<16x1152xf32, #tpu.memory_space<vmem>>, vector<16x1152xf32>
    %c0_2 = arith.constant 0 : index
    %c0_3 = arith.constant 0 : index
    %4 = vector.load %arg3[%c0_2, %c0_3] : memref<16x512xbf16, #tpu.memory_space<vmem>>, vector<16x512xbf16>
    %c0_4 = arith.constant 0 : index
    %c0_5 = arith.constant 0 : index
    %5 = vector.load %arg4[%c0_4, %c0_5] : memref<512x1152xbf16, #tpu.memory_space<vmem>>, vector<512x1152xbf16>
    %cst = arith.constant dense<0.000000e+00> : vector<16x1152xf32>
    %6 = tpu.matmul %4, %5, %cst {dimension_numbers = #tpu.dot_dimension_numbers<[1], [0], [0], [1], [0, 0, 1, 1], [], []>} : vector<16x512xbf16>, vector<512x1152xbf16>, vector<16x1152xf32> -> vector<16x1152xf32>
    %7 = arith.addf %3, %6 : vector<16x1152xf32>
    %c0_6 = arith.constant 0 : index
    %c0_7 = arith.constant 0 : index
    %8 = vector.load %arg7[%c0_6, %c0_7] : memref<16x1152xf32, #tpu.memory_space<vmem>>, vector<16x1152xf32>
    tpu.vector_store %arg7[%c0_6, %c0_7], %7 {strides = array<i32>} : memref<16x1152xf32, #tpu.memory_space<vmem>>, vector<16x1152xf32>,
    %c10_i32 = arith.constant 10 : i32
    %9 = arith.cmpi eq, %arg2, %c10_i32 : i32
    %10 = arith.extui %9 : i1 to i32
    %c0_i32_8 = arith.constant 0 : i32
    %11 = arith.cmpi ne, %10, %c0_i32_8 : i32
    scf.if %11 {
      %c0_9 = arith.constant 0 : index
      %c0_10 = arith.constant 0 : index
      %12 = vector.load %arg7[%c0_9, %c0_10] : memref<16x1152xf32, #tpu.memory_space<vmem>>, vector<16x1152xf32>
      %c0_11 = arith.constant 0 : index
      %c0_12 = arith.constant 0 : index
      %13 = vector.load %arg5[%c0_11, %c0_12] : memref<1x1152xf32, #tpu.memory_space<vmem>>, vector<1x1152xf32>
      %14 = vector.broadcast %13 : vector<1x1152xf32> to vector<16x1152xf32>
      %15 = arith.addf %12, %14 : vector<16x1152xf32>
      %cst_13 = arith.constant 0.000000e+00 : f32
      %16 = vector.broadcast %cst_13 : f32 to vector<16x1152xf32>
      %17 = arith.cmpf oge, %15, %16 : vector<16x1152xf32>
      %cst_14 = arith.constant 1.000000e-01 : f32
      %18 = vector.broadcast %cst_14 : f32 to vector<16x1152xf32>
      %19 = arith.mulf %18, %15 : vector<16x1152xf32>
      %20 = arith.select %17, %15, %19 : vector<16x1152xi1>, vector<16x1152xf32>
      %c0_15 = arith.constant 0 : index
      %c0_16 = arith.constant 0 : index
      %21 = vector.load %arg6[%c0_15, %c0_16] : memref<16x1152xf32, #tpu.memory_space<vmem>>, vector<16x1152xf32>
      tpu.vector_store %arg6[%c0_15, %c0_16], %20 {strides = array<i32>} : memref<16x1152xf32, #tpu.memory_space<vmem>>, vector<16x1152xf32>,
    } else {
    }
    return
  }
  func.func @transform_0(%arg0: i32, %arg1: i32, %arg2: i32) -> (i32, i32) {
    %c0_i32 = arith.constant 0 : i32
    return %arg0, %arg2 : i32, i32
  }
  func.func @transform_1(%arg0: i32, %arg1: i32, %arg2: i32) -> (i32, i32) {
    %c0_i32 = arith.constant 0 : i32
    return %arg2, %arg1 : i32, i32
  }
  func.func @transform_2(%arg0: i32, %arg1: i32, %arg2: i32) -> (i32, i32) {
    %c0_i32 = arith.constant 0 : i32
    %c0_i32_0 = arith.constant 0 : i32
    return %c0_i32, %arg1 : i32, i32
  }
  func.func @transform_3(%arg0: i32, %arg1: i32, %arg2: i32) -> (i32, i32) {
    %c0_i32 = arith.constant 0 : i32
    return %arg0, %arg1 : i32, i32
  }
}

</mosaic_0001>

<llo_original>
// kernel: qdiscriminator_p_forward.5
$region0: #{qdiscriminator_p_forward.5}
  #allocation0 [shape = 'u32[]', space=smem, size = 0x4, offset = 0x4, fixed_abs, tag = 'smem constant byte address 0x4 - core index']
  #allocation1 [shape = 'u32[144,128]{1,0:T(1,128)}', space=vmem, size = 0x12000, scoped, tag = 'internal scratch']
  #allocation2 [shape = 'f32[96,128]{1,0:T(8,128)}', space=vmem, size = 0xc000, scoped, tag = 'scratch operand']
  %s0 = inlined_call_operand.vmem [shape: bf16[96,128], index: 0, kind: input, shape index: {}]
  %s1 = inlined_call_operand.hbm [shape: bf16[128,128], index: 1, kind: input, shape index: {}]
  %s2 = inlined_call_operand.hbm [shape: f32[1,128], index: 2, kind: input, shape index: {}]
  %s3 = inlined_call_operand.vmem [shape: f32[96,128], index: 3, kind: output, shape index: {}]
  %s4 = sld [smem:[#allocation0]]
  $region38: #{qdiscriminator_p_forward.5} parent=0
    _
  %s6 = ssub.s32 1, %s4
  %s7 = scalar_select 0, %s6, %s4
  $region1: #{qdiscriminator_p_forward.5} parent=0
    #allocation3 [shape = 'u8[32768]{0}', space=vmem, size = 0x8000, scoped, tag = 'input window, operand 1, single buffered']
    #allocation4 [shape = 's32[1]{0}', space=sflag, size = 0x4, scoped, tag = 'scoped memory for qdiscriminator_p_forward.5']
    #allocation5 [shape = 'u8[512]{0}', space=vmem, size = 0x400, scoped, tag = 'input window, operand 2, single buffered']
    #allocation6 [shape = 's32[1]{0}', space=sflag, size = 0x4, scoped, tag = 'scoped memory for qdiscriminator_p_forward.5']
    %8 = vsyncpa [#allocation4], 0
    %9 = vsyncpa [#allocation6], 0
    // Predicated region
    $region2: #{qdiscriminator_p_forward.5} parent=1 // pred_check
      _
    $region3: #{qdiscriminator_p_forward.5} parent=1 // pred_check_branch
      %11 = sbr.rel (0) target = $region5
    $region4: #{qdiscriminator_p_forward.5} parent=1 // pred_region
      _
    $region5: #{qdiscriminator_p_forward.5} parent=1 // pred_fallthru
      _
    // Predicated region
    $region6: #{qdiscriminator_p_forward.5} parent=1 // pred_check
      _
    $region7: #{qdiscriminator_p_forward.5} parent=1 // pred_check_branch
      %13 = sbr.rel (0) target = $region9
    $region8: #{qdiscriminator_p_forward.5} parent=1 // pred_region
      %s15 = ssub.s32 1024, 1024
      %16 = vsyncadd [#allocation4], %s15
      %s17 = sshll.u32 [#allocation3], 4
      %s18 = int_to_ptr.vmem [resolvable:$true] %s17
      %23 = dma.hbm_to_vmem [thread:$0]  %s1, 1024, %s18, [#allocation4], 64, 64, 4
    $region9: #{qdiscriminator_p_forward.5} parent=1 // pred_fallthru
      _
    // Predicated region
    $region10: #{qdiscriminator_p_forward.5} parent=1 // pred_check
      _
    $region11: #{qdiscriminator_p_forward.5} parent=1 // pred_check_branch
      %25 = sbr.rel (0) target = $region13
    $region12: #{qdiscriminator_p_forward.5} parent=1 // pred_region
      %s27 = ssub.s32 16, 16
      %28 = vsyncadd [#allocation6], %s27
      %s30 = sshll.u32 [#allocation5], 4
      %s31 = int_to_ptr.vmem [resolvable:$true] %s30
      %33 = dma.hbm_to_vmem [thread:$0]  %s2, 16, %s31, [#allocation6]
    $region13: #{qdiscriminator_p_forward.5} parent=1 // pred_fallthru
      _
    // Predicated region
    $region14: #{qdiscriminator_p_forward.5} parent=1 // pred_check
      _
    $region15: #{qdiscriminator_p_forward.5} parent=1 // pred_check_branch
      %35 = sbr.rel (0) target = $region17
    $region16: #{qdiscriminator_p_forward.5} parent=1 // pred_region
      %36 = dma.done [#allocation4], 1024
    $region17: #{qdiscriminator_p_forward.5} parent=1 // pred_fallthru
      _
    // Predicated region
    $region18: #{qdiscriminator_p_forward.5} parent=1 // pred_check
      _
    $region19: #{qdiscriminator_p_forward.5} parent=1 // pred_check_branch
      %38 = sbr.rel (0) target = $region21
    $region20: #{qdiscriminator_p_forward.5} parent=1 // pred_region
      %39 = dma.done [#allocation6], 16
    $region21: #{qdiscriminator_p_forward.5} parent=1 // pred_fallthru
      _
    %p41 = scmp.eq.s32.totalorder 0, 0
    // Predicated region
    $region22: #{qdiscriminator_p_forward.5} parent=1 // pred_check
      %p42 = pneg %p41
    $region23: #{qdiscriminator_p_forward.5} parent=1 // pred_check_branch
      %44 = sbr.rel (%p42) target = $region25
    $region24: #{qdiscriminator_p_forward.5} parent=1 // pred_region
      %45 = vst [vmem:[#allocation2] sm:$0xff] 0.0
      %46 = vst [vmem:[#allocation2 + $0x8] sm:$0xff] 0.0
      %47 = vst [vmem:[#allocation2 + $0x10] sm:$0xff] 0.0
      %48 = vst [vmem:[#allocation2 + $0x18] sm:$0xff] 0.0
      %49 = vst [vmem:[#allocation2 + $0x20] sm:$0xff] 0.0
      %50 = vst [vmem:[#allocation2 + $0x28] sm:$0xff] 0.0
      %51 = vst [vmem:[#allocation2 + $0x30] sm:$0xff] 0.0
      %52 = vst [vmem:[#allocation2 + $0x38] sm:$0xff] 0.0
      %53 = vst [vmem:[#allocation2 + $0x40] sm:$0xff] 0.0
      %54 = vst [vmem:[#allocation2 + $0x48] sm:$0xff] 0.0
      %55 = vst [vmem:[#allocation2 + $0x50] sm:$0xff] 0.0
      %56 = vst [vmem:[#allocation2 + $0x58] sm:$0xff] 0.0
    $region25: #{qdiscriminator_p_forward.5} parent=1 // pred_fallthru
      _
    %v57 = vld [vmem:[#allocation2] sm:$0xff]
    %v58 = vld [vmem:[#allocation2 + $0x8] sm:$0xff]
    %v59 = vld [vmem:[#allocation2 + $0x10] sm:$0xff]
    %v60 = vld [vmem:[#allocation2 + $0x18] sm:$0xff]
    %v61 = vld [vmem:[#allocation2 + $0x20] sm:$0xff]
    %v62 = vld [vmem:[#allocation2 + $0x28] sm:$0xff]
    %v63 = vld [vmem:[#allocation2 + $0x30] sm:$0xff]
    %v64 = vld [vmem:[#allocation2 + $0x38] sm:$0xff]
    %v65 = vld [vmem:[#allocation2 + $0x40] sm:$0xff]
    %v66 = vld [vmem:[#allocation2 + $0x48] sm:$0xff]
    %v67 = vld [vmem:[#allocation2 + $0x50] sm:$0xff]
    %v68 = vld [vmem:[#allocation2 + $0x58] sm:$0xff]
    %v69 = vld [vmem:[%s0] sm:$0xf]
    %v70 = vld [vmem:[%s0 + $0x4] sm:$0xf]
    %v71 = vld [vmem:[%s0 + $0x8] sm:$0xf]
    %v72 = vld [vmem:[%s0 + $0xc] sm:$0xf]
    %v73 = vld [vmem:[%s0 + $0x10] sm:$0xf]
    %v74 = vld [vmem:[%s0 + $0x14] sm:$0xf]
    %v75 = vld [vmem:[%s0 + $0x18] sm:$0xf]
    %v76 = vld [vmem:[%s0 + $0x1c] sm:$0xf]
    %v77 = vld [vmem:[%s0 + $0x20] sm:$0xf]
    %v78 = vld [vmem:[%s0 + $0x24] sm:$0xf]
    %v79 = vld [vmem:[%s0 + $0x28] sm:$0xf]
    %v80 = vld [vmem:[%s0 + $0x2c] sm:$0xf]
    %v81 = vld [vmem:[#allocation3] sm:$0xf]
    %v82 = vld [vmem:[#allocation3 + $0x4] sm:$0xf]
    %v83 = vld [vmem:[#allocation3 + $0x8] sm:$0xf]
    %v84 = vld [vmem:[#allocation3 + $0xc] sm:$0xf]
    %v85 = vld [vmem:[#allocation3 + $0x10] sm:$0xf]
    %v86 = vld [vmem:[#allocation3 + $0x14] sm:$0xf]
    %v87 = vld [vmem:[#allocation3 + $0x18] sm:$0xf]
    %v88 = vld [vmem:[#allocation3 + $0x1c] sm:$0xf]
    %v89 = vld [vmem:[#allocation3 + $0x20] sm:$0xf]
    %v90 = vld [vmem:[#allocation3 + $0x24] sm:$0xf]
    %v91 = vld [vmem:[#allocation3 + $0x28] sm:$0xf]
    %v92 = vld [vmem:[#allocation3 + $0x2c] sm:$0xf]
    %v93 = vld [vmem:[#allocation3 + $0x30] sm:$0xf]
    %v94 = vld [vmem:[#allocation3 + $0x34] sm:$0xf]
    %v95 = vld [vmem:[#allocation3 + $0x38] sm:$0xf]
    %v96 = vld [vmem:[#allocation3 + $0x3c] sm:$0xf]
    %v109 = vunpack.c.l.b16 %v69
    %v110 = vunpack.c.l.b16 %v70
    %v111 = vunpack.c.l.b16 %v71
    %v112 = vunpack.c.l.b16 %v72
    %v113 = vunpack.c.l.b16 %v73
    %v114 = vunpack.c.l.b16 %v74
    %v115 = vunpack.c.l.b16 %v75
    %v116 = vunpack.c.l.b16 %v76
    %v117 = vunpack.c.l.b16 %v77
    %v118 = vunpack.c.l.b16 %v78
    %v119 = vunpack.c.l.b16 %v79
    %v120 = vunpack.c.l.b16 %v80
    %v121 = vpack.c.b16 %v110, %v109
    %v122 = vpack.c.b16 %v112, %v111
    %v123 = vpack.c.b16 %v114, %v113
    %v124 = vpack.c.b16 %v116, %v115
    %v125 = vpack.c.b16 %v118, %v117
    %v126 = vpack.c.b16 %v120, %v119
    %v149 = vunpack.c.l.b16 %v81
    %v150 = vunpack.c.l.b16 %v82
    %v151 = vunpack.c.l.b16 %v83
    %v152 = vunpack.c.l.b16 %v84
    %v153 = vunpack.c.l.b16 %v85
    %v154 = vunpack.c.l.b16 %v86
    %v155 = vunpack.c.l.b16 %v87
    %v156 = vunpack.c.l.b16 %v88
    %v157 = vunpack.c.l.b16 %v89
    %v158 = vunpack.c.l.b16 %v90
    %v159 = vunpack.c.l.b16 %v91
    %v160 = vunpack.c.l.b16 %v92
    %v161 = vunpack.c.l.b16 %v93
    %v162 = vunpack.c.l.b16 %v94
    %v163 = vunpack.c.l.b16 %v95
    %v164 = vunpack.c.l.b16 %v96
    %v165 = vpack.c.b16 %v150, %v149
    %v166 = vpack.c.b16 %v152, %v151
    %v167 = vpack.c.b16 %v154, %v153
    %v168 = vpack.c.b16 %v156, %v155
    %v169 = vpack.c.b16 %v158, %v157
    %v170 = vpack.c.b16 %v160, %v159
    %v171 = vpack.c.b16 %v162, %v161
    %v172 = vpack.c.b16 %v164, %v163
    %181 = vmatprep.subr.bf16.mxu0 0
    %182 = vmatpush1.bf16.msra.mxu0 %v165
    %183 = vmatprep.subr.bf16.mxu0 0
    %184 = vmatpush1.bf16.msra.mxu0 %v166
    %185 = vmatprep.subr.bf16.mxu0 0
    %186 = vmatpush1.bf16.msra.mxu0 %v167
    %187 = vmatprep.subr.bf16.mxu0 0
    %188 = vmatpush1.bf16.msra.mxu0 %v168
    %189 = vmatprep.subr.bf16.mxu0 0
    %190 = vmatpush1.bf16.msra.mxu0 %v169
    %191 = vmatprep.subr.bf16.mxu0 0
    %192 = vmatpush1.bf16.msra.mxu0 %v170
    %193 = vmatprep.subr.bf16.mxu0 0
    %194 = vmatpush1.bf16.msra.mxu0 %v171
    %195 = vmatprep.subr.bf16.mxu0 0
    %196 = vmatpush1.bf16.msra.mxu0 %v172
    %197 = vmatprep.subr.bf16.mxu0 0
    %198 = vmatpush1.bf16.msra.mxu0 0
    %199 = vmatprep.subr.bf16.mxu0 0
    %200 = vmatpush1.bf16.msra.mxu0 0
    %201 = vmatprep.subr.bf16.mxu0 0
    %202 = vmatpush1.bf16.msra.mxu0 0
    %203 = vmatprep.subr.bf16.mxu0 0
    %204 = vmatpush1.bf16.msra.mxu0 0
    %205 = vmatprep.subr.bf16.mxu0 0
    %206 = vmatpush1.bf16.msra.mxu0 0
    %207 = vmatprep.subr.bf16.mxu0 0
    %208 = vmatpush1.bf16.msra.mxu0 0
    %209 = vmatprep.subr.bf16.mxu0 0
    %210 = vmatpush1.bf16.msra.mxu0 0
    %211 = vmatprep.subr.bf16.mxu0 0
    %212 = vmatpush1.bf16.msra.mxu0 0
    %213 = vmatprep.mubr.bf16.mxu0 0
    %214 = vmatmul.mubr.bf16.gmra.mrb[0].mxu0 %v121
    %v215 = vpop.f32.mrb[0].mxu0
    %v216 = vadd.f32 0.0, %v215
    %v217 = vpop.f32.mrb[0].mxu0
    %v218 = vpop.f32.mrb[0].mxu0
    %v219 = vadd.f32 0.0, %v218
    %v220 = vpop.f32.mrb[0].mxu0
    %221 = vmatprep.mubr.bf16.mxu0 0
    %222 = vmatmul.mubr.bf16.gmra.mrb[0].mxu0 %v122
    %v223 = vpop.f32.mrb[0].mxu0
    %v224 = vadd.f32 0.0, %v223
    %v225 = vpop.f32.mrb[0].mxu0
    %v226 = vpop.f32.mrb[0].mxu0
    %v227 = vadd.f32 0.0, %v226
    %v228 = vpop.f32.mrb[0].mxu0
    %229 = vmatprep.mubr.bf16.mxu0 0
    %230 = vmatmul.mubr.bf16.gmra.mrb[0].mxu0 %v123
    %v231 = vpop.f32.mrb[0].mxu0
    %v232 = vadd.f32 0.0, %v231
    %v233 = vpop.f32.mrb[0].mxu0
    %v234 = vpop.f32.mrb[0].mxu0
    %v235 = vadd.f32 0.0, %v234
    %v236 = vpop.f32.mrb[0].mxu0
    %237 = vmatprep.mubr.bf16.mxu0 0
    %238 = vmatmul.mubr.bf16.gmra.mrb[0].mxu0 %v124
    %v239 = vpop.f32.mrb[0].mxu0
    %v240 = vadd.f32 0.0, %v239
    %v241 = vpop.f32.mrb[0].mxu0
    %v242 = vpop.f32.mrb[0].mxu0
    %v243 = vadd.f32 0.0, %v242
    %v244 = vpop.f32.mrb[0].mxu0
    %245 = vmatprep.mubr.bf16.mxu0 0
    %246 = vmatmul.mubr.bf16.gmra.mrb[0].mxu0 %v125
    %v247 = vpop.f32.mrb[0].mxu0
    %v248 = vadd.f32 0.0, %v247
    %v249 = vpop.f32.mrb[0].mxu0
    %v250 = vpop.f32.mrb[0].mxu0
    %v251 = vadd.f32 0.0, %v250
    %v252 = vpop.f32.mrb[0].mxu0
    %253 = vmatprep.mubr.bf16.mxu0 0
    %254 = vmatmul.mubr.bf16.gmra.mrb[0].mxu0 %v126
    %v255 = vpop.f32.mrb[0].mxu0
    %v256 = vadd.f32 0.0, %v255
    %v257 = vpop.f32.mrb[0].mxu0
    %v258 = vpop.f32.mrb[0].mxu0
    %v259 = vadd.f32 0.0, %v258
    %v260 = vpop.f32.mrb[0].mxu0
    %261 = vdwg.mxu0
    %v262 = vadd.f32 %v57, %v216
    %v263 = vadd.f32 %v58, %v219
    %v264 = vadd.f32 %v59, %v224
    %v265 = vadd.f32 %v60, %v227
    %v266 = vadd.f32 %v61, %v232
    %v267 = vadd.f32 %v62, %v235
    %v268 = vadd.f32 %v63, %v240
    %v269 = vadd.f32 %v64, %v243
    %v270 = vadd.f32 %v65, %v248
    %v271 = vadd.f32 %v66, %v251
    %v272 = vadd.f32 %v67, %v256
    %v273 = vadd.f32 %v68, %v259
    %274 = vst [vmem:[#allocation2] sm:$0xff] %v262
    %275 = vst [vmem:[#allocation2 + $0x8] sm:$0xff] %v263
    %276 = vst [vmem:[#allocation2 + $0x10] sm:$0xff] %v264
    %277 = vst [vmem:[#allocation2 + $0x18] sm:$0xff] %v265
    %278 = vst [vmem:[#allocation2 + $0x20] sm:$0xff] %v266
    %279 = vst [vmem:[#allocation2 + $0x28] sm:$0xff] %v267
    %280 = vst [vmem:[#allocation2 + $0x30] sm:$0xff] %v268
    %281 = vst [vmem:[#allocation2 + $0x38] sm:$0xff] %v269
    %282 = vst [vmem:[#allocation2 + $0x40] sm:$0xff] %v270
    %283 = vst [vmem:[#allocation2 + $0x48] sm:$0xff] %v271
    %284 = vst [vmem:[#allocation2 + $0x50] sm:$0xff] %v272
    %285 = vst [vmem:[#allocation2 + $0x58] sm:$0xff] %v273
    // Predicated region
    $region26: #{qdiscriminator_p_forward.5} parent=1 // pred_check
      %p286 = pneg %p41
    $region27: #{qdiscriminator_p_forward.5} parent=1 // pred_check_branch
      %288 = sbr.rel (%p286) target = $region29
    $region28: #{qdiscriminator_p_forward.5} parent=1 // pred_region
      %v289 = vld [vmem:[#allocation2] sm:$0xff]
      %v290 = vld [vmem:[#allocation2 + $0x8] sm:$0xff]
      %v291 = vld [vmem:[#allocation2 + $0x10] sm:$0xff]
      %v292 = vld [vmem:[#allocation2 + $0x18] sm:$0xff]
      %v293 = vld [vmem:[#allocation2 + $0x20] sm:$0xff]
      %v294 = vld [vmem:[#allocation2 + $0x28] sm:$0xff]
      %v295 = vld [vmem:[#allocation2 + $0x30] sm:$0xff]
      %v296 = vld [vmem:[#allocation2 + $0x38] sm:$0xff]
      %v297 = vld [vmem:[#allocation2 + $0x40] sm:$0xff]
      %v298 = vld [vmem:[#allocation2 + $0x48] sm:$0xff]
      %v299 = vld [vmem:[#allocation2 + $0x50] sm:$0xff]
      %v300 = vld [vmem:[#allocation2 + $0x58] sm:$0xff]
      %v301 = vld [vmem:[#allocation5] sm:$0x1]
      %v303 = vlaneseq
      %v304 = vshrl.u32 %v303, 7
      %v305 = vsub.s32 0, %v304
      %v306 = vrot.slane %v301, %v305
      %v308 = vadd.f32 %v289, %v306
      %v309 = vadd.f32 %v290, %v306
      %v310 = vadd.f32 %v291, %v306
      %v311 = vadd.f32 %v292, %v306
      %v312 = vadd.f32 %v293, %v306
      %v313 = vadd.f32 %v294, %v306
      %v314 = vadd.f32 %v295, %v306
      %v315 = vadd.f32 %v296, %v306
      %v316 = vadd.f32 %v297, %v306
      %v317 = vadd.f32 %v298, %v306
      %v318 = vadd.f32 %v299, %v306
      %v319 = vadd.f32 %v300, %v306
      %vm320 = vcmp.ge.f32.partialorder %v308, 0.0
      %vm321 = vcmp.ge.f32.partialorder %v309, 0.0
      %vm322 = vcmp.ge.f32.partialorder %v310, 0.0
      %vm323 = vcmp.ge.f32.partialorder %v311, 0.0
      %vm324 = vcmp.ge.f32.partialorder %v312, 0.0
      %vm325 = vcmp.ge.f32.partialorder %v313, 0.0
      %vm326 = vcmp.ge.f32.partialorder %v314, 0.0
      %vm327 = vcmp.ge.f32.partialorder %v315, 0.0
      %vm328 = vcmp.ge.f32.partialorder %v316, 0.0
      %vm329 = vcmp.ge.f32.partialorder %v317, 0.0
      %vm330 = vcmp.ge.f32.partialorder %v318, 0.0
      %vm331 = vcmp.ge.f32.partialorder %v319, 0.0
      %v332 = vmul.f32 %v308, 0.1
      %v333 = vmul.f32 %v309, 0.1
      %v334 = vmul.f32 %v310, 0.1
      %v335 = vmul.f32 %v311, 0.1
      %v336 = vmul.f32 %v312, 0.1
      %v337 = vmul.f32 %v313, 0.1
      %v338 = vmul.f32 %v314, 0.1
      %v339 = vmul.f32 %v315, 0.1
      %v340 = vmul.f32 %v316, 0.1
      %v341 = vmul.f32 %v317, 0.1
      %v342 = vmul.f32 %v318, 0.1
      %v343 = vmul.f32 %v319, 0.1
      %v344 = vsel %vm320, %v308, %v332
      %v345 = vsel %vm321, %v309, %v333
      %v346 = vsel %vm322, %v310, %v334
      %v347 = vsel %vm323, %v311, %v335
      %v348 = vsel %vm324, %v312, %v336
      %v349 = vsel %vm325, %v313, %v337
      %v350 = vsel %vm326, %v314, %v338
      %v351 = vsel %vm327, %v315, %v339
      %v352 = vsel %vm328, %v316, %v340
      %v353 = vsel %vm329, %v317, %v341
      %v354 = vsel %vm330, %v318, %v342
      %v355 = vsel %vm331, %v319, %v343
      %356 = vst [vmem:[%s3] sm:$0xff] %v344
      %357 = vst [vmem:[%s3 + $0x8] sm:$0xff] %v345
      %358 = vst [vmem:[%s3 + $0x10] sm:$0xff] %v346
      %359 = vst [vmem:[%s3 + $0x18] sm:$0xff] %v347
      %360 = vst [vmem:[%s3 + $0x20] sm:$0xff] %v348
      %361 = vst [vmem:[%s3 + $0x28] sm:$0xff] %v349
      %362 = vst [vmem:[%s3 + $0x30] sm:$0xff] %v350
      %363 = vst [vmem:[%s3 + $0x38] sm:$0xff] %v351
      %364 = vst [vmem:[%s3 + $0x40] sm:$0xff] %v352
      %365 = vst [vmem:[%s3 + $0x48] sm:$0xff] %v353
      %366 = vst [vmem:[%s3 + $0x50] sm:$0xff] %v354
      %367 = vst [vmem:[%s3 + $0x58] sm:$0xff] %v355
    $region29: #{qdiscriminator_p_forward.5} parent=1 // pred_fallthru
      _
    // Predicated region
    $region30: #{qdiscriminator_p_forward.5} parent=1 // pred_check
      _
    $region31: #{qdiscriminator_p_forward.5} parent=1 // pred_check_branch
      %369 = sbr.rel (0) target = $region33
    $region32: #{qdiscriminator_p_forward.5} parent=1 // pred_region
      _
    $region33: #{qdiscriminator_p_forward.5} parent=1 // pred_fallthru
      _
    // Predicated region
    $region34: #{qdiscriminator_p_forward.5} parent=1 // pred_check
      _
    $region35: #{qdiscriminator_p_forward.5} parent=1 // pred_check_branch
      %371 = sbr.rel (0) target = $region37
    $region36: #{qdiscriminator_p_forward.5} parent=1 // pred_region
      _
    $region37: #{qdiscriminator_p_forward.5} parent=1 // pred_fallthru
      _
    %372 = vsyncpa [#allocation4], 1
    %373 = vsyncpa [#allocation6], 1

// kernel: qdiscriminator_p_forward.6
$region0: #{qdiscriminator_p_forward.6}
  #allocation0 [shape = 'u32[]', space=smem, size = 0x4, offset = 0x4, fixed_abs, tag = 'smem constant byte address 0x4 - core index']
  #allocation1 [shape = 'u32[144,128]{1,0:T(1,128)}', space=vmem, size = 0x12000, scoped, tag = 'internal scratch']
  #allocation2 [shape = 'f32[32,128]{1,0:T(8,128)}', space=vmem, size = 0x4000, scoped, tag = 'scratch operand']
  %s0 = inlined_call_operand.vmem [shape: bf16[32,256], index: 0, kind: input, shape index: {}]
  %s1 = inlined_call_operand.hbm [shape: bf16[256,128], index: 1, kind: input, shape index: {}]
  %s2 = inlined_call_operand.hbm [shape: f32[1,128], index: 2, kind: input, shape index: {}]
  %s3 = inlined_call_operand.vmem [shape: f32[32,128], index: 3, kind: output, shape index: {}]
  %s4 = sld [smem:[#allocation0]]
  $region38: #{qdiscriminator_p_forward.6} parent=0
    _
  %s6 = ssub.s32 1, %s4
  %s7 = scalar_select 0, %s6, %s4
  $region1: #{qdiscriminator_p_forward.6} parent=0
    #allocation3 [shape = 'u8[65536]{0}', space=vmem, size = 0x10000, scoped, tag = 'input window, operand 1, single buffered']
    #allocation4 [shape = 's32[1]{0}', space=sflag, size = 0x4, scoped, tag = 'scoped memory for qdiscriminator_p_forward.6']
    #allocation5 [shape = 'u8[512]{0}', space=vmem, size = 0x400, scoped, tag = 'input window, operand 2, single buffered']
    #allocation6 [shape = 's32[1]{0}', space=sflag, size = 0x4, scoped, tag = 'scoped memory for qdiscriminator_p_forward.6']
    %8 = vsyncpa [#allocation4], 0
    %9 = vsyncpa [#allocation6], 0
    // Predicated region
    $region2: #{qdiscriminator_p_forward.6} parent=1 // pred_check
      _
    $region3: #{qdiscriminator_p_forward.6} parent=1 // pred_check_branch
      %11 = sbr.rel (0) target = $region5
    $region4: #{qdiscriminator_p_forward.6} parent=1 // pred_region
      _
    $region5: #{qdiscriminator_p_forward.6} parent=1 // pred_fallthru
      _
    // Predicated region
    $region6: #{qdiscriminator_p_forward.6} parent=1 // pred_check
      _
    $region7: #{qdiscriminator_p_forward.6} parent=1 // pred_check_branch
      %13 = sbr.rel (0) target = $region9
    $region8: #{qdiscriminator_p_forward.6} parent=1 // pred_region
      %s15 = ssub.s32 2048, 2048
      %16 = vsyncadd [#allocation4], %s15
      %s17 = sshll.u32 [#allocation3], 4
      %s18 = int_to_ptr.vmem [resolvable:$true] %s17
      %23 = dma.hbm_to_vmem [thread:$0]  %s1, 2048, %s18, [#allocation4], 64, 64, 4
    $region9: #{qdiscriminator_p_forward.6} parent=1 // pred_fallthru
      _
    // Predicated region
    $region10: #{qdiscriminator_p_forward.6} parent=1 // pred_check
      _
    $region11: #{qdiscriminator_p_forward.6} parent=1 // pred_check_branch
      %25 = sbr.rel (0) target = $region13
    $region12: #{qdiscriminator_p_forward.6} parent=1 // pred_region
      %s27 = ssub.s32 16, 16
      %28 = vsyncadd [#allocation6], %s27
      %s30 = sshll.u32 [#allocation5], 4
      %s31 = int_to_ptr.vmem [resolvable:$true] %s30
      %33 = dma.hbm_to_vmem [thread:$0]  %s2, 16, %s31, [#allocation6]
    $region13: #{qdiscriminator_p_forward.6} parent=1 // pred_fallthru
      _
    // Predicated region
    $region14: #{qdiscriminator_p_forward.6} parent=1 // pred_check
      _
    $region15: #{qdiscriminator_p_forward.6} parent=1 // pred_check_branch
      %35 = sbr.rel (0) target = $region17
    $region16: #{qdiscriminator_p_forward.6} parent=1 // pred_region
      %36 = dma.done [#allocation4], 2048
    $region17: #{qdiscriminator_p_forward.6} parent=1 // pred_fallthru
      _
    // Predicated region
    $region18: #{qdiscriminator_p_forward.6} parent=1 // pred_check
      _
    $region19: #{qdiscriminator_p_forward.6} parent=1 // pred_check_branch
      %38 = sbr.rel (0) target = $region21
    $region20: #{qdiscriminator_p_forward.6} parent=1 // pred_region
      %39 = dma.done [#allocation6], 16
    $region21: #{qdiscriminator_p_forward.6} parent=1 // pred_fallthru
      _
    %p41 = scmp.eq.s32.totalorder 0, 0
    // Predicated region
    $region22: #{qdiscriminator_p_forward.6} parent=1 // pred_check
      %p42 = pneg %p41
    $region23: #{qdiscriminator_p_forward.6} parent=1 // pred_check_branch
      %44 = sbr.rel (%p42) target = $region25
    $region24: #{qdiscriminator_p_forward.6} parent=1 // pred_region
      %45 = vst [vmem:[#allocation2] sm:$0xff] 0.0
      %46 = vst [vmem:[#allocation2 + $0x8] sm:$0xff] 0.0
      %47 = vst [vmem:[#allocation2 + $0x10] sm:$0xff] 0.0
      %48 = vst [vmem:[#allocation2 + $0x18] sm:$0xff] 0.0
    $region25: #{qdiscriminator_p_forward.6} parent=1 // pred_fallthru
      _
    %v49 = vld [vmem:[#allocation2] sm:$0xff]
    %v50 = vld [vmem:[#allocation2 + $0x8] sm:$0xff]
    %v51 = vld [vmem:[#allocation2 + $0x10] sm:$0xff]
    %v52 = vld [vmem:[#allocation2 + $0x18] sm:$0xff]
    %v53 = vld [vmem:[%s0] sm:$0xff]
    %v54 = vld [vmem:[%s0 + $0x8] sm:$0xff]
    %v55 = vld [vmem:[%s0 + $0x10] sm:$0xff]
    %v56 = vld [vmem:[%s0 + $0x18] sm:$0xff]
    %v57 = vld [vmem:[#allocation3] sm:$0xf]
    %v58 = vld [vmem:[#allocation3 + $0x4] sm:$0xf]
    %v59 = vld [vmem:[#allocation3 + $0x8] sm:$0xf]
    %v60 = vld [vmem:[#allocation3 + $0xc] sm:$0xf]
    %v61 = vld [vmem:[#allocation3 + $0x10] sm:$0xf]
    %v62 = vld [vmem:[#allocation3 + $0x14] sm:$0xf]
    %v63 = vld [vmem:[#allocation3 + $0x18] sm:$0xf]
    %v64 = vld [vmem:[#allocation3 + $0x1c] sm:$0xf]
    %v65 = vld [vmem:[#allocation3 + $0x20] sm:$0xf]
    %v66 = vld [vmem:[#allocation3 + $0x24] sm:$0xf]
    %v67 = vld [vmem:[#allocation3 + $0x28] sm:$0xf]
    %v68 = vld [vmem:[#allocation3 + $0x2c] sm:$0xf]
    %v69 = vld [vmem:[#allocation3 + $0x30] sm:$0xf]
    %v70 = vld [vmem:[#allocation3 + $0x34] sm:$0xf]
    %v71 = vld [vmem:[#allocation3 + $0x38] sm:$0xf]
    %v72 = vld [vmem:[#allocation3 + $0x3c] sm:$0xf]
    %v73 = vld [vmem:[#allocation3 + $0x40] sm:$0xf]
    %v74 = vld [vmem:[#allocation3 + $0x44] sm:$0xf]
    %v75 = vld [vmem:[#allocation3 + $0x48] sm:$0xf]
    %v76 = vld [vmem:[#allocation3 + $0x4c] sm:$0xf]
    %v77 = vld [vmem:[#allocation3 + $0x50] sm:$0xf]
    %v78 = vld [vmem:[#allocation3 + $0x54] sm:$0xf]
    %v79 = vld [vmem:[#allocation3 + $0x58] sm:$0xf]
    %v80 = vld [vmem:[#allocation3 + $0x5c] sm:$0xf]
    %v81 = vld [vmem:[#allocation3 + $0x60] sm:$0xf]
    %v82 = vld [vmem:[#allocation3 + $0x64] sm:$0xf]
    %v83 = vld [vmem:[#allocation3 + $0x68] sm:$0xf]
    %v84 = vld [vmem:[#allocation3 + $0x6c] sm:$0xf]
    %v85 = vld [vmem:[#allocation3 + $0x70] sm:$0xf]
    %v86 = vld [vmem:[#allocation3 + $0x74] sm:$0xf]
    %v87 = vld [vmem:[#allocation3 + $0x78] sm:$0xf]
    %v88 = vld [vmem:[#allocation3 + $0x7c] sm:$0xf]
    %v93 = vunpack.c.l.b16 %v53
    %v94 = vunpack.c.h.b16 %v53
    %v95 = vunpack.c.l.b16 %v54
    %v96 = vunpack.c.h.b16 %v54
    %v97 = vunpack.c.l.b16 %v55
    %v98 = vunpack.c.h.b16 %v55
    %v99 = vunpack.c.l.b16 %v56
    %v100 = vunpack.c.h.b16 %v56
    %v101 = vpack.c.b16 %v95, %v93
    %v102 = vpack.c.b16 %v96, %v94
    %v103 = vpack.c.b16 %v99, %v97
    %v104 = vpack.c.b16 %v100, %v98
    %v141 = vunpack.c.l.b16 %v57
    %v142 = vunpack.c.l.b16 %v58
    %v143 = vunpack.c.l.b16 %v59
    %v144 = vunpack.c.l.b16 %v60
    %v145 = vunpack.c.l.b16 %v61
    %v146 = vunpack.c.l.b16 %v62
    %v147 = vunpack.c.l.b16 %v63
    %v148 = vunpack.c.l.b16 %v64
    %v149 = vunpack.c.l.b16 %v65
    %v150 = vunpack.c.l.b16 %v66
    %v151 = vunpack.c.l.b16 %v67
    %v152 = vunpack.c.l.b16 %v68
    %v153 = vunpack.c.l.b16 %v69
    %v154 = vunpack.c.l.b16 %v70
    %v155 = vunpack.c.l.b16 %v71
    %v156 = vunpack.c.l.b16 %v72
    %v157 = vunpack.c.l.b16 %v73
    %v158 = vunpack.c.l.b16 %v74
    %v159 = vunpack.c.l.b16 %v75
    %v160 = vunpack.c.l.b16 %v76
    %v161 = vunpack.c.l.b16 %v77
    %v162 = vunpack.c.l.b16 %v78
    %v163 = vunpack.c.l.b16 %v79
    %v164 = vunpack.c.l.b16 %v80
    %v165 = vunpack.c.l.b16 %v81
    %v166 = vunpack.c.l.b16 %v82
    %v167 = vunpack.c.l.b16 %v83
    %v168 = vunpack.c.l.b16 %v84
    %v169 = vunpack.c.l.b16 %v85
    %v170 = vunpack.c.l.b16 %v86
    %v171 = vunpack.c.l.b16 %v87
    %v172 = vunpack.c.l.b16 %v88
    %v173 = vpack.c.b16 %v142, %v141
    %v174 = vpack.c.b16 %v144, %v143
    %v175 = vpack.c.b16 %v146, %v145
    %v176 = vpack.c.b16 %v148, %v147
    %v177 = vpack.c.b16 %v150, %v149
    %v178 = vpack.c.b16 %v152, %v151
    %v179 = vpack.c.b16 %v154, %v153
    %v180 = vpack.c.b16 %v156, %v155
    %v181 = vpack.c.b16 %v158, %v157
    %v182 = vpack.c.b16 %v160, %v159
    %v183 = vpack.c.b16 %v162, %v161
    %v184 = vpack.c.b16 %v164, %v163
    %v185 = vpack.c.b16 %v166, %v165
    %v186 = vpack.c.b16 %v168, %v167
    %v187 = vpack.c.b16 %v170, %v169
    %v188 = vpack.c.b16 %v172, %v171
    %205 = vmatprep.subr.bf16.mxu0 0
    %206 = vmatpush1.bf16.msra.mxu0 %v173
    %207 = vmatprep.subr.bf16.mxu0 0
    %208 = vmatpush1.bf16.msra.mxu0 %v174
    %209 = vmatprep.subr.bf16.mxu0 0
    %210 = vmatpush1.bf16.msra.mxu0 %v175
    %211 = vmatprep.subr.bf16.mxu0 0
    %212 = vmatpush1.bf16.msra.mxu0 %v176
    %213 = vmatprep.subr.bf16.mxu0 0
    %214 = vmatpush1.bf16.msra.mxu0 %v177
    %215 = vmatprep.subr.bf16.mxu0 0
    %216 = vmatpush1.bf16.msra.mxu0 %v178
    %217 = vmatprep.subr.bf16.mxu0 0
    %218 = vmatpush1.bf16.msra.mxu0 %v179
    %219 = vmatprep.subr.bf16.mxu0 0
    %220 = vmatpush1.bf16.msra.mxu0 %v180
    %221 = vmatprep.subr.bf16.mxu0 0
    %222 = vmatpush1.bf16.msra.mxu0 %v181
    %223 = vmatprep.subr.bf16.mxu0 0
    %224 = vmatpush1.bf16.msra.mxu0 %v182
    %225 = vmatprep.subr.bf16.mxu0 0
    %226 = vmatpush1.bf16.msra.mxu0 %v183
    %227 = vmatprep.subr.bf16.mxu0 0
    %228 = vmatpush1.bf16.msra.mxu0 %v184
    %229 = vmatprep.subr.bf16.mxu0 0
    %230 = vmatpush1.bf16.msra.mxu0 %v185
    %231 = vmatprep.subr.bf16.mxu0 0
    %232 = vmatpush1.bf16.msra.mxu0 %v186
    %233 = vmatprep.subr.bf16.mxu0 0
    %234 = vmatpush1.bf16.msra.mxu0 %v187
    %235 = vmatprep.subr.bf16.mxu0 0
    %236 = vmatpush1.bf16.msra.mxu0 %v188
    %237 = vmatprep.mubr.bf16.mxu0 %v102
    %238 = vmatmul.mubr.bf16.gmra.mrb[0].mxu0 %v101
    %v239 = vpop.f32.mrb[0].mxu0
    %v240 = vadd.f32 0.0, %v239
    %v241 = vpop.f32.mrb[0].mxu0
    %v242 = vpop.f32.mrb[0].mxu0
    %v243 = vadd.f32 0.0, %v242
    %v244 = vpop.f32.mrb[0].mxu0
    %245 = vmatprep.mubr.bf16.mxu0 %v104
    %246 = vmatmul.mubr.bf16.gmra.mrb[0].mxu0 %v103
    %v247 = vpop.f32.mrb[0].mxu0
    %v248 = vadd.f32 0.0, %v247
    %v249 = vpop.f32.mrb[0].mxu0
    %v250 = vpop.f32.mrb[0].mxu0
    %v251 = vadd.f32 0.0, %v250
    %v252 = vpop.f32.mrb[0].mxu0
    %253 = vdwg.mxu0
    %v254 = vadd.f32 %v49, %v240
    %v255 = vadd.f32 %v50, %v243
    %v256 = vadd.f32 %v51, %v248
    %v257 = vadd.f32 %v52, %v251
    %258 = vst [vmem:[#allocation2] sm:$0xff] %v254
    %259 = vst [vmem:[#allocation2 + $0x8] sm:$0xff] %v255
    %260 = vst [vmem:[#allocation2 + $0x10] sm:$0xff] %v256
    %261 = vst [vmem:[#allocation2 + $0x18] sm:$0xff] %v257
    // Predicated region
    $region26: #{qdiscriminator_p_forward.6} parent=1 // pred_check
      %p262 = pneg %p41
    $region27: #{qdiscriminator_p_forward.6} parent=1 // pred_check_branch
      %264 = sbr.rel (%p262) target = $region29
    $region28: #{qdiscriminator_p_forward.6} parent=1 // pred_region
      %v265 = vld [vmem:[#allocation2] sm:$0xff]
      %v266 = vld [vmem:[#allocation2 + $0x8] sm:$0xff]
      %v267 = vld [vmem:[#allocation2 + $0x10] sm:$0xff]
      %v268 = vld [vmem:[#allocation2 + $0x18] sm:$0xff]
      %v269 = vld [vmem:[#allocation5] sm:$0x1]
      %v271 = vlaneseq
      %v272 = vshrl.u32 %v271, 7
      %v273 = vsub.s32 0, %v272
      %v274 = vrot.slane %v269, %v273
      %v276 = vadd.f32 %v265, %v274
      %v277 = vadd.f32 %v266, %v274
      %v278 = vadd.f32 %v267, %v274
      %v279 = vadd.f32 %v268, %v274
      %vm280 = vcmp.ge.f32.partialorder %v276, 0.0
      %vm281 = vcmp.ge.f32.partialorder %v277, 0.0
      %vm282 = vcmp.ge.f32.partialorder %v278, 0.0
      %vm283 = vcmp.ge.f32.partialorder %v279, 0.0
      %v284 = vmul.f32 %v276, 0.1
      %v285 = vmul.f32 %v277, 0.1
      %v286 = vmul.f32 %v278, 0.1
      %v287 = vmul.f32 %v279, 0.1
      %v288 = vsel %vm280, %v276, %v284
      %v289 = vsel %vm281, %v277, %v285
      %v290 = vsel %vm282, %v278, %v286
      %v291 = vsel %vm283, %v279, %v287
      %292 = vst [vmem:[%s3] sm:$0xff] %v288
      %293 = vst [vmem:[%s3 + $0x8] sm:$0xff] %v289
      %294 = vst [vmem:[%s3 + $0x10] sm:$0xff] %v290
      %295 = vst [vmem:[%s3 + $0x18] sm:$0xff] %v291
    $region29: #{qdiscriminator_p_forward.6} parent=1 // pred_fallthru
      _
    // Predicated region
    $region30: #{qdiscriminator_p_forward.6} parent=1 // pred_check
      _
    $region31: #{qdiscriminator_p_forward.6} parent=1 // pred_check_branch
      %297 = sbr.rel (0) target = $region33
    $region32: #{qdiscriminator_p_forward.6} parent=1 // pred_region
      _
    $region33: #{qdiscriminator_p_forward.6} parent=1 // pred_fallthru
      _
    // Predicated region
    $region34: #{qdiscriminator_p_forward.6} parent=1 // pred_check
      _
    $region35: #{qdiscriminator_p_forward.6} parent=1 // pred_check_branch
      %299 = sbr.rel (0) target = $region37
    $region36: #{qdiscriminator_p_forward.6} parent=1 // pred_region
      _
    $region37: #{qdiscriminator_p_forward.6} parent=1 // pred_fallthru
      _
    %300 = vsyncpa [#allocation4], 1
    %301 = vsyncpa [#allocation6], 1

// kernel: qdiscriminator_p_forward.7
$region0: #{qdiscriminator_p_forward.7}
  #allocation0 [shape = 'u32[]', space=smem, size = 0x4, offset = 0x4, fixed_abs, tag = 'smem constant byte address 0x4 - core index']
  #allocation1 [shape = 'u32[144,128]{1,0:T(1,128)}', space=vmem, size = 0x12000, scoped, tag = 'internal scratch']
  #allocation2 [shape = 'f32[16,512]{1,0:T(8,128)}', space=vmem, size = 0x8000, scoped, tag = 'scratch operand']
  %s0 = inlined_call_operand.vmem [shape: bf16[16,640], index: 0, kind: input, shape index: {}]
  %s1 = inlined_call_operand.hbm [shape: bf16[640,512], index: 1, kind: input, shape index: {}]
  %s2 = inlined_call_operand.hbm [shape: f32[1,512], index: 2, kind: input, shape index: {}]
  %s3 = inlined_call_operand.vmem [shape: f32[16,512], index: 3, kind: output, shape index: {}]
  %s4 = sld [smem:[#allocation0]]
  $region38: #{qdiscriminator_p_forward.7} parent=0
    _
  %s6 = ssub.s32 1, %s4
  %s7 = scalar_select 0, %s6, %s4
  $region1: #{qdiscriminator_p_forward.7} parent=0
    #allocation3 [shape = 'u8[655360]{0}', space=vmem, size = 0xa0000, scoped, tag = 'input window, operand 1, single buffered']
    #allocation4 [shape = 's32[1]{0}', space=sflag, size = 0x4, scoped, tag = 'scoped memory for qdiscriminator_p_forward.7']
    #allocation5 [shape = 'u8[2048]{0}', space=vmem, size = 0x800, scoped, tag = 'input window, operand 2, single buffered']
    #allocation6 [shape = 's32[1]{0}', space=sflag, size = 0x4, scoped, tag = 'scoped memory for qdiscriminator_p_forward.7']
    %8 = vsyncpa [#allocation4], 0
    %9 = vsyncpa [#allocation6], 0
    // Predicated region
    $region2: #{qdiscriminator_p_forward.7} parent=1 // pred_check
      _
    $region3: #{qdiscriminator_p_forward.7} parent=1 // pred_check_branch
      %11 = sbr.rel (0) target = $region5
    $region4: #{qdiscriminator_p_forward.7} parent=1 // pred_region
      _
    $region5: #{qdiscriminator_p_forward.7} parent=1 // pred_fallthru
      _
    // Predicated region
    $region6: #{qdiscriminator_p_forward.7} parent=1 // pred_check
      _
    $region7: #{qdiscriminator_p_forward.7} parent=1 // pred_check_branch
      %13 = sbr.rel (0) target = $region9
    $region8: #{qdiscriminator_p_forward.7} parent=1 // pred_region
      %s15 = ssub.s32 20480, 20480
      %16 = vsyncadd [#allocation4], %s15
      %s17 = sshll.u32 [#allocation3], 4
      %s18 = int_to_ptr.vmem [resolvable:$true] %s17
      %23 = dma.hbm_to_vmem [thread:$0]  %s1, 20480, %s18, [#allocation4], 256, 256, 16
    $region9: #{qdiscriminator_p_forward.7} parent=1 // pred_fallthru
      _
    // Predicated region
    $region10: #{qdiscriminator_p_forward.7} parent=1 // pred_check
      _
    $region11: #{qdiscriminator_p_forward.7} parent=1 // pred_check_branch
      %25 = sbr.rel (0) target = $region13
    $region12: #{qdiscriminator_p_forward.7} parent=1 // pred_region
      %s27 = ssub.s32 64, 64
      %28 = vsyncadd [#allocation6], %s27
      %s30 = sshll.u32 [#allocation5], 4
      %s31 = int_to_ptr.vmem [resolvable:$true] %s30
      %33 = dma.hbm_to_vmem [thread:$0]  %s2, 64, %s31, [#allocation6]
    $region13: #{qdiscriminator_p_forward.7} parent=1 // pred_fallthru
      _
    // Predicated region
    $region14: #{qdiscriminator_p_forward.7} parent=1 // pred_check
      _
    $region15: #{qdiscriminator_p_forward.7} parent=1 // pred_check_branch
      %35 = sbr.rel (0) target = $region17
    $region16: #{qdiscriminator_p_forward.7} parent=1 // pred_region
      %36 = dma.done [#allocation4], 20480
    $region17: #{qdiscriminator_p_forward.7} parent=1 // pred_fallthru
      _
    // Predicated region
    $region18: #{qdiscriminator_p_forward.7} parent=1 // pred_check
      _
    $region19: #{qdiscriminator_p_forward.7} parent=1 // pred_check_branch
      %38 = sbr.rel (0) target = $region21
    $region20: #{qdiscriminator_p_forward.7} parent=1 // pred_region
      %39 = dma.done [#allocation6], 64
    $region21: #{qdiscriminator_p_forward.7} parent=1 // pred_fallthru
      _
    %p41 = scmp.eq.s32.totalorder 0, 0
    // Predicated region
    $region22: #{qdiscriminator_p_forward.7} parent=1 // pred_check
      %p42 = pneg %p41
    $region23: #{qdiscriminator_p_forward.7} parent=1 // pred_check_branch
      %44 = sbr.rel (%p42) target = $region25
    $region24: #{qdiscriminator_p_forward.7} parent=1 // pred_region
      %45 = vst [vmem:[#allocation2] sm:$0xff] 0.0
      %46 = vst [vmem:[#allocation2 + $0x8] sm:$0xff] 0.0
      %47 = vst [vmem:[#allocation2 + $0x10] sm:$0xff] 0.0
      %48 = vst [vmem:[#allocation2 + $0x18] sm:$0xff] 0.0
      %49 = vst [vmem:[#allocation2 + $0x20] sm:$0xff] 0.0
      %50 = vst [vmem:[#allocation2 + $0x28] sm:$0xff] 0.0
      %51 = vst [vmem:[#allocation2 + $0x30] sm:$0xff] 0.0
      %52 = vst [vmem:[#allocation2 + $0x38] sm:$0xff] 0.0
    $region25: #{qdiscriminator_p_forward.7} parent=1 // pred_fallthru
      _
    %v53 = vld [vmem:[#allocation2] sm:$0xff]
    %v54 = vld [vmem:[#allocation2 + $0x8] sm:$0xff]
    %v55 = vld [vmem:[#allocation2 + $0x10] sm:$0xff]
    %v56 = vld [vmem:[#allocation2 + $0x18] sm:$0xff]
    %v57 = vld [vmem:[#allocation2 + $0x20] sm:$0xff]
    %v58 = vld [vmem:[#allocation2 + $0x28] sm:$0xff]
    %v59 = vld [vmem:[#allocation2 + $0x30] sm:$0xff]
    %v60 = vld [vmem:[#allocation2 + $0x38] sm:$0xff]
    %v61 = vld [vmem:[%s0] sm:$0xff]
    %v62 = vld [vmem:[%s0 + $0x8] sm:$0xff]
    %v63 = vld [vmem:[%s0 + $0x10] sm:$0xf]
    %v64 = vld [vmem:[%s0 + $0x14] sm:$0xff]
    %v65 = vld [vmem:[%s0 + $0x1c] sm:$0xff]
    %v66 = vld [vmem:[%s0 + $0x24] sm:$0xf]
    %v67 = vld [vmem:[#allocation3] sm:$0xff]
    %v68 = vld [vmem:[#allocation3 + $0x8] sm:$0xff]
    %v69 = vld [vmem:[#allocation3 + $0x10] sm:$0xff]
    %v70 = vld [vmem:[#allocation3 + $0x18] sm:$0xff]
    %v71 = vld [vmem:[#allocation3 + $0x20] sm:$0xff]
    %v72 = vld [vmem:[#allocation3 + $0x28] sm:$0xff]
    %v73 = vld [vmem:[#allocation3 + $0x30] sm:$0xff]
    %v74 = vld [vmem:[#allocation3 + $0x38] sm:$0xff]
    %v75 = vld [vmem:[#allocation3 + $0x40] sm:$0xff]
    %v76 = vld [vmem:[#allocation3 + $0x48] sm:$0xff]
    %v77 = vld [vmem:[#allocation3 + $0x50] sm:$0xff]
    %v78 = vld [vmem:[#allocation3 + $0x58] sm:$0xff]
    %v79 = vld [vmem:[#allocation3 + $0x60] sm:$0xff]
    %v80 = vld [vmem:[#allocation3 + $0x68] sm:$0xff]
    %v81 = vld [vmem:[#allocation3 + $0x70] sm:$0xff]
    %v82 = vld [vmem:[#allocation3 + $0x78] sm:$0xff]
    %v83 = vld [vmem:[#allocation3 + $0x80] sm:$0xff]
    %v84 = vld [vmem:[#allocation3 + $0x88] sm:$0xff]
    %v85 = vld [vmem:[#allocation3 + $0x90] sm:$0xff]
    %v86 = vld [vmem:[#allocation3 + $0x98] sm:$0xff]
    %v87 = vld [vmem:[#allocation3 + $0xa0] sm:$0xff]
    %v88 = vld [vmem:[#allocation3 + $0xa8] sm:$0xff]
    %v89 = vld [vmem:[#allocation3 + $0xb0] sm:$0xff]
    %v90 = vld [vmem:[#allocation3 + $0xb8] sm:$0xff]
    %v91 = vld [vmem:[#allocation3 + $0xc0] sm:$0xff]
    %v92 = vld [vmem:[#allocation3 + $0xc8] sm:$0xff]
    %v93 = vld [vmem:[#allocation3 + $0xd0] sm:$0xff]
    %v94 = vld [vmem:[#allocation3 + $0xd8] sm:$0xff]
    %v95 = vld [vmem:[#allocation3 + $0xe0] sm:$0xff]
    %v96 = vld [vmem:[#allocation3 + $0xe8] sm:$0xff]
    %v97 = vld [vmem:[#allocation3 + $0xf0] sm:$0xff]
    %v98 = vld [vmem:[#allocation3 + $0xf8] sm:$0xff]
    %v99 = vld [vmem:[#allocation3 + $0x100] sm:$0xff]
    %v100 = vld [vmem:[#allocation3 + $0x108] sm:$0xff]
    %v101 = vld [vmem:[#allocation3 + $0x110] sm:$0xff]
    %v102 = vld [vmem:[#allocation3 + $0x118] sm:$0xff]
    %v103 = vld [vmem:[#allocation3 + $0x120] sm:$0xff]
    %v104 = vld [vmem:[#allocation3 + $0x128] sm:$0xff]
    %v105 = vld [vmem:[#allocation3 + $0x130] sm:$0xff]
    %v106 = vld [vmem:[#allocation3 + $0x138] sm:$0xff]
    %v107 = vld [vmem:[#allocation3 + $0x140] sm:$0xff]
    %v108 = vld [vmem:[#allocation3 + $0x148] sm:$0xff]
    %v109 = vld [vmem:[#allocation3 + $0x150] sm:$0xff]
    %v110 = vld [vmem:[#allocation3 + $0x158] sm:$0xff]
    %v111 = vld [vmem:[#allocation3 + $0x160] sm:$0xff]
    %v112 = vld [vmem:[#allocation3 + $0x168] sm:$0xff]
    %v113 = vld [vmem:[#allocation3 + $0x170] sm:$0xff]
    %v114 = vld [vmem:[#allocation3 + $0x178] sm:$0xff]
    %v115 = vld [vmem:[#allocation3 + $0x180] sm:$0xff]
    %v116 = vld [vmem:[#allocation3 + $0x188] sm:$0xff]
    %v117 = vld [vmem:[#allocation3 + $0x190] sm:$0xff]
    %v118 = vld [vmem:[#allocation3 + $0x198] sm:$0xff]
    %v119 = vld [vmem:[#allocation3 + $0x1a0] sm:$0xff]
    %v120 = vld [vmem:[#allocation3 + $0x1a8] sm:$0xff]
    %v121 = vld [vmem:[#allocation3 + $0x1b0] sm:$0xff]
    %v122 = vld [vmem:[#allocation3 + $0x1b8] sm:$0xff]
    %v123 = vld [vmem:[#allocation3 + $0x1c0] sm:$0xff]
    %v124 = vld [vmem:[#allocation3 + $0x1c8] sm:$0xff]
    %v125 = vld [vmem:[#allocation3 + $0x1d0] sm:$0xff]
    %v126 = vld [vmem:[#allocation3 + $0x1d8] sm:$0xff]
    %v127 = vld [vmem:[#allocation3 + $0x1e0] sm:$0xff]
    %v128 = vld [vmem:[#allocation3 + $0x1e8] sm:$0xff]
    %v129 = vld [vmem:[#allocation3 + $0x1f0] sm:$0xff]
    %v130 = vld [vmem:[#allocation3 + $0x1f8] sm:$0xff]
    %v131 = vld [vmem:[#allocation3 + $0x200] sm:$0xff]
    %v132 = vld [vmem:[#allocation3 + $0x208] sm:$0xff]
    %v133 = vld [vmem:[#allocation3 + $0x210] sm:$0xff]
    %v134 = vld [vmem:[#allocation3 + $0x218] sm:$0xff]
    %v135 = vld [vmem:[#allocation3 + $0x220] sm:$0xff]
    %v136 = vld [vmem:[#allocation3 + $0x228] sm:$0xff]
    %v137 = vld [vmem:[#allocation3 + $0x230] sm:$0xff]
    %v138 = vld [vmem:[#allocation3 + $0x238] sm:$0xff]
    %v139 = vld [vmem:[#allocation3 + $0x240] sm:$0xff]
    %v140 = vld [vmem:[#allocation3 + $0x248] sm:$0xff]
    %v141 = vld [vmem:[#allocation3 + $0x250] sm:$0xff]
    %v142 = vld [vmem:[#allocation3 + $0x258] sm:$0xff]
    %v143 = vld [vmem:[#allocation3 + $0x260] sm:$0xff]
    %v144 = vld [vmem:[#allocation3 + $0x268] sm:$0xff]
    %v145 = vld [vmem:[#allocation3 + $0x270] sm:$0xff]
    %v146 = vld [vmem:[#allocation3 + $0x278] sm:$0xff]
    %v147 = vld [vmem:[#allocation3 + $0x280] sm:$0xff]
    %v148 = vld [vmem:[#allocation3 + $0x288] sm:$0xff]
    %v149 = vld [vmem:[#allocation3 + $0x290] sm:$0xff]
    %v150 = vld [vmem:[#allocation3 + $0x298] sm:$0xff]
    %v151 = vld [vmem:[#allocation3 + $0x2a0] sm:$0xff]
    %v152 = vld [vmem:[#allocation3 + $0x2a8] sm:$0xff]
    %v153 = vld [vmem:[#allocation3 + $0x2b0] sm:$0xff]
    %v154 = vld [vmem:[#allocation3 + $0x2b8] sm:$0xff]
    %v155 = vld [vmem:[#allocation3 + $0x2c0] sm:$0xff]
    %v156 = vld [vmem:[#allocation3 + $0x2c8] sm:$0xff]
    %v157 = vld [vmem:[#allocation3 + $0x2d0] sm:$0xff]
    %v158 = vld [vmem:[#allocation3 + $0x2d8] sm:$0xff]
    %v159 = vld [vmem:[#allocation3 + $0x2e0] sm:$0xff]
    %v160 = vld [vmem:[#allocation3 + $0x2e8] sm:$0xff]
    %v161 = vld [vmem:[#allocation3 + $0x2f0] sm:$0xff]
    %v162 = vld [vmem:[#allocation3 + $0x2f8] sm:$0xff]
    %v163 = vld [vmem:[#allocation3 + $0x300] sm:$0xff]
    %v164 = vld [vmem:[#allocation3 + $0x308] sm:$0xff]
    %v165 = vld [vmem:[#allocation3 + $0x310] sm:$0xff]
    %v166 = vld [vmem:[#allocation3 + $0x318] sm:$0xff]
    %v167 = vld [vmem:[#allocation3 + $0x320] sm:$0xff]
    %v168 = vld [vmem:[#allocation3 + $0x328] sm:$0xff]
    %v169 = vld [vmem:[#allocation3 + $0x330] sm:$0xff]
    %v170 = vld [vmem:[#allocation3 + $0x338] sm:$0xff]
    %v171 = vld [vmem:[#allocation3 + $0x340] sm:$0xff]
    %v172 = vld [vmem:[#allocation3 + $0x348] sm:$0xff]
    %v173 = vld [vmem:[#allocation3 + $0x350] sm:$0xff]
    %v174 = vld [vmem:[#allocation3 + $0x358] sm:$0xff]
    %v175 = vld [vmem:[#allocation3 + $0x360] sm:$0xff]
    %v176 = vld [vmem:[#allocation3 + $0x368] sm:$0xff]
    %v177 = vld [vmem:[#allocation3 + $0x370] sm:$0xff]
    %v178 = vld [vmem:[#allocation3 + $0x378] sm:$0xff]
    %v179 = vld [vmem:[#allocation3 + $0x380] sm:$0xff]
    %v180 = vld [vmem:[#allocation3 + $0x388] sm:$0xff]
    %v181 = vld [vmem:[#allocation3 + $0x390] sm:$0xff]
    %v182 = vld [vmem:[#allocation3 + $0x398] sm:$0xff]
    %v183 = vld [vmem:[#allocation3 + $0x3a0] sm:$0xff]
    %v184 = vld [vmem:[#allocation3 + $0x3a8] sm:$0xff]
    %v185 = vld [vmem:[#allocation3 + $0x3b0] sm:$0xff]
    %v186 = vld [vmem:[#allocation3 + $0x3b8] sm:$0xff]
    %v187 = vld [vmem:[#allocation3 + $0x3c0] sm:$0xff]
    %v188 = vld [vmem:[#allocation3 + $0x3c8] sm:$0xff]
    %v189 = vld [vmem:[#allocation3 + $0x3d0] sm:$0xff]
    %v190 = vld [vmem:[#allocation3 + $0x3d8] sm:$0xff]
    %v191 = vld [vmem:[#allocation3 + $0x3e0] sm:$0xff]
    %v192 = vld [vmem:[#allocation3 + $0x3e8] sm:$0xff]
    %v193 = vld [vmem:[#allocation3 + $0x3f0] sm:$0xff]
    %v194 = vld [vmem:[#allocation3 + $0x3f8] sm:$0xff]
    %v195 = vld [vmem:[#allocation3 + $0x400] sm:$0xff]
    %v196 = vld [vmem:[#allocation3 + $0x408] sm:$0xff]
    %v197 = vld [vmem:[#allocation3 + $0x410] sm:$0xff]
    %v198 = vld [vmem:[#allocation3 + $0x418] sm:$0xff]
    %v199 = vld [vmem:[#allocation3 + $0x420] sm:$0xff]
    %v200 = vld [vmem:[#allocation3 + $0x428] sm:$0xff]
    %v201 = vld [vmem:[#allocation3 + $0x430] sm:$0xff]
    %v202 = vld [vmem:[#allocation3 + $0x438] sm:$0xff]
    %v203 = vld [vmem:[#allocation3 + $0x440] sm:$0xff]
    %v204 = vld [vmem:[#allocation3 + $0x448] sm:$0xff]
    %v205 = vld [vmem:[#allocation3 + $0x450] sm:$0xff]
    %v206 = vld [vmem:[#allocation3 + $0x458] sm:$0xff]
    %v207 = vld [vmem:[#allocation3 + $0x460] sm:$0xff]
    %v208 = vld [vmem:[#allocation3 + $0x468] sm:$0xff]
    %v209 = vld [vmem:[#allocation3 + $0x470] sm:$0xff]
    %v210 = vld [vmem:[#allocation3 + $0x478] sm:$0xff]
    %v211 = vld [vmem:[#allocation3 + $0x480] sm:$0xff]
    %v212 = vld [vmem:[#allocation3 + $0x488] sm:$0xff]
    %v213 = vld [vmem:[#allocation3 + $0x490] sm:$0xff]
    %v214 = vld [vmem:[#allocation3 + $0x498] sm:$0xff]
    %v215 = vld [vmem:[#allocation3 + $0x4a0] sm:$0xff]
    %v216 = vld [vmem:[#allocation3 + $0x4a8] sm:$0xff]
    %v217 = vld [vmem:[#allocation3 + $0x4b0] sm:$0xff]
    %v218 = vld [vmem:[#allocation3 + $0x4b8] sm:$0xff]
    %v219 = vld [vmem:[#allocation3 + $0x4c0] sm:$0xff]
    %v220 = vld [vmem:[#allocation3 + $0x4c8] sm:$0xff]
    %v221 = vld [vmem:[#allocation3 + $0x4d0] sm:$0xff]
    %v222 = vld [vmem:[#allocation3 + $0x4d8] sm:$0xff]
    %v223 = vld [vmem:[#allocation3 + $0x4e0] sm:$0xff]
    %v224 = vld [vmem:[#allocation3 + $0x4e8] sm:$0xff]
    %v225 = vld [vmem:[#allocation3 + $0x4f0] sm:$0xff]
    %v226 = vld [vmem:[#allocation3 + $0x4f8] sm:$0xff]
    %v233 = vunpack.c.l.b16 %v61
    %v234 = vunpack.c.h.b16 %v61
    %v235 = vunpack.c.l.b16 %v62
    %v236 = vunpack.c.h.b16 %v62
    %v237 = vunpack.c.l.b16 %v63
    %v238 = vunpack.c.l.b16 %v64
    %v239 = vunpack.c.h.b16 %v64
    %v240 = vunpack.c.l.b16 %v65
    %v241 = vunpack.c.h.b16 %v65
    %v242 = vunpack.c.l.b16 %v66
    %v243 = vpack.c.b16 %v238, %v233
    %v244 = vpack.c.b16 %v239, %v234
    %v245 = vpack.c.b16 %v240, %v235
    %v246 = vpack.c.b16 %v241, %v236
    %v247 = vpack.c.b16 %v242, %v237
    %v413 = vunpack.c.l.b16 %v67
    %v414 = vunpack.c.h.b16 %v67
    %v415 = vunpack.c.l.b16 %v68
    %v416 = vunpack.c.h.b16 %v68
    %v417 = vunpack.c.l.b16 %v69
    %v418 = vunpack.c.h.b16 %v69
    %v419 = vunpack.c.l.b16 %v70
    %v420 = vunpack.c.h.b16 %v70
    %v421 = vunpack.c.l.b16 %v71
    %v422 = vunpack.c.h.b16 %v71
    %v423 = vunpack.c.l.b16 %v72
    %v424 = vunpack.c.h.b16 %v72
    %v425 = vunpack.c.l.b16 %v73
    %v426 = vunpack.c.h.b16 %v73
    %v427 = vunpack.c.l.b16 %v74
    %v428 = vunpack.c.h.b16 %v74
    %v429 = vunpack.c.l.b16 %v75
    %v430 = vunpack.c.h.b16 %v75
    %v431 = vunpack.c.l.b16 %v76
    %v432 = vunpack.c.h.b16 %v76
    %v433 = vunpack.c.l.b16 %v77
    %v434 = vunpack.c.h.b16 %v77
    %v435 = vunpack.c.l.b16 %v78
    %v436 = vunpack.c.h.b16 %v78
    %v437 = vunpack.c.l.b16 %v79
    %v438 = vunpack.c.h.b16 %v79
    %v439 = vunpack.c.l.b16 %v80
    %v440 = vunpack.c.h.b16 %v80
    %v441 = vunpack.c.l.b16 %v81
    %v442 = vunpack.c.h.b16 %v81
    %v443 = vunpack.c.l.b16 %v82
    %v444 = vunpack.c.h.b16 %v82
    %v445 = vunpack.c.l.b16 %v83
    %v446 = vunpack.c.h.b16 %v83
    %v447 = vunpack.c.l.b16 %v84
    %v448 = vunpack.c.h.b16 %v84
    %v449 = vunpack.c.l.b16 %v85
    %v450 = vunpack.c.h.b16 %v85
    %v451 = vunpack.c.l.b16 %v86
    %v452 = vunpack.c.h.b16 %v86
    %v453 = vunpack.c.l.b16 %v87
    %v454 = vunpack.c.h.b16 %v87
    %v455 = vunpack.c.l.b16 %v88
    %v456 = vunpack.c.h.b16 %v88
    %v457 = vunpack.c.l.b16 %v89
    %v458 = vunpack.c.h.b16 %v89
    %v459 = vunpack.c.l.b16 %v90
    %v460 = vunpack.c.h.b16 %v90
    %v461 = vunpack.c.l.b16 %v91
    %v462 = vunpack.c.h.b16 %v91
    %v463 = vunpack.c.l.b16 %v92
    %v464 = vunpack.c.h.b16 %v92
    %v465 = vunpack.c.l.b16 %v93
    %v466 = vunpack.c.h.b16 %v93
    %v467 = vunpack.c.l.b16 %v94
    %v468 = vunpack.c.h.b16 %v94
    %v469 = vunpack.c.l.b16 %v95
    %v470 = vunpack.c.h.b16 %v95
    %v471 = vunpack.c.l.b16 %v96
    %v472 = vunpack.c.h.b16 %v96
    %v473 = vunpack.c.l.b16 %v97
    %v474 = vunpack.c.h.b16 %v97
    %v475 = vunpack.c.l.b16 %v98
    %v476 = vunpack.c.h.b16 %v98
    %v477 = vunpack.c.l.b16 %v99
    %v478 = vunpack.c.h.b16 %v99
    %v479 = vunpack.c.l.b16 %v100
    %v480 = vunpack.c.h.b16 %v100
    %v481 = vunpack.c.l.b16 %v101
    %v482 = vunpack.c.h.b16 %v101
    %v483 = vunpack.c.l.b16 %v102
    %v484 = vunpack.c.h.b16 %v102
    %v485 = vunpack.c.l.b16 %v103
    %v486 = vunpack.c.h.b16 %v103
    %v487 = vunpack.c.l.b16 %v104
    %v488 = vunpack.c.h.b16 %v104
    %v489 = vunpack.c.l.b16 %v105
    %v490 = vunpack.c.h.b16 %v105
    %v491 = vunpack.c.l.b16 %v106
    %v492 = vunpack.c.h.b16 %v106
    %v493 = vunpack.c.l.b16 %v107
    %v494 = vunpack.c.h.b16 %v107
    %v495 = vunpack.c.l.b16 %v108
    %v496 = vunpack.c.h.b16 %v108
    %v497 = vunpack.c.l.b16 %v109
    %v498 = vunpack.c.h.b16 %v109
    %v499 = vunpack.c.l.b16 %v110
    %v500 = vunpack.c.h.b16 %v110
    %v501 = vunpack.c.l.b16 %v111
    %v502 = vunpack.c.h.b16 %v111
    %v503 = vunpack.c.l.b16 %v112
    %v504 = vunpack.c.h.b16 %v112
    %v505 = vunpack.c.l.b16 %v113
    %v506 = vunpack.c.h.b16 %v113
    %v507 = vunpack.c.l.b16 %v114
    %v508 = vunpack.c.h.b16 %v114
    %v509 = vunpack.c.l.b16 %v115
    %v510 = vunpack.c.h.b16 %v115
    %v511 = vunpack.c.l.b16 %v116
    %v512 = vunpack.c.h.b16 %v116
    %v513 = vunpack.c.l.b16 %v117
    %v514 = vunpack.c.h.b16 %v117
    %v515 = vunpack.c.l.b16 %v118
    %v516 = vunpack.c.h.b16 %v118
    %v517 = vunpack.c.l.b16 %v119
    %v518 = vunpack.c.h.b16 %v119
    %v519 = vunpack.c.l.b16 %v120
    %v520 = vunpack.c.h.b16 %v120
    %v521 = vunpack.c.l.b16 %v121
    %v522 = vunpack.c.h.b16 %v121
    %v523 = vunpack.c.l.b16 %v122
    %v524 = vunpack.c.h.b16 %v122
    %v525 = vunpack.c.l.b16 %v123
    %v526 = vunpack.c.h.b16 %v123
    %v527 = vunpack.c.l.b16 %v124
    %v528 = vunpack.c.h.b16 %v124
    %v529 = vunpack.c.l.b16 %v125
    %v530 = vunpack.c.h.b16 %v125
    %v531 = vunpack.c.l.b16 %v126
    %v532 = vunpack.c.h.b16 %v126
    %v533 = vunpack.c.l.b16 %v127
    %v534 = vunpack.c.h.b16 %v127
    %v535 = vunpack.c.l.b16 %v128
    %v536 = vunpack.c.h.b16 %v128
    %v537 = vunpack.c.l.b16 %v129
    %v538 = vunpack.c.h.b16 %v129
    %v539 = vunpack.c.l.b16 %v130
    %v540 = vunpack.c.h.b16 %v130
    %v541 = vunpack.c.l.b16 %v131
    %v542 = vunpack.c.h.b16 %v131
    %v543 = vunpack.c.l.b16 %v132
    %v544 = vunpack.c.h.b16 %v132
    %v545 = vunpack.c.l.b16 %v133
    %v546 = vunpack.c.h.b16 %v133
    %v547 = vunpack.c.l.b16 %v134
    %v548 = vunpack.c.h.b16 %v134
    %v549 = vunpack.c.l.b16 %v135
    %v550 = vunpack.c.h.b16 %v135
    %v551 = vunpack.c.l.b16 %v136
    %v552 = vunpack.c.h.b16 %v136
    %v553 = vunpack.c.l.b16 %v137
    %v554 = vunpack.c.h.b16 %v137
    %v555 = vunpack.c.l.b16 %v138
    %v556 = vunpack.c.h.b16 %v138
    %v557 = vunpack.c.l.b16 %v139
    %v558 = vunpack.c.h.b16 %v139
    %v559 = vunpack.c.l.b16 %v140
    %v560 = vunpack.c.h.b16 %v140
    %v561 = vunpack.c.l.b16 %v141
    %v562 = vunpack.c.h.b16 %v141
    %v563 = vunpack.c.l.b16 %v142
    %v564 = vunpack.c.h.b16 %v142
    %v565 = vunpack.c.l.b16 %v143
    %v566 = vunpack.c.h.b16 %v143
    %v567 = vunpack.c.l.b16 %v144
    %v568 = vunpack.c.h.b16 %v144
    %v569 = vunpack.c.l.b16 %v145
    %v570 = vunpack.c.h.b16 %v145
    %v571 = vunpack.c.l.b16 %v146
    %v572 = vunpack.c.h.b16 %v146
    %v573 = vunpack.c.l.b16 %v147
    %v574 = vunpack.c.h.b16 %v147
    %v575 = vunpack.c.l.b16 %v148
    %v576 = vunpack.c.h.b16 %v148
    %v577 = vunpack.c.l.b16 %v149
    %v578 = vunpack.c.h.b16 %v149
    %v579 = vunpack.c.l.b16 %v150
    %v580 = vunpack.c.h.b16 %v150
    %v581 = vunpack.c.l.b16 %v151
    %v582 = vunpack.c.h.b16 %v151
    %v583 = vunpack.c.l.b16 %v152
    %v584 = vunpack.c.h.b16 %v152
    %v585 = vunpack.c.l.b16 %v153
    %v586 = vunpack.c.h.b16 %v153
    %v587 = vunpack.c.l.b16 %v154
    %v588 = vunpack.c.h.b16 %v154
    %v589 = vunpack.c.l.b16 %v155
    %v590 = vunpack.c.h.b16 %v155
    %v591 = vunpack.c.l.b16 %v156
    %v592 = vunpack.c.h.b16 %v156
    %v593 = vunpack.c.l.b16 %v157
    %v594 = vunpack.c.h.b16 %v157
    %v595 = vunpack.c.l.b16 %v158
    %v596 = vunpack.c.h.b16 %v158
    %v597 = vunpack.c.l.b16 %v159
    %v598 = vunpack.c.h.b16 %v159
    %v599 = vunpack.c.l.b16 %v160
    %v600 = vunpack.c.h.b16 %v160
    %v601 = vunpack.c.l.b16 %v161
    %v602 = vunpack.c.h.b16 %v161
    %v603 = vunpack.c.l.b16 %v162
    %v604 = vunpack.c.h.b16 %v162
    %v605 = vunpack.c.l.b16 %v163
    %v606 = vunpack.c.h.b16 %v163
    %v607 = vunpack.c.l.b16 %v164
    %v608 = vunpack.c.h.b16 %v164
    %v609 = vunpack.c.l.b16 %v165
    %v610 = vunpack.c.h.b16 %v165
    %v611 = vunpack.c.l.b16 %v166
    %v612 = vunpack.c.h.b16 %v166
    %v613 = vunpack.c.l.b16 %v167
    %v614 = vunpack.c.h.b16 %v167
    %v615 = vunpack.c.l.b16 %v168
    %v616 = vunpack.c.h.b16 %v168
    %v617 = vunpack.c.l.b16 %v169
    %v618 = vunpack.c.h.b16 %v169
    %v619 = vunpack.c.l.b16 %v170
    %v620 = vunpack.c.h.b16 %v170
    %v621 = vunpack.c.l.b16 %v171
    %v622 = vunpack.c.h.b16 %v171
    %v623 = vunpack.c.l.b16 %v172
    %v624 = vunpack.c.h.b16 %v172
    %v625 = vunpack.c.l.b16 %v173
    %v626 = vunpack.c.h.b16 %v173
    %v627 = vunpack.c.l.b16 %v174
    %v628 = vunpack.c.h.b16 %v174
    %v629 = vunpack.c.l.b16 %v175
    %v630 = vunpack.c.h.b16 %v175
    %v631 = vunpack.c.l.b16 %v176
    %v632 = vunpack.c.h.b16 %v176
    %v633 = vunpack.c.l.b16 %v177
    %v634 = vunpack.c.h.b16 %v177
    %v635 = vunpack.c.l.b16 %v178
    %v636 = vunpack.c.h.b16 %v178
    %v637 = vunpack.c.l.b16 %v179
    %v638 = vunpack.c.h.b16 %v179
    %v639 = vunpack.c.l.b16 %v180
    %v640 = vunpack.c.h.b16 %v180
    %v641 = vunpack.c.l.b16 %v181
    %v642 = vunpack.c.h.b16 %v181
    %v643 = vunpack.c.l.b16 %v182
    %v644 = vunpack.c.h.b16 %v182
    %v645 = vunpack.c.l.b16 %v183
    %v646 = vunpack.c.h.b16 %v183
    %v647 = vunpack.c.l.b16 %v184
    %v648 = vunpack.c.h.b16 %v184
    %v649 = vunpack.c.l.b16 %v185
    %v650 = vunpack.c.h.b16 %v185
    %v651 = vunpack.c.l.b16 %v186
    %v652 = vunpack.c.h.b16 %v186
    %v653 = vunpack.c.l.b16 %v187
    %v654 = vunpack.c.h.b16 %v187
    %v655 = vunpack.c.l.b16 %v188
    %v656 = vunpack.c.h.b16 %v188
    %v657 = vunpack.c.l.b16 %v189
    %v658 = vunpack.c.h.b16 %v189
    %v659 = vunpack.c.l.b16 %v190
    %v660 = vunpack.c.h.b16 %v190
    %v661 = vunpack.c.l.b16 %v191
    %v662 = vunpack.c.h.b16 %v191
    %v663 = vunpack.c.l.b16 %v192
    %v664 = vunpack.c.h.b16 %v192
    %v665 = vunpack.c.l.b16 %v193
    %v666 = vunpack.c.h.b16 %v193
    %v667 = vunpack.c.l.b16 %v194
    %v668 = vunpack.c.h.b16 %v194
    %v669 = vunpack.c.l.b16 %v195
    %v670 = vunpack.c.h.b16 %v195
    %v671 = vunpack.c.l.b16 %v196
    %v672 = vunpack.c.h.b16 %v196
    %v673 = vunpack.c.l.b16 %v197
    %v674 = vunpack.c.h.b16 %v197
    %v675 = vunpack.c.l.b16 %v198
    %v676 = vunpack.c.h.b16 %v198
    %v677 = vunpack.c.l.b16 %v199
    %v678 = vunpack.c.h.b16 %v199
    %v679 = vunpack.c.l.b16 %v200
    %v680 = vunpack.c.h.b16 %v200
    %v681 = vunpack.c.l.b16 %v201
    %v682 = vunpack.c.h.b16 %v201
    %v683 = vunpack.c.l.b16 %v202
    %v684 = vunpack.c.h.b16 %v202
    %v685 = vunpack.c.l.b16 %v203
    %v686 = vunpack.c.h.b16 %v203
    %v687 = vunpack.c.l.b16 %v204
    %v688 = vunpack.c.h.b16 %v204
    %v689 = vunpack.c.l.b16 %v205
    %v690 = vunpack.c.h.b16 %v205
    %v691 = vunpack.c.l.b16 %v206
    %v692 = vunpack.c.h.b16 %v206
    %v693 = vunpack.c.l.b16 %v207
    %v694 = vunpack.c.h.b16 %v207
    %v695 = vunpack.c.l.b16 %v208
    %v696 = vunpack.c.h.b16 %v208
    %v697 = vunpack.c.l.b16 %v209
    %v698 = vunpack.c.h.b16 %v209
    %v699 = vunpack.c.l.b16 %v210
    %v700 = vunpack.c.h.b16 %v210
    %v701 = vunpack.c.l.b16 %v211
    %v702 = vunpack.c.h.b16 %v211
    %v703 = vunpack.c.l.b16 %v212
    %v704 = vunpack.c.h.b16 %v212
    %v705 = vunpack.c.l.b16 %v213
    %v706 = vunpack.c.h.b16 %v213
    %v707 = vunpack.c.l.b16 %v214
    %v708 = vunpack.c.h.b16 %v214
    %v709 = vunpack.c.l.b16 %v215
    %v710 = vunpack.c.h.b16 %v215
    %v711 = vunpack.c.l.b16 %v216
    %v712 = vunpack.c.h.b16 %v216
    %v713 = vunpack.c.l.b16 %v217
    %v714 = vunpack.c.h.b16 %v217
    %v715 = vunpack.c.l.b16 %v218
    %v716 = vunpack.c.h.b16 %v218
    %v717 = vunpack.c.l.b16 %v219
    %v718 = vunpack.c.h.b16 %v219
    %v719 = vunpack.c.l.b16 %v220
    %v720 = vunpack.c.h.b16 %v220
    %v721 = vunpack.c.l.b16 %v221
    %v722 = vunpack.c.h.b16 %v221
    %v723 = vunpack.c.l.b16 %v222
    %v724 = vunpack.c.h.b16 %v222
    %v725 = vunpack.c.l.b16 %v223
    %v726 = vunpack.c.h.b16 %v223
    %v727 = vunpack.c.l.b16 %v224
    %v728 = vunpack.c.h.b16 %v224
    %v729 = vunpack.c.l.b16 %v225
    %v730 = vunpack.c.h.b16 %v225
    %v731 = vunpack.c.l.b16 %v226
    %v732 = vunpack.c.h.b16 %v226
    %v733 = vpack.c.b16 %v417, %v413
    %v734 = vpack.c.b16 %v418, %v414
    %v735 = vpack.c.b16 %v419, %v415
    %v736 = vpack.c.b16 %v420, %v416
    %v737 = vpack.c.b16 %v425, %v421
    %v738 = vpack.c.b16 %v426, %v422
    %v739 = vpack.c.b16 %v427, %v423
    %v740 = vpack.c.b16 %v428, %v424
    %v741 = vpack.c.b16 %v433, %v429
    %v742 = vpack.c.b16 %v434, %v430
    %v743 = vpack.c.b16 %v435, %v431
    %v744 = vpack.c.b16 %v436, %v432
    %v745 = vpack.c.b16 %v441, %v437
    %v746 = vpack.c.b16 %v442, %v438
    %v747 = vpack.c.b16 %v443, %v439
    %v748 = vpack.c.b16 %v444, %v440
    %v749 = vpack.c.b16 %v449, %v445
    %v750 = vpack.c.b16 %v450, %v446
    %v751 = vpack.c.b16 %v451, %v447
    %v752 = vpack.c.b16 %v452, %v448
    %v753 = vpack.c.b16 %v457, %v453
    %v754 = vpack.c.b16 %v458, %v454
    %v755 = vpack.c.b16 %v459, %v455
    %v756 = vpack.c.b16 %v460, %v456
    %v757 = vpack.c.b16 %v465, %v461
    %v758 = vpack.c.b16 %v466, %v462
    %v759 = vpack.c.b16 %v467, %v463
    %v760 = vpack.c.b16 %v468, %v464
    %v761 = vpack.c.b16 %v473, %v469
    %v762 = vpack.c.b16 %v474, %v470
    %v763 = vpack.c.b16 %v475, %v471
    %v764 = vpack.c.b16 %v476, %v472
    %v765 = vpack.c.b16 %v481, %v477
    %v766 = vpack.c.b16 %v482, %v478
    %v767 = vpack.c.b16 %v483, %v479
    %v768 = vpack.c.b16 %v484, %v480
    %v769 = vpack.c.b16 %v489, %v485
    %v770 = vpack.c.b16 %v490, %v486
    %v771 = vpack.c.b16 %v491, %v487
    %v772 = vpack.c.b16 %v492, %v488
    %v773 = vpack.c.b16 %v497, %v493
    %v774 = vpack.c.b16 %v498, %v494
    %v775 = vpack.c.b16 %v499, %v495
    %v776 = vpack.c.b16 %v500, %v496
    %v777 = vpack.c.b16 %v505, %v501
    %v778 = vpack.c.b16 %v506, %v502
    %v779 = vpack.c.b16 %v507, %v503
    %v780 = vpack.c.b16 %v508, %v504
    %v781 = vpack.c.b16 %v513, %v509
    %v782 = vpack.c.b16 %v514, %v510
    %v783 = vpack.c.b16 %v515, %v511
    %v784 = vpack.c.b16 %v516, %v512
    %v785 = vpack.c.b16 %v521, %v517
    %v786 = vpack.c.b16 %v522, %v518
    %v787 = vpack.c.b16 %v523, %v519
    %v788 = vpack.c.b16 %v524, %v520
    %v789 = vpack.c.b16 %v529, %v525
    %v790 = vpack.c.b16 %v530, %v526
    %v791 = vpack.c.b16 %v531, %v527
    %v792 = vpack.c.b16 %v532, %v528
    %v793 = vpack.c.b16 %v537, %v533
    %v794 = vpack.c.b16 %v538, %v534
    %v795 = vpack.c.b16 %v539, %v535
    %v796 = vpack.c.b16 %v540, %v536
    %v797 = vpack.c.b16 %v545, %v541
    %v798 = vpack.c.b16 %v546, %v542
    %v799 = vpack.c.b16 %v547, %v543
    %v800 = vpack.c.b16 %v548, %v544
    %v801 = vpack.c.b16 %v553, %v549
    %v802 = vpack.c.b16 %v554, %v550
    %v803 = vpack.c.b16 %v555, %v551
    %v804 = vpack.c.b16 %v556, %v552
    %v805 = vpack.c.b16 %v561, %v557
    %v806 = vpack.c.b16 %v562, %v558
    %v807 = vpack.c.b16 %v563, %v559
    %v808 = vpack.c.b16 %v564, %v560
    %v809 = vpack.c.b16 %v569, %v565
    %v810 = vpack.c.b16 %v570, %v566
    %v811 = vpack.c.b16 %v571, %v567
    %v812 = vpack.c.b16 %v572, %v568
    %v813 = vpack.c.b16 %v577, %v573
    %v814 = vpack.c.b16 %v578, %v574
    %v815 = vpack.c.b16 %v579, %v575
    %v816 = vpack.c.b16 %v580, %v576
    %v817 = vpack.c.b16 %v585, %v581
    %v818 = vpack.c.b16 %v586, %v582
    %v819 = vpack.c.b16 %v587, %v583
    %v820 = vpack.c.b16 %v588, %v584
    %v821 = vpack.c.b16 %v593, %v589
    %v822 = vpack.c.b16 %v594, %v590
    %v823 = vpack.c.b16 %v595, %v591
    %v824 = vpack.c.b16 %v596, %v592
    %v825 = vpack.c.b16 %v601, %v597
    %v826 = vpack.c.b16 %v602, %v598
    %v827 = vpack.c.b16 %v603, %v599
    %v828 = vpack.c.b16 %v604, %v600
    %v829 = vpack.c.b16 %v609, %v605
    %v830 = vpack.c.b16 %v610, %v606
    %v831 = vpack.c.b16 %v611, %v607
    %v832 = vpack.c.b16 %v612, %v608
    %v833 = vpack.c.b16 %v617, %v613
    %v834 = vpack.c.b16 %v618, %v614
    %v835 = vpack.c.b16 %v619, %v615
    %v836 = vpack.c.b16 %v620, %v616
    %v837 = vpack.c.b16 %v625, %v621
    %v838 = vpack.c.b16 %v626, %v622
    %v839 = vpack.c.b16 %v627, %v623
    %v840 = vpack.c.b16 %v628, %v624
    %v841 = vpack.c.b16 %v633, %v629
    %v842 = vpack.c.b16 %v634, %v630
    %v843 = vpack.c.b16 %v635, %v631
    %v844 = vpack.c.b16 %v636, %v632
    %v845 = vpack.c.b16 %v641, %v637
    %v846 = vpack.c.b16 %v642, %v638
    %v847 = vpack.c.b16 %v643, %v639
    %v848 = vpack.c.b16 %v644, %v640
    %v849 = vpack.c.b16 %v649, %v645
    %v850 = vpack.c.b16 %v650, %v646
    %v851 = vpack.c.b16 %v651, %v647
    %v852 = vpack.c.b16 %v652, %v648
    %v853 = vpack.c.b16 %v657, %v653
    %v854 = vpack.c.b16 %v658, %v654
    %v855 = vpack.c.b16 %v659, %v655
    %v856 = vpack.c.b16 %v660, %v656
    %v857 = vpack.c.b16 %v665, %v661
    %v858 = vpack.c.b16 %v666, %v662
    %v859 = vpack.c.b16 %v667, %v663
    %v860 = vpack.c.b16 %v668, %v664
    %v861 = vpack.c.b16 %v673, %v669
    %v862 = vpack.c.b16 %v674, %v670
    %v863 = vpack.c.b16 %v675, %v671
    %v864 = vpack.c.b16 %v676, %v672
    %v865 = vpack.c.b16 %v681, %v677
    %v866 = vpack.c.b16 %v682, %v678
    %v867 = vpack.c.b16 %v683, %v679
    %v868 = vpack.c.b16 %v684, %v680
    %v869 = vpack.c.b16 %v689, %v685
    %v870 = vpack.c.b16 %v690, %v686
    %v871 = vpack.c.b16 %v691, %v687
    %v872 = vpack.c.b16 %v692, %v688
    %v873 = vpack.c.b16 %v697, %v693
    %v874 = vpack.c.b16 %v698, %v694
    %v875 = vpack.c.b16 %v699, %v695
    %v876 = vpack.c.b16 %v700, %v696
    %v877 = vpack.c.b16 %v705, %v701
    %v878 = vpack.c.b16 %v706, %v702
    %v879 = vpack.c.b16 %v707, %v703
    %v880 = vpack.c.b16 %v708, %v704
    %v881 = vpack.c.b16 %v713, %v709
    %v882 = vpack.c.b16 %v714, %v710
    %v883 = vpack.c.b16 %v715, %v711
    %v884 = vpack.c.b16 %v716, %v712
    %v885 = vpack.c.b16 %v721, %v717
    %v886 = vpack.c.b16 %v722, %v718
    %v887 = vpack.c.b16 %v723, %v719
    %v888 = vpack.c.b16 %v724, %v720
    %v889 = vpack.c.b16 %v729, %v725
    %v890 = vpack.c.b16 %v730, %v726
    %v891 = vpack.c.b16 %v731, %v727
    %v892 = vpack.c.b16 %v732, %v728
    %1053 = vmatprep.subr.bf16.mxu0 %v734
    %1054 = vmatpush1.bf16.msra.mxu0 %v733
    %1055 = vmatprep.subr.bf16.mxu0 %v738
    %1056 = vmatpush1.bf16.msra.mxu0 %v737
    %1057 = vmatprep.subr.bf16.mxu0 %v742
    %1058 = vmatpush1.bf16.msra.mxu0 %v741
    %1059 = vmatprep.subr.bf16.mxu0 %v746
    %1060 = vmatpush1.bf16.msra.mxu0 %v745
    %1061 = vmatprep.subr.bf16.mxu0 %v750
    %1062 = vmatpush1.bf16.msra.mxu0 %v749
    %1063 = vmatprep.subr.bf16.mxu0 %v754
    %1064 = vmatpush1.bf16.msra.mxu0 %v753
    %1065 = vmatprep.subr.bf16.mxu0 %v758
    %1066 = vmatpush1.bf16.msra.mxu0 %v757
    %1067 = vmatprep.subr.bf16.mxu0 %v762
    %1068 = vmatpush1.bf16.msra.mxu0 %v761
    %1069 = vmatprep.subr.bf16.mxu0 %v766
    %1070 = vmatpush1.bf16.msra.mxu0 %v765
    %1071 = vmatprep.subr.bf16.mxu0 %v770
    %1072 = vmatpush1.bf16.msra.mxu0 %v769
    %1073 = vmatprep.subr.bf16.mxu0 %v774
    %1074 = vmatpush1.bf16.msra.mxu0 %v773
    %1075 = vmatprep.subr.bf16.mxu0 %v778
    %1076 = vmatpush1.bf16.msra.mxu0 %v777
    %1077 = vmatprep.subr.bf16.mxu0 %v782
    %1078 = vmatpush1.bf16.msra.mxu0 %v781
    %1079 = vmatprep.subr.bf16.mxu0 %v786
    %1080 = vmatpush1.bf16.msra.mxu0 %v785
    %1081 = vmatprep.subr.bf16.mxu0 %v790
    %1082 = vmatpush1.bf16.msra.mxu0 %v789
    %1083 = vmatprep.subr.bf16.mxu0 %v794
    %1084 = vmatpush1.bf16.msra.mxu0 %v793
    %1085 = vmatprep.mubr.bf16.mxu0 %v244
    %1086 = vmatmul.mubr.bf16.gmra.mrb[0].mxu0 %v243
    %v1087 = vpop.f32.mrb[0].mxu0
    %v1088 = vadd.f32 0.0, %v1087
    %v1089 = vpop.f32.mrb[0].mxu0
    %v1090 = vadd.f32 0.0, %v1089
    %v1091 = vpop.f32.mrb[0].mxu0
    %v1092 = vadd.f32 0.0, %v1091
    %v1093 = vpop.f32.mrb[0].mxu0
    %v1094 = vadd.f32 0.0, %v1093
    %1095 = vdwg.mxu0
    %1096 = vmatprep.subr.bf16.mxu0 %v798
    %1097 = vmatpush1.bf16.msra.mxu0 %v797
    %1098 = vmatprep.subr.bf16.mxu0 %v802
    %1099 = vmatpush1.bf16.msra.mxu0 %v801
    %1100 = vmatprep.subr.bf16.mxu0 %v806
    %1101 = vmatpush1.bf16.msra.mxu0 %v805
    %1102 = vmatprep.subr.bf16.mxu0 %v810
    %1103 = vmatpush1.bf16.msra.mxu0 %v809
    %1104 = vmatprep.subr.bf16.mxu0 %v814
    %1105 = vmatpush1.bf16.msra.mxu0 %v813
    %1106 = vmatprep.subr.bf16.mxu0 %v818
    %1107 = vmatpush1.bf16.msra.mxu0 %v817
    %1108 = vmatprep.subr.bf16.mxu0 %v822
    %1109 = vmatpush1.bf16.msra.mxu0 %v821
    %1110 = vmatprep.subr.bf16.mxu0 %v826
    %1111 = vmatpush1.bf16.msra.mxu0 %v825
    %1112 = vmatprep.subr.bf16.mxu0 %v830
    %1113 = vmatpush1.bf16.msra.mxu0 %v829
    %1114 = vmatprep.subr.bf16.mxu0 %v834
    %1115 = vmatpush1.bf16.msra.mxu0 %v833
    %1116 = vmatprep.subr.bf16.mxu0 %v838
    %1117 = vmatpush1.bf16.msra.mxu0 %v837
    %1118 = vmatprep.subr.bf16.mxu0 %v842
    %1119 = vmatpush1.bf16.msra.mxu0 %v841
    %1120 = vmatprep.subr.bf16.mxu0 %v846
    %1121 = vmatpush1.bf16.msra.mxu0 %v845
    %1122 = vmatprep.subr.bf16.mxu0 %v850
    %1123 = vmatpush1.bf16.msra.mxu0 %v849
    %1124 = vmatprep.subr.bf16.mxu0 %v854
    %1125 = vmatpush1.bf16.msra.mxu0 %v853
    %1126 = vmatprep.subr.bf16.mxu0 %v858
    %1127 = vmatpush1.bf16.msra.mxu0 %v857
    %1128 = vmatprep.mubr.bf16.mxu0 %v246
    %1129 = vmatmul.mubr.bf16.gmra.mrb[0].mxu0 %v245
    %v1130 = vpop.f32.mrb[0].mxu0
    %v1131 = vadd.f32 %v1088, %v1130
    %v1132 = vpop.f32.mrb[0].mxu0
    %v1133 = vadd.f32 %v1090, %v1132
    %v1134 = vpop.f32.mrb[0].mxu0
    %v1135 = vadd.f32 %v1092, %v1134
    %v1136 = vpop.f32.mrb[0].mxu0
    %v1137 = vadd.f32 %v1094, %v1136
    %1138 = vdwg.mxu0
    %1139 = vmatprep.subr.bf16.mxu0 %v862
    %1140 = vmatpush1.bf16.msra.mxu0 %v861
    %1141 = vmatprep.subr.bf16.mxu0 %v866
    %1142 = vmatpush1.bf16.msra.mxu0 %v865
    %1143 = vmatprep.subr.bf16.mxu0 %v870
    %1144 = vmatpush1.bf16.msra.mxu0 %v869
    %1145 = vmatprep.subr.bf16.mxu0 %v874
    %1146 = vmatpush1.bf16.msra.mxu0 %v873
    %1147 = vmatprep.subr.bf16.mxu0 %v878
    %1148 = vmatpush1.bf16.msra.mxu0 %v877
    %1149 = vmatprep.subr.bf16.mxu0 %v882
    %1150 = vmatpush1.bf16.msra.mxu0 %v881
    %1151 = vmatprep.subr.bf16.mxu0 %v886
    %1152 = vmatpush1.bf16.msra.mxu0 %v885
    %1153 = vmatprep.subr.bf16.mxu0 %v890
    %1154 = vmatpush1.bf16.msra.mxu0 %v889
    %1155 = vmatprep.subr.bf16.mxu0 0
    %1156 = vmatpush1.bf16.msra.mxu0 0
    %1157 = vmatprep.subr.bf16.mxu0 0
    %1158 = vmatpush1.bf16.msra.mxu0 0
    %1159 = vmatprep.subr.bf16.mxu0 0
    %1160 = vmatpush1.bf16.msra.mxu0 0
    %1161 = vmatprep.subr.bf16.mxu0 0
    %1162 = vmatpush1.bf16.msra.mxu0 0
    %1163 = vmatprep.subr.bf16.mxu0 0
    %1164 = vmatpush1.bf16.msra.mxu0 0
    %1165 = vmatprep.subr.bf16.mxu0 0
    %1166 = vmatpush1.bf16.msra.mxu0 0
    %1167 = vmatprep.subr.bf16.mxu0 0
    %1168 = vmatpush1.bf16.msra.mxu0 0
    %1169 = vmatprep.subr.bf16.mxu0 0
    %1170 = vmatpush1.bf16.msra.mxu0 0
    %1171 = vmatprep.mubr.bf16.mxu0 0
    %1172 = vmatmul.mubr.bf16.gmra.mrb[0].mxu0 %v247
    %v1173 = vpop.f32.mrb[0].mxu0
    %v1174 = vadd.f32 %v1131, %v1173
    %v1175 = vpop.f32.mrb[0].mxu0
    %v1176 = vadd.f32 %v1133, %v1175
    %v1177 = vpop.f32.mrb[0].mxu0
    %v1178 = vadd.f32 %v1135, %v1177
    %v1179 = vpop.f32.mrb[0].mxu0
    %v1180 = vadd.f32 %v1137, %v1179
    %1181 = vdwg.mxu0
    %1182 = vmatprep.subr.bf16.mxu0 %v736
    %1183 = vmatpush1.bf16.msra.mxu0 %v735
    %1184 = vmatprep.subr.bf16.mxu0 %v740
    %1185 = vmatpush1.bf16.msra.mxu0 %v739
    %1186 = vmatprep.subr.bf16.mxu0 %v744
    %1187 = vmatpush1.bf16.msra.mxu0 %v743
    %1188 = vmatprep.subr.bf16.mxu0 %v748
    %1189 = vmatpush1.bf16.msra.mxu0 %v747
    %1190 = vmatprep.subr.bf16.mxu0 %v752
    %1191 = vmatpush1.bf16.msra.mxu0 %v751
    %1192 = vmatprep.subr.bf16.mxu0 %v756
    %1193 = vmatpush1.bf16.msra.mxu0 %v755
    %1194 = vmatprep.subr.bf16.mxu0 %v760
    %1195 = vmatpush1.bf16.msra.mxu0 %v759
    %1196 = vmatprep.subr.bf16.mxu0 %v764
    %1197 = vmatpush1.bf16.msra.mxu0 %v763
    %1198 = vmatprep.subr.bf16.mxu0 %v768
    %1199 = vmatpush1.bf16.msra.mxu0 %v767
    %1200 = vmatprep.subr.bf16.mxu0 %v772
    %1201 = vmatpush1.bf16.msra.mxu0 %v771
    %1202 = vmatprep.subr.bf16.mxu0 %v776
    %1203 = vmatpush1.bf16.msra.mxu0 %v775
    %1204 = vmatprep.subr.bf16.mxu0 %v780
    %1205 = vmatpush1.bf16.msra.mxu0 %v779
    %1206 = vmatprep.subr.bf16.mxu0 %v784
    %1207 = vmatpush1.bf16.msra.mxu0 %v783
    %1208 = vmatprep.subr.bf16.mxu0 %v788
    %1209 = vmatpush1.bf16.msra.mxu0 %v787
    %1210 = vmatprep.subr.bf16.mxu0 %v792
    %1211 = vmatpush1.bf16.msra.mxu0 %v791
    %1212 = vmatprep.subr.bf16.mxu0 %v796
    %1213 = vmatpush1.bf16.msra.mxu0 %v795
    %1214 = vmatprep.mubr.bf16.mxu0 %v244
    %1215 = vmatmul.mubr.bf16.gmra.mrb[0].mxu0 %v243
    %v1216 = vpop.f32.mrb[0].mxu0
    %v1217 = vadd.f32 0.0, %v1216
    %v1218 = vpop.f32.mrb[0].mxu0
    %v1219 = vadd.f32 0.0, %v1218
    %v1220 = vpop.f32.mrb[0].mxu0
    %v1221 = vadd.f32 0.0, %v1220
    %v1222 = vpop.f32.mrb[0].mxu0
    %v1223 = vadd.f32 0.0, %v1222
    %1224 = vdwg.mxu0
    %1225 = vmatprep.subr.bf16.mxu0 %v800
    %1226 = vmatpush1.bf16.msra.mxu0 %v799
    %1227 = vmatprep.subr.bf16.mxu0 %v804
    %1228 = vmatpush1.bf16.msra.mxu0 %v803
    %1229 = vmatprep.subr.bf16.mxu0 %v808
    %1230 = vmatpush1.bf16.msra.mxu0 %v807
    %1231 = vmatprep.subr.bf16.mxu0 %v812
    %1232 = vmatpush1.bf16.msra.mxu0 %v811
    %1233 = vmatprep.subr.bf16.mxu0 %v816
    %1234 = vmatpush1.bf16.msra.mxu0 %v815
    %1235 = vmatprep.subr.bf16.mxu0 %v820
    %1236 = vmatpush1.bf16.msra.mxu0 %v819
    %1237 = vmatprep.subr.bf16.mxu0 %v824
    %1238 = vmatpush1.bf16.msra.mxu0 %v823
    %1239 = vmatprep.subr.bf16.mxu0 %v828
    %1240 = vmatpush1.bf16.msra.mxu0 %v827
    %1241 = vmatprep.subr.bf16.mxu0 %v832
    %1242 = vmatpush1.bf16.msra.mxu0 %v831
    %1243 = vmatprep.subr.bf16.mxu0 %v836
    %1244 = vmatpush1.bf16.msra.mxu0 %v835
    %1245 = vmatprep.subr.bf16.mxu0 %v840
    %1246 = vmatpush1.bf16.msra.mxu0 %v839
    %1247 = vmatprep.subr.bf16.mxu0 %v844
    %1248 = vmatpush1.bf16.msra.mxu0 %v843
    %1249 = vmatprep.subr.bf16.mxu0 %v848
    %1250 = vmatpush1.bf16.msra.mxu0 %v847
    %1251 = vmatprep.subr.bf16.mxu0 %v852
    %1252 = vmatpush1.bf16.msra.mxu0 %v851
    %1253 = vmatprep.subr.bf16.mxu0 %v856
    %1254 = vmatpush1.bf16.msra.mxu0 %v855
    %1255 = vmatprep.subr.bf16.mxu0 %v860
    %1256 = vmatpush1.bf16.msra.mxu0 %v859
    %1257 = vmatprep.mubr.bf16.mxu0 %v246
    %1258 = vmatmul.mubr.bf16.gmra.mrb[0].mxu0 %v245
    %v1259 = vpop.f32.mrb[0].mxu0
    %v1260 = vadd.f32 %v1217, %v1259
    %v1261 = vpop.f32.mrb[0].mxu0
    %v1262 = vadd.f32 %v1219, %v1261
    %v1263 = vpop.f32.mrb[0].mxu0
    %v1264 = vadd.f32 %v1221, %v1263
    %v1265 = vpop.f32.mrb[0].mxu0
    %v1266 = vadd.f32 %v1223, %v1265
    %1267 = vdwg.mxu0
    %1268 = vmatprep.subr.bf16.mxu0 %v864
    %1269 = vmatpush1.bf16.msra.mxu0 %v863
    %1270 = vmatprep.subr.bf16.mxu0 %v868
    %1271 = vmatpush1.bf16.msra.mxu0 %v867
    %1272 = vmatprep.subr.bf16.mxu0 %v872
    %1273 = vmatpush1.bf16.msra.mxu0 %v871
    %1274 = vmatprep.subr.bf16.mxu0 %v876
    %1275 = vmatpush1.bf16.msra.mxu0 %v875
    %1276 = vmatprep.subr.bf16.mxu0 %v880
    %1277 = vmatpush1.bf16.msra.mxu0 %v879
    %1278 = vmatprep.subr.bf16.mxu0 %v884
    %1279 = vmatpush1.bf16.msra.mxu0 %v883
    %1280 = vmatprep.subr.bf16.mxu0 %v888
    %1281 = vmatpush1.bf16.msra.mxu0 %v887
    %1282 = vmatprep.subr.bf16.mxu0 %v892
    %1283 = vmatpush1.bf16.msra.mxu0 %v891
    %1284 = vmatprep.subr.bf16.mxu0 0
    %1285 = vmatpush1.bf16.msra.mxu0 0
    %1286 = vmatprep.subr.bf16.mxu0 0
    %1287 = vmatpush1.bf16.msra.mxu0 0
    %1288 = vmatprep.subr.bf16.mxu0 0
    %1289 = vmatpush1.bf16.msra.mxu0 0
    %1290 = vmatprep.subr.bf16.mxu0 0
    %1291 = vmatpush1.bf16.msra.mxu0 0
    %1292 = vmatprep.subr.bf16.mxu0 0
    %1293 = vmatpush1.bf16.msra.mxu0 0
    %1294 = vmatprep.subr.bf16.mxu0 0
    %1295 = vmatpush1.bf16.msra.mxu0 0
    %1296 = vmatprep.subr.bf16.mxu0 0
    %1297 = vmatpush1.bf16.msra.mxu0 0
    %1298 = vmatprep.subr.bf16.mxu0 0
    %1299 = vmatpush1.bf16.msra.mxu0 0
    %1300 = vmatprep.mubr.bf16.mxu0 0
    %1301 = vmatmul.mubr.bf16.gmra.mrb[0].mxu0 %v247
    %v1302 = vpop.f32.mrb[0].mxu0
    %v1303 = vadd.f32 %v1260, %v1302
    %v1304 = vpop.f32.mrb[0].mxu0
    %v1305 = vadd.f32 %v1262, %v1304
    %v1306 = vpop.f32.mrb[0].mxu0
    %v1307 = vadd.f32 %v1264, %v1306
    %v1308 = vpop.f32.mrb[0].mxu0
    %v1309 = vadd.f32 %v1266, %v1308
    %1310 = vdwg.mxu0
    %v1311 = vadd.f32 %v53, %v1174
    %v1312 = vadd.f32 %v54, %v1176
    %v1313 = vadd.f32 %v55, %v1303
    %v1314 = vadd.f32 %v56, %v1305
    %v1315 = vadd.f32 %v57, %v1178
    %v1316 = vadd.f32 %v58, %v1180
    %v1317 = vadd.f32 %v59, %v1307
    %v1318 = vadd.f32 %v60, %v1309
    %1319 = vst [vmem:[#allocation2] sm:$0xff] %v1311
    %1320 = vst [vmem:[#allocation2 + $0x8] sm:$0xff] %v1312
    %1321 = vst [vmem:[#allocation2 + $0x10] sm:$0xff] %v1313
    %1322 = vst [vmem:[#allocation2 + $0x18] sm:$0xff] %v1314
    %1323 = vst [vmem:[#allocation2 + $0x20] sm:$0xff] %v1315
    %1324 = vst [vmem:[#allocation2 + $0x28] sm:$0xff] %v1316
    %1325 = vst [vmem:[#allocation2 + $0x30] sm:$0xff] %v1317
    %1326 = vst [vmem:[#allocation2 + $0x38] sm:$0xff] %v1318
    // Predicated region
    $region26: #{qdiscriminator_p_forward.7} parent=1 // pred_check
      %p1327 = pneg %p41
    $region27: #{qdiscriminator_p_forward.7} parent=1 // pred_check_branch
      %1329 = sbr.rel (%p1327) target = $region29
    $region28: #{qdiscriminator_p_forward.7} parent=1 // pred_region
      %v1330 = vld [vmem:[#allocation2] sm:$0xff]
      %v1331 = vld [vmem:[#allocation2 + $0x8] sm:$0xff]
      %v1332 = vld [vmem:[#allocation2 + $0x10] sm:$0xff]
      %v1333 = vld [vmem:[#allocation2 + $0x18] sm:$0xff]
      %v1334 = vld [vmem:[#allocation2 + $0x20] sm:$0xff]
      %v1335 = vld [vmem:[#allocation2 + $0x28] sm:$0xff]
      %v1336 = vld [vmem:[#allocation2 + $0x30] sm:$0xff]
      %v1337 = vld [vmem:[#allocation2 + $0x38] sm:$0xff]
      %v1338 = vld [vmem:[#allocation5] sm:$0xf]
      %v1340 = vlaneseq
      %v1341 = vshrl.u32 %v1340, 7
      %v1342 = vsub.s32 0, %v1341
      %v1343 = vrot.slane %v1338, %v1342
      %v1344 = vlaneseq
      %v1345 = vshrl.u32 %v1344, 7
      %v1346 = vsub.s32 1, %v1345
      %v1347 = vrot.slane %v1338, %v1346
      %v1348 = vlaneseq
      %v1349 = vshrl.u32 %v1348, 7
      %v1350 = vsub.s32 2, %v1349
      %v1351 = vrot.slane %v1338, %v1350
      %v1352 = vlaneseq
      %v1353 = vshrl.u32 %v1352, 7
      %v1354 = vsub.s32 3, %v1353
      %v1355 = vrot.slane %v1338, %v1354
      %v1360 = vadd.f32 %v1330, %v1343
      %v1361 = vadd.f32 %v1331, %v1347
      %v1362 = vadd.f32 %v1332, %v1351
      %v1363 = vadd.f32 %v1333, %v1355
      %v1364 = vadd.f32 %v1334, %v1343
      %v1365 = vadd.f32 %v1335, %v1347
      %v1366 = vadd.f32 %v1336, %v1351
      %v1367 = vadd.f32 %v1337, %v1355
      %vm1368 = vcmp.ge.f32.partialorder %v1360, 0.0
      %vm1369 = vcmp.ge.f32.partialorder %v1361, 0.0
      %vm1370 = vcmp.ge.f32.partialorder %v1362, 0.0
      %vm1371 = vcmp.ge.f32.partialorder %v1363, 0.0
      %vm1372 = vcmp.ge.f32.partialorder %v1364, 0.0
      %vm1373 = vcmp.ge.f32.partialorder %v1365, 0.0
      %vm1374 = vcmp.ge.f32.partialorder %v1366, 0.0
      %vm1375 = vcmp.ge.f32.partialorder %v1367, 0.0
      %v1376 = vmul.f32 %v1360, 0.1
      %v1377 = vmul.f32 %v1361, 0.1
      %v1378 = vmul.f32 %v1362, 0.1
      %v1379 = vmul.f32 %v1363, 0.1
      %v1380 = vmul.f32 %v1364, 0.1
      %v1381 = vmul.f32 %v1365, 0.1
      %v1382 = vmul.f32 %v1366, 0.1
      %v1383 = vmul.f32 %v1367, 0.1
      %v1384 = vsel %vm1368, %v1360, %v1376
      %v1385 = vsel %vm1369, %v1361, %v1377
      %v1386 = vsel %vm1370, %v1362, %v1378
      %v1387 = vsel %vm1371, %v1363, %v1379
      %v1388 = vsel %vm1372, %v1364, %v1380
      %v1389 = vsel %vm1373, %v1365, %v1381
      %v1390 = vsel %vm1374, %v1366, %v1382
      %v1391 = vsel %vm1375, %v1367, %v1383
      %1392 = vst [vmem:[%s3] sm:$0xff] %v1384
      %1393 = vst [vmem:[%s3 + $0x8] sm:$0xff] %v1385
      %1394 = vst [vmem:[%s3 + $0x10] sm:$0xff] %v1386
      %1395 = vst [vmem:[%s3 + $0x18] sm:$0xff] %v1387
      %1396 = vst [vmem:[%s3 + $0x20] sm:$0xff] %v1388
      %1397 = vst [vmem:[%s3 + $0x28] sm:$0xff] %v1389
      %1398 = vst [vmem:[%s3 + $0x30] sm:$0xff] %v1390
      %1399 = vst [vmem:[%s3 + $0x38] sm:$0xff] %v1391
    $region29: #{qdiscriminator_p_forward.7} parent=1 // pred_fallthru
      _
    // Predicated region
    $region30: #{qdiscriminator_p_forward.7} parent=1 // pred_check
      _
    $region31: #{qdiscriminator_p_forward.7} parent=1 // pred_check_branch
      %1401 = sbr.rel (0) target = $region33
    $region32: #{qdiscriminator_p_forward.7} parent=1 // pred_region
      _
    $region33: #{qdiscriminator_p_forward.7} parent=1 // pred_fallthru
      _
    // Predicated region
    $region34: #{qdiscriminator_p_forward.7} parent=1 // pred_check
      _
    $region35: #{qdiscriminator_p_forward.7} parent=1 // pred_check_branch
      %1403 = sbr.rel (0) target = $region37
    $region36: #{qdiscriminator_p_forward.7} parent=1 // pred_region
      _
    $region37: #{qdiscriminator_p_forward.7} parent=1 // pred_fallthru
      _
    %1404 = vsyncpa [#allocation4], 1
    %1405 = vsyncpa [#allocation6], 1

// kernel: qdiscriminator_p_forward.8
$region0: #{qdiscriminator_p_forward.8}
  #allocation0 [shape = 'u32[]', space=smem, size = 0x4, offset = 0x4, fixed_abs, tag = 'smem constant byte address 0x4 - core index']
  #allocation1 [shape = 'u32[144,128]{1,0:T(1,128)}', space=vmem, size = 0x12000, scoped, tag = 'internal scratch']
  #allocation2 [shape = 'f32[16,1152]{1,0:T(8,128)}', space=vmem, size = 0x12000, scoped, tag = 'scratch operand']
  %s0 = inlined_call_operand.vmem [shape: bf16[16,2560], index: 0, kind: input, shape index: {}]
  %s1 = inlined_call_operand.hbm [shape: bf16[2560,1152], index: 1, kind: input, shape index: {}]
  %s2 = inlined_call_operand.hbm [shape: f32[1,1152], index: 2, kind: input, shape index: {}]
  %s3 = inlined_call_operand.vmem [shape: f32[16,1152], index: 3, kind: output, shape index: {}]
  %s4 = sld [smem:[#allocation0]]
  $region84: #{qdiscriminator_p_forward.8} parent=0
    _
  %s6 = ssub.s32 1, %s4
  %s7 = scalar_select 0, %s6, %s4
  $region1: #{qdiscriminator_p_forward.8} parent=0
    #allocation3 [shape = 'u8[32768]{0}', space=vmem, size = 0x8000, scoped, tag = 'input window, operand 0']
    #allocation4 [shape = 'u8[2359296]{0}', space=vmem, size = 0x240000, scoped, tag = 'input window, operand 1']
    #allocation5 [shape = 's32[2]{0}', space=sflag, size = 0x8, scoped, tag = 'scoped memory for qdiscriminator_p_forward.8']
    #allocation6 [shape = 'u8[4608]{0}', space=vmem, size = 0x1400, scoped, tag = 'input window, operand 2, single buffered']
    #allocation7 [shape = 's32[1]{0}', space=sflag, size = 0x4, scoped, tag = 'scoped memory for qdiscriminator_p_forward.8']
    %8 = vsyncpa [#allocation5], 0
    %s9 = scalar_lea.sflag [#allocation5], 1
    %10 = vsyncpa %s9, 0
    %11 = vsyncpa [#allocation7], 0
    loop: start=0, step=1, limit=7
    $region2: #{qdiscriminator_p_forward.8} parent=1 // loop_pre_header
      _
    $region3: #{qdiscriminator_p_forward.8} parent=1 // loop_header
      %s13 = sphi 0, %s17
      %p14 = scmp.ge.s32.totalorder %s13, 7
      %s20 = sphi 0, %s39
      %s21 = sphi 0, %s35
      %s22 = sphi 0, %s31
      %s23 = sphi 0, %s20
      %s24 = sphi 0, %s21
      %s25 = sphi 0, %s22
      %s26 = sphi 0, %s23
      %s27 = sphi 0, %s24
      %s28 = sphi 0, %s25
      %s44 = sphi 0, %s46
      %s47 = sphi 0, %s44
      %s48 = sphi 0, %s47
      %s64 = sphi 0, %s48
      %s72 = sphi 0, %s74
      %s75 = sphi 0, %s72
      %s76 = sphi 0, %s75
      %s92 = sphi 0, %s76
      %s98 = sphi 0, %s100
      %s101 = sphi 0, %s98
      %s102 = sphi 0, %s101
      %s118 = sphi 0, %s102
      %s126 = sphi 0, %s128
      %s129 = sphi 0, %s126
      %s130 = sphi 0, %s129
      %s146 = sphi 0, %s130
    $region4: #{qdiscriminator_p_forward.8} parent=1 // loop_header_branch
      %16 = sbr.rel (%p14) target = $region8
    $region5: #{qdiscriminator_p_forward.8} parent=1 // loop_body
      %s18 = ssub.s32 %s13, 1
      %s19 = ssub.s32 %s13, 2
      %s29 = sadd.s32 1, %s22
      %p30 = scmp.ge.s32.totalorder %s29, 5
      %s31 = scalar_select %p30, 0, %s29
      %s32 = sadd.s32 1, %s21
      %s33 = scalar_select %p30, %s32, %s21
      %p34 = scmp.ge.s32.totalorder %s33, 1
      %s35 = scalar_select %p34, 0, %s33
      %s36 = sadd.s32 1, %s20
      %s37 = scalar_select %p34, %s36, %s20
      %p38 = scmp.ge.s32.totalorder %s37, 1
      %s39 = scalar_select %p38, 0, %s37
      %s40 = ssub.s32 %s20, %s39
      %s41 = ssub.s32 %s22, %s31
      %s42 = sor.u32 %s40, %s41
      %p43 = scmp.eq.s32.totalorder %s42, 0
      %s45 = sadd.s32 %s44, 1
      %s46 = scalar_select %p43, %s44, %s45
      %p49 = pneg %p43
      %p50 = scmp.eq.s32.totalorder %s13, 4
      %p51 = por %p49, %p50
      %p52 = scmp.ne.s32.totalorder %s44, %s47
      %p53 = scmp.eq.s32.totalorder %s13, 0
      %p54 = por %p52, %p53
      %p55 = scmp.ne.s32.totalorder %s44, %s47
      %p56 = scmp.eq.s32.totalorder %s18, 4
      %p57 = por %p55, %p56
      %p58 = scmp.ne.s32.totalorder %s47, %s48
      %p59 = scmp.eq.s32.totalorder %s18, 0
      %p60 = por %p58, %p59
      %p61 = scmp.ne.s32.totalorder %s47, %s48
      %p62 = scmp.eq.s32.totalorder %s19, 4
      %p63 = por %p61, %p62
      %p65 = scmp.ne.s32.totalorder %s48, %s64
      %p66 = scmp.eq.s32.totalorder %s19, 0
      %p67 = por %p65, %p66
      %s68 = ssub.s32 %s22, %s31
      %s69 = ssub.s32 %s21, %s35
      %s70 = sor.u32 %s68, %s69
      %p71 = scmp.eq.s32.totalorder %s70, 0
      %s73 = sadd.s32 %s72, 1
      %s74 = scalar_select %p71, %s72, %s73
      %p77 = pneg %p71
      %p78 = scmp.eq.s32.totalorder %s13, 4
      %p79 = por %p77, %p78
      %p80 = scmp.ne.s32.totalorder %s72, %s75
      %p81 = scmp.eq.s32.totalorder %s13, 0
      %p82 = por %p80, %p81
      %p83 = scmp.ne.s32.totalorder %s72, %s75
      %p84 = scmp.eq.s32.totalorder %s18, 4
      %p85 = por %p83, %p84
      %p86 = scmp.ne.s32.totalorder %s75, %s76
      %p87 = scmp.eq.s32.totalorder %s18, 0
      %p88 = por %p86, %p87
      %p89 = scmp.ne.s32.totalorder %s75, %s76
      %p90 = scmp.eq.s32.totalorder %s19, 4
      %p91 = por %p89, %p90
      %p93 = scmp.ne.s32.totalorder %s76, %s92
      %p94 = scmp.eq.s32.totalorder %s19, 0
      %p95 = por %p93, %p94
      %s96 = ssub.s32 %s21, %s35
      %p97 = scmp.eq.s32.totalorder %s96, 0
      %s99 = sadd.s32 %s98, 1
      %s100 = scalar_select %p97, %s98, %s99
      %p103 = pneg %p97
      %p104 = scmp.eq.s32.totalorder %s13, 4
      %p105 = por %p103, %p104
      %p106 = scmp.ne.s32.totalorder %s98, %s101
      %p107 = scmp.eq.s32.totalorder %s13, 0
      %p108 = por %p106, %p107
      %p109 = scmp.ne.s32.totalorder %s98, %s101
      %p110 = scmp.eq.s32.totalorder %s18, 4
      %p111 = por %p109, %p110
      %p112 = scmp.ne.s32.totalorder %s101, %s102
      %p113 = scmp.eq.s32.totalorder %s18, 0
      %p114 = por %p112, %p113
      %p115 = scmp.ne.s32.totalorder %s101, %s102
      %p116 = scmp.eq.s32.totalorder %s19, 4
      %p117 = por %p115, %p116
      %p119 = scmp.ne.s32.totalorder %s102, %s118
      %p120 = scmp.eq.s32.totalorder %s19, 0
      %p121 = por %p119, %p120
      %s122 = ssub.s32 %s20, %s39
      %s123 = ssub.s32 %s21, %s35
      %s124 = sor.u32 %s122, %s123
      %p125 = scmp.eq.s32.totalorder %s124, 0
      %s127 = sadd.s32 %s126, 1
      %s128 = scalar_select %p125, %s126, %s127
      %p131 = pneg %p125
      %p132 = scmp.eq.s32.totalorder %s13, 4
      %p133 = por %p131, %p132
      %p134 = scmp.ne.s32.totalorder %s126, %s129
      %p135 = scmp.eq.s32.totalorder %s13, 0
      %p136 = por %p134, %p135
      %p137 = scmp.ne.s32.totalorder %s126, %s129
      %p138 = scmp.eq.s32.totalorder %s18, 4
      %p139 = por %p137, %p138
      %p140 = scmp.ne.s32.totalorder %s129, %s130
      %p141 = scmp.eq.s32.totalorder %s18, 0
      %p142 = por %p140, %p141
      %p143 = scmp.ne.s32.totalorder %s129, %s130
      %p144 = scmp.eq.s32.totalorder %s19, 4
      %p145 = por %p143, %p144
      %p147 = scmp.ne.s32.totalorder %s130, %s146
      %p148 = scmp.eq.s32.totalorder %s19, 0
      %p149 = por %p147, %p148
      %p150 = scmp.le.s32.totalorder 1, %s13
      %p151 = scmp.lt.s32.totalorder %s13, 6
      %p152 = pnand %p150, %p151
      %p153 = pneg %p152
      // Predicated region
      $region9: #{qdiscriminator_p_forward.8} parent=5 // pred_check
        _
      $region10: #{qdiscriminator_p_forward.8} parent=5 // pred_check_branch
        %155 = sbr.rel (%p152) target = $region12
      $region11: #{qdiscriminator_p_forward.8} parent=5 // pred_region
        %s156 = ssub.s32 %s13, 1
        // Predicated region
        $region13: #{qdiscriminator_p_forward.8} parent=11 // pred_check
          %p157 = pneg %p114
        $region14: #{qdiscriminator_p_forward.8} parent=11 // pred_check_branch
          %159 = sbr.rel (%p157) target = $region16
        $region15: #{qdiscriminator_p_forward.8} parent=11 // pred_region
          %s160 = smul.u32 9, %s24
          %s162 = ssub.s32 144, 144
          %163 = vsyncadd [#allocation7], %s162
          %s164 = smul.addr %s160, 16
          %s165 = scalar_lea.hbm %s2, %s164
          %s167 = sshll.u32 [#allocation6], 4
          %s168 = int_to_ptr.vmem [resolvable:$true] %s167
          %170 = dma.hbm_to_vmem [thread:$0]  %s165, 144, %s168, [#allocation7]
        $region16: #{qdiscriminator_p_forward.8} parent=11 // pred_fallthru
          _
      $region12: #{qdiscriminator_p_forward.8} parent=5 // pred_fallthru
        _
      %p171 = scmp.lt.s32.totalorder %s13, 5
      // Predicated region
      $region17: #{qdiscriminator_p_forward.8} parent=5 // pred_check
        %p172 = pneg %p171
      $region18: #{qdiscriminator_p_forward.8} parent=5 // pred_check_branch
        %174 = sbr.rel (%p172) target = $region20
      $region19: #{qdiscriminator_p_forward.8} parent=5 // pred_region
        // Predicated region
        $region21: #{qdiscriminator_p_forward.8} parent=19 // pred_check
          %p175 = pneg %p54
        $region22: #{qdiscriminator_p_forward.8} parent=19 // pred_check_branch
          %177 = sbr.rel (%p175) target = $region24
        $region23: #{qdiscriminator_p_forward.8} parent=19 // pred_region
          %s178 = sand.u32 %s44, 1
          %s179 = sand.u32 %s44, 1
          %s180 = smul.addr %s179, 32
          %s181 = scalar_lea.vmem [#allocation3], %s180
          %s182 = smul.u32 2, %s20
          %s183 = smul.u32 4, %s22
          %s184 = smul.addr %s182, 20
          %s185 = sadd.s32 %s183, %s184
          %s186 = smul.addr %s185, 4
          %s187 = scalar_lea.vmem %s0, %s186
          // Predicated region
          $region25: #{qdiscriminator_p_forward.8} parent=23 // pred_check
            _
          $region26: #{qdiscriminator_p_forward.8} parent=23 // pred_check_branch
            %189 = sbr.rel (0) target = $region28
          $region27: #{qdiscriminator_p_forward.8} parent=23 // pred_region
            // Predicated region
            $region29: #{qdiscriminator_p_forward.8} parent=27 // pred_check
              _
            $region30: #{qdiscriminator_p_forward.8} parent=27 // pred_check_branch
              %191 = sbr.rel (0) target = $region32
            $region31: #{qdiscriminator_p_forward.8} parent=27 // pred_region
              loop: start=0, step=1, limit=1
              $region33: #{qdiscriminator_p_forward.8} parent=31 // loop_pre_header
                _
              $region34: #{qdiscriminator_p_forward.8} parent=31 // loop_header
                %s193 = sphi 0, %s197
                %p194 = scmp.ge.s32.totalorder %s193, 1
                %s198 = sphi %s187, %s187
                %s199 = sphi %s181, %s181
              $region35: #{qdiscriminator_p_forward.8} parent=31 // loop_header_branch
                %196 = sbr.rel (%p194) target = $region39
              $region36: #{qdiscriminator_p_forward.8} parent=31 // loop_body
                %v200 = vld [vmem:[%s198] sm:$0xff]
                %201 = vst [vmem:[%s199] sm:$0xff] %v200
                %v202 = vld [vmem:[%s198 + $0x8] sm:$0xff]
                %203 = vst [vmem:[%s199 + $0x8] sm:$0xff] %v202
                %v204 = vld [vmem:[%s198 + $0x50] sm:$0xff]
                %205 = vst [vmem:[%s199 + $0x10] sm:$0xff] %v204
                %v206 = vld [vmem:[%s198 + $0x58] sm:$0xff]
                %207 = vst [vmem:[%s199 + $0x18] sm:$0xff] %v206
              $region37: #{qdiscriminator_p_forward.8} parent=31 // loop_footer
                %s197 = sadd.s32 1, %s193
              $region38: #{qdiscriminator_p_forward.8} parent=31 // loop_footer_branch
                %192 = sbr.rel target = $region34
              $region39: #{qdiscriminator_p_forward.8} parent=31 // loop_exit
                _
            $region32: #{qdiscriminator_p_forward.8} parent=27 // pred_fallthru
              _
            // Predicated region
            $region40: #{qdiscriminator_p_forward.8} parent=27 // pred_check
              _
            $region41: #{qdiscriminator_p_forward.8} parent=27 // pred_check_branch
              %209 = sbr.rel target = $region43
            $region42: #{qdiscriminator_p_forward.8} parent=27 // pred_region
              _
            $region43: #{qdiscriminator_p_forward.8} parent=27 // pred_fallthru
              _
          $region28: #{qdiscriminator_p_forward.8} parent=23 // pred_fallthru
            _
          %210 = vnop
        $region24: #{qdiscriminator_p_forward.8} parent=19 // pred_fallthru
          _
        // Predicated region
        $region44: #{qdiscriminator_p_forward.8} parent=19 // pred_check
          %p211 = pneg %p82
        $region45: #{qdiscriminator_p_forward.8} parent=19 // pred_check_branch
          %213 = sbr.rel (%p211) target = $region47
        $region46: #{qdiscriminator_p_forward.8} parent=19 // pred_region
          %s214 = sand.u32 %s72, 1
          %s215 = scalar_lea.sflag [#allocation5], %s214
          %s216 = sand.u32 %s72, 1
          %s217 = smul.addr %s216, 2304
          %s218 = scalar_lea.vmem [#allocation4], %s217
          %s219 = smul.u32 64, %s22
          %s220 = smul.u32 9, %s21
          %s222 = ssub.s32 36864, 36864
          %223 = vsyncadd %s215, %s222
          %s224 = smul.addr %s219, 9
          %s225 = sadd.s32 %s220, %s224
          %s226 = smul.addr %s225, 64
          %s227 = scalar_lea.hbm %s1, %s226
          %s228 = sshll.u32 %s218, 4
          %s229 = int_to_ptr.vmem [resolvable:$true] %s228
          %234 = dma.hbm_to_vmem [thread:$0]  %s227, 36864, %s229, %s215, 576, 576, 36
        $region47: #{qdiscriminator_p_forward.8} parent=19 // pred_fallthru
          _
      $region20: #{qdiscriminator_p_forward.8} parent=5 // pred_fallthru
        _
      %p235 = scmp.le.s32.totalorder 1, %s13
      %p236 = scmp.lt.s32.totalorder %s13, 6
      %p237 = pnand %p235, %p236
      %p238 = pneg %p237
      // Predicated region
      $region48: #{qdiscriminator_p_forward.8} parent=5 // pred_check
        _
      $region49: #{qdiscriminator_p_forward.8} parent=5 // pred_check_branch
        %240 = sbr.rel (%p237) target = $region51
      $region50: #{qdiscriminator_p_forward.8} parent=5 // pred_region
        %s241 = ssub.s32 %s13, 1
        %s242 = sand.u32 %s47, 1
        %s243 = sand.u32 %s47, 1
        %s244 = smul.addr %s243, 32
        %s245 = scalar_lea.vmem [#allocation3], %s244
        // Predicated region
        $region52: #{qdiscriminator_p_forward.8} parent=50 // pred_check
          %p246 = pneg %p60
        $region53: #{qdiscriminator_p_forward.8} parent=50 // pred_check_branch
          %248 = sbr.rel (%p246) target = $region55
        $region54: #{qdiscriminator_p_forward.8} parent=50 // pred_region
          _
        $region55: #{qdiscriminator_p_forward.8} parent=50 // pred_fallthru
          _
        %s249 = sand.u32 %s75, 1
        %s250 = scalar_lea.sflag [#allocation5], %s249
        %s251 = sand.u32 %s75, 1
        %s252 = smul.addr %s251, 2304
        %s253 = scalar_lea.vmem [#allocation4], %s252
        // Predicated region
        $region56: #{qdiscriminator_p_forward.8} parent=50 // pred_check
          %p254 = pneg %p88
        $region57: #{qdiscriminator_p_forward.8} parent=50 // pred_check_branch
          %256 = sbr.rel (%p254) target = $region59
        $region58: #{qdiscriminator_p_forward.8} parent=50 // pred_region
          %257 = dma.done %s250, 36864
        $region59: #{qdiscriminator_p_forward.8} parent=50 // pred_fallthru
          _
        // Predicated region
        $region60: #{qdiscriminator_p_forward.8} parent=50 // pred_check
          %p258 = pneg %p114
        $region61: #{qdiscriminator_p_forward.8} parent=50 // pred_check_branch
          %260 = sbr.rel (%p258) target = $region63
        $region62: #{qdiscriminator_p_forward.8} parent=50 // pred_region
          %261 = dma.done [#allocation7], 144
        $region63: #{qdiscriminator_p_forward.8} parent=50 // pred_fallthru
          _
        %s262 = sand.u32 %s47, 1
        %s263 = sand.u32 %s47, 1
        %s264 = smul.addr %s263, 32
        %s265 = scalar_lea.vmem [#allocation3], %s264
        %p266 = pneg %p60
        %p267 = pneg %p57
        %s268 = sand.u32 %s75, 1
        %s269 = scalar_lea.sflag [#allocation5], %s268
        %s270 = sand.u32 %s75, 1
        %s271 = smul.addr %s270, 2304
        %s272 = scalar_lea.vmem [#allocation4], %s271
        %p273 = pneg %p88
        %p274 = pneg %p85
        %p275 = pneg %p114
        %p276 = pneg %p111
        %p277 = pneg %p142
        %p278 = pneg %p139
        %s279 = smul.u32 2, %s23
        %s280 = smul.u32 9, %s24
        %p281 = scmp.lt.s32.totalorder %s279, 1
        %s282 = scalar_select %p281, %s279, 1
        %p283 = scmp.lt.s32.totalorder %s280, 8
        %s284 = scalar_select %p283, %s280, 8
        %s285 = smul.addr %s282, 9
        %s286 = sadd.s32 %s284, %s285
        %s287 = smul.addr %s286, 8
        %s288 = scalar_lea.vmem %s3, %s287
        %s289 = smul.u32 2, %s23
        %s290 = smul.u32 4, %s25
        %s291 = smul.u32 64, %s25
        %s292 = smul.u32 9, %s24
        %s293 = smul.u32 9, %s24
        %s294 = smul.u32 2, %s23
        %s295 = smul.u32 9, %s24
        %p296 = scmp.lt.s32.totalorder %s294, 1
        %s297 = scalar_select %p296, %s294, 1
        %p298 = scmp.lt.s32.totalorder %s295, 8
        %s299 = scalar_select %p298, %s295, 8
        %s300 = smul.addr %s297, 9
        %s301 = sadd.s32 %s299, %s300
        %s302 = smul.addr %s301, 8
        %s303 = scalar_lea.vmem %s3, %s302
        %s304 = smul.u32 2, %s23
        %s305 = smul.u32 9, %s24
        %p307 = scmp.eq.s32.totalorder %s25, 0
        // Predicated region
        $region64: #{qdiscriminator_p_forward.8} parent=50 // pred_check
          %p308 = pneg %p307
        $region65: #{qdiscriminator_p_forward.8} parent=50 // pred_check_branch
          %310 = sbr.rel (%p308) target = $region67
        $region66: #{qdiscriminator_p_forward.8} parent=50 // pred_region
          %311 = vst [vmem:[#allocation2] sm:$0xff] 0.0
          %312 = vst [vmem:[#allocation2 + $0x8] sm:$0xff] 0.0
          %313 = vst [vmem:[#allocation2 + $0x10] sm:$0xff] 0.0
          %314 = vst [vmem:[#allocation2 + $0x18] sm:$0xff] 0.0
          %315 = vst [vmem:[#allocation2 + $0x20] sm:$0xff] 0.0
          %316 = vst [vmem:[#allocation2 + $0x28] sm:$0xff] 0.0
          %317 = vst [vmem:[#allocation2 + $0x30] sm:$0xff] 0.0
          %318 = vst [vmem:[#allocation2 + $0x38] sm:$0xff] 0.0
          %319 = vst [vmem:[#allocation2 + $0x40] sm:$0xff] 0.0
          %320 = vst [vmem:[#allocation2 + $0x48] sm:$0xff] 0.0
          %321 = vst [vmem:[#allocation2 + $0x50] sm:$0xff] 0.0
          %322 = vst [vmem:[#allocation2 + $0x58] sm:$0xff] 0.0
          %323 = vst [vmem:[#allocation2 + $0x60] sm:$0xff] 0.0
          %324 = vst [vmem:[#allocation2 + $0x68] sm:$0xff] 0.0
          %325 = vst [vmem:[#allocation2 + $0x70] sm:$0xff] 0.0
          %326 = vst [vmem:[#allocation2 + $0x78] sm:$0xff] 0.0
          %327 = vst [vmem:[#allocation2 + $0x80] sm:$0xff] 0.0
          %328 = vst [vmem:[#allocation2 + $0x88] sm:$0xff] 0.0
        $region67: #{qdiscriminator_p_forward.8} parent=50 // pred_fallthru
          _
        %v329 = vld [vmem:[#allocation2] sm:$0xff]
        %v330 = vld [vmem:[#allocation2 + $0x8] sm:$0xff]
        %v331 = vld [vmem:[#allocation2 + $0x10] sm:$0xff]
        %v332 = vld [vmem:[#allocation2 + $0x18] sm:$0xff]
        %v333 = vld [vmem:[#allocation2 + $0x20] sm:$0xff]
        %v334 = vld [vmem:[#allocation2 + $0x28] sm:$0xff]
        %v335 = vld [vmem:[#allocation2 + $0x30] sm:$0xff]
        %v336 = vld [vmem:[#allocation2 + $0x38] sm:$0xff]
        %v337 = vld [vmem:[#allocation2 + $0x40] sm:$0xff]
        %v338 = vld [vmem:[#allocation2 + $0x48] sm:$0xff]
        %v339 = vld [vmem:[#allocation2 + $0x50] sm:$0xff]
        %v340 = vld [vmem:[#allocation2 + $0x58] sm:$0xff]
        %v341 = vld [vmem:[#allocation2 + $0x60] sm:$0xff]
        %v342 = vld [vmem:[#allocation2 + $0x68] sm:$0xff]
        %v343 = vld [vmem:[#allocation2 + $0x70] sm:$0xff]
        %v344 = vld [vmem:[#allocation2 + $0x78] sm:$0xff]
        %v345 = vld [vmem:[#allocation2 + $0x80] sm:$0xff]
        %v346 = vld [vmem:[#allocation2 + $0x88] sm:$0xff]
        %v347 = vld [vmem:[%s245] sm:$0xff]
        %v348 = vld [vmem:[%s245 + $0x8] sm:$0xff]
        %v349 = vld [vmem:[%s245 + $0x10] sm:$0xff]
        %v350 = vld [vmem:[%s245 + $0x18] sm:$0xff]
        %v351 = vld [vmem:[%s253] sm:$0xff]
        %v352 = vld [vmem:[%s253 + $0x8] sm:$0xff]
        %v353 = vld [vmem:[%s253 + $0x10] sm:$0xff]
        %v354 = vld [vmem:[%s253 + $0x18] sm:$0xff]
        %v355 = vld [vmem:[%s253 + $0x20] sm:$0xf]
        %v356 = vld [vmem:[%s253 + $0x24] sm:$0xff]
        %v357 = vld [vmem:[%s253 + $0x2c] sm:$0xff]
        %v358 = vld [vmem:[%s253 + $0x34] sm:$0xff]
        %v359 = vld [vmem:[%s253 + $0x3c] sm:$0xff]
        %v360 = vld [vmem:[%s253 + $0x44] sm:$0xf]
        %v361 = vld [vmem:[%s253 + $0x48] sm:$0xff]
        %v362 = vld [vmem:[%s253 + $0x50] sm:$0xff]
        %v363 = vld [vmem:[%s253 + $0x58] sm:$0xff]
        %v364 = vld [vmem:[%s253 + $0x60] sm:$0xff]
        %v365 = vld [vmem:[%s253 + $0x68] sm:$0xf]
        %v366 = vld [vmem:[%s253 + $0x6c] sm:$0xff]
        %v367 = vld [vmem:[%s253 + $0x74] sm:$0xff]
        %v368 = vld [vmem:[%s253 + $0x7c] sm:$0xff]
        %v369 = vld [vmem:[%s253 + $0x84] sm:$0xff]
        %v370 = vld [vmem:[%s253 + $0x8c] sm:$0xf]
        %v371 = vld [vmem:[%s253 + $0x90] sm:$0xff]
        %v372 = vld [vmem:[%s253 + $0x98] sm:$0xff]
        %v373 = vld [vmem:[%s253 + $0xa0] sm:$0xff]
        %v374 = vld [vmem:[%s253 + $0xa8] sm:$0xff]
        %v375 = vld [vmem:[%s253 + $0xb0] sm:$0xf]
        %v376 = vld [vmem:[%s253 + $0xb4] sm:$0xff]
        %v377 = vld [vmem:[%s253 + $0xbc] sm:$0xff]
        %v378 = vld [vmem:[%s253 + $0xc4] sm:$0xff]
        %v379 = vld [vmem:[%s253 + $0xcc] sm:$0xff]
        %v380 = vld [vmem:[%s253 + $0xd4] sm:$0xf]
        %v381 = vld [vmem:[%s253 + $0xd8] sm:$0xff]
        %v382 = vld [vmem:[%s253 + $0xe0] sm:$0xff]
        %v383 = vld [vmem:[%s253 + $0xe8] sm:$0xff]
        %v384 = vld [vmem:[%s253 + $0xf0] sm:$0xff]
        %v385 = vld [vmem:[%s253 + $0xf8] sm:$0xf]
        %v386 = vld [vmem:[%s253 + $0xfc] sm:$0xff]
        %v387 = vld [vmem:[%s253 + $0x104] sm:$0xff]
        %v388 = vld [vmem:[%s253 + $0x10c] sm:$0xff]
        %v389 = vld [vmem:[%s253 + $0x114] sm:$0xff]
        %v390 = vld [vmem:[%s253 + $0x11c] sm:$0xf]
        %v391 = vld [vmem:[%s253 + $0x120] sm:$0xff]
        %v392 = vld [vmem:[%s253 + $0x128] sm:$0xff]
        %v393 = vld [vmem:[%s253 + $0x130] sm:$0xff]
        %v394 = vld [vmem:[%s253 + $0x138] sm:$0xff]
        %v395 = vld [vmem:[%s253 + $0x140] sm:$0xf]
        %v396 = vld [vmem:[%s253 + $0x144] sm:$0xff]
        %v397 = vld [vmem:[%s253 + $0x14c] sm:$0xff]
        %v398 = vld [vmem:[%s253 + $0x154] sm:$0xff]
        %v399 = vld [vmem:[%s253 + $0x15c] sm:$0xff]
        %v400 = vld [vmem:[%s253 + $0x164] sm:$0xf]
        %v401 = vld [vmem:[%s253 + $0x168] sm:$0xff]
        %v402 = vld [vmem:[%s253 + $0x170] sm:$0xff]
        %v403 = vld [vmem:[%s253 + $0x178] sm:$0xff]
        %v404 = vld [vmem:[%s253 + $0x180] sm:$0xff]
        %v405 = vld [vmem:[%s253 + $0x188] sm:$0xf]
        %v406 = vld [vmem:[%s253 + $0x18c] sm:$0xff]
        %v407 = vld [vmem:[%s253 + $0x194] sm:$0xff]
        %v408 = vld [vmem:[%s253 + $0x19c] sm:$0xff]
        %v409 = vld [vmem:[%s253 + $0x1a4] sm:$0xff]
        %v410 = vld [vmem:[%s253 + $0x1ac] sm:$0xf]
        %v411 = vld [vmem:[%s253 + $0x1b0] sm:$0xff]
        %v412 = vld [vmem:[%s253 + $0x1b8] sm:$0xff]
        %v413 = vld [vmem:[%s253 + $0x1c0] sm:$0xff]
        %v414 = vld [vmem:[%s253 + $0x1c8] sm:$0xff]
        %v415 = vld [vmem:[%s253 + $0x1d0] sm:$0xf]
        %v416 = vld [vmem:[%s253 + $0x1d4] sm:$0xff]
        %v417 = vld [vmem:[%s253 + $0x1dc] sm:$0xff]
        %v418 = vld [vmem:[%s253 + $0x1e4] sm:$0xff]
        %v419 = vld [vmem:[%s253 + $0x1ec] sm:$0xff]
        %v420 = vld [vmem:[%s253 + $0x1f4] sm:$0xf]
        %v421 = vld [vmem:[%s253 + $0x1f8] sm:$0xff]
        %v422 = vld [vmem:[%s253 + $0x200] sm:$0xff]
        %v423 = vld [vmem:[%s253 + $0x208] sm:$0xff]
        %v424 = vld [vmem:[%s253 + $0x210] sm:$0xff]
        %v425 = vld [vmem:[%s253 + $0x218] sm:$0xf]
        %v426 = vld [vmem:[%s253 + $0x21c] sm:$0xff]
        %v427 = vld [vmem:[%s253 + $0x224] sm:$0xff]
        %v428 = vld [vmem:[%s253 + $0x22c] sm:$0xff]
        %v429 = vld [vmem:[%s253 + $0x234] sm:$0xff]
        %v430 = vld [vmem:[%s253 + $0x23c] sm:$0xf]
        %v431 = vld [vmem:[%s253 + $0x240] sm:$0xff]
        %v432 = vld [vmem:[%s253 + $0x248] sm:$0xff]
        %v433 = vld [vmem:[%s253 + $0x250] sm:$0xff]
        %v434 = vld [vmem:[%s253 + $0x258] sm:$0xff]
        %v435 = vld [vmem:[%s253 + $0x260] sm:$0xf]
        %v436 = vld [vmem:[%s253 + $0x264] sm:$0xff]
        %v437 = vld [vmem:[%s253 + $0x26c] sm:$0xff]
        %v438 = vld [vmem:[%s253 + $0x274] sm:$0xff]
        %v439 = vld [vmem:[%s253 + $0x27c] sm:$0xff]
        %v440 = vld [vmem:[%s253 + $0x284] sm:$0xf]
        %v441 = vld [vmem:[%s253 + $0x288] sm:$0xff]
        %v442 = vld [vmem:[%s253 + $0x290] sm:$0xff]
        %v443 = vld [vmem:[%s253 + $0x298] sm:$0xff]
        %v444 = vld [vmem:[%s253 + $0x2a0] sm:$0xff]
        %v445 = vld [vmem:[%s253 + $0x2a8] sm:$0xf]
        %v446 = vld [vmem:[%s253 + $0x2ac] sm:$0xff]
        %v447 = vld [vmem:[%s253 + $0x2b4] sm:$0xff]
        %v448 = vld [vmem:[%s253 + $0x2bc] sm:$0xff]
        %v449 = vld [vmem:[%s253 + $0x2c4] sm:$0xff]
        %v450 = vld [vmem:[%s253 + $0x2cc] sm:$0xf]
        %v451 = vld [vmem:[%s253 + $0x2d0] sm:$0xff]
        %v452 = vld [vmem:[%s253 + $0x2d8] sm:$0xff]
        %v453 = vld [vmem:[%s253 + $0x2e0] sm:$0xff]
        %v454 = vld [vmem:[%s253 + $0x2e8] sm:$0xff]
        %v455 = vld [vmem:[%s253 + $0x2f0] sm:$0xf]
        %v456 = vld [vmem:[%s253 + $0x2f4] sm:$0xff]
        %v457 = vld [vmem:[%s253 + $0x2fc] sm:$0xff]
        %v458 = vld [vmem:[%s253 + $0x304] sm:$0xff]
        %v459 = vld [vmem:[%s253 + $0x30c] sm:$0xff]
        %v460 = vld [vmem:[%s253 + $0x314] sm:$0xf]
        %v461 = vld [vmem:[%s253 + $0x318] sm:$0xff]
        %v462 = vld [vmem:[%s253 + $0x320] sm:$0xff]
        %v463 = vld [vmem:[%s253 + $0x328] sm:$0xff]
        %v464 = vld [vmem:[%s253 + $0x330] sm:$0xff]
        %v465 = vld [vmem:[%s253 + $0x338] sm:$0xf]
        %v466 = vld [vmem:[%s253 + $0x33c] sm:$0xff]
        %v467 = vld [vmem:[%s253 + $0x344] sm:$0xff]
        %v468 = vld [vmem:[%s253 + $0x34c] sm:$0xff]
        %v469 = vld [vmem:[%s253 + $0x354] sm:$0xff]
        %v470 = vld [vmem:[%s253 + $0x35c] sm:$0xf]
        %v471 = vld [vmem:[%s253 + $0x360] sm:$0xff]
        %v472 = vld [vmem:[%s253 + $0x368] sm:$0xff]
        %v473 = vld [vmem:[%s253 + $0x370] sm:$0xff]
        %v474 = vld [vmem:[%s253 + $0x378] sm:$0xff]
        %v475 = vld [vmem:[%s253 + $0x380] sm:$0xf]
        %v476 = vld [vmem:[%s253 + $0x384] sm:$0xff]
        %v477 = vld [vmem:[%s253 + $0x38c] sm:$0xff]
        %v478 = vld [vmem:[%s253 + $0x394] sm:$0xff]
        %v479 = vld [vmem:[%s253 + $0x39c] sm:$0xff]
        %v480 = vld [vmem:[%s253 + $0x3a4] sm:$0xf]
        %v481 = vld [vmem:[%s253 + $0x3a8] sm:$0xff]
        %v482 = vld [vmem:[%s253 + $0x3b0] sm:$0xff]
        %v483 = vld [vmem:[%s253 + $0x3b8] sm:$0xff]
        %v484 = vld [vmem:[%s253 + $0x3c0] sm:$0xff]
        %v485 = vld [vmem:[%s253 + $0x3c8] sm:$0xf]
        %v486 = vld [vmem:[%s253 + $0x3cc] sm:$0xff]
        %v487 = vld [vmem:[%s253 + $0x3d4] sm:$0xff]
        %v488 = vld [vmem:[%s253 + $0x3dc] sm:$0xff]
        %v489 = vld [vmem:[%s253 + $0x3e4] sm:$0xff]
        %v490 = vld [vmem:[%s253 + $0x3ec] sm:$0xf]
        %v491 = vld [vmem:[%s253 + $0x3f0] sm:$0xff]
        %v492 = vld [vmem:[%s253 + $0x3f8] sm:$0xff]
        %v493 = vld [vmem:[%s253 + $0x400] sm:$0xff]
        %v494 = vld [vmem:[%s253 + $0x408] sm:$0xff]
        %v495 = vld [vmem:[%s253 + $0x410] sm:$0xf]
        %v496 = vld [vmem:[%s253 + $0x414] sm:$0xff]
        %v497 = vld [vmem:[%s253 + $0x41c] sm:$0xff]
        %v498 = vld [vmem:[%s253 + $0x424] sm:$0xff]
        %v499 = vld [vmem:[%s253 + $0x42c] sm:$0xff]
        %v500 = vld [vmem:[%s253 + $0x434] sm:$0xf]
        %v501 = vld [vmem:[%s253 + $0x438] sm:$0xff]
        %v502 = vld [vmem:[%s253 + $0x440] sm:$0xff]
        %v503 = vld [vmem:[%s253 + $0x448] sm:$0xff]
        %v504 = vld [vmem:[%s253 + $0x450] sm:$0xff]
        %v505 = vld [vmem:[%s253 + $0x458] sm:$0xf]
        %v506 = vld [vmem:[%s253 + $0x45c] sm:$0xff]
        %v507 = vld [vmem:[%s253 + $0x464] sm:$0xff]
        %v508 = vld [vmem:[%s253 + $0x46c] sm:$0xff]
        %v509 = vld [vmem:[%s253 + $0x474] sm:$0xff]
        %v510 = vld [vmem:[%s253 + $0x47c] sm:$0xf]
        %v511 = vld [vmem:[%s253 + $0x480] sm:$0xff]
        %v512 = vld [vmem:[%s253 + $0x488] sm:$0xff]
        %v513 = vld [vmem:[%s253 + $0x490] sm:$0xff]
        %v514 = vld [vmem:[%s253 + $0x498] sm:$0xff]
        %v515 = vld [vmem:[%s253 + $0x4a0] sm:$0xf]
        %v516 = vld [vmem:[%s253 + $0x4a4] sm:$0xff]
        %v517 = vld [vmem:[%s253 + $0x4ac] sm:$0xff]
        %v518 = vld [vmem:[%s253 + $0x4b4] sm:$0xff]
        %v519 = vld [vmem:[%s253 + $0x4bc] sm:$0xff]
        %v520 = vld [vmem:[%s253 + $0x4c4] sm:$0xf]
        %v521 = vld [vmem:[%s253 + $0x4c8] sm:$0xff]
        %v522 = vld [vmem:[%s253 + $0x4d0] sm:$0xff]
        %v523 = vld [vmem:[%s253 + $0x4d8] sm:$0xff]
        %v524 = vld [vmem:[%s253 + $0x4e0] sm:$0xff]
        %v525 = vld [vmem:[%s253 + $0x4e8] sm:$0xf]
        %v526 = vld [vmem:[%s253 + $0x4ec] sm:$0xff]
        %v527 = vld [vmem:[%s253 + $0x4f4] sm:$0xff]
        %v528 = vld [vmem:[%s253 + $0x4fc] sm:$0xff]
        %v529 = vld [vmem:[%s253 + $0x504] sm:$0xff]
        %v530 = vld [vmem:[%s253 + $0x50c] sm:$0xf]
        %v531 = vld [vmem:[%s253 + $0x510] sm:$0xff]
        %v532 = vld [vmem:[%s253 + $0x518] sm:$0xff]
        %v533 = vld [vmem:[%s253 + $0x520] sm:$0xff]
        %v534 = vld [vmem:[%s253 + $0x528] sm:$0xff]
        %v535 = vld [vmem:[%s253 + $0x530] sm:$0xf]
        %v536 = vld [vmem:[%s253 + $0x534] sm:$0xff]
        %v537 = vld [vmem:[%s253 + $0x53c] sm:$0xff]
        %v538 = vld [vmem:[%s253 + $0x544] sm:$0xff]
        %v539 = vld [vmem:[%s253 + $0x54c] sm:$0xff]
        %v540 = vld [vmem:[%s253 + $0x554] sm:$0xf]
        %v541 = vld [vmem:[%s253 + $0x558] sm:$0xff]
        %v542 = vld [vmem:[%s253 + $0x560] sm:$0xff]
        %v543 = vld [vmem:[%s253 + $0x568] sm:$0xff]
        %v544 = vld [vmem:[%s253 + $0x570] sm:$0xff]
        %v545 = vld [vmem:[%s253 + $0x578] sm:$0xf]
        %v546 = vld [vmem:[%s253 + $0x57c] sm:$0xff]
        %v547 = vld [vmem:[%s253 + $0x584] sm:$0xff]
        %v548 = vld [vmem:[%s253 + $0x58c] sm:$0xff]
        %v549 = vld [vmem:[%s253 + $0x594] sm:$0xff]
        %v550 = vld [vmem:[%s253 + $0x59c] sm:$0xf]
        %v551 = vld [vmem:[%s253 + $0x5a0] sm:$0xff]
        %v552 = vld [vmem:[%s253 + $0x5a8] sm:$0xff]
        %v553 = vld [vmem:[%s253 + $0x5b0] sm:$0xff]
        %v554 = vld [vmem:[%s253 + $0x5b8] sm:$0xff]
        %v555 = vld [vmem:[%s253 + $0x5c0] sm:$0xf]
        %v556 = vld [vmem:[%s253 + $0x5c4] sm:$0xff]
        %v557 = vld [vmem:[%s253 + $0x5cc] sm:$0xff]
        %v558 = vld [vmem:[%s253 + $0x5d4] sm:$0xff]
        %v559 = vld [vmem:[%s253 + $0x5dc] sm:$0xff]
        %v560 = vld [vmem:[%s253 + $0x5e4] sm:$0xf]
        %v561 = vld [vmem:[%s253 + $0x5e8] sm:$0xff]
        %v562 = vld [vmem:[%s253 + $0x5f0] sm:$0xff]
        %v563 = vld [vmem:[%s253 + $0x5f8] sm:$0xff]
        %v564 = vld [vmem:[%s253 + $0x600] sm:$0xff]
        %v565 = vld [vmem:[%s253 + $0x608] sm:$0xf]
        %v566 = vld [vmem:[%s253 + $0x60c] sm:$0xff]
        %v567 = vld [vmem:[%s253 + $0x614] sm:$0xff]
        %v568 = vld [vmem:[%s253 + $0x61c] sm:$0xff]
        %v569 = vld [vmem:[%s253 + $0x624] sm:$0xff]
        %v570 = vld [vmem:[%s253 + $0x62c] sm:$0xf]
        %v571 = vld [vmem:[%s253 + $0x630] sm:$0xff]
        %v572 = vld [vmem:[%s253 + $0x638] sm:$0xff]
        %v573 = vld [vmem:[%s253 + $0x640] sm:$0xff]
        %v574 = vld [vmem:[%s253 + $0x648] sm:$0xff]
        %v575 = vld [vmem:[%s253 + $0x650] sm:$0xf]
        %v576 = vld [vmem:[%s253 + $0x654] sm:$0xff]
        %v577 = vld [vmem:[%s253 + $0x65c] sm:$0xff]
        %v578 = vld [vmem:[%s253 + $0x664] sm:$0xff]
        %v579 = vld [vmem:[%s253 + $0x66c] sm:$0xff]
        %v580 = vld [vmem:[%s253 + $0x674] sm:$0xf]
        %v581 = vld [vmem:[%s253 + $0x678] sm:$0xff]
        %v582 = vld [vmem:[%s253 + $0x680] sm:$0xff]
        %v583 = vld [vmem:[%s253 + $0x688] sm:$0xff]
        %v584 = vld [vmem:[%s253 + $0x690] sm:$0xff]
        %v585 = vld [vmem:[%s253 + $0x698] sm:$0xf]
        %v586 = vld [vmem:[%s253 + $0x69c] sm:$0xff]
        %v587 = vld [vmem:[%s253 + $0x6a4] sm:$0xff]
        %v588 = vld [vmem:[%s253 + $0x6ac] sm:$0xff]
        %v589 = vld [vmem:[%s253 + $0x6b4] sm:$0xff]
        %v590 = vld [vmem:[%s253 + $0x6bc] sm:$0xf]
        %v591 = vld [vmem:[%s253 + $0x6c0] sm:$0xff]
        %v592 = vld [vmem:[%s253 + $0x6c8] sm:$0xff]
        %v593 = vld [vmem:[%s253 + $0x6d0] sm:$0xff]
        %v594 = vld [vmem:[%s253 + $0x6d8] sm:$0xff]
        %v595 = vld [vmem:[%s253 + $0x6e0] sm:$0xf]
        %v596 = vld [vmem:[%s253 + $0x6e4] sm:$0xff]
        %v597 = vld [vmem:[%s253 + $0x6ec] sm:$0xff]
        %v598 = vld [vmem:[%s253 + $0x6f4] sm:$0xff]
        %v599 = vld [vmem:[%s253 + $0x6fc] sm:$0xff]
        %v600 = vld [vmem:[%s253 + $0x704] sm:$0xf]
        %v601 = vld [vmem:[%s253 + $0x708] sm:$0xff]
        %v602 = vld [vmem:[%s253 + $0x710] sm:$0xff]
        %v603 = vld [vmem:[%s253 + $0x718] sm:$0xff]
        %v604 = vld [vmem:[%s253 + $0x720] sm:$0xff]
        %v605 = vld [vmem:[%s253 + $0x728] sm:$0xf]
        %v606 = vld [vmem:[%s253 + $0x72c] sm:$0xff]
        %v607 = vld [vmem:[%s253 + $0x734] sm:$0xff]
        %v608 = vld [vmem:[%s253 + $0x73c] sm:$0xff]
        %v609 = vld [vmem:[%s253 + $0x744] sm:$0xff]
        %v610 = vld [vmem:[%s253 + $0x74c] sm:$0xf]
        %v611 = vld [vmem:[%s253 + $0x750] sm:$0xff]
        %v612 = vld [vmem:[%s253 + $0x758] sm:$0xff]
        %v613 = vld [vmem:[%s253 + $0x760] sm:$0xff]
        %v614 = vld [vmem:[%s253 + $0x768] sm:$0xff]
        %v615 = vld [vmem:[%s253 + $0x770] sm:$0xf]
        %v616 = vld [vmem:[%s253 + $0x774] sm:$0xff]
        %v617 = vld [vmem:[%s253 + $0x77c] sm:$0xff]
        %v618 = vld [vmem:[%s253 + $0x784] sm:$0xff]
        %v619 = vld [vmem:[%s253 + $0x78c] sm:$0xff]
        %v620 = vld [vmem:[%s253 + $0x794] sm:$0xf]
        %v621 = vld [vmem:[%s253 + $0x798] sm:$0xff]
        %v622 = vld [vmem:[%s253 + $0x7a0] sm:$0xff]
        %v623 = vld [vmem:[%s253 + $0x7a8] sm:$0xff]
        %v624 = vld [vmem:[%s253 + $0x7b0] sm:$0xff]
        %v625 = vld [vmem:[%s253 + $0x7b8] sm:$0xf]
        %v626 = vld [vmem:[%s253 + $0x7bc] sm:$0xff]
        %v627 = vld [vmem:[%s253 + $0x7c4] sm:$0xff]
        %v628 = vld [vmem:[%s253 + $0x7cc] sm:$0xff]
        %v629 = vld [vmem:[%s253 + $0x7d4] sm:$0xff]
        %v630 = vld [vmem:[%s253 + $0x7dc] sm:$0xf]
        %v631 = vld [vmem:[%s253 + $0x7e0] sm:$0xff]
        %v632 = vld [vmem:[%s253 + $0x7e8] sm:$0xff]
        %v633 = vld [vmem:[%s253 + $0x7f0] sm:$0xff]
        %v634 = vld [vmem:[%s253 + $0x7f8] sm:$0xff]
        %v635 = vld [vmem:[%s253 + $0x800] sm:$0xf]
        %v636 = vld [vmem:[%s253 + $0x804] sm:$0xff]
        %v637 = vld [vmem:[%s253 + $0x80c] sm:$0xff]
        %v638 = vld [vmem:[%s253 + $0x814] sm:$0xff]
        %v639 = vld [vmem:[%s253 + $0x81c] sm:$0xff]
        %v640 = vld [vmem:[%s253 + $0x824] sm:$0xf]
        %v641 = vld [vmem:[%s253 + $0x828] sm:$0xff]
        %v642 = vld [vmem:[%s253 + $0x830] sm:$0xff]
        %v643 = vld [vmem:[%s253 + $0x838] sm:$0xff]
        %v644 = vld [vmem:[%s253 + $0x840] sm:$0xff]
        %v645 = vld [vmem:[%s253 + $0x848] sm:$0xf]
        %v646 = vld [vmem:[%s253 + $0x84c] sm:$0xff]
        %v647 = vld [vmem:[%s253 + $0x854] sm:$0xff]
        %v648 = vld [vmem:[%s253 + $0x85c] sm:$0xff]
        %v649 = vld [vmem:[%s253 + $0x864] sm:$0xff]
        %v650 = vld [vmem:[%s253 + $0x86c] sm:$0xf]
        %v651 = vld [vmem:[%s253 + $0x870] sm:$0xff]
        %v652 = vld [vmem:[%s253 + $0x878] sm:$0xff]
        %v653 = vld [vmem:[%s253 + $0x880] sm:$0xff]
        %v654 = vld [vmem:[%s253 + $0x888] sm:$0xff]
        %v655 = vld [vmem:[%s253 + $0x890] sm:$0xf]
        %v656 = vld [vmem:[%s253 + $0x894] sm:$0xff]
        %v657 = vld [vmem:[%s253 + $0x89c] sm:$0xff]
        %v658 = vld [vmem:[%s253 + $0x8a4] sm:$0xff]
        %v659 = vld [vmem:[%s253 + $0x8ac] sm:$0xff]
        %v660 = vld [vmem:[%s253 + $0x8b4] sm:$0xf]
        %v661 = vld [vmem:[%s253 + $0x8b8] sm:$0xff]
        %v662 = vld [vmem:[%s253 + $0x8c0] sm:$0xff]
        %v663 = vld [vmem:[%s253 + $0x8c8] sm:$0xff]
        %v664 = vld [vmem:[%s253 + $0x8d0] sm:$0xff]
        %v665 = vld [vmem:[%s253 + $0x8d8] sm:$0xf]
        %v666 = vld [vmem:[%s253 + $0x8dc] sm:$0xff]
        %v667 = vld [vmem:[%s253 + $0x8e4] sm:$0xff]
        %v668 = vld [vmem:[%s253 + $0x8ec] sm:$0xff]
        %v669 = vld [vmem:[%s253 + $0x8f4] sm:$0xff]
        %v670 = vld [vmem:[%s253 + $0x8fc] sm:$0xf]
        %v675 = vunpack.c.l.b16 %v347
        %v676 = vunpack.c.h.b16 %v347
        %v677 = vunpack.c.l.b16 %v348
        %v678 = vunpack.c.h.b16 %v348
        %v679 = vunpack.c.l.b16 %v349
        %v680 = vunpack.c.h.b16 %v349
        %v681 = vunpack.c.l.b16 %v350
        %v682 = vunpack.c.h.b16 %v350
        %v683 = vpack.c.b16 %v679, %v675
        %v684 = vpack.c.b16 %v680, %v676
        %v685 = vpack.c.b16 %v681, %v677
        %v686 = vpack.c.b16 %v682, %v678
        %v1011 = vunpack.c.l.b16 %v351
        %v1012 = vunpack.c.h.b16 %v351
        %v1013 = vunpack.c.l.b16 %v352
        %v1014 = vunpack.c.h.b16 %v352
        %v1015 = vunpack.c.l.b16 %v353
        %v1016 = vunpack.c.h.b16 %v353
        %v1017 = vunpack.c.l.b16 %v354
        %v1018 = vunpack.c.h.b16 %v354
        %v1019 = vunpack.c.l.b16 %v355
        %v1020 = vunpack.c.l.b16 %v356
        %v1021 = vunpack.c.h.b16 %v356
        %v1022 = vunpack.c.l.b16 %v357
        %v1023 = vunpack.c.h.b16 %v357
        %v1024 = vunpack.c.l.b16 %v358
        %v1025 = vunpack.c.h.b16 %v358
        %v1026 = vunpack.c.l.b16 %v359
        %v1027 = vunpack.c.h.b16 %v359
        %v1028 = vunpack.c.l.b16 %v360
        %v1029 = vunpack.c.l.b16 %v361
        %v1030 = vunpack.c.h.b16 %v361
        %v1031 = vunpack.c.l.b16 %v362
        %v1032 = vunpack.c.h.b16 %v362
        %v1033 = vunpack.c.l.b16 %v363
        %v1034 = vunpack.c.h.b16 %v363
        %v1035 = vunpack.c.l.b16 %v364
        %v1036 = vunpack.c.h.b16 %v364
        %v1037 = vunpack.c.l.b16 %v365
        %v1038 = vunpack.c.l.b16 %v366
        %v1039 = vunpack.c.h.b16 %v366
        %v1040 = vunpack.c.l.b16 %v367
        %v1041 = vunpack.c.h.b16 %v367
        %v1042 = vunpack.c.l.b16 %v368
        %v1043 = vunpack.c.h.b16 %v368
        %v1044 = vunpack.c.l.b16 %v369
        %v1045 = vunpack.c.h.b16 %v369
        %v1046 = vunpack.c.l.b16 %v370
        %v1047 = vunpack.c.l.b16 %v371
        %v1048 = vunpack.c.h.b16 %v371
        %v1049 = vunpack.c.l.b16 %v372
        %v1050 = vunpack.c.h.b16 %v372
        %v1051 = vunpack.c.l.b16 %v373
        %v1052 = vunpack.c.h.b16 %v373
        %v1053 = vunpack.c.l.b16 %v374
        %v1054 = vunpack.c.h.b16 %v374
        %v1055 = vunpack.c.l.b16 %v375
        %v1056 = vunpack.c.l.b16 %v376
        %v1057 = vunpack.c.h.b16 %v376
        %v1058 = vunpack.c.l.b16 %v377
        %v1059 = vunpack.c.h.b16 %v377
        %v1060 = vunpack.c.l.b16 %v378
        %v1061 = vunpack.c.h.b16 %v378
        %v1062 = vunpack.c.l.b16 %v379
        %v1063 = vunpack.c.h.b16 %v379
        %v1064 = vunpack.c.l.b16 %v380
        %v1065 = vunpack.c.l.b16 %v381
        %v1066 = vunpack.c.h.b16 %v381
        %v1067 = vunpack.c.l.b16 %v382
        %v1068 = vunpack.c.h.b16 %v382
        %v1069 = vunpack.c.l.b16 %v383
        %v1070 = vunpack.c.h.b16 %v383
        %v1071 = vunpack.c.l.b16 %v384
        %v1072 = vunpack.c.h.b16 %v384
        %v1073 = vunpack.c.l.b16 %v385
        %v1074 = vunpack.c.l.b16 %v386
        %v1075 = vunpack.c.h.b16 %v386
        %v1076 = vunpack.c.l.b16 %v387
        %v1077 = vunpack.c.h.b16 %v387
        %v1078 = vunpack.c.l.b16 %v388
        %v1079 = vunpack.c.h.b16 %v388
        %v1080 = vunpack.c.l.b16 %v389
        %v1081 = vunpack.c.h.b16 %v389
        %v1082 = vunpack.c.l.b16 %v390
        %v1083 = vunpack.c.l.b16 %v391
        %v1084 = vunpack.c.h.b16 %v391
        %v1085 = vunpack.c.l.b16 %v392
        %v1086 = vunpack.c.h.b16 %v392
        %v1087 = vunpack.c.l.b16 %v393
        %v1088 = vunpack.c.h.b16 %v393
        %v1089 = vunpack.c.l.b16 %v394
        %v1090 = vunpack.c.h.b16 %v394
        %v1091 = vunpack.c.l.b16 %v395
        %v1092 = vunpack.c.l.b16 %v396
        %v1093 = vunpack.c.h.b16 %v396
        %v1094 = vunpack.c.l.b16 %v397
        %v1095 = vunpack.c.h.b16 %v397
        %v1096 = vunpack.c.l.b16 %v398
        %v1097 = vunpack.c.h.b16 %v398
        %v1098 = vunpack.c.l.b16 %v399
        %v1099 = vunpack.c.h.b16 %v399
        %v1100 = vunpack.c.l.b16 %v400
        %v1101 = vunpack.c.l.b16 %v401
        %v1102 = vunpack.c.h.b16 %v401
        %v1103 = vunpack.c.l.b16 %v402
        %v1104 = vunpack.c.h.b16 %v402
        %v1105 = vunpack.c.l.b16 %v403
        %v1106 = vunpack.c.h.b16 %v403
        %v1107 = vunpack.c.l.b16 %v404
        %v1108 = vunpack.c.h.b16 %v404
        %v1109 = vunpack.c.l.b16 %v405
        %v1110 = vunpack.c.l.b16 %v406
        %v1111 = vunpack.c.h.b16 %v406
        %v1112 = vunpack.c.l.b16 %v407
        %v1113 = vunpack.c.h.b16 %v407
        %v1114 = vunpack.c.l.b16 %v408
        %v1115 = vunpack.c.h.b16 %v408
        %v1116 = vunpack.c.l.b16 %v409
        %v1117 = vunpack.c.h.b16 %v409
        %v1118 = vunpack.c.l.b16 %v410
        %v1119 = vunpack.c.l.b16 %v411
        %v1120 = vunpack.c.h.b16 %v411
        %v1121 = vunpack.c.l.b16 %v412
        %v1122 = vunpack.c.h.b16 %v412
        %v1123 = vunpack.c.l.b16 %v413
        %v1124 = vunpack.c.h.b16 %v413
        %v1125 = vunpack.c.l.b16 %v414
        %v1126 = vunpack.c.h.b16 %v414
        %v1127 = vunpack.c.l.b16 %v415
        %v1128 = vunpack.c.l.b16 %v416
        %v1129 = vunpack.c.h.b16 %v416
        %v1130 = vunpack.c.l.b16 %v417
        %v1131 = vunpack.c.h.b16 %v417
        %v1132 = vunpack.c.l.b16 %v418
        %v1133 = vunpack.c.h.b16 %v418
        %v1134 = vunpack.c.l.b16 %v419
        %v1135 = vunpack.c.h.b16 %v419
        %v1136 = vunpack.c.l.b16 %v420
        %v1137 = vunpack.c.l.b16 %v421
        %v1138 = vunpack.c.h.b16 %v421
        %v1139 = vunpack.c.l.b16 %v422
        %v1140 = vunpack.c.h.b16 %v422
        %v1141 = vunpack.c.l.b16 %v423
        %v1142 = vunpack.c.h.b16 %v423
        %v1143 = vunpack.c.l.b16 %v424
        %v1144 = vunpack.c.h.b16 %v424
        %v1145 = vunpack.c.l.b16 %v425
        %v1146 = vunpack.c.l.b16 %v426
        %v1147 = vunpack.c.h.b16 %v426
        %v1148 = vunpack.c.l.b16 %v427
        %v1149 = vunpack.c.h.b16 %v427
        %v1150 = vunpack.c.l.b16 %v428
        %v1151 = vunpack.c.h.b16 %v428
        %v1152 = vunpack.c.l.b16 %v429
        %v1153 = vunpack.c.h.b16 %v429
        %v1154 = vunpack.c.l.b16 %v430
        %v1155 = vunpack.c.l.b16 %v431
        %v1156 = vunpack.c.h.b16 %v431
        %v1157 = vunpack.c.l.b16 %v432
        %v1158 = vunpack.c.h.b16 %v432
        %v1159 = vunpack.c.l.b16 %v433
        %v1160 = vunpack.c.h.b16 %v433
        %v1161 = vunpack.c.l.b16 %v434
        %v1162 = vunpack.c.h.b16 %v434
        %v1163 = vunpack.c.l.b16 %v435
        %v1164 = vunpack.c.l.b16 %v436
        %v1165 = vunpack.c.h.b16 %v436
        %v1166 = vunpack.c.l.b16 %v437
        %v1167 = vunpack.c.h.b16 %v437
        %v1168 = vunpack.c.l.b16 %v438
        %v1169 = vunpack.c.h.b16 %v438
        %v1170 = vunpack.c.l.b16 %v439
        %v1171 = vunpack.c.h.b16 %v439
        %v1172 = vunpack.c.l.b16 %v440
        %v1173 = vunpack.c.l.b16 %v441
        %v1174 = vunpack.c.h.b16 %v441
        %v1175 = vunpack.c.l.b16 %v442
        %v1176 = vunpack.c.h.b16 %v442
        %v1177 = vunpack.c.l.b16 %v443
        %v1178 = vunpack.c.h.b16 %v443
        %v1179 = vunpack.c.l.b16 %v444
        %v1180 = vunpack.c.h.b16 %v444
        %v1181 = vunpack.c.l.b16 %v445
        %v1182 = vunpack.c.l.b16 %v446
        %v1183 = vunpack.c.h.b16 %v446
        %v1184 = vunpack.c.l.b16 %v447
        %v1185 = vunpack.c.h.b16 %v447
        %v1186 = vunpack.c.l.b16 %v448
        %v1187 = vunpack.c.h.b16 %v448
        %v1188 = vunpack.c.l.b16 %v449
        %v1189 = vunpack.c.h.b16 %v449
        %v1190 = vunpack.c.l.b16 %v450
        %v1191 = vunpack.c.l.b16 %v451
        %v1192 = vunpack.c.h.b16 %v451
        %v1193 = vunpack.c.l.b16 %v452
        %v1194 = vunpack.c.h.b16 %v452
        %v1195 = vunpack.c.l.b16 %v453
        %v1196 = vunpack.c.h.b16 %v453
        %v1197 = vunpack.c.l.b16 %v454
        %v1198 = vunpack.c.h.b16 %v454
        %v1199 = vunpack.c.l.b16 %v455
        %v1200 = vunpack.c.l.b16 %v456
        %v1201 = vunpack.c.h.b16 %v456
        %v1202 = vunpack.c.l.b16 %v457
        %v1203 = vunpack.c.h.b16 %v457
        %v1204 = vunpack.c.l.b16 %v458
        %v1205 = vunpack.c.h.b16 %v458
        %v1206 = vunpack.c.l.b16 %v459
        %v1207 = vunpack.c.h.b16 %v459
        %v1208 = vunpack.c.l.b16 %v460
        %v1209 = vunpack.c.l.b16 %v461
        %v1210 = vunpack.c.h.b16 %v461
        %v1211 = vunpack.c.l.b16 %v462
        %v1212 = vunpack.c.h.b16 %v462
        %v1213 = vunpack.c.l.b16 %v463
        %v1214 = vunpack.c.h.b16 %v463
        %v1215 = vunpack.c.l.b16 %v464
        %v1216 = vunpack.c.h.b16 %v464
        %v1217 = vunpack.c.l.b16 %v465
        %v1218 = vunpack.c.l.b16 %v466
        %v1219 = vunpack.c.h.b16 %v466
        %v1220 = vunpack.c.l.b16 %v467
        %v1221 = vunpack.c.h.b16 %v467
        %v1222 = vunpack.c.l.b16 %v468
        %v1223 = vunpack.c.h.b16 %v468
        %v1224 = vunpack.c.l.b16 %v469
        %v1225 = vunpack.c.h.b16 %v469
        %v1226 = vunpack.c.l.b16 %v470
        %v1227 = vunpack.c.l.b16 %v471
        %v1228 = vunpack.c.h.b16 %v471
        %v1229 = vunpack.c.l.b16 %v472
        %v1230 = vunpack.c.h.b16 %v472
        %v1231 = vunpack.c.l.b16 %v473
        %v1232 = vunpack.c.h.b16 %v473
        %v1233 = vunpack.c.l.b16 %v474
        %v1234 = vunpack.c.h.b16 %v474
        %v1235 = vunpack.c.l.b16 %v475
        %v1236 = vunpack.c.l.b16 %v476
        %v1237 = vunpack.c.h.b16 %v476
        %v1238 = vunpack.c.l.b16 %v477
        %v1239 = vunpack.c.h.b16 %v477
        %v1240 = vunpack.c.l.b16 %v478
        %v1241 = vunpack.c.h.b16 %v478
        %v1242 = vunpack.c.l.b16 %v479
        %v1243 = vunpack.c.h.b16 %v479
        %v1244 = vunpack.c.l.b16 %v480
        %v1245 = vunpack.c.l.b16 %v481
        %v1246 = vunpack.c.h.b16 %v481
        %v1247 = vunpack.c.l.b16 %v482
        %v1248 = vunpack.c.h.b16 %v482
        %v1249 = vunpack.c.l.b16 %v483
        %v1250 = vunpack.c.h.b16 %v483
        %v1251 = vunpack.c.l.b16 %v484
        %v1252 = vunpack.c.h.b16 %v484
        %v1253 = vunpack.c.l.b16 %v485
        %v1254 = vunpack.c.l.b16 %v486
        %v1255 = vunpack.c.h.b16 %v486
        %v1256 = vunpack.c.l.b16 %v487
        %v1257 = vunpack.c.h.b16 %v487
        %v1258 = vunpack.c.l.b16 %v488
        %v1259 = vunpack.c.h.b16 %v488
        %v1260 = vunpack.c.l.b16 %v489
        %v1261 = vunpack.c.h.b16 %v489
        %v1262 = vunpack.c.l.b16 %v490
        %v1263 = vunpack.c.l.b16 %v491
        %v1264 = vunpack.c.h.b16 %v491
        %v1265 = vunpack.c.l.b16 %v492
        %v1266 = vunpack.c.h.b16 %v492
        %v1267 = vunpack.c.l.b16 %v493
        %v1268 = vunpack.c.h.b16 %v493
        %v1269 = vunpack.c.l.b16 %v494
        %v1270 = vunpack.c.h.b16 %v494
        %v1271 = vunpack.c.l.b16 %v495
        %v1272 = vunpack.c.l.b16 %v496
        %v1273 = vunpack.c.h.b16 %v496
        %v1274 = vunpack.c.l.b16 %v497
        %v1275 = vunpack.c.h.b16 %v497
        %v1276 = vunpack.c.l.b16 %v498
        %v1277 = vunpack.c.h.b16 %v498
        %v1278 = vunpack.c.l.b16 %v499
        %v1279 = vunpack.c.h.b16 %v499
        %v1280 = vunpack.c.l.b16 %v500
        %v1281 = vunpack.c.l.b16 %v501
        %v1282 = vunpack.c.h.b16 %v501
        %v1283 = vunpack.c.l.b16 %v502
        %v1284 = vunpack.c.h.b16 %v502
        %v1285 = vunpack.c.l.b16 %v503
        %v1286 = vunpack.c.h.b16 %v503
        %v1287 = vunpack.c.l.b16 %v504
        %v1288 = vunpack.c.h.b16 %v504
        %v1289 = vunpack.c.l.b16 %v505
        %v1290 = vunpack.c.l.b16 %v506
        %v1291 = vunpack.c.h.b16 %v506
        %v1292 = vunpack.c.l.b16 %v507
        %v1293 = vunpack.c.h.b16 %v507
        %v1294 = vunpack.c.l.b16 %v508
        %v1295 = vunpack.c.h.b16 %v508
        %v1296 = vunpack.c.l.b16 %v509
        %v1297 = vunpack.c.h.b16 %v509
        %v1298 = vunpack.c.l.b16 %v510
        %v1299 = vunpack.c.l.b16 %v511
        %v1300 = vunpack.c.h.b16 %v511
        %v1301 = vunpack.c.l.b16 %v512
        %v1302 = vunpack.c.h.b16 %v512
        %v1303 = vunpack.c.l.b16 %v513
        %v1304 = vunpack.c.h.b16 %v513
        %v1305 = vunpack.c.l.b16 %v514
        %v1306 = vunpack.c.h.b16 %v514
        %v1307 = vunpack.c.l.b16 %v515
        %v1308 = vunpack.c.l.b16 %v516
        %v1309 = vunpack.c.h.b16 %v516
        %v1310 = vunpack.c.l.b16 %v517
        %v1311 = vunpack.c.h.b16 %v517
        %v1312 = vunpack.c.l.b16 %v518
        %v1313 = vunpack.c.h.b16 %v518
        %v1314 = vunpack.c.l.b16 %v519
        %v1315 = vunpack.c.h.b16 %v519
        %v1316 = vunpack.c.l.b16 %v520
        %v1317 = vunpack.c.l.b16 %v521
        %v1318 = vunpack.c.h.b16 %v521
        %v1319 = vunpack.c.l.b16 %v522
        %v1320 = vunpack.c.h.b16 %v522
        %v1321 = vunpack.c.l.b16 %v523
        %v1322 = vunpack.c.h.b16 %v523
        %v1323 = vunpack.c.l.b16 %v524
        %v1324 = vunpack.c.h.b16 %v524
        %v1325 = vunpack.c.l.b16 %v525
        %v1326 = vunpack.c.l.b16 %v526
        %v1327 = vunpack.c.h.b16 %v526
        %v1328 = vunpack.c.l.b16 %v527
        %v1329 = vunpack.c.h.b16 %v527
        %v1330 = vunpack.c.l.b16 %v528
        %v1331 = vunpack.c.h.b16 %v528
        %v1332 = vunpack.c.l.b16 %v529
        %v1333 = vunpack.c.h.b16 %v529
        %v1334 = vunpack.c.l.b16 %v530
        %v1335 = vunpack.c.l.b16 %v531
        %v1336 = vunpack.c.h.b16 %v531
        %v1337 = vunpack.c.l.b16 %v532
        %v1338 = vunpack.c.h.b16 %v532
        %v1339 = vunpack.c.l.b16 %v533
        %v1340 = vunpack.c.h.b16 %v533
        %v1341 = vunpack.c.l.b16 %v534
        %v1342 = vunpack.c.h.b16 %v534
        %v1343 = vunpack.c.l.b16 %v535
        %v1344 = vunpack.c.l.b16 %v536
        %v1345 = vunpack.c.h.b16 %v536
        %v1346 = vunpack.c.l.b16 %v537
        %v1347 = vunpack.c.h.b16 %v537
        %v1348 = vunpack.c.l.b16 %v538
        %v1349 = vunpack.c.h.b16 %v538
        %v1350 = vunpack.c.l.b16 %v539
        %v1351 = vunpack.c.h.b16 %v539
        %v1352 = vunpack.c.l.b16 %v540
        %v1353 = vunpack.c.l.b16 %v541
        %v1354 = vunpack.c.h.b16 %v541
        %v1355 = vunpack.c.l.b16 %v542
        %v1356 = vunpack.c.h.b16 %v542
        %v1357 = vunpack.c.l.b16 %v543
        %v1358 = vunpack.c.h.b16 %v543
        %v1359 = vunpack.c.l.b16 %v544
        %v1360 = vunpack.c.h.b16 %v544
        %v1361 = vunpack.c.l.b16 %v545
        %v1362 = vunpack.c.l.b16 %v546
        %v1363 = vunpack.c.h.b16 %v546
        %v1364 = vunpack.c.l.b16 %v547
        %v1365 = vunpack.c.h.b16 %v547
        %v1366 = vunpack.c.l.b16 %v548
        %v1367 = vunpack.c.h.b16 %v548
        %v1368 = vunpack.c.l.b16 %v549
        %v1369 = vunpack.c.h.b16 %v549
        %v1370 = vunpack.c.l.b16 %v550
        %v1371 = vunpack.c.l.b16 %v551
        %v1372 = vunpack.c.h.b16 %v551
        %v1373 = vunpack.c.l.b16 %v552
        %v1374 = vunpack.c.h.b16 %v552
        %v1375 = vunpack.c.l.b16 %v553
        %v1376 = vunpack.c.h.b16 %v553
        %v1377 = vunpack.c.l.b16 %v554
        %v1378 = vunpack.c.h.b16 %v554
        %v1379 = vunpack.c.l.b16 %v555
        %v1380 = vunpack.c.l.b16 %v556
        %v1381 = vunpack.c.h.b16 %v556
        %v1382 = vunpack.c.l.b16 %v557
        %v1383 = vunpack.c.h.b16 %v557
        %v1384 = vunpack.c.l.b16 %v558
        %v1385 = vunpack.c.h.b16 %v558
        %v1386 = vunpack.c.l.b16 %v559
        %v1387 = vunpack.c.h.b16 %v559
        %v1388 = vunpack.c.l.b16 %v560
        %v1389 = vunpack.c.l.b16 %v561
        %v1390 = vunpack.c.h.b16 %v561
        %v1391 = vunpack.c.l.b16 %v562
        %v1392 = vunpack.c.h.b16 %v562
        %v1393 = vunpack.c.l.b16 %v563
        %v1394 = vunpack.c.h.b16 %v563
        %v1395 = vunpack.c.l.b16 %v564
        %v1396 = vunpack.c.h.b16 %v564
        %v1397 = vunpack.c.l.b16 %v565
        %v1398 = vunpack.c.l.b16 %v566
        %v1399 = vunpack.c.h.b16 %v566
        %v1400 = vunpack.c.l.b16 %v567
        %v1401 = vunpack.c.h.b16 %v567
        %v1402 = vunpack.c.l.b16 %v568
        %v1403 = vunpack.c.h.b16 %v568
        %v1404 = vunpack.c.l.b16 %v569
        %v1405 = vunpack.c.h.b16 %v569
        %v1406 = vunpack.c.l.b16 %v570
        %v1407 = vunpack.c.l.b16 %v571
        %v1408 = vunpack.c.h.b16 %v571
        %v1409 = vunpack.c.l.b16 %v572
        %v1410 = vunpack.c.h.b16 %v572
        %v1411 = vunpack.c.l.b16 %v573
        %v1412 = vunpack.c.h.b16 %v573
        %v1413 = vunpack.c.l.b16 %v574
        %v1414 = vunpack.c.h.b16 %v574
        %v1415 = vunpack.c.l.b16 %v575
        %v1416 = vunpack.c.l.b16 %v576
        %v1417 = vunpack.c.h.b16 %v576
        %v1418 = vunpack.c.l.b16 %v577
        %v1419 = vunpack.c.h.b16 %v577
        %v1420 = vunpack.c.l.b16 %v578
        %v1421 = vunpack.c.h.b16 %v578
        %v1422 = vunpack.c.l.b16 %v579
        %v1423 = vunpack.c.h.b16 %v579
        %v1424 = vunpack.c.l.b16 %v580
        %v1425 = vunpack.c.l.b16 %v581
        %v1426 = vunpack.c.h.b16 %v581
        %v1427 = vunpack.c.l.b16 %v582
        %v1428 = vunpack.c.h.b16 %v582
        %v1429 = vunpack.c.l.b16 %v583
        %v1430 = vunpack.c.h.b16 %v583
        %v1431 = vunpack.c.l.b16 %v584
        %v1432 = vunpack.c.h.b16 %v584
        %v1433 = vunpack.c.l.b16 %v585
        %v1434 = vunpack.c.l.b16 %v586
        %v1435 = vunpack.c.h.b16 %v586
        %v1436 = vunpack.c.l.b16 %v587
        %v1437 = vunpack.c.h.b16 %v587
        %v1438 = vunpack.c.l.b16 %v588
        %v1439 = vunpack.c.h.b16 %v588
        %v1440 = vunpack.c.l.b16 %v589
        %v1441 = vunpack.c.h.b16 %v589
        %v1442 = vunpack.c.l.b16 %v590
        %v1443 = vunpack.c.l.b16 %v591
        %v1444 = vunpack.c.h.b16 %v591
        %v1445 = vunpack.c.l.b16 %v592
        %v1446 = vunpack.c.h.b16 %v592
        %v1447 = vunpack.c.l.b16 %v593
        %v1448 = vunpack.c.h.b16 %v593
        %v1449 = vunpack.c.l.b16 %v594
        %v1450 = vunpack.c.h.b16 %v594
        %v1451 = vunpack.c.l.b16 %v595
        %v1452 = vunpack.c.l.b16 %v596
        %v1453 = vunpack.c.h.b16 %v596
        %v1454 = vunpack.c.l.b16 %v597
        %v1455 = vunpack.c.h.b16 %v597
        %v1456 = vunpack.c.l.b16 %v598
        %v1457 = vunpack.c.h.b16 %v598
        %v1458 = vunpack.c.l.b16 %v599
        %v1459 = vunpack.c.h.b16 %v599
        %v1460 = vunpack.c.l.b16 %v600
        %v1461 = vunpack.c.l.b16 %v601
        %v1462 = vunpack.c.h.b16 %v601
        %v1463 = vunpack.c.l.b16 %v602
        %v1464 = vunpack.c.h.b16 %v602
        %v1465 = vunpack.c.l.b16 %v603
        %v1466 = vunpack.c.h.b16 %v603
        %v1467 = vunpack.c.l.b16 %v604
        %v1468 = vunpack.c.h.b16 %v604
        %v1469 = vunpack.c.l.b16 %v605
        %v1470 = vunpack.c.l.b16 %v606
        %v1471 = vunpack.c.h.b16 %v606
        %v1472 = vunpack.c.l.b16 %v607
        %v1473 = vunpack.c.h.b16 %v607
        %v1474 = vunpack.c.l.b16 %v608
        %v1475 = vunpack.c.h.b16 %v608
        %v1476 = vunpack.c.l.b16 %v609
        %v1477 = vunpack.c.h.b16 %v609
        %v1478 = vunpack.c.l.b16 %v610
        %v1479 = vunpack.c.l.b16 %v611
        %v1480 = vunpack.c.h.b16 %v611
        %v1481 = vunpack.c.l.b16 %v612
        %v1482 = vunpack.c.h.b16 %v612
        %v1483 = vunpack.c.l.b16 %v613
        %v1484 = vunpack.c.h.b16 %v613
        %v1485 = vunpack.c.l.b16 %v614
        %v1486 = vunpack.c.h.b16 %v614
        %v1487 = vunpack.c.l.b16 %v615
        %v1488 = vunpack.c.l.b16 %v616
        %v1489 = vunpack.c.h.b16 %v616
        %v1490 = vunpack.c.l.b16 %v617
        %v1491 = vunpack.c.h.b16 %v617
        %v1492 = vunpack.c.l.b16 %v618
        %v1493 = vunpack.c.h.b16 %v618
        %v1494 = vunpack.c.l.b16 %v619
        %v1495 = vunpack.c.h.b16 %v619
        %v1496 = vunpack.c.l.b16 %v620
        %v1497 = vunpack.c.l.b16 %v621
        %v1498 = vunpack.c.h.b16 %v621
        %v1499 = vunpack.c.l.b16 %v622
        %v1500 = vunpack.c.h.b16 %v622
        %v1501 = vunpack.c.l.b16 %v623
        %v1502 = vunpack.c.h.b16 %v623
        %v1503 = vunpack.c.l.b16 %v624
        %v1504 = vunpack.c.h.b16 %v624
        %v1505 = vunpack.c.l.b16 %v625
        %v1506 = vunpack.c.l.b16 %v626
        %v1507 = vunpack.c.h.b16 %v626
        %v1508 = vunpack.c.l.b16 %v627
        %v1509 = vunpack.c.h.b16 %v627
        %v1510 = vunpack.c.l.b16 %v628
        %v1511 = vunpack.c.h.b16 %v628
        %v1512 = vunpack.c.l.b16 %v629
        %v1513 = vunpack.c.h.b16 %v629
        %v1514 = vunpack.c.l.b16 %v630
        %v1515 = vunpack.c.l.b16 %v631
        %v1516 = vunpack.c.h.b16 %v631
        %v1517 = vunpack.c.l.b16 %v632
        %v1518 = vunpack.c.h.b16 %v632
        %v1519 = vunpack.c.l.b16 %v633
        %v1520 = vunpack.c.h.b16 %v633
        %v1521 = vunpack.c.l.b16 %v634
        %v1522 = vunpack.c.h.b16 %v634
        %v1523 = vunpack.c.l.b16 %v635
        %v1524 = vunpack.c.l.b16 %v636
        %v1525 = vunpack.c.h.b16 %v636
        %v1526 = vunpack.c.l.b16 %v637
        %v1527 = vunpack.c.h.b16 %v637
        %v1528 = vunpack.c.l.b16 %v638
        %v1529 = vunpack.c.h.b16 %v638
        %v1530 = vunpack.c.l.b16 %v639
        %v1531 = vunpack.c.h.b16 %v639
        %v1532 = vunpack.c.l.b16 %v640
        %v1533 = vunpack.c.l.b16 %v641
        %v1534 = vunpack.c.h.b16 %v641
        %v1535 = vunpack.c.l.b16 %v642
        %v1536 = vunpack.c.h.b16 %v642
        %v1537 = vunpack.c.l.b16 %v643
        %v1538 = vunpack.c.h.b16 %v643
        %v1539 = vunpack.c.l.b16 %v644
        %v1540 = vunpack.c.h.b16 %v644
        %v1541 = vunpack.c.l.b16 %v645
        %v1542 = vunpack.c.l.b16 %v646
        %v1543 = vunpack.c.h.b16 %v646
        %v1544 = vunpack.c.l.b16 %v647
        %v1545 = vunpack.c.h.b16 %v647
        %v1546 = vunpack.c.l.b16 %v648
        %v1547 = vunpack.c.h.b16 %v648
        %v1548 = vunpack.c.l.b16 %v649
        %v1549 = vunpack.c.h.b16 %v649
        %v1550 = vunpack.c.l.b16 %v650
        %v1551 = vunpack.c.l.b16 %v651
        %v1552 = vunpack.c.h.b16 %v651
        %v1553 = vunpack.c.l.b16 %v652
        %v1554 = vunpack.c.h.b16 %v652
        %v1555 = vunpack.c.l.b16 %v653
        %v1556 = vunpack.c.h.b16 %v653
        %v1557 = vunpack.c.l.b16 %v654
        %v1558 = vunpack.c.h.b16 %v654
        %v1559 = vunpack.c.l.b16 %v655
        %v1560 = vunpack.c.l.b16 %v656
        %v1561 = vunpack.c.h.b16 %v656
        %v1562 = vunpack.c.l.b16 %v657
        %v1563 = vunpack.c.h.b16 %v657
        %v1564 = vunpack.c.l.b16 %v658
        %v1565 = vunpack.c.h.b16 %v658
        %v1566 = vunpack.c.l.b16 %v659
        %v1567 = vunpack.c.h.b16 %v659
        %v1568 = vunpack.c.l.b16 %v660
        %v1569 = vunpack.c.l.b16 %v661
        %v1570 = vunpack.c.h.b16 %v661
        %v1571 = vunpack.c.l.b16 %v662
        %v1572 = vunpack.c.h.b16 %v662
        %v1573 = vunpack.c.l.b16 %v663
        %v1574 = vunpack.c.h.b16 %v663
        %v1575 = vunpack.c.l.b16 %v664
        %v1576 = vunpack.c.h.b16 %v664
        %v1577 = vunpack.c.l.b16 %v665
        %v1578 = vunpack.c.l.b16 %v666
        %v1579 = vunpack.c.h.b16 %v666
        %v1580 = vunpack.c.l.b16 %v667
        %v1581 = vunpack.c.h.b16 %v667
        %v1582 = vunpack.c.l.b16 %v668
        %v1583 = vunpack.c.h.b16 %v668
        %v1584 = vunpack.c.l.b16 %v669
        %v1585 = vunpack.c.h.b16 %v669
        %v1586 = vunpack.c.l.b16 %v670
        %v1587 = vpack.c.b16 %v1020, %v1011
        %v1588 = vpack.c.b16 %v1021, %v1012
        %v1589 = vpack.c.b16 %v1022, %v1013
        %v1590 = vpack.c.b16 %v1023, %v1014
        %v1591 = vpack.c.b16 %v1024, %v1015
        %v1592 = vpack.c.b16 %v1025, %v1016
        %v1593 = vpack.c.b16 %v1026, %v1017
        %v1594 = vpack.c.b16 %v1027, %v1018
        %v1595 = vpack.c.b16 %v1028, %v1019
        %v1596 = vpack.c.b16 %v1038, %v1029
        %v1597 = vpack.c.b16 %v1039, %v1030
        %v1598 = vpack.c.b16 %v1040, %v1031
        %v1599 = vpack.c.b16 %v1041, %v1032
        %v1600 = vpack.c.b16 %v1042, %v1033
        %v1601 = vpack.c.b16 %v1043, %v1034
        %v1602 = vpack.c.b16 %v1044, %v1035
        %v1603 = vpack.c.b16 %v1045, %v1036
        %v1604 = vpack.c.b16 %v1046, %v1037
        %v1605 = vpack.c.b16 %v1056, %v1047
        %v1606 = vpack.c.b16 %v1057, %v1048
        %v1607 = vpack.c.b16 %v1058, %v1049
        %v1608 = vpack.c.b16 %v1059, %v1050
        %v1609 = vpack.c.b16 %v1060, %v1051
        %v1610 = vpack.c.b16 %v1061, %v1052
        %v1611 = vpack.c.b16 %v1062, %v1053
        %v1612 = vpack.c.b16 %v1063, %v1054
        %v1613 = vpack.c.b16 %v1064, %v1055
        %v1614 = vpack.c.b16 %v1074, %v1065
        %v1615 = vpack.c.b16 %v1075, %v1066
        %v1616 = vpack.c.b16 %v1076, %v1067
        %v1617 = vpack.c.b16 %v1077, %v1068
        %v1618 = vpack.c.b16 %v1078, %v1069
        %v1619 = vpack.c.b16 %v1079, %v1070
        %v1620 = vpack.c.b16 %v1080, %v1071
        %v1621 = vpack.c.b16 %v1081, %v1072
        %v1622 = vpack.c.b16 %v1082, %v1073
        %v1623 = vpack.c.b16 %v1092, %v1083
        %v1624 = vpack.c.b16 %v1093, %v1084
        %v1625 = vpack.c.b16 %v1094, %v1085
        %v1626 = vpack.c.b16 %v1095, %v1086
        %v1627 = vpack.c.b16 %v1096, %v1087
        %v1628 = vpack.c.b16 %v1097, %v1088
        %v1629 = vpack.c.b16 %v1098, %v1089
        %v1630 = vpack.c.b16 %v1099, %v1090
        %v1631 = vpack.c.b16 %v1100, %v1091
        %v1632 = vpack.c.b16 %v1110, %v1101
        %v1633 = vpack.c.b16 %v1111, %v1102
        %v1634 = vpack.c.b16 %v1112, %v1103
        %v1635 = vpack.c.b16 %v1113, %v1104
        %v1636 = vpack.c.b16 %v1114, %v1105
        %v1637 = vpack.c.b16 %v1115, %v1106
        %v1638 = vpack.c.b16 %v1116, %v1107
        %v1639 = vpack.c.b16 %v1117, %v1108
        %v1640 = vpack.c.b16 %v1118, %v1109
        %v1641 = vpack.c.b16 %v1128, %v1119
        %v1642 = vpack.c.b16 %v1129, %v1120
        %v1643 = vpack.c.b16 %v1130, %v1121
        %v1644 = vpack.c.b16 %v1131, %v1122
        %v1645 = vpack.c.b16 %v1132, %v1123
        %v1646 = vpack.c.b16 %v1133, %v1124
        %v1647 = vpack.c.b16 %v1134, %v1125
        %v1648 = vpack.c.b16 %v1135, %v1126
        %v1649 = vpack.c.b16 %v1136, %v1127
        %v1650 = vpack.c.b16 %v1146, %v1137
        %v1651 = vpack.c.b16 %v1147, %v1138
        %v1652 = vpack.c.b16 %v1148, %v1139
        %v1653 = vpack.c.b16 %v1149, %v1140
        %v1654 = vpack.c.b16 %v1150, %v1141
        %v1655 = vpack.c.b16 %v1151, %v1142
        %v1656 = vpack.c.b16 %v1152, %v1143
        %v1657 = vpack.c.b16 %v1153, %v1144
        %v1658 = vpack.c.b16 %v1154, %v1145
        %v1659 = vpack.c.b16 %v1164, %v1155
        %v1660 = vpack.c.b16 %v1165, %v1156
        %v1661 = vpack.c.b16 %v1166, %v1157
        %v1662 = vpack.c.b16 %v1167, %v1158
        %v1663 = vpack.c.b16 %v1168, %v1159
        %v1664 = vpack.c.b16 %v1169, %v1160
        %v1665 = vpack.c.b16 %v1170, %v1161
        %v1666 = vpack.c.b16 %v1171, %v1162
        %v1667 = vpack.c.b16 %v1172, %v1163
        %v1668 = vpack.c.b16 %v1182, %v1173
        %v1669 = vpack.c.b16 %v1183, %v1174
        %v1670 = vpack.c.b16 %v1184, %v1175
        %v1671 = vpack.c.b16 %v1185, %v1176
        %v1672 = vpack.c.b16 %v1186, %v1177
        %v1673 = vpack.c.b16 %v1187, %v1178
        %v1674 = vpack.c.b16 %v1188, %v1179
        %v1675 = vpack.c.b16 %v1189, %v1180
        %v1676 = vpack.c.b16 %v1190, %v1181
        %v1677 = vpack.c.b16 %v1200, %v1191
        %v1678 = vpack.c.b16 %v1201, %v1192
        %v1679 = vpack.c.b16 %v1202, %v1193
        %v1680 = vpack.c.b16 %v1203, %v1194
        %v1681 = vpack.c.b16 %v1204, %v1195
        %v1682 = vpack.c.b16 %v1205, %v1196
        %v1683 = vpack.c.b16 %v1206, %v1197
        %v1684 = vpack.c.b16 %v1207, %v1198
        %v1685 = vpack.c.b16 %v1208, %v1199
        %v1686 = vpack.c.b16 %v1218, %v1209
        %v1687 = vpack.c.b16 %v1219, %v1210
        %v1688 = vpack.c.b16 %v1220, %v1211
        %v1689 = vpack.c.b16 %v1221, %v1212
        %v1690 = vpack.c.b16 %v1222, %v1213
        %v1691 = vpack.c.b16 %v1223, %v1214
        %v1692 = vpack.c.b16 %v1224, %v1215
        %v1693 = vpack.c.b16 %v1225, %v1216
        %v1694 = vpack.c.b16 %v1226, %v1217
        %v1695 = vpack.c.b16 %v1236, %v1227
        %v1696 = vpack.c.b16 %v1237, %v1228
        %v1697 = vpack.c.b16 %v1238, %v1229
        %v1698 = vpack.c.b16 %v1239, %v1230
        %v1699 = vpack.c.b16 %v1240, %v1231
        %v1700 = vpack.c.b16 %v1241, %v1232
        %v1701 = vpack.c.b16 %v1242, %v1233
        %v1702 = vpack.c.b16 %v1243, %v1234
        %v1703 = vpack.c.b16 %v1244, %v1235
        %v1704 = vpack.c.b16 %v1254, %v1245
        %v1705 = vpack.c.b16 %v1255, %v1246
        %v1706 = vpack.c.b16 %v1256, %v1247
        %v1707 = vpack.c.b16 %v1257, %v1248
        %v1708 = vpack.c.b16 %v1258, %v1249
        %v1709 = vpack.c.b16 %v1259, %v1250
        %v1710 = vpack.c.b16 %v1260, %v1251
        %v1711 = vpack.c.b16 %v1261, %v1252
        %v1712 = vpack.c.b16 %v1262, %v1253
        %v1713 = vpack.c.b16 %v1272, %v1263
        %v1714 = vpack.c.b16 %v1273, %v1264
        %v1715 = vpack.c.b16 %v1274, %v1265
        %v1716 = vpack.c.b16 %v1275, %v1266
        %v1717 = vpack.c.b16 %v1276, %v1267
        %v1718 = vpack.c.b16 %v1277, %v1268
        %v1719 = vpack.c.b16 %v1278, %v1269
        %v1720 = vpack.c.b16 %v1279, %v1270
        %v1721 = vpack.c.b16 %v1280, %v1271
        %v1722 = vpack.c.b16 %v1290, %v1281
        %v1723 = vpack.c.b16 %v1291, %v1282
        %v1724 = vpack.c.b16 %v1292, %v1283
        %v1725 = vpack.c.b16 %v1293, %v1284
        %v1726 = vpack.c.b16 %v1294, %v1285
        %v1727 = vpack.c.b16 %v1295, %v1286
        %v1728 = vpack.c.b16 %v1296, %v1287
        %v1729 = vpack.c.b16 %v1297, %v1288
        %v1730 = vpack.c.b16 %v1298, %v1289
        %v1731 = vpack.c.b16 %v1308, %v1299
        %v1732 = vpack.c.b16 %v1309, %v1300
        %v1733 = vpack.c.b16 %v1310, %v1301
        %v1734 = vpack.c.b16 %v1311, %v1302
        %v1735 = vpack.c.b16 %v1312, %v1303
        %v1736 = vpack.c.b16 %v1313, %v1304
        %v1737 = vpack.c.b16 %v1314, %v1305
        %v1738 = vpack.c.b16 %v1315, %v1306
        %v1739 = vpack.c.b16 %v1316, %v1307
        %v1740 = vpack.c.b16 %v1326, %v1317
        %v1741 = vpack.c.b16 %v1327, %v1318
        %v1742 = vpack.c.b16 %v1328, %v1319
        %v1743 = vpack.c.b16 %v1329, %v1320
        %v1744 = vpack.c.b16 %v1330, %v1321
        %v1745 = vpack.c.b16 %v1331, %v1322
        %v1746 = vpack.c.b16 %v1332, %v1323
        %v1747 = vpack.c.b16 %v1333, %v1324
        %v1748 = vpack.c.b16 %v1334, %v1325
        %v1749 = vpack.c.b16 %v1344, %v1335
        %v1750 = vpack.c.b16 %v1345, %v1336
        %v1751 = vpack.c.b16 %v1346, %v1337
        %v1752 = vpack.c.b16 %v1347, %v1338
        %v1753 = vpack.c.b16 %v1348, %v1339
        %v1754 = vpack.c.b16 %v1349, %v1340
        %v1755 = vpack.c.b16 %v1350, %v1341
        %v1756 = vpack.c.b16 %v1351, %v1342
        %v1757 = vpack.c.b16 %v1352, %v1343
        %v1758 = vpack.c.b16 %v1362, %v1353
        %v1759 = vpack.c.b16 %v1363, %v1354
        %v1760 = vpack.c.b16 %v1364, %v1355
        %v1761 = vpack.c.b16 %v1365, %v1356
        %v1762 = vpack.c.b16 %v1366, %v1357
        %v1763 = vpack.c.b16 %v1367, %v1358
        %v1764 = vpack.c.b16 %v1368, %v1359
        %v1765 = vpack.c.b16 %v1369, %v1360
        %v1766 = vpack.c.b16 %v1370, %v1361
        %v1767 = vpack.c.b16 %v1380, %v1371
        %v1768 = vpack.c.b16 %v1381, %v1372
        %v1769 = vpack.c.b16 %v1382, %v1373
        %v1770 = vpack.c.b16 %v1383, %v1374
        %v1771 = vpack.c.b16 %v1384, %v1375
        %v1772 = vpack.c.b16 %v1385, %v1376
        %v1773 = vpack.c.b16 %v1386, %v1377
        %v1774 = vpack.c.b16 %v1387, %v1378
        %v1775 = vpack.c.b16 %v1388, %v1379
        %v1776 = vpack.c.b16 %v1398, %v1389
        %v1777 = vpack.c.b16 %v1399, %v1390
        %v1778 = vpack.c.b16 %v1400, %v1391
        %v1779 = vpack.c.b16 %v1401, %v1392
        %v1780 = vpack.c.b16 %v1402, %v1393
        %v1781 = vpack.c.b16 %v1403, %v1394
        %v1782 = vpack.c.b16 %v1404, %v1395
        %v1783 = vpack.c.b16 %v1405, %v1396
        %v1784 = vpack.c.b16 %v1406, %v1397
        %v1785 = vpack.c.b16 %v1416, %v1407
        %v1786 = vpack.c.b16 %v1417, %v1408
        %v1787 = vpack.c.b16 %v1418, %v1409
        %v1788 = vpack.c.b16 %v1419, %v1410
        %v1789 = vpack.c.b16 %v1420, %v1411
        %v1790 = vpack.c.b16 %v1421, %v1412
        %v1791 = vpack.c.b16 %v1422, %v1413
        %v1792 = vpack.c.b16 %v1423, %v1414
        %v1793 = vpack.c.b16 %v1424, %v1415
        %v1794 = vpack.c.b16 %v1434, %v1425
        %v1795 = vpack.c.b16 %v1435, %v1426
        %v1796 = vpack.c.b16 %v1436, %v1427
        %v1797 = vpack.c.b16 %v1437, %v1428
        %v1798 = vpack.c.b16 %v1438, %v1429
        %v1799 = vpack.c.b16 %v1439, %v1430
        %v1800 = vpack.c.b16 %v1440, %v1431
        %v1801 = vpack.c.b16 %v1441, %v1432
        %v1802 = vpack.c.b16 %v1442, %v1433
        %v1803 = vpack.c.b16 %v1452, %v1443
        %v1804 = vpack.c.b16 %v1453, %v1444
        %v1805 = vpack.c.b16 %v1454, %v1445
        %v1806 = vpack.c.b16 %v1455, %v1446
        %v1807 = vpack.c.b16 %v1456, %v1447
        %v1808 = vpack.c.b16 %v1457, %v1448
        %v1809 = vpack.c.b16 %v1458, %v1449
        %v1810 = vpack.c.b16 %v1459, %v1450
        %v1811 = vpack.c.b16 %v1460, %v1451
        %v1812 = vpack.c.b16 %v1470, %v1461
        %v1813 = vpack.c.b16 %v1471, %v1462
        %v1814 = vpack.c.b16 %v1472, %v1463
        %v1815 = vpack.c.b16 %v1473, %v1464
        %v1816 = vpack.c.b16 %v1474, %v1465
        %v1817 = vpack.c.b16 %v1475, %v1466
        %v1818 = vpack.c.b16 %v1476, %v1467
        %v1819 = vpack.c.b16 %v1477, %v1468
        %v1820 = vpack.c.b16 %v1478, %v1469
        %v1821 = vpack.c.b16 %v1488, %v1479
        %v1822 = vpack.c.b16 %v1489, %v1480
        %v1823 = vpack.c.b16 %v1490, %v1481
        %v1824 = vpack.c.b16 %v1491, %v1482
        %v1825 = vpack.c.b16 %v1492, %v1483
        %v1826 = vpack.c.b16 %v1493, %v1484
        %v1827 = vpack.c.b16 %v1494, %v1485
        %v1828 = vpack.c.b16 %v1495, %v1486
        %v1829 = vpack.c.b16 %v1496, %v1487
        %v1830 = vpack.c.b16 %v1506, %v1497
        %v1831 = vpack.c.b16 %v1507, %v1498
        %v1832 = vpack.c.b16 %v1508, %v1499
        %v1833 = vpack.c.b16 %v1509, %v1500
        %v1834 = vpack.c.b16 %v1510, %v1501
        %v1835 = vpack.c.b16 %v1511, %v1502
        %v1836 = vpack.c.b16 %v1512, %v1503
        %v1837 = vpack.c.b16 %v1513, %v1504
        %v1838 = vpack.c.b16 %v1514, %v1505
        %v1839 = vpack.c.b16 %v1524, %v1515
        %v1840 = vpack.c.b16 %v1525, %v1516
        %v1841 = vpack.c.b16 %v1526, %v1517
        %v1842 = vpack.c.b16 %v1527, %v1518
        %v1843 = vpack.c.b16 %v1528, %v1519
        %v1844 = vpack.c.b16 %v1529, %v1520
        %v1845 = vpack.c.b16 %v1530, %v1521
        %v1846 = vpack.c.b16 %v1531, %v1522
        %v1847 = vpack.c.b16 %v1532, %v1523
        %v1848 = vpack.c.b16 %v1542, %v1533
        %v1849 = vpack.c.b16 %v1543, %v1534
        %v1850 = vpack.c.b16 %v1544, %v1535
        %v1851 = vpack.c.b16 %v1545, %v1536
        %v1852 = vpack.c.b16 %v1546, %v1537
        %v1853 = vpack.c.b16 %v1547, %v1538
        %v1854 = vpack.c.b16 %v1548, %v1539
        %v1855 = vpack.c.b16 %v1549, %v1540
        %v1856 = vpack.c.b16 %v1550, %v1541
        %v1857 = vpack.c.b16 %v1560, %v1551
        %v1858 = vpack.c.b16 %v1561, %v1552
        %v1859 = vpack.c.b16 %v1562, %v1553
        %v1860 = vpack.c.b16 %v1563, %v1554
        %v1861 = vpack.c.b16 %v1564, %v1555
        %v1862 = vpack.c.b16 %v1565, %v1556
        %v1863 = vpack.c.b16 %v1566, %v1557
        %v1864 = vpack.c.b16 %v1567, %v1558
        %v1865 = vpack.c.b16 %v1568, %v1559
        %v1866 = vpack.c.b16 %v1578, %v1569
        %v1867 = vpack.c.b16 %v1579, %v1570
        %v1868 = vpack.c.b16 %v1580, %v1571
        %v1869 = vpack.c.b16 %v1581, %v1572
        %v1870 = vpack.c.b16 %v1582, %v1573
        %v1871 = vpack.c.b16 %v1583, %v1574
        %v1872 = vpack.c.b16 %v1584, %v1575
        %v1873 = vpack.c.b16 %v1585, %v1576
        %v1874 = vpack.c.b16 %v1586, %v1577
        %2163 = vmatprep.subr.bf16.mxu0 %v1588
        %2164 = vmatpush1.bf16.msra.mxu0 %v1587
        %2165 = vmatprep.subr.bf16.mxu0 %v1597
        %2166 = vmatpush1.bf16.msra.mxu0 %v1596
        %2167 = vmatprep.subr.bf16.mxu0 %v1606
        %2168 = vmatpush1.bf16.msra.mxu0 %v1605
        %2169 = vmatprep.subr.bf16.mxu0 %v1615
        %2170 = vmatpush1.bf16.msra.mxu0 %v1614
        %2171 = vmatprep.subr.bf16.mxu0 %v1624
        %2172 = vmatpush1.bf16.msra.mxu0 %v1623
        %2173 = vmatprep.subr.bf16.mxu0 %v1633
        %2174 = vmatpush1.bf16.msra.mxu0 %v1632
        %2175 = vmatprep.subr.bf16.mxu0 %v1642
        %2176 = vmatpush1.bf16.msra.mxu0 %v1641
        %2177 = vmatprep.subr.bf16.mxu0 %v1651
        %2178 = vmatpush1.bf16.msra.mxu0 %v1650
        %2179 = vmatprep.subr.bf16.mxu0 %v1660
        %2180 = vmatpush1.bf16.msra.mxu0 %v1659
        %2181 = vmatprep.subr.bf16.mxu0 %v1669
        %2182 = vmatpush1.bf16.msra.mxu0 %v1668
        %2183 = vmatprep.subr.bf16.mxu0 %v1678
        %2184 = vmatpush1.bf16.msra.mxu0 %v1677
        %2185 = vmatprep.subr.bf16.mxu0 %v1687
        %2186 = vmatpush1.bf16.msra.mxu0 %v1686
        %2187 = vmatprep.subr.bf16.mxu0 %v1696
        %2188 = vmatpush1.bf16.msra.mxu0 %v1695
        %2189 = vmatprep.subr.bf16.mxu0 %v1705
        %2190 = vmatpush1.bf16.msra.mxu0 %v1704
        %2191 = vmatprep.subr.bf16.mxu0 %v1714
        %2192 = vmatpush1.bf16.msra.mxu0 %v1713
        %2193 = vmatprep.subr.bf16.mxu0 %v1723
        %2194 = vmatpush1.bf16.msra.mxu0 %v1722
        %2195 = vmatprep.mubr.bf16.mxu0 %v684
        %2196 = vmatmul.mubr.bf16.gmra.mrb[0].mxu0 %v683
        %v2197 = vpop.f32.mrb[0].mxu0
        %v2198 = vadd.f32 0.0, %v2197
        %v2199 = vpop.f32.mrb[0].mxu0
        %v2200 = vadd.f32 0.0, %v2199
        %v2201 = vpop.f32.mrb[0].mxu0
        %v2202 = vadd.f32 0.0, %v2201
        %v2203 = vpop.f32.mrb[0].mxu0
        %v2204 = vadd.f32 0.0, %v2203
        %2205 = vdwg.mxu0
        %2206 = vmatprep.subr.bf16.mxu0 %v1732
        %2207 = vmatpush1.bf16.msra.mxu0 %v1731
        %2208 = vmatprep.subr.bf16.mxu0 %v1741
        %2209 = vmatpush1.bf16.msra.mxu0 %v1740
        %2210 = vmatprep.subr.bf16.mxu0 %v1750
        %2211 = vmatpush1.bf16.msra.mxu0 %v1749
        %2212 = vmatprep.subr.bf16.mxu0 %v1759
        %2213 = vmatpush1.bf16.msra.mxu0 %v1758
        %2214 = vmatprep.subr.bf16.mxu0 %v1768
        %2215 = vmatpush1.bf16.msra.mxu0 %v1767
        %2216 = vmatprep.subr.bf16.mxu0 %v1777
        %2217 = vmatpush1.bf16.msra.mxu0 %v1776
        %2218 = vmatprep.subr.bf16.mxu0 %v1786
        %2219 = vmatpush1.bf16.msra.mxu0 %v1785
        %2220 = vmatprep.subr.bf16.mxu0 %v1795
        %2221 = vmatpush1.bf16.msra.mxu0 %v1794
        %2222 = vmatprep.subr.bf16.mxu0 %v1804
        %2223 = vmatpush1.bf16.msra.mxu0 %v1803
        %2224 = vmatprep.subr.bf16.mxu0 %v1813
        %2225 = vmatpush1.bf16.msra.mxu0 %v1812
        %2226 = vmatprep.subr.bf16.mxu0 %v1822
        %2227 = vmatpush1.bf16.msra.mxu0 %v1821
        %2228 = vmatprep.subr.bf16.mxu0 %v1831
        %2229 = vmatpush1.bf16.msra.mxu0 %v1830
        %2230 = vmatprep.subr.bf16.mxu0 %v1840
        %2231 = vmatpush1.bf16.msra.mxu0 %v1839
        %2232 = vmatprep.subr.bf16.mxu0 %v1849
        %2233 = vmatpush1.bf16.msra.mxu0 %v1848
        %2234 = vmatprep.subr.bf16.mxu0 %v1858
        %2235 = vmatpush1.bf16.msra.mxu0 %v1857
        %2236 = vmatprep.subr.bf16.mxu0 %v1867
        %2237 = vmatpush1.bf16.msra.mxu0 %v1866
        %2238 = vmatprep.mubr.bf16.mxu0 %v686
        %2239 = vmatmul.mubr.bf16.gmra.mrb[0].mxu0 %v685
        %v2240 = vpop.f32.mrb[0].mxu0
        %v2241 = vadd.f32 %v2198, %v2240
        %v2242 = vpop.f32.mrb[0].mxu0
        %v2243 = vadd.f32 %v2200, %v2242
        %v2244 = vpop.f32.mrb[0].mxu0
        %v2245 = vadd.f32 %v2202, %v2244
        %v2246 = vpop.f32.mrb[0].mxu0
        %v2247 = vadd.f32 %v2204, %v2246
        %2248 = vdwg.mxu0
        %2249 = vmatprep.subr.bf16.mxu0 %v1590
        %2250 = vmatpush1.bf16.msra.mxu0 %v1589
        %2251 = vmatprep.subr.bf16.mxu0 %v1599
        %2252 = vmatpush1.bf16.msra.mxu0 %v1598
        %2253 = vmatprep.subr.bf16.mxu0 %v1608
        %2254 = vmatpush1.bf16.msra.mxu0 %v1607
        %2255 = vmatprep.subr.bf16.mxu0 %v1617
        %2256 = vmatpush1.bf16.msra.mxu0 %v1616
        %2257 = vmatprep.subr.bf16.mxu0 %v1626
        %2258 = vmatpush1.bf16.msra.mxu0 %v1625
        %2259 = vmatprep.subr.bf16.mxu0 %v1635
        %2260 = vmatpush1.bf16.msra.mxu0 %v1634
        %2261 = vmatprep.subr.bf16.mxu0 %v1644
        %2262 = vmatpush1.bf16.msra.mxu0 %v1643
        %2263 = vmatprep.subr.bf16.mxu0 %v1653
        %2264 = vmatpush1.bf16.msra.mxu0 %v1652
        %2265 = vmatprep.subr.bf16.mxu0 %v1662
        %2266 = vmatpush1.bf16.msra.mxu0 %v1661
        %2267 = vmatprep.subr.bf16.mxu0 %v1671
        %2268 = vmatpush1.bf16.msra.mxu0 %v1670
        %2269 = vmatprep.subr.bf16.mxu0 %v1680
        %2270 = vmatpush1.bf16.msra.mxu0 %v1679
        %2271 = vmatprep.subr.bf16.mxu0 %v1689
        %2272 = vmatpush1.bf16.msra.mxu0 %v1688
        %2273 = vmatprep.subr.bf16.mxu0 %v1698
        %2274 = vmatpush1.bf16.msra.mxu0 %v1697
        %2275 = vmatprep.subr.bf16.mxu0 %v1707
        %2276 = vmatpush1.bf16.msra.mxu0 %v1706
        %2277 = vmatprep.subr.bf16.mxu0 %v1716
        %2278 = vmatpush1.bf16.msra.mxu0 %v1715
        %2279 = vmatprep.subr.bf16.mxu0 %v1725
        %2280 = vmatpush1.bf16.msra.mxu0 %v1724
        %2281 = vmatprep.mubr.bf16.mxu0 %v684
        %2282 = vmatmul.mubr.bf16.gmra.mrb[0].mxu0 %v683
        %v2283 = vpop.f32.mrb[0].mxu0
        %v2284 = vadd.f32 0.0, %v2283
        %v2285 = vpop.f32.mrb[0].mxu0
        %v2286 = vadd.f32 0.0, %v2285
        %v2287 = vpop.f32.mrb[0].mxu0
        %v2288 = vadd.f32 0.0, %v2287
        %v2289 = vpop.f32.mrb[0].mxu0
        %v2290 = vadd.f32 0.0, %v2289
        %2291 = vdwg.mxu0
        %2292 = vmatprep.subr.bf16.mxu0 %v1734
        %2293 = vmatpush1.bf16.msra.mxu0 %v1733
        %2294 = vmatprep.subr.bf16.mxu0 %v1743
        %2295 = vmatpush1.bf16.msra.mxu0 %v1742
        %2296 = vmatprep.subr.bf16.mxu0 %v1752
        %2297 = vmatpush1.bf16.msra.mxu0 %v1751
        %2298 = vmatprep.subr.bf16.mxu0 %v1761
        %2299 = vmatpush1.bf16.msra.mxu0 %v1760
        %2300 = vmatprep.subr.bf16.mxu0 %v1770
        %2301 = vmatpush1.bf16.msra.mxu0 %v1769
        %2302 = vmatprep.subr.bf16.mxu0 %v1779
        %2303 = vmatpush1.bf16.msra.mxu0 %v1778
        %2304 = vmatprep.subr.bf16.mxu0 %v1788
        %2305 = vmatpush1.bf16.msra.mxu0 %v1787
        %2306 = vmatprep.subr.bf16.mxu0 %v1797
        %2307 = vmatpush1.bf16.msra.mxu0 %v1796
        %2308 = vmatprep.subr.bf16.mxu0 %v1806
        %2309 = vmatpush1.bf16.msra.mxu0 %v1805
        %2310 = vmatprep.subr.bf16.mxu0 %v1815
        %2311 = vmatpush1.bf16.msra.mxu0 %v1814
        %2312 = vmatprep.subr.bf16.mxu0 %v1824
        %2313 = vmatpush1.bf16.msra.mxu0 %v1823
        %2314 = vmatprep.subr.bf16.mxu0 %v1833
        %2315 = vmatpush1.bf16.msra.mxu0 %v1832
        %2316 = vmatprep.subr.bf16.mxu0 %v1842
        %2317 = vmatpush1.bf16.msra.mxu0 %v1841
        %2318 = vmatprep.subr.bf16.mxu0 %v1851
        %2319 = vmatpush1.bf16.msra.mxu0 %v1850
        %2320 = vmatprep.subr.bf16.mxu0 %v1860
        %2321 = vmatpush1.bf16.msra.mxu0 %v1859
        %2322 = vmatprep.subr.bf16.mxu0 %v1869
        %2323 = vmatpush1.bf16.msra.mxu0 %v1868
        %2324 = vmatprep.mubr.bf16.mxu0 %v686
        %2325 = vmatmul.mubr.bf16.gmra.mrb[0].mxu0 %v685
        %v2326 = vpop.f32.mrb[0].mxu0
        %v2327 = vadd.f32 %v2284, %v2326
        %v2328 = vpop.f32.mrb[0].mxu0
        %v2329 = vadd.f32 %v2286, %v2328
        %v2330 = vpop.f32.mrb[0].mxu0
        %v2331 = vadd.f32 %v2288, %v2330
        %v2332 = vpop.f32.mrb[0].mxu0
        %v2333 = vadd.f32 %v2290, %v2332
        %2334 = vdwg.mxu0
        %2335 = vmatprep.subr.bf16.mxu0 %v1592
        %2336 = vmatpush1.bf16.msra.mxu0 %v1591
        %2337 = vmatprep.subr.bf16.mxu0 %v1601
        %2338 = vmatpush1.bf16.msra.mxu0 %v1600
        %2339 = vmatprep.subr.bf16.mxu0 %v1610
        %2340 = vmatpush1.bf16.msra.mxu0 %v1609
        %2341 = vmatprep.subr.bf16.mxu0 %v1619
        %2342 = vmatpush1.bf16.msra.mxu0 %v1618
        %2343 = vmatprep.subr.bf16.mxu0 %v1628
        %2344 = vmatpush1.bf16.msra.mxu0 %v1627
        %2345 = vmatprep.subr.bf16.mxu0 %v1637
        %2346 = vmatpush1.bf16.msra.mxu0 %v1636
        %2347 = vmatprep.subr.bf16.mxu0 %v1646
        %2348 = vmatpush1.bf16.msra.mxu0 %v1645
        %2349 = vmatprep.subr.bf16.mxu0 %v1655
        %2350 = vmatpush1.bf16.msra.mxu0 %v1654
        %2351 = vmatprep.subr.bf16.mxu0 %v1664
        %2352 = vmatpush1.bf16.msra.mxu0 %v1663
        %2353 = vmatprep.subr.bf16.mxu0 %v1673
        %2354 = vmatpush1.bf16.msra.mxu0 %v1672
        %2355 = vmatprep.subr.bf16.mxu0 %v1682
        %2356 = vmatpush1.bf16.msra.mxu0 %v1681
        %2357 = vmatprep.subr.bf16.mxu0 %v1691
        %2358 = vmatpush1.bf16.msra.mxu0 %v1690
        %2359 = vmatprep.subr.bf16.mxu0 %v1700
        %2360 = vmatpush1.bf16.msra.mxu0 %v1699
        %2361 = vmatprep.subr.bf16.mxu0 %v1709
        %2362 = vmatpush1.bf16.msra.mxu0 %v1708
        %2363 = vmatprep.subr.bf16.mxu0 %v1718
        %2364 = vmatpush1.bf16.msra.mxu0 %v1717
        %2365 = vmatprep.subr.bf16.mxu0 %v1727
        %2366 = vmatpush1.bf16.msra.mxu0 %v1726
        %2367 = vmatprep.mubr.bf16.mxu0 %v684
        %2368 = vmatmul.mubr.bf16.gmra.mrb[0].mxu0 %v683
        %v2369 = vpop.f32.mrb[0].mxu0
        %v2370 = vadd.f32 0.0, %v2369
        %v2371 = vpop.f32.mrb[0].mxu0
        %v2372 = vadd.f32 0.0, %v2371
        %v2373 = vpop.f32.mrb[0].mxu0
        %v2374 = vadd.f32 0.0, %v2373
        %v2375 = vpop.f32.mrb[0].mxu0
        %v2376 = vadd.f32 0.0, %v2375
        %2377 = vdwg.mxu0
        %2378 = vmatprep.subr.bf16.mxu0 %v1736
        %2379 = vmatpush1.bf16.msra.mxu0 %v1735
        %2380 = vmatprep.subr.bf16.mxu0 %v1745
        %2381 = vmatpush1.bf16.msra.mxu0 %v1744
        %2382 = vmatprep.subr.bf16.mxu0 %v1754
        %2383 = vmatpush1.bf16.msra.mxu0 %v1753
        %2384 = vmatprep.subr.bf16.mxu0 %v1763
        %2385 = vmatpush1.bf16.msra.mxu0 %v1762
        %2386 = vmatprep.subr.bf16.mxu0 %v1772
        %2387 = vmatpush1.bf16.msra.mxu0 %v1771
        %2388 = vmatprep.subr.bf16.mxu0 %v1781
        %2389 = vmatpush1.bf16.msra.mxu0 %v1780
        %2390 = vmatprep.subr.bf16.mxu0 %v1790
        %2391 = vmatpush1.bf16.msra.mxu0 %v1789
        %2392 = vmatprep.subr.bf16.mxu0 %v1799
        %2393 = vmatpush1.bf16.msra.mxu0 %v1798
        %2394 = vmatprep.subr.bf16.mxu0 %v1808
        %2395 = vmatpush1.bf16.msra.mxu0 %v1807
        %2396 = vmatprep.subr.bf16.mxu0 %v1817
        %2397 = vmatpush1.bf16.msra.mxu0 %v1816
        %2398 = vmatprep.subr.bf16.mxu0 %v1826
        %2399 = vmatpush1.bf16.msra.mxu0 %v1825
        %2400 = vmatprep.subr.bf16.mxu0 %v1835
        %2401 = vmatpush1.bf16.msra.mxu0 %v1834
        %2402 = vmatprep.subr.bf16.mxu0 %v1844
        %2403 = vmatpush1.bf16.msra.mxu0 %v1843
        %2404 = vmatprep.subr.bf16.mxu0 %v1853
        %2405 = vmatpush1.bf16.msra.mxu0 %v1852
        %2406 = vmatprep.subr.bf16.mxu0 %v1862
        %2407 = vmatpush1.bf16.msra.mxu0 %v1861
        %2408 = vmatprep.subr.bf16.mxu0 %v1871
        %2409 = vmatpush1.bf16.msra.mxu0 %v1870
        %2410 = vmatprep.mubr.bf16.mxu0 %v686
        %2411 = vmatmul.mubr.bf16.gmra.mrb[0].mxu0 %v685
        %v2412 = vpop.f32.mrb[0].mxu0
        %v2413 = vadd.f32 %v2370, %v2412
        %v2414 = vpop.f32.mrb[0].mxu0
        %v2415 = vadd.f32 %v2372, %v2414
        %v2416 = vpop.f32.mrb[0].mxu0
        %v2417 = vadd.f32 %v2374, %v2416
        %v2418 = vpop.f32.mrb[0].mxu0
        %v2419 = vadd.f32 %v2376, %v2418
        %2420 = vdwg.mxu0
        %2421 = vmatprep.subr.bf16.mxu0 %v1594
        %2422 = vmatpush1.bf16.msra.mxu0 %v1593
        %2423 = vmatprep.subr.bf16.mxu0 %v1603
        %2424 = vmatpush1.bf16.msra.mxu0 %v1602
        %2425 = vmatprep.subr.bf16.mxu0 %v1612
        %2426 = vmatpush1.bf16.msra.mxu0 %v1611
        %2427 = vmatprep.subr.bf16.mxu0 %v1621
        %2428 = vmatpush1.bf16.msra.mxu0 %v1620
        %2429 = vmatprep.subr.bf16.mxu0 %v1630
        %2430 = vmatpush1.bf16.msra.mxu0 %v1629
        %2431 = vmatprep.subr.bf16.mxu0 %v1639
        %2432 = vmatpush1.bf16.msra.mxu0 %v1638
        %2433 = vmatprep.subr.bf16.mxu0 %v1648
        %2434 = vmatpush1.bf16.msra.mxu0 %v1647
        %2435 = vmatprep.subr.bf16.mxu0 %v1657
        %2436 = vmatpush1.bf16.msra.mxu0 %v1656
        %2437 = vmatprep.subr.bf16.mxu0 %v1666
        %2438 = vmatpush1.bf16.msra.mxu0 %v1665
        %2439 = vmatprep.subr.bf16.mxu0 %v1675
        %2440 = vmatpush1.bf16.msra.mxu0 %v1674
        %2441 = vmatprep.subr.bf16.mxu0 %v1684
        %2442 = vmatpush1.bf16.msra.mxu0 %v1683
        %2443 = vmatprep.subr.bf16.mxu0 %v1693
        %2444 = vmatpush1.bf16.msra.mxu0 %v1692
        %2445 = vmatprep.subr.bf16.mxu0 %v1702
        %2446 = vmatpush1.bf16.msra.mxu0 %v1701
        %2447 = vmatprep.subr.bf16.mxu0 %v1711
        %2448 = vmatpush1.bf16.msra.mxu0 %v1710
        %2449 = vmatprep.subr.bf16.mxu0 %v1720
        %2450 = vmatpush1.bf16.msra.mxu0 %v1719
        %2451 = vmatprep.subr.bf16.mxu0 %v1729
        %2452 = vmatpush1.bf16.msra.mxu0 %v1728
        %2453 = vmatprep.mubr.bf16.mxu0 %v684
        %2454 = vmatmul.mubr.bf16.gmra.mrb[0].mxu0 %v683
        %v2455 = vpop.f32.mrb[0].mxu0
        %v2456 = vadd.f32 0.0, %v2455
        %v2457 = vpop.f32.mrb[0].mxu0
        %v2458 = vadd.f32 0.0, %v2457
        %v2459 = vpop.f32.mrb[0].mxu0
        %v2460 = vadd.f32 0.0, %v2459
        %v2461 = vpop.f32.mrb[0].mxu0
        %v2462 = vadd.f32 0.0, %v2461
        %2463 = vdwg.mxu0
        %2464 = vmatprep.subr.bf16.mxu0 %v1738
        %2465 = vmatpush1.bf16.msra.mxu0 %v1737
        %2466 = vmatprep.subr.bf16.mxu0 %v1747
        %2467 = vmatpush1.bf16.msra.mxu0 %v1746
        %2468 = vmatprep.subr.bf16.mxu0 %v1756
        %2469 = vmatpush1.bf16.msra.mxu0 %v1755
        %2470 = vmatprep.subr.bf16.mxu0 %v1765
        %2471 = vmatpush1.bf16.msra.mxu0 %v1764
        %2472 = vmatprep.subr.bf16.mxu0 %v1774
        %2473 = vmatpush1.bf16.msra.mxu0 %v1773
        %2474 = vmatprep.subr.bf16.mxu0 %v1783
        %2475 = vmatpush1.bf16.msra.mxu0 %v1782
        %2476 = vmatprep.subr.bf16.mxu0 %v1792
        %2477 = vmatpush1.bf16.msra.mxu0 %v1791
        %2478 = vmatprep.subr.bf16.mxu0 %v1801
        %2479 = vmatpush1.bf16.msra.mxu0 %v1800
        %2480 = vmatprep.subr.bf16.mxu0 %v1810
        %2481 = vmatpush1.bf16.msra.mxu0 %v1809
        %2482 = vmatprep.subr.bf16.mxu0 %v1819
        %2483 = vmatpush1.bf16.msra.mxu0 %v1818
        %2484 = vmatprep.subr.bf16.mxu0 %v1828
        %2485 = vmatpush1.bf16.msra.mxu0 %v1827
        %2486 = vmatprep.subr.bf16.mxu0 %v1837
        %2487 = vmatpush1.bf16.msra.mxu0 %v1836
        %2488 = vmatprep.subr.bf16.mxu0 %v1846
        %2489 = vmatpush1.bf16.msra.mxu0 %v1845
        %2490 = vmatprep.subr.bf16.mxu0 %v1855
        %2491 = vmatpush1.bf16.msra.mxu0 %v1854
        %2492 = vmatprep.subr.bf16.mxu0 %v1864
        %2493 = vmatpush1.bf16.msra.mxu0 %v1863
        %2494 = vmatprep.subr.bf16.mxu0 %v1873
        %2495 = vmatpush1.bf16.msra.mxu0 %v1872
        %2496 = vmatprep.mubr.bf16.mxu0 %v686
        %2497 = vmatmul.mubr.bf16.gmra.mrb[0].mxu0 %v685
        %v2498 = vpop.f32.mrb[0].mxu0
        %v2499 = vadd.f32 %v2456, %v2498
        %v2500 = vpop.f32.mrb[0].mxu0
        %v2501 = vadd.f32 %v2458, %v2500
        %v2502 = vpop.f32.mrb[0].mxu0
        %v2503 = vadd.f32 %v2460, %v2502
        %v2504 = vpop.f32.mrb[0].mxu0
        %v2505 = vadd.f32 %v2462, %v2504
        %2506 = vdwg.mxu0
        %2507 = vmatprep.subr.bf16.mxu0 0
        %2508 = vmatpush1.bf16.msra.mxu0 %v1595
        %2509 = vmatprep.subr.bf16.mxu0 0
        %2510 = vmatpush1.bf16.msra.mxu0 %v1604
        %2511 = vmatprep.subr.bf16.mxu0 0
        %2512 = vmatpush1.bf16.msra.mxu0 %v1613
        %2513 = vmatprep.subr.bf16.mxu0 0
        %2514 = vmatpush1.bf16.msra.mxu0 %v1622
        %2515 = vmatprep.subr.bf16.mxu0 0
        %2516 = vmatpush1.bf16.msra.mxu0 %v1631
        %2517 = vmatprep.subr.bf16.mxu0 0
        %2518 = vmatpush1.bf16.msra.mxu0 %v1640
        %2519 = vmatprep.subr.bf16.mxu0 0
        %2520 = vmatpush1.bf16.msra.mxu0 %v1649
        %2521 = vmatprep.subr.bf16.mxu0 0
        %2522 = vmatpush1.bf16.msra.mxu0 %v1658
        %2523 = vmatprep.subr.bf16.mxu0 0
        %2524 = vmatpush1.bf16.msra.mxu0 %v1667
        %2525 = vmatprep.subr.bf16.mxu0 0
        %2526 = vmatpush1.bf16.msra.mxu0 %v1676
        %2527 = vmatprep.subr.bf16.mxu0 0
        %2528 = vmatpush1.bf16.msra.mxu0 %v1685
        %2529 = vmatprep.subr.bf16.mxu0 0
        %2530 = vmatpush1.bf16.msra.mxu0 %v1694
        %2531 = vmatprep.subr.bf16.mxu0 0
        %2532 = vmatpush1.bf16.msra.mxu0 %v1703
        %2533 = vmatprep.subr.bf16.mxu0 0
        %2534 = vmatpush1.bf16.msra.mxu0 %v1712
        %2535 = vmatprep.subr.bf16.mxu0 0
        %2536 = vmatpush1.bf16.msra.mxu0 %v1721
        %2537 = vmatprep.subr.bf16.mxu0 0
        %2538 = vmatpush1.bf16.msra.mxu0 %v1730
        %2539 = vmatprep.mubr.bf16.mxu0 %v684
        %2540 = vmatmul.mubr.bf16.gmra.mrb[0].mxu0 %v683
        %v2541 = vpop.f32.mrb[0].mxu0
        %v2542 = vadd.f32 0.0, %v2541
        %v2543 = vpop.f32.mrb[0].mxu0
        %v2544 = vpop.f32.mrb[0].mxu0
        %v2545 = vadd.f32 0.0, %v2544
        %v2546 = vpop.f32.mrb[0].mxu0
        %2547 = vdwg.mxu0
        %2548 = vmatprep.subr.bf16.mxu0 0
        %2549 = vmatpush1.bf16.msra.mxu0 %v1739
        %2550 = vmatprep.subr.bf16.mxu0 0
        %2551 = vmatpush1.bf16.msra.mxu0 %v1748
        %2552 = vmatprep.subr.bf16.mxu0 0
        %2553 = vmatpush1.bf16.msra.mxu0 %v1757
        %2554 = vmatprep.subr.bf16.mxu0 0
        %2555 = vmatpush1.bf16.msra.mxu0 %v1766
        %2556 = vmatprep.subr.bf16.mxu0 0
        %2557 = vmatpush1.bf16.msra.mxu0 %v1775
        %2558 = vmatprep.subr.bf16.mxu0 0
        %2559 = vmatpush1.bf16.msra.mxu0 %v1784
        %2560 = vmatprep.subr.bf16.mxu0 0
        %2561 = vmatpush1.bf16.msra.mxu0 %v1793
        %2562 = vmatprep.subr.bf16.mxu0 0
        %2563 = vmatpush1.bf16.msra.mxu0 %v1802
        %2564 = vmatprep.subr.bf16.mxu0 0
        %2565 = vmatpush1.bf16.msra.mxu0 %v1811
        %2566 = vmatprep.subr.bf16.mxu0 0
        %2567 = vmatpush1.bf16.msra.mxu0 %v1820
        %2568 = vmatprep.subr.bf16.mxu0 0
        %2569 = vmatpush1.bf16.msra.mxu0 %v1829
        %2570 = vmatprep.subr.bf16.mxu0 0
        %2571 = vmatpush1.bf16.msra.mxu0 %v1838
        %2572 = vmatprep.subr.bf16.mxu0 0
        %2573 = vmatpush1.bf16.msra.mxu0 %v1847
        %2574 = vmatprep.subr.bf16.mxu0 0
        %2575 = vmatpush1.bf16.msra.mxu0 %v1856
        %2576 = vmatprep.subr.bf16.mxu0 0
        %2577 = vmatpush1.bf16.msra.mxu0 %v1865
        %2578 = vmatprep.subr.bf16.mxu0 0
        %2579 = vmatpush1.bf16.msra.mxu0 %v1874
        %2580 = vmatprep.mubr.bf16.mxu0 %v686
        %2581 = vmatmul.mubr.bf16.gmra.mrb[0].mxu0 %v685
        %v2582 = vpop.f32.mrb[0].mxu0
        %v2583 = vadd.f32 %v2542, %v2582
        %v2584 = vpop.f32.mrb[0].mxu0
        %v2585 = vpop.f32.mrb[0].mxu0
        %v2586 = vadd.f32 %v2545, %v2585
        %v2587 = vpop.f32.mrb[0].mxu0
        %2588 = vdwg.mxu0
        %v2589 = vadd.f32 %v329, %v2241
        %v2590 = vadd.f32 %v330, %v2243
        %v2591 = vadd.f32 %v331, %v2327
        %v2592 = vadd.f32 %v332, %v2329
        %v2593 = vadd.f32 %v333, %v2413
        %v2594 = vadd.f32 %v334, %v2415
        %v2595 = vadd.f32 %v335, %v2499
        %v2596 = vadd.f32 %v336, %v2501
        %v2597 = vadd.f32 %v337, %v2583
        %v2598 = vadd.f32 %v338, %v2245
        %v2599 = vadd.f32 %v339, %v2247
        %v2600 = vadd.f32 %v340, %v2331
        %v2601 = vadd.f32 %v341, %v2333
        %v2602 = vadd.f32 %v342, %v2417
        %v2603 = vadd.f32 %v343, %v2419
        %v2604 = vadd.f32 %v344, %v2503
        %v2605 = vadd.f32 %v345, %v2505
        %v2606 = vadd.f32 %v346, %v2586
        %2607 = vst [vmem:[#allocation2] sm:$0xff] %v2589
        %2608 = vst [vmem:[#allocation2 + $0x8] sm:$0xff] %v2590
        %2609 = vst [vmem:[#allocation2 + $0x10] sm:$0xff] %v2591
        %2610 = vst [vmem:[#allocation2 + $0x18] sm:$0xff] %v2592
        %2611 = vst [vmem:[#allocation2 + $0x20] sm:$0xff] %v2593
        %2612 = vst [vmem:[#allocation2 + $0x28] sm:$0xff] %v2594
        %2613 = vst [vmem:[#allocation2 + $0x30] sm:$0xff] %v2595
        %2614 = vst [vmem:[#allocation2 + $0x38] sm:$0xff] %v2596
        %2615 = vst [vmem:[#allocation2 + $0x40] sm:$0xff] %v2597
        %2616 = vst [vmem:[#allocation2 + $0x48] sm:$0xff] %v2598
        %2617 = vst [vmem:[#allocation2 + $0x50] sm:$0xff] %v2599
        %2618 = vst [vmem:[#allocation2 + $0x58] sm:$0xff] %v2600
        %2619 = vst [vmem:[#allocation2 + $0x60] sm:$0xff] %v2601
        %2620 = vst [vmem:[#allocation2 + $0x68] sm:$0xff] %v2602
        %2621 = vst [vmem:[#allocation2 + $0x70] sm:$0xff] %v2603
        %2622 = vst [vmem:[#allocation2 + $0x78] sm:$0xff] %v2604
        %2623 = vst [vmem:[#allocation2 + $0x80] sm:$0xff] %v2605
        %2624 = vst [vmem:[#allocation2 + $0x88] sm:$0xff] %v2606
        %p2625 = scmp.eq.s32.totalorder %s25, 4
        // Predicated region
        $region68: #{qdiscriminator_p_forward.8} parent=50 // pred_check
          %p2626 = pneg %p2625
        $region69: #{qdiscriminator_p_forward.8} parent=50 // pred_check_branch
          %2628 = sbr.rel (%p2626) target = $region71
        $region70: #{qdiscriminator_p_forward.8} parent=50 // pred_region
          %v2629 = vld [vmem:[#allocation2] sm:$0xff]
          %v2630 = vld [vmem:[#allocation2 + $0x8] sm:$0xff]
          %v2631 = vld [vmem:[#allocation2 + $0x10] sm:$0xff]
          %v2632 = vld [vmem:[#allocation2 + $0x18] sm:$0xff]
          %v2633 = vld [vmem:[#allocation2 + $0x20] sm:$0xff]
          %v2634 = vld [vmem:[#allocation2 + $0x28] sm:$0xff]
          %v2635 = vld [vmem:[#allocation2 + $0x30] sm:$0xff]
          %v2636 = vld [vmem:[#allocation2 + $0x38] sm:$0xff]
          %v2637 = vld [vmem:[#allocation2 + $0x40] sm:$0xff]
          %v2638 = vld [vmem:[#allocation2 + $0x48] sm:$0xff]
          %v2639 = vld [vmem:[#allocation2 + $0x50] sm:$0xff]
          %v2640 = vld [vmem:[#allocation2 + $0x58] sm:$0xff]
          %v2641 = vld [vmem:[#allocation2 + $0x60] sm:$0xff]
          %v2642 = vld [vmem:[#allocation2 + $0x68] sm:$0xff]
          %v2643 = vld [vmem:[#allocation2 + $0x70] sm:$0xff]
          %v2644 = vld [vmem:[#allocation2 + $0x78] sm:$0xff]
          %v2645 = vld [vmem:[#allocation2 + $0x80] sm:$0xff]
          %v2646 = vld [vmem:[#allocation2 + $0x88] sm:$0xff]
          %v2647 = vld [vmem:[#allocation6] sm:$0xff]
          %v2648 = vld [vmem:[#allocation6 + $0x8] sm:$0x1]
          %v2651 = vlaneseq
          %v2652 = vshrl.u32 %v2651, 7
          %v2653 = vsub.s32 0, %v2652
          %v2654 = vrot.slane %v2647, %v2653
          %v2655 = vlaneseq
          %v2656 = vshrl.u32 %v2655, 7
          %v2657 = vsub.s32 1, %v2656
          %v2658 = vrot.slane %v2647, %v2657
          %v2659 = vlaneseq
          %v2660 = vshrl.u32 %v2659, 7
          %v2661 = vsub.s32 2, %v2660
          %v2662 = vrot.slane %v2647, %v2661
          %v2663 = vlaneseq
          %v2664 = vshrl.u32 %v2663, 7
          %v2665 = vsub.s32 3, %v2664
          %v2666 = vrot.slane %v2647, %v2665
          %v2667 = vlaneseq
          %v2668 = vshrl.u32 %v2667, 7
          %v2669 = vsub.s32 4, %v2668
          %v2670 = vrot.slane %v2647, %v2669
          %v2671 = vlaneseq
          %v2672 = vshrl.u32 %v2671, 7
          %v2673 = vsub.s32 5, %v2672
          %v2674 = vrot.slane %v2647, %v2673
          %v2675 = vlaneseq
          %v2676 = vshrl.u32 %v2675, 7
          %v2677 = vsub.s32 6, %v2676
          %v2678 = vrot.slane %v2647, %v2677
          %v2679 = vlaneseq
          %v2680 = vshrl.u32 %v2679, 7
          %v2681 = vsub.s32 7, %v2680
          %v2682 = vrot.slane %v2647, %v2681
          %v2683 = vlaneseq
          %v2684 = vshrl.u32 %v2683, 7
          %v2685 = vsub.s32 0, %v2684
          %v2686 = vrot.slane %v2648, %v2685
          %v2696 = vadd.f32 %v2629, %v2654
          %v2697 = vadd.f32 %v2630, %v2658
          %v2698 = vadd.f32 %v2631, %v2662
          %v2699 = vadd.f32 %v2632, %v2666
          %v2700 = vadd.f32 %v2633, %v2670
          %v2701 = vadd.f32 %v2634, %v2674
          %v2702 = vadd.f32 %v2635, %v2678
          %v2703 = vadd.f32 %v2636, %v2682
          %v2704 = vadd.f32 %v2637, %v2686
          %v2705 = vadd.f32 %v2638, %v2654
          %v2706 = vadd.f32 %v2639, %v2658
          %v2707 = vadd.f32 %v2640, %v2662
          %v2708 = vadd.f32 %v2641, %v2666
          %v2709 = vadd.f32 %v2642, %v2670
          %v2710 = vadd.f32 %v2643, %v2674
          %v2711 = vadd.f32 %v2644, %v2678
          %v2712 = vadd.f32 %v2645, %v2682
          %v2713 = vadd.f32 %v2646, %v2686
          %vm2714 = vcmp.ge.f32.partialorder %v2696, 0.0
          %vm2715 = vcmp.ge.f32.partialorder %v2697, 0.0
          %vm2716 = vcmp.ge.f32.partialorder %v2698, 0.0
          %vm2717 = vcmp.ge.f32.partialorder %v2699, 0.0
          %vm2718 = vcmp.ge.f32.partialorder %v2700, 0.0
          %vm2719 = vcmp.ge.f32.partialorder %v2701, 0.0
          %vm2720 = vcmp.ge.f32.partialorder %v2702, 0.0
          %vm2721 = vcmp.ge.f32.partialorder %v2703, 0.0
          %vm2722 = vcmp.ge.f32.partialorder %v2704, 0.0
          %vm2723 = vcmp.ge.f32.partialorder %v2705, 0.0
          %vm2724 = vcmp.ge.f32.partialorder %v2706, 0.0
          %vm2725 = vcmp.ge.f32.partialorder %v2707, 0.0
          %vm2726 = vcmp.ge.f32.partialorder %v2708, 0.0
          %vm2727 = vcmp.ge.f32.partialorder %v2709, 0.0
          %vm2728 = vcmp.ge.f32.partialorder %v2710, 0.0
          %vm2729 = vcmp.ge.f32.partialorder %v2711, 0.0
          %vm2730 = vcmp.ge.f32.partialorder %v2712, 0.0
          %vm2731 = vcmp.ge.f32.partialorder %v2713, 0.0
          %v2732 = vmul.f32 %v2696, 0.1
          %v2733 = vmul.f32 %v2697, 0.1
          %v2734 = vmul.f32 %v2698, 0.1
          %v2735 = vmul.f32 %v2699, 0.1
          %v2736 = vmul.f32 %v2700, 0.1
          %v2737 = vmul.f32 %v2701, 0.1
          %v2738 = vmul.f32 %v2702, 0.1
          %v2739 = vmul.f32 %v2703, 0.1
          %v2740 = vmul.f32 %v2704, 0.1
          %v2741 = vmul.f32 %v2705, 0.1
          %v2742 = vmul.f32 %v2706, 0.1
          %v2743 = vmul.f32 %v2707, 0.1
          %v2744 = vmul.f32 %v2708, 0.1
          %v2745 = vmul.f32 %v2709, 0.1
          %v2746 = vmul.f32 %v2710, 0.1
          %v2747 = vmul.f32 %v2711, 0.1
          %v2748 = vmul.f32 %v2712, 0.1
          %v2749 = vmul.f32 %v2713, 0.1
          %v2750 = vsel %vm2714, %v2696, %v2732
          %v2751 = vsel %vm2715, %v2697, %v2733
          %v2752 = vsel %vm2716, %v2698, %v2734
          %v2753 = vsel %vm2717, %v2699, %v2735
          %v2754 = vsel %vm2718, %v2700, %v2736
          %v2755 = vsel %vm2719, %v2701, %v2737
          %v2756 = vsel %vm2720, %v2702, %v2738
          %v2757 = vsel %vm2721, %v2703, %v2739
          %v2758 = vsel %vm2722, %v2704, %v2740
          %v2759 = vsel %vm2723, %v2705, %v2741
          %v2760 = vsel %vm2724, %v2706, %v2742
          %v2761 = vsel %vm2725, %v2707, %v2743
          %v2762 = vsel %vm2726, %v2708, %v2744
          %v2763 = vsel %vm2727, %v2709, %v2745
          %v2764 = vsel %vm2728, %v2710, %v2746
          %v2765 = vsel %vm2729, %v2711, %v2747
          %v2766 = vsel %vm2730, %v2712, %v2748
          %v2767 = vsel %vm2731, %v2713, %v2749
          %2768 = vst [vmem:[%s303] sm:$0xff] %v2750
          %2769 = vst [vmem:[%s303 + $0x8] sm:$0xff] %v2751
          %2770 = vst [vmem:[%s303 + $0x10] sm:$0xff] %v2752
          %2771 = vst [vmem:[%s303 + $0x18] sm:$0xff] %v2753
          %2772 = vst [vmem:[%s303 + $0x20] sm:$0xff] %v2754
          %2773 = vst [vmem:[%s303 + $0x28] sm:$0xff] %v2755
          %2774 = vst [vmem:[%s303 + $0x30] sm:$0xff] %v2756
          %2775 = vst [vmem:[%s303 + $0x38] sm:$0xff] %v2757
          %2776 = vst [vmem:[%s303 + $0x40] sm:$0xff] %v2758
          %2777 = vst [vmem:[%s303 + $0x48] sm:$0xff] %v2759
          %2778 = vst [vmem:[%s303 + $0x50] sm:$0xff] %v2760
          %2779 = vst [vmem:[%s303 + $0x58] sm:$0xff] %v2761
          %2780 = vst [vmem:[%s303 + $0x60] sm:$0xff] %v2762
          %2781 = vst [vmem:[%s303 + $0x68] sm:$0xff] %v2763
          %2782 = vst [vmem:[%s303 + $0x70] sm:$0xff] %v2764
          %2783 = vst [vmem:[%s303 + $0x78] sm:$0xff] %v2765
          %2784 = vst [vmem:[%s303 + $0x80] sm:$0xff] %v2766
          %2785 = vst [vmem:[%s303 + $0x88] sm:$0xff] %v2767
        $region71: #{qdiscriminator_p_forward.8} parent=50 // pred_fallthru
          _
        %s2786 = smul.u32 2, %s23
        %s2787 = smul.u32 9, %s24
        %p2788 = scmp.lt.s32.totalorder %s2786, 1
        %s2789 = scalar_select %p2788, %s2786, 1
        %p2790 = scmp.lt.s32.totalorder %s2787, 8
        %s2791 = scalar_select %p2790, %s2787, 8
        %s2792 = smul.addr %s2789, 9
        %s2793 = sadd.s32 %s2791, %s2792
        %s2794 = smul.addr %s2793, 8
        %s2795 = scalar_lea.vmem %s3, %s2794
        // Predicated region
        $region72: #{qdiscriminator_p_forward.8} parent=50 // pred_check
          %p2796 = pneg %p139
        $region73: #{qdiscriminator_p_forward.8} parent=50 // pred_check_branch
          %2798 = sbr.rel (%p2796) target = $region75
        $region74: #{qdiscriminator_p_forward.8} parent=50 // pred_region
          %s2799 = smul.u32 2, %s23
          %s2800 = smul.u32 9, %s24
        $region75: #{qdiscriminator_p_forward.8} parent=50 // pred_fallthru
          _
        // Predicated region
        $region76: #{qdiscriminator_p_forward.8} parent=50 // pred_check
          %p2801 = pneg %p139
        $region77: #{qdiscriminator_p_forward.8} parent=50 // pred_check_branch
          %2803 = sbr.rel (%p2801) target = $region79
        $region78: #{qdiscriminator_p_forward.8} parent=50 // pred_region
          %s2804 = smul.u32 2, %s23
          %s2805 = smul.u32 9, %s24
          %p2806 = scmp.lt.s32.totalorder %s2804, 1
          %s2807 = scalar_select %p2806, %s2804, 1
          %p2808 = scmp.lt.s32.totalorder %s2805, 8
          %s2809 = scalar_select %p2808, %s2805, 8
          %s2810 = smul.addr %s2807, 9
          %s2811 = sadd.s32 %s2809, %s2810
          %s2812 = smul.addr %s2811, 8
          %s2813 = scalar_lea.vmem %s3, %s2812
        $region79: #{qdiscriminator_p_forward.8} parent=50 // pred_fallthru
          _
      $region51: #{qdiscriminator_p_forward.8} parent=5 // pred_fallthru
        _
      %p2814 = scmp.le.s32.totalorder 2, %s13
      // Predicated region
      $region80: #{qdiscriminator_p_forward.8} parent=5 // pred_check
        %p2815 = pneg %p2814
      $region81: #{qdiscriminator_p_forward.8} parent=5 // pred_check_branch
        %2817 = sbr.rel (%p2815) target = $region83
      $region82: #{qdiscriminator_p_forward.8} parent=5 // pred_region
        %s2818 = ssub.s32 %s13, 2
      $region83: #{qdiscriminator_p_forward.8} parent=5 // pred_fallthru
        _
    $region6: #{qdiscriminator_p_forward.8} parent=1 // loop_footer
      %s17 = sadd.s32 1, %s13
    $region7: #{qdiscriminator_p_forward.8} parent=1 // loop_footer_branch
      %12 = sbr.rel target = $region3
    $region8: #{qdiscriminator_p_forward.8} parent=1 // loop_exit
      _
    %2819 = vsyncpa [#allocation5], 1
    %s2820 = scalar_lea.sflag [#allocation5], 1
    %2821 = vsyncpa %s2820, 1
    %2822 = vsyncpa [#allocation7], 1

// kernel: qdiscriminator_p_forward.9
$region0: #{qdiscriminator_p_forward.9}
  #allocation0 [shape = 'u32[]', space=smem, size = 0x4, offset = 0x4, fixed_abs, tag = 'smem constant byte address 0x4 - core index']
  #allocation1 [shape = 'u32[144,128]{1,0:T(1,128)}', space=vmem, size = 0x12000, scoped, tag = 'internal scratch']
  #allocation2 [shape = 'f32[16,1152]{1,0:T(8,128)}', space=vmem, size = 0x12000, scoped, tag = 'scratch operand']
  %s0 = inlined_call_operand.vmem [shape: bf16[16,5632], index: 0, kind: input, shape index: {}]
  %s1 = inlined_call_operand.hbm [shape: bf16[5632,1152], index: 1, kind: input, shape index: {}]
  %s2 = inlined_call_operand.hbm [shape: f32[1,1152], index: 2, kind: input, shape index: {}]
  %s3 = inlined_call_operand.vmem [shape: f32[16,1152], index: 3, kind: output, shape index: {}]
  %s4 = sld [smem:[#allocation0]]
  $region84: #{qdiscriminator_p_forward.9} parent=0
    _
  %s6 = ssub.s32 1, %s4
  %s7 = scalar_select 0, %s6, %s4
  $region1: #{qdiscriminator_p_forward.9} parent=0
    #allocation3 [shape = 'u8[32768]{0}', space=vmem, size = 0x8000, scoped, tag = 'input window, operand 0']
    #allocation4 [shape = 'u8[2359296]{0}', space=vmem, size = 0x240000, scoped, tag = 'input window, operand 1']
    #allocation5 [shape = 's32[2]{0}', space=sflag, size = 0x8, scoped, tag = 'scoped memory for qdiscriminator_p_forward.9']
    #allocation6 [shape = 'u8[4608]{0}', space=vmem, size = 0x1400, scoped, tag = 'input window, operand 2, single buffered']
    #allocation7 [shape = 's32[1]{0}', space=sflag, size = 0x4, scoped, tag = 'scoped memory for qdiscriminator_p_forward.9']
    %8 = vsyncpa [#allocation5], 0
    %s9 = scalar_lea.sflag [#allocation5], 1
    %10 = vsyncpa %s9, 0
    %11 = vsyncpa [#allocation7], 0
    loop: start=0, step=1, limit=13
    $region2: #{qdiscriminator_p_forward.9} parent=1 // loop_pre_header
      _
    $region3: #{qdiscriminator_p_forward.9} parent=1 // loop_header
      %s13 = sphi 0, %s17
      %p14 = scmp.ge.s32.totalorder %s13, 13
      %s20 = sphi 0, %s39
      %s21 = sphi 0, %s35
      %s22 = sphi 0, %s31
      %s23 = sphi 0, %s20
      %s24 = sphi 0, %s21
      %s25 = sphi 0, %s22
      %s26 = sphi 0, %s23
      %s27 = sphi 0, %s24
      %s28 = sphi 0, %s25
      %s44 = sphi 0, %s46
      %s47 = sphi 0, %s44
      %s48 = sphi 0, %s47
      %s64 = sphi 0, %s48
      %s72 = sphi 0, %s74
      %s75 = sphi 0, %s72
      %s76 = sphi 0, %s75
      %s92 = sphi 0, %s76
      %s98 = sphi 0, %s100
      %s101 = sphi 0, %s98
      %s102 = sphi 0, %s101
      %s118 = sphi 0, %s102
      %s126 = sphi 0, %s128
      %s129 = sphi 0, %s126
      %s130 = sphi 0, %s129
      %s146 = sphi 0, %s130
    $region4: #{qdiscriminator_p_forward.9} parent=1 // loop_header_branch
      %16 = sbr.rel (%p14) target = $region8
    $region5: #{qdiscriminator_p_forward.9} parent=1 // loop_body
      %s18 = ssub.s32 %s13, 1
      %s19 = ssub.s32 %s13, 2
      %s29 = sadd.s32 1, %s22
      %p30 = scmp.ge.s32.totalorder %s29, 11
      %s31 = scalar_select %p30, 0, %s29
      %s32 = sadd.s32 1, %s21
      %s33 = scalar_select %p30, %s32, %s21
      %p34 = scmp.ge.s32.totalorder %s33, 1
      %s35 = scalar_select %p34, 0, %s33
      %s36 = sadd.s32 1, %s20
      %s37 = scalar_select %p34, %s36, %s20
      %p38 = scmp.ge.s32.totalorder %s37, 1
      %s39 = scalar_select %p38, 0, %s37
      %s40 = ssub.s32 %s20, %s39
      %s41 = ssub.s32 %s22, %s31
      %s42 = sor.u32 %s40, %s41
      %p43 = scmp.eq.s32.totalorder %s42, 0
      %s45 = sadd.s32 %s44, 1
      %s46 = scalar_select %p43, %s44, %s45
      %p49 = pneg %p43
      %p50 = scmp.eq.s32.totalorder %s13, 10
      %p51 = por %p49, %p50
      %p52 = scmp.ne.s32.totalorder %s44, %s47
      %p53 = scmp.eq.s32.totalorder %s13, 0
      %p54 = por %p52, %p53
      %p55 = scmp.ne.s32.totalorder %s44, %s47
      %p56 = scmp.eq.s32.totalorder %s18, 10
      %p57 = por %p55, %p56
      %p58 = scmp.ne.s32.totalorder %s47, %s48
      %p59 = scmp.eq.s32.totalorder %s18, 0
      %p60 = por %p58, %p59
      %p61 = scmp.ne.s32.totalorder %s47, %s48
      %p62 = scmp.eq.s32.totalorder %s19, 10
      %p63 = por %p61, %p62
      %p65 = scmp.ne.s32.totalorder %s48, %s64
      %p66 = scmp.eq.s32.totalorder %s19, 0
      %p67 = por %p65, %p66
      %s68 = ssub.s32 %s22, %s31
      %s69 = ssub.s32 %s21, %s35
      %s70 = sor.u32 %s68, %s69
      %p71 = scmp.eq.s32.totalorder %s70, 0
      %s73 = sadd.s32 %s72, 1
      %s74 = scalar_select %p71, %s72, %s73
      %p77 = pneg %p71
      %p78 = scmp.eq.s32.totalorder %s13, 10
      %p79 = por %p77, %p78
      %p80 = scmp.ne.s32.totalorder %s72, %s75
      %p81 = scmp.eq.s32.totalorder %s13, 0
      %p82 = por %p80, %p81
      %p83 = scmp.ne.s32.totalorder %s72, %s75
      %p84 = scmp.eq.s32.totalorder %s18, 10
      %p85 = por %p83, %p84
      %p86 = scmp.ne.s32.totalorder %s75, %s76
      %p87 = scmp.eq.s32.totalorder %s18, 0
      %p88 = por %p86, %p87
      %p89 = scmp.ne.s32.totalorder %s75, %s76
      %p90 = scmp.eq.s32.totalorder %s19, 10
      %p91 = por %p89, %p90
      %p93 = scmp.ne.s32.totalorder %s76, %s92
      %p94 = scmp.eq.s32.totalorder %s19, 0
      %p95 = por %p93, %p94
      %s96 = ssub.s32 %s21, %s35
      %p97 = scmp.eq.s32.totalorder %s96, 0
      %s99 = sadd.s32 %s98, 1
      %s100 = scalar_select %p97, %s98, %s99
      %p103 = pneg %p97
      %p104 = scmp.eq.s32.totalorder %s13, 10
      %p105 = por %p103, %p104
      %p106 = scmp.ne.s32.totalorder %s98, %s101
      %p107 = scmp.eq.s32.totalorder %s13, 0
      %p108 = por %p106, %p107
      %p109 = scmp.ne.s32.totalorder %s98, %s101
      %p110 = scmp.eq.s32.totalorder %s18, 10
      %p111 = por %p109, %p110
      %p112 = scmp.ne.s32.totalorder %s101, %s102
      %p113 = scmp.eq.s32.totalorder %s18, 0
      %p114 = por %p112, %p113
      %p115 = scmp.ne.s32.totalorder %s101, %s102
      %p116 = scmp.eq.s32.totalorder %s19, 10
      %p117 = por %p115, %p116
      %p119 = scmp.ne.s32.totalorder %s102, %s118
      %p120 = scmp.eq.s32.totalorder %s19, 0
      %p121 = por %p119, %p120
      %s122 = ssub.s32 %s20, %s39
      %s123 = ssub.s32 %s21, %s35
      %s124 = sor.u32 %s122, %s123
      %p125 = scmp.eq.s32.totalorder %s124, 0
      %s127 = sadd.s32 %s126, 1
      %s128 = scalar_select %p125, %s126, %s127
      %p131 = pneg %p125
      %p132 = scmp.eq.s32.totalorder %s13, 10
      %p133 = por %p131, %p132
      %p134 = scmp.ne.s32.totalorder %s126, %s129
      %p135 = scmp.eq.s32.totalorder %s13, 0
      %p136 = por %p134, %p135
      %p137 = scmp.ne.s32.totalorder %s126, %s129
      %p138 = scmp.eq.s32.totalorder %s18, 10
      %p139 = por %p137, %p138
      %p140 = scmp.ne.s32.totalorder %s129, %s130
      %p141 = scmp.eq.s32.totalorder %s18, 0
      %p142 = por %p140, %p141
      %p143 = scmp.ne.s32.totalorder %s129, %s130
      %p144 = scmp.eq.s32.totalorder %s19, 10
      %p145 = por %p143, %p144
      %p147 = scmp.ne.s32.totalorder %s130, %s146
      %p148 = scmp.eq.s32.totalorder %s19, 0
      %p149 = por %p147, %p148
      %p150 = scmp.le.s32.totalorder 1, %s13
      %p151 = scmp.lt.s32.totalorder %s13, 12
      %p152 = pnand %p150, %p151
      %p153 = pneg %p152
      // Predicated region
      $region9: #{qdiscriminator_p_forward.9} parent=5 // pred_check
        _
      $region10: #{qdiscriminator_p_forward.9} parent=5 // pred_check_branch
        %155 = sbr.rel (%p152) target = $region12
      $region11: #{qdiscriminator_p_forward.9} parent=5 // pred_region
        %s156 = ssub.s32 %s13, 1
        // Predicated region
        $region13: #{qdiscriminator_p_forward.9} parent=11 // pred_check
          %p157 = pneg %p114
        $region14: #{qdiscriminator_p_forward.9} parent=11 // pred_check_branch
          %159 = sbr.rel (%p157) target = $region16
        $region15: #{qdiscriminator_p_forward.9} parent=11 // pred_region
          %s160 = smul.u32 9, %s24
          %s162 = ssub.s32 144, 144
          %163 = vsyncadd [#allocation7], %s162
          %s164 = smul.addr %s160, 16
          %s165 = scalar_lea.hbm %s2, %s164
          %s167 = sshll.u32 [#allocation6], 4
          %s168 = int_to_ptr.vmem [resolvable:$true] %s167
          %170 = dma.hbm_to_vmem [thread:$0]  %s165, 144, %s168, [#allocation7]
        $region16: #{qdiscriminator_p_forward.9} parent=11 // pred_fallthru
          _
      $region12: #{qdiscriminator_p_forward.9} parent=5 // pred_fallthru
        _
      %p171 = scmp.lt.s32.totalorder %s13, 11
      // Predicated region
      $region17: #{qdiscriminator_p_forward.9} parent=5 // pred_check
        %p172 = pneg %p171
      $region18: #{qdiscriminator_p_forward.9} parent=5 // pred_check_branch
        %174 = sbr.rel (%p172) target = $region20
      $region19: #{qdiscriminator_p_forward.9} parent=5 // pred_region
        // Predicated region
        $region21: #{qdiscriminator_p_forward.9} parent=19 // pred_check
          %p175 = pneg %p54
        $region22: #{qdiscriminator_p_forward.9} parent=19 // pred_check_branch
          %177 = sbr.rel (%p175) target = $region24
        $region23: #{qdiscriminator_p_forward.9} parent=19 // pred_region
          %s178 = sand.u32 %s44, 1
          %s179 = sand.u32 %s44, 1
          %s180 = smul.addr %s179, 32
          %s181 = scalar_lea.vmem [#allocation3], %s180
          %s182 = smul.u32 2, %s20
          %s183 = smul.u32 4, %s22
          %s184 = smul.addr %s182, 44
          %s185 = sadd.s32 %s183, %s184
          %s186 = smul.addr %s185, 4
          %s187 = scalar_lea.vmem %s0, %s186
          // Predicated region
          $region25: #{qdiscriminator_p_forward.9} parent=23 // pred_check
            _
          $region26: #{qdiscriminator_p_forward.9} parent=23 // pred_check_branch
            %189 = sbr.rel (0) target = $region28
          $region27: #{qdiscriminator_p_forward.9} parent=23 // pred_region
            // Predicated region
            $region29: #{qdiscriminator_p_forward.9} parent=27 // pred_check
              _
            $region30: #{qdiscriminator_p_forward.9} parent=27 // pred_check_branch
              %191 = sbr.rel (0) target = $region32
            $region31: #{qdiscriminator_p_forward.9} parent=27 // pred_region
              loop: start=0, step=1, limit=1
              $region33: #{qdiscriminator_p_forward.9} parent=31 // loop_pre_header
                _
              $region34: #{qdiscriminator_p_forward.9} parent=31 // loop_header
                %s193 = sphi 0, %s197
                %p194 = scmp.ge.s32.totalorder %s193, 1
                %s198 = sphi %s187, %s187
                %s199 = sphi %s181, %s181
              $region35: #{qdiscriminator_p_forward.9} parent=31 // loop_header_branch
                %196 = sbr.rel (%p194) target = $region39
              $region36: #{qdiscriminator_p_forward.9} parent=31 // loop_body
                %v200 = vld [vmem:[%s198] sm:$0xff]
                %201 = vst [vmem:[%s199] sm:$0xff] %v200
                %v202 = vld [vmem:[%s198 + $0x8] sm:$0xff]
                %203 = vst [vmem:[%s199 + $0x8] sm:$0xff] %v202
                %v204 = vld [vmem:[%s198 + $0xb0] sm:$0xff]
                %205 = vst [vmem:[%s199 + $0x10] sm:$0xff] %v204
                %v206 = vld [vmem:[%s198 + $0xb8] sm:$0xff]
                %207 = vst [vmem:[%s199 + $0x18] sm:$0xff] %v206
              $region37: #{qdiscriminator_p_forward.9} parent=31 // loop_footer
                %s197 = sadd.s32 1, %s193
              $region38: #{qdiscriminator_p_forward.9} parent=31 // loop_footer_branch
                %192 = sbr.rel target = $region34
              $region39: #{qdiscriminator_p_forward.9} parent=31 // loop_exit
                _
            $region32: #{qdiscriminator_p_forward.9} parent=27 // pred_fallthru
              _
            // Predicated region
            $region40: #{qdiscriminator_p_forward.9} parent=27 // pred_check
              _
            $region41: #{qdiscriminator_p_forward.9} parent=27 // pred_check_branch
              %209 = sbr.rel target = $region43
            $region42: #{qdiscriminator_p_forward.9} parent=27 // pred_region
              _
            $region43: #{qdiscriminator_p_forward.9} parent=27 // pred_fallthru
              _
          $region28: #{qdiscriminator_p_forward.9} parent=23 // pred_fallthru
            _
          %210 = vnop
        $region24: #{qdiscriminator_p_forward.9} parent=19 // pred_fallthru
          _
        // Predicated region
        $region44: #{qdiscriminator_p_forward.9} parent=19 // pred_check
          %p211 = pneg %p82
        $region45: #{qdiscriminator_p_forward.9} parent=19 // pred_check_branch
          %213 = sbr.rel (%p211) target = $region47
        $region46: #{qdiscriminator_p_forward.9} parent=19 // pred_region
          %s214 = sand.u32 %s72, 1
          %s215 = scalar_lea.sflag [#allocation5], %s214
          %s216 = sand.u32 %s72, 1
          %s217 = smul.addr %s216, 2304
          %s218 = scalar_lea.vmem [#allocation4], %s217
          %s219 = smul.u32 64, %s22
          %s220 = smul.u32 9, %s21
          %s222 = ssub.s32 36864, 36864
          %223 = vsyncadd %s215, %s222
          %s224 = smul.addr %s219, 9
          %s225 = sadd.s32 %s220, %s224
          %s226 = smul.addr %s225, 64
          %s227 = scalar_lea.hbm %s1, %s226
          %s228 = sshll.u32 %s218, 4
          %s229 = int_to_ptr.vmem [resolvable:$true] %s228
          %234 = dma.hbm_to_vmem [thread:$0]  %s227, 36864, %s229, %s215, 576, 576, 36
        $region47: #{qdiscriminator_p_forward.9} parent=19 // pred_fallthru
          _
      $region20: #{qdiscriminator_p_forward.9} parent=5 // pred_fallthru
        _
      %p235 = scmp.le.s32.totalorder 1, %s13
      %p236 = scmp.lt.s32.totalorder %s13, 12
      %p237 = pnand %p235, %p236
      %p238 = pneg %p237
      // Predicated region
      $region48: #{qdiscriminator_p_forward.9} parent=5 // pred_check
        _
      $region49: #{qdiscriminator_p_forward.9} parent=5 // pred_check_branch
        %240 = sbr.rel (%p237) target = $region51
      $region50: #{qdiscriminator_p_forward.9} parent=5 // pred_region
        %s241 = ssub.s32 %s13, 1
        %s242 = sand.u32 %s47, 1
        %s243 = sand.u32 %s47, 1
        %s244 = smul.addr %s243, 32
        %s245 = scalar_lea.vmem [#allocation3], %s244
        // Predicated region
        $region52: #{qdiscriminator_p_forward.9} parent=50 // pred_check
          %p246 = pneg %p60
        $region53: #{qdiscriminator_p_forward.9} parent=50 // pred_check_branch
          %248 = sbr.rel (%p246) target = $region55
        $region54: #{qdiscriminator_p_forward.9} parent=50 // pred_region
          _
        $region55: #{qdiscriminator_p_forward.9} parent=50 // pred_fallthru
          _
        %s249 = sand.u32 %s75, 1
        %s250 = scalar_lea.sflag [#allocation5], %s249
        %s251 = sand.u32 %s75, 1
        %s252 = smul.addr %s251, 2304
        %s253 = scalar_lea.vmem [#allocation4], %s252
        // Predicated region
        $region56: #{qdiscriminator_p_forward.9} parent=50 // pred_check
          %p254 = pneg %p88
        $region57: #{qdiscriminator_p_forward.9} parent=50 // pred_check_branch
          %256 = sbr.rel (%p254) target = $region59
        $region58: #{qdiscriminator_p_forward.9} parent=50 // pred_region
          %257 = dma.done %s250, 36864
        $region59: #{qdiscriminator_p_forward.9} parent=50 // pred_fallthru
          _
        // Predicated region
        $region60: #{qdiscriminator_p_forward.9} parent=50 // pred_check
          %p258 = pneg %p114
        $region61: #{qdiscriminator_p_forward.9} parent=50 // pred_check_branch
          %260 = sbr.rel (%p258) target = $region63
        $region62: #{qdiscriminator_p_forward.9} parent=50 // pred_region
          %261 = dma.done [#allocation7], 144
        $region63: #{qdiscriminator_p_forward.9} parent=50 // pred_fallthru
          _
        %s262 = sand.u32 %s47, 1
        %s263 = sand.u32 %s47, 1
        %s264 = smul.addr %s263, 32
        %s265 = scalar_lea.vmem [#allocation3], %s264
        %p266 = pneg %p60
        %p267 = pneg %p57
        %s268 = sand.u32 %s75, 1
        %s269 = scalar_lea.sflag [#allocation5], %s268
        %s270 = sand.u32 %s75, 1
        %s271 = smul.addr %s270, 2304
        %s272 = scalar_lea.vmem [#allocation4], %s271
        %p273 = pneg %p88
        %p274 = pneg %p85
        %p275 = pneg %p114
        %p276 = pneg %p111
        %p277 = pneg %p142
        %p278 = pneg %p139
        %s279 = smul.u32 2, %s23
        %s280 = smul.u32 9, %s24
        %p281 = scmp.lt.s32.totalorder %s279, 1
        %s282 = scalar_select %p281, %s279, 1
        %p283 = scmp.lt.s32.totalorder %s280, 8
        %s284 = scalar_select %p283, %s280, 8
        %s285 = smul.addr %s282, 9
        %s286 = sadd.s32 %s284, %s285
        %s287 = smul.addr %s286, 8
        %s288 = scalar_lea.vmem %s3, %s287
        %s289 = smul.u32 2, %s23
        %s290 = smul.u32 4, %s25
        %s291 = smul.u32 64, %s25
        %s292 = smul.u32 9, %s24
        %s293 = smul.u32 9, %s24
        %s294 = smul.u32 2, %s23
        %s295 = smul.u32 9, %s24
        %p296 = scmp.lt.s32.totalorder %s294, 1
        %s297 = scalar_select %p296, %s294, 1
        %p298 = scmp.lt.s32.totalorder %s295, 8
        %s299 = scalar_select %p298, %s295, 8
        %s300 = smul.addr %s297, 9
        %s301 = sadd.s32 %s299, %s300
        %s302 = smul.addr %s301, 8
        %s303 = scalar_lea.vmem %s3, %s302
        %s304 = smul.u32 2, %s23
        %s305 = smul.u32 9, %s24
        %p307 = scmp.eq.s32.totalorder %s25, 0
        // Predicated region
        $region64: #{qdiscriminator_p_forward.9} parent=50 // pred_check
          %p308 = pneg %p307
        $region65: #{qdiscriminator_p_forward.9} parent=50 // pred_check_branch
          %310 = sbr.rel (%p308) target = $region67
        $region66: #{qdiscriminator_p_forward.9} parent=50 // pred_region
          %311 = vst [vmem:[#allocation2] sm:$0xff] 0.0
          %312 = vst [vmem:[#allocation2 + $0x8] sm:$0xff] 0.0
          %313 = vst [vmem:[#allocation2 + $0x10] sm:$0xff] 0.0
          %314 = vst [vmem:[#allocation2 + $0x18] sm:$0xff] 0.0
          %315 = vst [vmem:[#allocation2 + $0x20] sm:$0xff] 0.0
          %316 = vst [vmem:[#allocation2 + $0x28] sm:$0xff] 0.0
          %317 = vst [vmem:[#allocation2 + $0x30] sm:$0xff] 0.0
          %318 = vst [vmem:[#allocation2 + $0x38] sm:$0xff] 0.0
          %319 = vst [vmem:[#allocation2 + $0x40] sm:$0xff] 0.0
          %320 = vst [vmem:[#allocation2 + $0x48] sm:$0xff] 0.0
          %321 = vst [vmem:[#allocation2 + $0x50] sm:$0xff] 0.0
          %322 = vst [vmem:[#allocation2 + $0x58] sm:$0xff] 0.0
          %323 = vst [vmem:[#allocation2 + $0x60] sm:$0xff] 0.0
          %324 = vst [vmem:[#allocation2 + $0x68] sm:$0xff] 0.0
          %325 = vst [vmem:[#allocation2 + $0x70] sm:$0xff] 0.0
          %326 = vst [vmem:[#allocation2 + $0x78] sm:$0xff] 0.0
          %327 = vst [vmem:[#allocation2 + $0x80] sm:$0xff] 0.0
          %328 = vst [vmem:[#allocation2 + $0x88] sm:$0xff] 0.0
        $region67: #{qdiscriminator_p_forward.9} parent=50 // pred_fallthru
          _
        %v329 = vld [vmem:[#allocation2] sm:$0xff]
        %v330 = vld [vmem:[#allocation2 + $0x8] sm:$0xff]
        %v331 = vld [vmem:[#allocation2 + $0x10] sm:$0xff]
        %v332 = vld [vmem:[#allocation2 + $0x18] sm:$0xff]
        %v333 = vld [vmem:[#allocation2 + $0x20] sm:$0xff]
        %v334 = vld [vmem:[#allocation2 + $0x28] sm:$0xff]
        %v335 = vld [vmem:[#allocation2 + $0x30] sm:$0xff]
        %v336 = vld [vmem:[#allocation2 + $0x38] sm:$0xff]
        %v337 = vld [vmem:[#allocation2 + $0x40] sm:$0xff]
        %v338 = vld [vmem:[#allocation2 + $0x48] sm:$0xff]
        %v339 = vld [vmem:[#allocation2 + $0x50] sm:$0xff]
        %v340 = vld [vmem:[#allocation2 + $0x58] sm:$0xff]
        %v341 = vld [vmem:[#allocation2 + $0x60] sm:$0xff]
        %v342 = vld [vmem:[#allocation2 + $0x68] sm:$0xff]
        %v343 = vld [vmem:[#allocation2 + $0x70] sm:$0xff]
        %v344 = vld [vmem:[#allocation2 + $0x78] sm:$0xff]
        %v345 = vld [vmem:[#allocation2 + $0x80] sm:$0xff]
        %v346 = vld [vmem:[#allocation2 + $0x88] sm:$0xff]
        %v347 = vld [vmem:[%s245] sm:$0xff]
        %v348 = vld [vmem:[%s245 + $0x8] sm:$0xff]
        %v349 = vld [vmem:[%s245 + $0x10] sm:$0xff]
        %v350 = vld [vmem:[%s245 + $0x18] sm:$0xff]
        %v351 = vld [vmem:[%s253] sm:$0xff]
        %v352 = vld [vmem:[%s253 + $0x8] sm:$0xff]
        %v353 = vld [vmem:[%s253 + $0x10] sm:$0xff]
        %v354 = vld [vmem:[%s253 + $0x18] sm:$0xff]
        %v355 = vld [vmem:[%s253 + $0x20] sm:$0xf]
        %v356 = vld [vmem:[%s253 + $0x24] sm:$0xff]
        %v357 = vld [vmem:[%s253 + $0x2c] sm:$0xff]
        %v358 = vld [vmem:[%s253 + $0x34] sm:$0xff]
        %v359 = vld [vmem:[%s253 + $0x3c] sm:$0xff]
        %v360 = vld [vmem:[%s253 + $0x44] sm:$0xf]
        %v361 = vld [vmem:[%s253 + $0x48] sm:$0xff]
        %v362 = vld [vmem:[%s253 + $0x50] sm:$0xff]
        %v363 = vld [vmem:[%s253 + $0x58] sm:$0xff]
        %v364 = vld [vmem:[%s253 + $0x60] sm:$0xff]
        %v365 = vld [vmem:[%s253 + $0x68] sm:$0xf]
        %v366 = vld [vmem:[%s253 + $0x6c] sm:$0xff]
        %v367 = vld [vmem:[%s253 + $0x74] sm:$0xff]
        %v368 = vld [vmem:[%s253 + $0x7c] sm:$0xff]
        %v369 = vld [vmem:[%s253 + $0x84] sm:$0xff]
        %v370 = vld [vmem:[%s253 + $0x8c] sm:$0xf]
        %v371 = vld [vmem:[%s253 + $0x90] sm:$0xff]
        %v372 = vld [vmem:[%s253 + $0x98] sm:$0xff]
        %v373 = vld [vmem:[%s253 + $0xa0] sm:$0xff]
        %v374 = vld [vmem:[%s253 + $0xa8] sm:$0xff]
        %v375 = vld [vmem:[%s253 + $0xb0] sm:$0xf]
        %v376 = vld [vmem:[%s253 + $0xb4] sm:$0xff]
        %v377 = vld [vmem:[%s253 + $0xbc] sm:$0xff]
        %v378 = vld [vmem:[%s253 + $0xc4] sm:$0xff]
        %v379 = vld [vmem:[%s253 + $0xcc] sm:$0xff]
        %v380 = vld [vmem:[%s253 + $0xd4] sm:$0xf]
        %v381 = vld [vmem:[%s253 + $0xd8] sm:$0xff]
        %v382 = vld [vmem:[%s253 + $0xe0] sm:$0xff]
        %v383 = vld [vmem:[%s253 + $0xe8] sm:$0xff]
        %v384 = vld [vmem:[%s253 + $0xf0] sm:$0xff]
        %v385 = vld [vmem:[%s253 + $0xf8] sm:$0xf]
        %v386 = vld [vmem:[%s253 + $0xfc] sm:$0xff]
        %v387 = vld [vmem:[%s253 + $0x104] sm:$0xff]
        %v388 = vld [vmem:[%s253 + $0x10c] sm:$0xff]
        %v389 = vld [vmem:[%s253 + $0x114] sm:$0xff]
        %v390 = vld [vmem:[%s253 + $0x11c] sm:$0xf]
        %v391 = vld [vmem:[%s253 + $0x120] sm:$0xff]
        %v392 = vld [vmem:[%s253 + $0x128] sm:$0xff]
        %v393 = vld [vmem:[%s253 + $0x130] sm:$0xff]
        %v394 = vld [vmem:[%s253 + $0x138] sm:$0xff]
        %v395 = vld [vmem:[%s253 + $0x140] sm:$0xf]
        %v396 = vld [vmem:[%s253 + $0x144] sm:$0xff]
        %v397 = vld [vmem:[%s253 + $0x14c] sm:$0xff]
        %v398 = vld [vmem:[%s253 + $0x154] sm:$0xff]
        %v399 = vld [vmem:[%s253 + $0x15c] sm:$0xff]
        %v400 = vld [vmem:[%s253 + $0x164] sm:$0xf]
        %v401 = vld [vmem:[%s253 + $0x168] sm:$0xff]
        %v402 = vld [vmem:[%s253 + $0x170] sm:$0xff]
        %v403 = vld [vmem:[%s253 + $0x178] sm:$0xff]
        %v404 = vld [vmem:[%s253 + $0x180] sm:$0xff]
        %v405 = vld [vmem:[%s253 + $0x188] sm:$0xf]
        %v406 = vld [vmem:[%s253 + $0x18c] sm:$0xff]
        %v407 = vld [vmem:[%s253 + $0x194] sm:$0xff]
        %v408 = vld [vmem:[%s253 + $0x19c] sm:$0xff]
        %v409 = vld [vmem:[%s253 + $0x1a4] sm:$0xff]
        %v410 = vld [vmem:[%s253 + $0x1ac] sm:$0xf]
        %v411 = vld [vmem:[%s253 + $0x1b0] sm:$0xff]
        %v412 = vld [vmem:[%s253 + $0x1b8] sm:$0xff]
        %v413 = vld [vmem:[%s253 + $0x1c0] sm:$0xff]
        %v414 = vld [vmem:[%s253 + $0x1c8] sm:$0xff]
        %v415 = vld [vmem:[%s253 + $0x1d0] sm:$0xf]
        %v416 = vld [vmem:[%s253 + $0x1d4] sm:$0xff]
        %v417 = vld [vmem:[%s253 + $0x1dc] sm:$0xff]
        %v418 = vld [vmem:[%s253 + $0x1e4] sm:$0xff]
        %v419 = vld [vmem:[%s253 + $0x1ec] sm:$0xff]
        %v420 = vld [vmem:[%s253 + $0x1f4] sm:$0xf]
        %v421 = vld [vmem:[%s253 + $0x1f8] sm:$0xff]
        %v422 = vld [vmem:[%s253 + $0x200] sm:$0xff]
        %v423 = vld [vmem:[%s253 + $0x208] sm:$0xff]
        %v424 = vld [vmem:[%s253 + $0x210] sm:$0xff]
        %v425 = vld [vmem:[%s253 + $0x218] sm:$0xf]
        %v426 = vld [vmem:[%s253 + $0x21c] sm:$0xff]
        %v427 = vld [vmem:[%s253 + $0x224] sm:$0xff]
        %v428 = vld [vmem:[%s253 + $0x22c] sm:$0xff]
        %v429 = vld [vmem:[%s253 + $0x234] sm:$0xff]
        %v430 = vld [vmem:[%s253 + $0x23c] sm:$0xf]
        %v431 = vld [vmem:[%s253 + $0x240] sm:$0xff]
        %v432 = vld [vmem:[%s253 + $0x248] sm:$0xff]
        %v433 = vld [vmem:[%s253 + $0x250] sm:$0xff]
        %v434 = vld [vmem:[%s253 + $0x258] sm:$0xff]
        %v435 = vld [vmem:[%s253 + $0x260] sm:$0xf]
        %v436 = vld [vmem:[%s253 + $0x264] sm:$0xff]
        %v437 = vld [vmem:[%s253 + $0x26c] sm:$0xff]
        %v438 = vld [vmem:[%s253 + $0x274] sm:$0xff]
        %v439 = vld [vmem:[%s253 + $0x27c] sm:$0xff]
        %v440 = vld [vmem:[%s253 + $0x284] sm:$0xf]
        %v441 = vld [vmem:[%s253 + $0x288] sm:$0xff]
        %v442 = vld [vmem:[%s253 + $0x290] sm:$0xff]
        %v443 = vld [vmem:[%s253 + $0x298] sm:$0xff]
        %v444 = vld [vmem:[%s253 + $0x2a0] sm:$0xff]
        %v445 = vld [vmem:[%s253 + $0x2a8] sm:$0xf]
        %v446 = vld [vmem:[%s253 + $0x2ac] sm:$0xff]
        %v447 = vld [vmem:[%s253 + $0x2b4] sm:$0xff]
        %v448 = vld [vmem:[%s253 + $0x2bc] sm:$0xff]
        %v449 = vld [vmem:[%s253 + $0x2c4] sm:$0xff]
        %v450 = vld [vmem:[%s253 + $0x2cc] sm:$0xf]
        %v451 = vld [vmem:[%s253 + $0x2d0] sm:$0xff]
        %v452 = vld [vmem:[%s253 + $0x2d8] sm:$0xff]
        %v453 = vld [vmem:[%s253 + $0x2e0] sm:$0xff]
        %v454 = vld [vmem:[%s253 + $0x2e8] sm:$0xff]
        %v455 = vld [vmem:[%s253 + $0x2f0] sm:$0xf]
        %v456 = vld [vmem:[%s253 + $0x2f4] sm:$0xff]
        %v457 = vld [vmem:[%s253 + $0x2fc] sm:$0xff]
        %v458 = vld [vmem:[%s253 + $0x304] sm:$0xff]
        %v459 = vld [vmem:[%s253 + $0x30c] sm:$0xff]
        %v460 = vld [vmem:[%s253 + $0x314] sm:$0xf]
        %v461 = vld [vmem:[%s253 + $0x318] sm:$0xff]
        %v462 = vld [vmem:[%s253 + $0x320] sm:$0xff]
        %v463 = vld [vmem:[%s253 + $0x328] sm:$0xff]
        %v464 = vld [vmem:[%s253 + $0x330] sm:$0xff]
        %v465 = vld [vmem:[%s253 + $0x338] sm:$0xf]
        %v466 = vld [vmem:[%s253 + $0x33c] sm:$0xff]
        %v467 = vld [vmem:[%s253 + $0x344] sm:$0xff]
        %v468 = vld [vmem:[%s253 + $0x34c] sm:$0xff]
        %v469 = vld [vmem:[%s253 + $0x354] sm:$0xff]
        %v470 = vld [vmem:[%s253 + $0x35c] sm:$0xf]
        %v471 = vld [vmem:[%s253 + $0x360] sm:$0xff]
        %v472 = vld [vmem:[%s253 + $0x368] sm:$0xff]
        %v473 = vld [vmem:[%s253 + $0x370] sm:$0xff]
        %v474 = vld [vmem:[%s253 + $0x378] sm:$0xff]
        %v475 = vld [vmem:[%s253 + $0x380] sm:$0xf]
        %v476 = vld [vmem:[%s253 + $0x384] sm:$0xff]
        %v477 = vld [vmem:[%s253 + $0x38c] sm:$0xff]
        %v478 = vld [vmem:[%s253 + $0x394] sm:$0xff]
        %v479 = vld [vmem:[%s253 + $0x39c] sm:$0xff]
        %v480 = vld [vmem:[%s253 + $0x3a4] sm:$0xf]
        %v481 = vld [vmem:[%s253 + $0x3a8] sm:$0xff]
        %v482 = vld [vmem:[%s253 + $0x3b0] sm:$0xff]
        %v483 = vld [vmem:[%s253 + $0x3b8] sm:$0xff]
        %v484 = vld [vmem:[%s253 + $0x3c0] sm:$0xff]
        %v485 = vld [vmem:[%s253 + $0x3c8] sm:$0xf]
        %v486 = vld [vmem:[%s253 + $0x3cc] sm:$0xff]
        %v487 = vld [vmem:[%s253 + $0x3d4] sm:$0xff]
        %v488 = vld [vmem:[%s253 + $0x3dc] sm:$0xff]
        %v489 = vld [vmem:[%s253 + $0x3e4] sm:$0xff]
        %v490 = vld [vmem:[%s253 + $0x3ec] sm:$0xf]
        %v491 = vld [vmem:[%s253 + $0x3f0] sm:$0xff]
        %v492 = vld [vmem:[%s253 + $0x3f8] sm:$0xff]
        %v493 = vld [vmem:[%s253 + $0x400] sm:$0xff]
        %v494 = vld [vmem:[%s253 + $0x408] sm:$0xff]
        %v495 = vld [vmem:[%s253 + $0x410] sm:$0xf]
        %v496 = vld [vmem:[%s253 + $0x414] sm:$0xff]
        %v497 = vld [vmem:[%s253 + $0x41c] sm:$0xff]
        %v498 = vld [vmem:[%s253 + $0x424] sm:$0xff]
        %v499 = vld [vmem:[%s253 + $0x42c] sm:$0xff]
        %v500 = vld [vmem:[%s253 + $0x434] sm:$0xf]
        %v501 = vld [vmem:[%s253 + $0x438] sm:$0xff]
        %v502 = vld [vmem:[%s253 + $0x440] sm:$0xff]
        %v503 = vld [vmem:[%s253 + $0x448] sm:$0xff]
        %v504 = vld [vmem:[%s253 + $0x450] sm:$0xff]
        %v505 = vld [vmem:[%s253 + $0x458] sm:$0xf]
        %v506 = vld [vmem:[%s253 + $0x45c] sm:$0xff]
        %v507 = vld [vmem:[%s253 + $0x464] sm:$0xff]
        %v508 = vld [vmem:[%s253 + $0x46c] sm:$0xff]
        %v509 = vld [vmem:[%s253 + $0x474] sm:$0xff]
        %v510 = vld [vmem:[%s253 + $0x47c] sm:$0xf]
        %v511 = vld [vmem:[%s253 + $0x480] sm:$0xff]
        %v512 = vld [vmem:[%s253 + $0x488] sm:$0xff]
        %v513 = vld [vmem:[%s253 + $0x490] sm:$0xff]
        %v514 = vld [vmem:[%s253 + $0x498] sm:$0xff]
        %v515 = vld [vmem:[%s253 + $0x4a0] sm:$0xf]
        %v516 = vld [vmem:[%s253 + $0x4a4] sm:$0xff]
        %v517 = vld [vmem:[%s253 + $0x4ac] sm:$0xff]
        %v518 = vld [vmem:[%s253 + $0x4b4] sm:$0xff]
        %v519 = vld [vmem:[%s253 + $0x4bc] sm:$0xff]
        %v520 = vld [vmem:[%s253 + $0x4c4] sm:$0xf]
        %v521 = vld [vmem:[%s253 + $0x4c8] sm:$0xff]
        %v522 = vld [vmem:[%s253 + $0x4d0] sm:$0xff]
        %v523 = vld [vmem:[%s253 + $0x4d8] sm:$0xff]
        %v524 = vld [vmem:[%s253 + $0x4e0] sm:$0xff]
        %v525 = vld [vmem:[%s253 + $0x4e8] sm:$0xf]
        %v526 = vld [vmem:[%s253 + $0x4ec] sm:$0xff]
        %v527 = vld [vmem:[%s253 + $0x4f4] sm:$0xff]
        %v528 = vld [vmem:[%s253 + $0x4fc] sm:$0xff]
        %v529 = vld [vmem:[%s253 + $0x504] sm:$0xff]
        %v530 = vld [vmem:[%s253 + $0x50c] sm:$0xf]
        %v531 = vld [vmem:[%s253 + $0x510] sm:$0xff]
        %v532 = vld [vmem:[%s253 + $0x518] sm:$0xff]
        %v533 = vld [vmem:[%s253 + $0x520] sm:$0xff]
        %v534 = vld [vmem:[%s253 + $0x528] sm:$0xff]
        %v535 = vld [vmem:[%s253 + $0x530] sm:$0xf]
        %v536 = vld [vmem:[%s253 + $0x534] sm:$0xff]
        %v537 = vld [vmem:[%s253 + $0x53c] sm:$0xff]
        %v538 = vld [vmem:[%s253 + $0x544] sm:$0xff]
        %v539 = vld [vmem:[%s253 + $0x54c] sm:$0xff]
        %v540 = vld [vmem:[%s253 + $0x554] sm:$0xf]
        %v541 = vld [vmem:[%s253 + $0x558] sm:$0xff]
        %v542 = vld [vmem:[%s253 + $0x560] sm:$0xff]
        %v543 = vld [vmem:[%s253 + $0x568] sm:$0xff]
        %v544 = vld [vmem:[%s253 + $0x570] sm:$0xff]
        %v545 = vld [vmem:[%s253 + $0x578] sm:$0xf]
        %v546 = vld [vmem:[%s253 + $0x57c] sm:$0xff]
        %v547 = vld [vmem:[%s253 + $0x584] sm:$0xff]
        %v548 = vld [vmem:[%s253 + $0x58c] sm:$0xff]
        %v549 = vld [vmem:[%s253 + $0x594] sm:$0xff]
        %v550 = vld [vmem:[%s253 + $0x59c] sm:$0xf]
        %v551 = vld [vmem:[%s253 + $0x5a0] sm:$0xff]
        %v552 = vld [vmem:[%s253 + $0x5a8] sm:$0xff]
        %v553 = vld [vmem:[%s253 + $0x5b0] sm:$0xff]
        %v554 = vld [vmem:[%s253 + $0x5b8] sm:$0xff]
        %v555 = vld [vmem:[%s253 + $0x5c0] sm:$0xf]
        %v556 = vld [vmem:[%s253 + $0x5c4] sm:$0xff]
        %v557 = vld [vmem:[%s253 + $0x5cc] sm:$0xff]
        %v558 = vld [vmem:[%s253 + $0x5d4] sm:$0xff]
        %v559 = vld [vmem:[%s253 + $0x5dc] sm:$0xff]
        %v560 = vld [vmem:[%s253 + $0x5e4] sm:$0xf]
        %v561 = vld [vmem:[%s253 + $0x5e8] sm:$0xff]
        %v562 = vld [vmem:[%s253 + $0x5f0] sm:$0xff]
        %v563 = vld [vmem:[%s253 + $0x5f8] sm:$0xff]
        %v564 = vld [vmem:[%s253 + $0x600] sm:$0xff]
        %v565 = vld [vmem:[%s253 + $0x608] sm:$0xf]
        %v566 = vld [vmem:[%s253 + $0x60c] sm:$0xff]
        %v567 = vld [vmem:[%s253 + $0x614] sm:$0xff]
        %v568 = vld [vmem:[%s253 + $0x61c] sm:$0xff]
        %v569 = vld [vmem:[%s253 + $0x624] sm:$0xff]
        %v570 = vld [vmem:[%s253 + $0x62c] sm:$0xf]
        %v571 = vld [vmem:[%s253 + $0x630] sm:$0xff]
        %v572 = vld [vmem:[%s253 + $0x638] sm:$0xff]
        %v573 = vld [vmem:[%s253 + $0x640] sm:$0xff]
        %v574 = vld [vmem:[%s253 + $0x648] sm:$0xff]
        %v575 = vld [vmem:[%s253 + $0x650] sm:$0xf]
        %v576 = vld [vmem:[%s253 + $0x654] sm:$0xff]
        %v577 = vld [vmem:[%s253 + $0x65c] sm:$0xff]
        %v578 = vld [vmem:[%s253 + $0x664] sm:$0xff]
        %v579 = vld [vmem:[%s253 + $0x66c] sm:$0xff]
        %v580 = vld [vmem:[%s253 + $0x674] sm:$0xf]
        %v581 = vld [vmem:[%s253 + $0x678] sm:$0xff]
        %v582 = vld [vmem:[%s253 + $0x680] sm:$0xff]
        %v583 = vld [vmem:[%s253 + $0x688] sm:$0xff]
        %v584 = vld [vmem:[%s253 + $0x690] sm:$0xff]
        %v585 = vld [vmem:[%s253 + $0x698] sm:$0xf]
        %v586 = vld [vmem:[%s253 + $0x69c] sm:$0xff]
        %v587 = vld [vmem:[%s253 + $0x6a4] sm:$0xff]
        %v588 = vld [vmem:[%s253 + $0x6ac] sm:$0xff]
        %v589 = vld [vmem:[%s253 + $0x6b4] sm:$0xff]
        %v590 = vld [vmem:[%s253 + $0x6bc] sm:$0xf]
        %v591 = vld [vmem:[%s253 + $0x6c0] sm:$0xff]
        %v592 = vld [vmem:[%s253 + $0x6c8] sm:$0xff]
        %v593 = vld [vmem:[%s253 + $0x6d0] sm:$0xff]
        %v594 = vld [vmem:[%s253 + $0x6d8] sm:$0xff]
        %v595 = vld [vmem:[%s253 + $0x6e0] sm:$0xf]
        %v596 = vld [vmem:[%s253 + $0x6e4] sm:$0xff]
        %v597 = vld [vmem:[%s253 + $0x6ec] sm:$0xff]
        %v598 = vld [vmem:[%s253 + $0x6f4] sm:$0xff]
        %v599 = vld [vmem:[%s253 + $0x6fc] sm:$0xff]
        %v600 = vld [vmem:[%s253 + $0x704] sm:$0xf]
        %v601 = vld [vmem:[%s253 + $0x708] sm:$0xff]
        %v602 = vld [vmem:[%s253 + $0x710] sm:$0xff]
        %v603 = vld [vmem:[%s253 + $0x718] sm:$0xff]
        %v604 = vld [vmem:[%s253 + $0x720] sm:$0xff]
        %v605 = vld [vmem:[%s253 + $0x728] sm:$0xf]
        %v606 = vld [vmem:[%s253 + $0x72c] sm:$0xff]
        %v607 = vld [vmem:[%s253 + $0x734] sm:$0xff]
        %v608 = vld [vmem:[%s253 + $0x73c] sm:$0xff]
        %v609 = vld [vmem:[%s253 + $0x744] sm:$0xff]
        %v610 = vld [vmem:[%s253 + $0x74c] sm:$0xf]
        %v611 = vld [vmem:[%s253 + $0x750] sm:$0xff]
        %v612 = vld [vmem:[%s253 + $0x758] sm:$0xff]
        %v613 = vld [vmem:[%s253 + $0x760] sm:$0xff]
        %v614 = vld [vmem:[%s253 + $0x768] sm:$0xff]
        %v615 = vld [vmem:[%s253 + $0x770] sm:$0xf]
        %v616 = vld [vmem:[%s253 + $0x774] sm:$0xff]
        %v617 = vld [vmem:[%s253 + $0x77c] sm:$0xff]
        %v618 = vld [vmem:[%s253 + $0x784] sm:$0xff]
        %v619 = vld [vmem:[%s253 + $0x78c] sm:$0xff]
        %v620 = vld [vmem:[%s253 + $0x794] sm:$0xf]
        %v621 = vld [vmem:[%s253 + $0x798] sm:$0xff]
        %v622 = vld [vmem:[%s253 + $0x7a0] sm:$0xff]
        %v623 = vld [vmem:[%s253 + $0x7a8] sm:$0xff]
        %v624 = vld [vmem:[%s253 + $0x7b0] sm:$0xff]
        %v625 = vld [vmem:[%s253 + $0x7b8] sm:$0xf]
        %v626 = vld [vmem:[%s253 + $0x7bc] sm:$0xff]
        %v627 = vld [vmem:[%s253 + $0x7c4] sm:$0xff]
        %v628 = vld [vmem:[%s253 + $0x7cc] sm:$0xff]
        %v629 = vld [vmem:[%s253 + $0x7d4] sm:$0xff]
        %v630 = vld [vmem:[%s253 + $0x7dc] sm:$0xf]
        %v631 = vld [vmem:[%s253 + $0x7e0] sm:$0xff]
        %v632 = vld [vmem:[%s253 + $0x7e8] sm:$0xff]
        %v633 = vld [vmem:[%s253 + $0x7f0] sm:$0xff]
        %v634 = vld [vmem:[%s253 + $0x7f8] sm:$0xff]
        %v635 = vld [vmem:[%s253 + $0x800] sm:$0xf]
        %v636 = vld [vmem:[%s253 + $0x804] sm:$0xff]
        %v637 = vld [vmem:[%s253 + $0x80c] sm:$0xff]
        %v638 = vld [vmem:[%s253 + $0x814] sm:$0xff]
        %v639 = vld [vmem:[%s253 + $0x81c] sm:$0xff]
        %v640 = vld [vmem:[%s253 + $0x824] sm:$0xf]
        %v641 = vld [vmem:[%s253 + $0x828] sm:$0xff]
        %v642 = vld [vmem:[%s253 + $0x830] sm:$0xff]
        %v643 = vld [vmem:[%s253 + $0x838] sm:$0xff]
        %v644 = vld [vmem:[%s253 + $0x840] sm:$0xff]
        %v645 = vld [vmem:[%s253 + $0x848] sm:$0xf]
        %v646 = vld [vmem:[%s253 + $0x84c] sm:$0xff]
        %v647 = vld [vmem:[%s253 + $0x854] sm:$0xff]
        %v648 = vld [vmem:[%s253 + $0x85c] sm:$0xff]
        %v649 = vld [vmem:[%s253 + $0x864] sm:$0xff]
        %v650 = vld [vmem:[%s253 + $0x86c] sm:$0xf]
        %v651 = vld [vmem:[%s253 + $0x870] sm:$0xff]
        %v652 = vld [vmem:[%s253 + $0x878] sm:$0xff]
        %v653 = vld [vmem:[%s253 + $0x880] sm:$0xff]
        %v654 = vld [vmem:[%s253 + $0x888] sm:$0xff]
        %v655 = vld [vmem:[%s253 + $0x890] sm:$0xf]
        %v656 = vld [vmem:[%s253 + $0x894] sm:$0xff]
        %v657 = vld [vmem:[%s253 + $0x89c] sm:$0xff]
        %v658 = vld [vmem:[%s253 + $0x8a4] sm:$0xff]
        %v659 = vld [vmem:[%s253 + $0x8ac] sm:$0xff]
        %v660 = vld [vmem:[%s253 + $0x8b4] sm:$0xf]
        %v661 = vld [vmem:[%s253 + $0x8b8] sm:$0xff]
        %v662 = vld [vmem:[%s253 + $0x8c0] sm:$0xff]
        %v663 = vld [vmem:[%s253 + $0x8c8] sm:$0xff]
        %v664 = vld [vmem:[%s253 + $0x8d0] sm:$0xff]
        %v665 = vld [vmem:[%s253 + $0x8d8] sm:$0xf]
        %v666 = vld [vmem:[%s253 + $0x8dc] sm:$0xff]
        %v667 = vld [vmem:[%s253 + $0x8e4] sm:$0xff]
        %v668 = vld [vmem:[%s253 + $0x8ec] sm:$0xff]
        %v669 = vld [vmem:[%s253 + $0x8f4] sm:$0xff]
        %v670 = vld [vmem:[%s253 + $0x8fc] sm:$0xf]
        %v675 = vunpack.c.l.b16 %v347
        %v676 = vunpack.c.h.b16 %v347
        %v677 = vunpack.c.l.b16 %v348
        %v678 = vunpack.c.h.b16 %v348
        %v679 = vunpack.c.l.b16 %v349
        %v680 = vunpack.c.h.b16 %v349
        %v681 = vunpack.c.l.b16 %v350
        %v682 = vunpack.c.h.b16 %v350
        %v683 = vpack.c.b16 %v679, %v675
        %v684 = vpack.c.b16 %v680, %v676
        %v685 = vpack.c.b16 %v681, %v677
        %v686 = vpack.c.b16 %v682, %v678
        %v1011 = vunpack.c.l.b16 %v351
        %v1012 = vunpack.c.h.b16 %v351
        %v1013 = vunpack.c.l.b16 %v352
        %v1014 = vunpack.c.h.b16 %v352
        %v1015 = vunpack.c.l.b16 %v353
        %v1016 = vunpack.c.h.b16 %v353
        %v1017 = vunpack.c.l.b16 %v354
        %v1018 = vunpack.c.h.b16 %v354
        %v1019 = vunpack.c.l.b16 %v355
        %v1020 = vunpack.c.l.b16 %v356
        %v1021 = vunpack.c.h.b16 %v356
        %v1022 = vunpack.c.l.b16 %v357
        %v1023 = vunpack.c.h.b16 %v357
        %v1024 = vunpack.c.l.b16 %v358
        %v1025 = vunpack.c.h.b16 %v358
        %v1026 = vunpack.c.l.b16 %v359
        %v1027 = vunpack.c.h.b16 %v359
        %v1028 = vunpack.c.l.b16 %v360
        %v1029 = vunpack.c.l.b16 %v361
        %v1030 = vunpack.c.h.b16 %v361
        %v1031 = vunpack.c.l.b16 %v362
        %v1032 = vunpack.c.h.b16 %v362
        %v1033 = vunpack.c.l.b16 %v363
        %v1034 = vunpack.c.h.b16 %v363
        %v1035 = vunpack.c.l.b16 %v364
        %v1036 = vunpack.c.h.b16 %v364
        %v1037 = vunpack.c.l.b16 %v365
        %v1038 = vunpack.c.l.b16 %v366
        %v1039 = vunpack.c.h.b16 %v366
        %v1040 = vunpack.c.l.b16 %v367
        %v1041 = vunpack.c.h.b16 %v367
        %v1042 = vunpack.c.l.b16 %v368
        %v1043 = vunpack.c.h.b16 %v368
        %v1044 = vunpack.c.l.b16 %v369
        %v1045 = vunpack.c.h.b16 %v369
        %v1046 = vunpack.c.l.b16 %v370
        %v1047 = vunpack.c.l.b16 %v371
        %v1048 = vunpack.c.h.b16 %v371
        %v1049 = vunpack.c.l.b16 %v372
        %v1050 = vunpack.c.h.b16 %v372
        %v1051 = vunpack.c.l.b16 %v373
        %v1052 = vunpack.c.h.b16 %v373
        %v1053 = vunpack.c.l.b16 %v374
        %v1054 = vunpack.c.h.b16 %v374
        %v1055 = vunpack.c.l.b16 %v375
        %v1056 = vunpack.c.l.b16 %v376
        %v1057 = vunpack.c.h.b16 %v376
        %v1058 = vunpack.c.l.b16 %v377
        %v1059 = vunpack.c.h.b16 %v377
        %v1060 = vunpack.c.l.b16 %v378
        %v1061 = vunpack.c.h.b16 %v378
        %v1062 = vunpack.c.l.b16 %v379
        %v1063 = vunpack.c.h.b16 %v379
        %v1064 = vunpack.c.l.b16 %v380
        %v1065 = vunpack.c.l.b16 %v381
        %v1066 = vunpack.c.h.b16 %v381
        %v1067 = vunpack.c.l.b16 %v382
        %v1068 = vunpack.c.h.b16 %v382
        %v1069 = vunpack.c.l.b16 %v383
        %v1070 = vunpack.c.h.b16 %v383
        %v1071 = vunpack.c.l.b16 %v384
        %v1072 = vunpack.c.h.b16 %v384
        %v1073 = vunpack.c.l.b16 %v385
        %v1074 = vunpack.c.l.b16 %v386
        %v1075 = vunpack.c.h.b16 %v386
        %v1076 = vunpack.c.l.b16 %v387
        %v1077 = vunpack.c.h.b16 %v387
        %v1078 = vunpack.c.l.b16 %v388
        %v1079 = vunpack.c.h.b16 %v388
        %v1080 = vunpack.c.l.b16 %v389
        %v1081 = vunpack.c.h.b16 %v389
        %v1082 = vunpack.c.l.b16 %v390
        %v1083 = vunpack.c.l.b16 %v391
        %v1084 = vunpack.c.h.b16 %v391
        %v1085 = vunpack.c.l.b16 %v392
        %v1086 = vunpack.c.h.b16 %v392
        %v1087 = vunpack.c.l.b16 %v393
        %v1088 = vunpack.c.h.b16 %v393
        %v1089 = vunpack.c.l.b16 %v394
        %v1090 = vunpack.c.h.b16 %v394
        %v1091 = vunpack.c.l.b16 %v395
        %v1092 = vunpack.c.l.b16 %v396
        %v1093 = vunpack.c.h.b16 %v396
        %v1094 = vunpack.c.l.b16 %v397
        %v1095 = vunpack.c.h.b16 %v397
        %v1096 = vunpack.c.l.b16 %v398
        %v1097 = vunpack.c.h.b16 %v398
        %v1098 = vunpack.c.l.b16 %v399
        %v1099 = vunpack.c.h.b16 %v399
        %v1100 = vunpack.c.l.b16 %v400
        %v1101 = vunpack.c.l.b16 %v401
        %v1102 = vunpack.c.h.b16 %v401
        %v1103 = vunpack.c.l.b16 %v402
        %v1104 = vunpack.c.h.b16 %v402
        %v1105 = vunpack.c.l.b16 %v403
        %v1106 = vunpack.c.h.b16 %v403
        %v1107 = vunpack.c.l.b16 %v404
        %v1108 = vunpack.c.h.b16 %v404
        %v1109 = vunpack.c.l.b16 %v405
        %v1110 = vunpack.c.l.b16 %v406
        %v1111 = vunpack.c.h.b16 %v406
        %v1112 = vunpack.c.l.b16 %v407
        %v1113 = vunpack.c.h.b16 %v407
        %v1114 = vunpack.c.l.b16 %v408
        %v1115 = vunpack.c.h.b16 %v408
        %v1116 = vunpack.c.l.b16 %v409
        %v1117 = vunpack.c.h.b16 %v409
        %v1118 = vunpack.c.l.b16 %v410
        %v1119 = vunpack.c.l.b16 %v411
        %v1120 = vunpack.c.h.b16 %v411
        %v1121 = vunpack.c.l.b16 %v412
        %v1122 = vunpack.c.h.b16 %v412
        %v1123 = vunpack.c.l.b16 %v413
        %v1124 = vunpack.c.h.b16 %v413
        %v1125 = vunpack.c.l.b16 %v414
        %v1126 = vunpack.c.h.b16 %v414
        %v1127 = vunpack.c.l.b16 %v415
        %v1128 = vunpack.c.l.b16 %v416
        %v1129 = vunpack.c.h.b16 %v416
        %v1130 = vunpack.c.l.b16 %v417
        %v1131 = vunpack.c.h.b16 %v417
        %v1132 = vunpack.c.l.b16 %v418
        %v1133 = vunpack.c.h.b16 %v418
        %v1134 = vunpack.c.l.b16 %v419
        %v1135 = vunpack.c.h.b16 %v419
        %v1136 = vunpack.c.l.b16 %v420
        %v1137 = vunpack.c.l.b16 %v421
        %v1138 = vunpack.c.h.b16 %v421
        %v1139 = vunpack.c.l.b16 %v422
        %v1140 = vunpack.c.h.b16 %v422
        %v1141 = vunpack.c.l.b16 %v423
        %v1142 = vunpack.c.h.b16 %v423
        %v1143 = vunpack.c.l.b16 %v424
        %v1144 = vunpack.c.h.b16 %v424
        %v1145 = vunpack.c.l.b16 %v425
        %v1146 = vunpack.c.l.b16 %v426
        %v1147 = vunpack.c.h.b16 %v426
        %v1148 = vunpack.c.l.b16 %v427
        %v1149 = vunpack.c.h.b16 %v427
        %v1150 = vunpack.c.l.b16 %v428
        %v1151 = vunpack.c.h.b16 %v428
        %v1152 = vunpack.c.l.b16 %v429
        %v1153 = vunpack.c.h.b16 %v429
        %v1154 = vunpack.c.l.b16 %v430
        %v1155 = vunpack.c.l.b16 %v431
        %v1156 = vunpack.c.h.b16 %v431
        %v1157 = vunpack.c.l.b16 %v432
        %v1158 = vunpack.c.h.b16 %v432
        %v1159 = vunpack.c.l.b16 %v433
        %v1160 = vunpack.c.h.b16 %v433
        %v1161 = vunpack.c.l.b16 %v434
        %v1162 = vunpack.c.h.b16 %v434
        %v1163 = vunpack.c.l.b16 %v435
        %v1164 = vunpack.c.l.b16 %v436
        %v1165 = vunpack.c.h.b16 %v436
        %v1166 = vunpack.c.l.b16 %v437
        %v1167 = vunpack.c.h.b16 %v437
        %v1168 = vunpack.c.l.b16 %v438
        %v1169 = vunpack.c.h.b16 %v438
        %v1170 = vunpack.c.l.b16 %v439
        %v1171 = vunpack.c.h.b16 %v439
        %v1172 = vunpack.c.l.b16 %v440
        %v1173 = vunpack.c.l.b16 %v441
        %v1174 = vunpack.c.h.b16 %v441
        %v1175 = vunpack.c.l.b16 %v442
        %v1176 = vunpack.c.h.b16 %v442
        %v1177 = vunpack.c.l.b16 %v443
        %v1178 = vunpack.c.h.b16 %v443
        %v1179 = vunpack.c.l.b16 %v444
        %v1180 = vunpack.c.h.b16 %v444
        %v1181 = vunpack.c.l.b16 %v445
        %v1182 = vunpack.c.l.b16 %v446
        %v1183 = vunpack.c.h.b16 %v446
        %v1184 = vunpack.c.l.b16 %v447
        %v1185 = vunpack.c.h.b16 %v447
        %v1186 = vunpack.c.l.b16 %v448
        %v1187 = vunpack.c.h.b16 %v448
        %v1188 = vunpack.c.l.b16 %v449
        %v1189 = vunpack.c.h.b16 %v449
        %v1190 = vunpack.c.l.b16 %v450
        %v1191 = vunpack.c.l.b16 %v451
        %v1192 = vunpack.c.h.b16 %v451
        %v1193 = vunpack.c.l.b16 %v452
        %v1194 = vunpack.c.h.b16 %v452
        %v1195 = vunpack.c.l.b16 %v453
        %v1196 = vunpack.c.h.b16 %v453
        %v1197 = vunpack.c.l.b16 %v454
        %v1198 = vunpack.c.h.b16 %v454
        %v1199 = vunpack.c.l.b16 %v455
        %v1200 = vunpack.c.l.b16 %v456
        %v1201 = vunpack.c.h.b16 %v456
        %v1202 = vunpack.c.l.b16 %v457
        %v1203 = vunpack.c.h.b16 %v457
        %v1204 = vunpack.c.l.b16 %v458
        %v1205 = vunpack.c.h.b16 %v458
        %v1206 = vunpack.c.l.b16 %v459
        %v1207 = vunpack.c.h.b16 %v459
        %v1208 = vunpack.c.l.b16 %v460
        %v1209 = vunpack.c.l.b16 %v461
        %v1210 = vunpack.c.h.b16 %v461
        %v1211 = vunpack.c.l.b16 %v462
        %v1212 = vunpack.c.h.b16 %v462
        %v1213 = vunpack.c.l.b16 %v463
        %v1214 = vunpack.c.h.b16 %v463
        %v1215 = vunpack.c.l.b16 %v464
        %v1216 = vunpack.c.h.b16 %v464
        %v1217 = vunpack.c.l.b16 %v465
        %v1218 = vunpack.c.l.b16 %v466
        %v1219 = vunpack.c.h.b16 %v466
        %v1220 = vunpack.c.l.b16 %v467
        %v1221 = vunpack.c.h.b16 %v467
        %v1222 = vunpack.c.l.b16 %v468
        %v1223 = vunpack.c.h.b16 %v468
        %v1224 = vunpack.c.l.b16 %v469
        %v1225 = vunpack.c.h.b16 %v469
        %v1226 = vunpack.c.l.b16 %v470
        %v1227 = vunpack.c.l.b16 %v471
        %v1228 = vunpack.c.h.b16 %v471
        %v1229 = vunpack.c.l.b16 %v472
        %v1230 = vunpack.c.h.b16 %v472
        %v1231 = vunpack.c.l.b16 %v473
        %v1232 = vunpack.c.h.b16 %v473
        %v1233 = vunpack.c.l.b16 %v474
        %v1234 = vunpack.c.h.b16 %v474
        %v1235 = vunpack.c.l.b16 %v475
        %v1236 = vunpack.c.l.b16 %v476
        %v1237 = vunpack.c.h.b16 %v476
        %v1238 = vunpack.c.l.b16 %v477
        %v1239 = vunpack.c.h.b16 %v477
        %v1240 = vunpack.c.l.b16 %v478
        %v1241 = vunpack.c.h.b16 %v478
        %v1242 = vunpack.c.l.b16 %v479
        %v1243 = vunpack.c.h.b16 %v479
        %v1244 = vunpack.c.l.b16 %v480
        %v1245 = vunpack.c.l.b16 %v481
        %v1246 = vunpack.c.h.b16 %v481
        %v1247 = vunpack.c.l.b16 %v482
        %v1248 = vunpack.c.h.b16 %v482
        %v1249 = vunpack.c.l.b16 %v483
        %v1250 = vunpack.c.h.b16 %v483
        %v1251 = vunpack.c.l.b16 %v484
        %v1252 = vunpack.c.h.b16 %v484
        %v1253 = vunpack.c.l.b16 %v485
        %v1254 = vunpack.c.l.b16 %v486
        %v1255 = vunpack.c.h.b16 %v486
        %v1256 = vunpack.c.l.b16 %v487
        %v1257 = vunpack.c.h.b16 %v487
        %v1258 = vunpack.c.l.b16 %v488
        %v1259 = vunpack.c.h.b16 %v488
        %v1260 = vunpack.c.l.b16 %v489
        %v1261 = vunpack.c.h.b16 %v489
        %v1262 = vunpack.c.l.b16 %v490
        %v1263 = vunpack.c.l.b16 %v491
        %v1264 = vunpack.c.h.b16 %v491
        %v1265 = vunpack.c.l.b16 %v492
        %v1266 = vunpack.c.h.b16 %v492
        %v1267 = vunpack.c.l.b16 %v493
        %v1268 = vunpack.c.h.b16 %v493
        %v1269 = vunpack.c.l.b16 %v494
        %v1270 = vunpack.c.h.b16 %v494
        %v1271 = vunpack.c.l.b16 %v495
        %v1272 = vunpack.c.l.b16 %v496
        %v1273 = vunpack.c.h.b16 %v496
        %v1274 = vunpack.c.l.b16 %v497
        %v1275 = vunpack.c.h.b16 %v497
        %v1276 = vunpack.c.l.b16 %v498
        %v1277 = vunpack.c.h.b16 %v498
        %v1278 = vunpack.c.l.b16 %v499
        %v1279 = vunpack.c.h.b16 %v499
        %v1280 = vunpack.c.l.b16 %v500
        %v1281 = vunpack.c.l.b16 %v501
        %v1282 = vunpack.c.h.b16 %v501
        %v1283 = vunpack.c.l.b16 %v502
        %v1284 = vunpack.c.h.b16 %v502
        %v1285 = vunpack.c.l.b16 %v503
        %v1286 = vunpack.c.h.b16 %v503
        %v1287 = vunpack.c.l.b16 %v504
        %v1288 = vunpack.c.h.b16 %v504
        %v1289 = vunpack.c.l.b16 %v505
        %v1290 = vunpack.c.l.b16 %v506
        %v1291 = vunpack.c.h.b16 %v506
        %v1292 = vunpack.c.l.b16 %v507
        %v1293 = vunpack.c.h.b16 %v507
        %v1294 = vunpack.c.l.b16 %v508
        %v1295 = vunpack.c.h.b16 %v508
        %v1296 = vunpack.c.l.b16 %v509
        %v1297 = vunpack.c.h.b16 %v509
        %v1298 = vunpack.c.l.b16 %v510
        %v1299 = vunpack.c.l.b16 %v511
        %v1300 = vunpack.c.h.b16 %v511
        %v1301 = vunpack.c.l.b16 %v512
        %v1302 = vunpack.c.h.b16 %v512
        %v1303 = vunpack.c.l.b16 %v513
        %v1304 = vunpack.c.h.b16 %v513
        %v1305 = vunpack.c.l.b16 %v514
        %v1306 = vunpack.c.h.b16 %v514
        %v1307 = vunpack.c.l.b16 %v515
        %v1308 = vunpack.c.l.b16 %v516
        %v1309 = vunpack.c.h.b16 %v516
        %v1310 = vunpack.c.l.b16 %v517
        %v1311 = vunpack.c.h.b16 %v517
        %v1312 = vunpack.c.l.b16 %v518
        %v1313 = vunpack.c.h.b16 %v518
        %v1314 = vunpack.c.l.b16 %v519
        %v1315 = vunpack.c.h.b16 %v519
        %v1316 = vunpack.c.l.b16 %v520
        %v1317 = vunpack.c.l.b16 %v521
        %v1318 = vunpack.c.h.b16 %v521
        %v1319 = vunpack.c.l.b16 %v522
        %v1320 = vunpack.c.h.b16 %v522
        %v1321 = vunpack.c.l.b16 %v523
        %v1322 = vunpack.c.h.b16 %v523
        %v1323 = vunpack.c.l.b16 %v524
        %v1324 = vunpack.c.h.b16 %v524
        %v1325 = vunpack.c.l.b16 %v525
        %v1326 = vunpack.c.l.b16 %v526
        %v1327 = vunpack.c.h.b16 %v526
        %v1328 = vunpack.c.l.b16 %v527
        %v1329 = vunpack.c.h.b16 %v527
        %v1330 = vunpack.c.l.b16 %v528
        %v1331 = vunpack.c.h.b16 %v528
        %v1332 = vunpack.c.l.b16 %v529
        %v1333 = vunpack.c.h.b16 %v529
        %v1334 = vunpack.c.l.b16 %v530
        %v1335 = vunpack.c.l.b16 %v531
        %v1336 = vunpack.c.h.b16 %v531
        %v1337 = vunpack.c.l.b16 %v532
        %v1338 = vunpack.c.h.b16 %v532
        %v1339 = vunpack.c.l.b16 %v533
        %v1340 = vunpack.c.h.b16 %v533
        %v1341 = vunpack.c.l.b16 %v534
        %v1342 = vunpack.c.h.b16 %v534
        %v1343 = vunpack.c.l.b16 %v535
        %v1344 = vunpack.c.l.b16 %v536
        %v1345 = vunpack.c.h.b16 %v536
        %v1346 = vunpack.c.l.b16 %v537
        %v1347 = vunpack.c.h.b16 %v537
        %v1348 = vunpack.c.l.b16 %v538
        %v1349 = vunpack.c.h.b16 %v538
        %v1350 = vunpack.c.l.b16 %v539
        %v1351 = vunpack.c.h.b16 %v539
        %v1352 = vunpack.c.l.b16 %v540
        %v1353 = vunpack.c.l.b16 %v541
        %v1354 = vunpack.c.h.b16 %v541
        %v1355 = vunpack.c.l.b16 %v542
        %v1356 = vunpack.c.h.b16 %v542
        %v1357 = vunpack.c.l.b16 %v543
        %v1358 = vunpack.c.h.b16 %v543
        %v1359 = vunpack.c.l.b16 %v544
        %v1360 = vunpack.c.h.b16 %v544
        %v1361 = vunpack.c.l.b16 %v545
        %v1362 = vunpack.c.l.b16 %v546
        %v1363 = vunpack.c.h.b16 %v546
        %v1364 = vunpack.c.l.b16 %v547
        %v1365 = vunpack.c.h.b16 %v547
        %v1366 = vunpack.c.l.b16 %v548
        %v1367 = vunpack.c.h.b16 %v548
        %v1368 = vunpack.c.l.b16 %v549
        %v1369 = vunpack.c.h.b16 %v549
        %v1370 = vunpack.c.l.b16 %v550
        %v1371 = vunpack.c.l.b16 %v551
        %v1372 = vunpack.c.h.b16 %v551
        %v1373 = vunpack.c.l.b16 %v552
        %v1374 = vunpack.c.h.b16 %v552
        %v1375 = vunpack.c.l.b16 %v553
        %v1376 = vunpack.c.h.b16 %v553
        %v1377 = vunpack.c.l.b16 %v554
        %v1378 = vunpack.c.h.b16 %v554
        %v1379 = vunpack.c.l.b16 %v555
        %v1380 = vunpack.c.l.b16 %v556
        %v1381 = vunpack.c.h.b16 %v556
        %v1382 = vunpack.c.l.b16 %v557
        %v1383 = vunpack.c.h.b16 %v557
        %v1384 = vunpack.c.l.b16 %v558
        %v1385 = vunpack.c.h.b16 %v558
        %v1386 = vunpack.c.l.b16 %v559
        %v1387 = vunpack.c.h.b16 %v559
        %v1388 = vunpack.c.l.b16 %v560
        %v1389 = vunpack.c.l.b16 %v561
        %v1390 = vunpack.c.h.b16 %v561
        %v1391 = vunpack.c.l.b16 %v562
        %v1392 = vunpack.c.h.b16 %v562
        %v1393 = vunpack.c.l.b16 %v563
        %v1394 = vunpack.c.h.b16 %v563
        %v1395 = vunpack.c.l.b16 %v564
        %v1396 = vunpack.c.h.b16 %v564
        %v1397 = vunpack.c.l.b16 %v565
        %v1398 = vunpack.c.l.b16 %v566
        %v1399 = vunpack.c.h.b16 %v566
        %v1400 = vunpack.c.l.b16 %v567
        %v1401 = vunpack.c.h.b16 %v567
        %v1402 = vunpack.c.l.b16 %v568
        %v1403 = vunpack.c.h.b16 %v568
        %v1404 = vunpack.c.l.b16 %v569
        %v1405 = vunpack.c.h.b16 %v569
        %v1406 = vunpack.c.l.b16 %v570
        %v1407 = vunpack.c.l.b16 %v571
        %v1408 = vunpack.c.h.b16 %v571
        %v1409 = vunpack.c.l.b16 %v572
        %v1410 = vunpack.c.h.b16 %v572
        %v1411 = vunpack.c.l.b16 %v573
        %v1412 = vunpack.c.h.b16 %v573
        %v1413 = vunpack.c.l.b16 %v574
        %v1414 = vunpack.c.h.b16 %v574
        %v1415 = vunpack.c.l.b16 %v575
        %v1416 = vunpack.c.l.b16 %v576
        %v1417 = vunpack.c.h.b16 %v576
        %v1418 = vunpack.c.l.b16 %v577
        %v1419 = vunpack.c.h.b16 %v577
        %v1420 = vunpack.c.l.b16 %v578
        %v1421 = vunpack.c.h.b16 %v578
        %v1422 = vunpack.c.l.b16 %v579
        %v1423 = vunpack.c.h.b16 %v579
        %v1424 = vunpack.c.l.b16 %v580
        %v1425 = vunpack.c.l.b16 %v581
        %v1426 = vunpack.c.h.b16 %v581
        %v1427 = vunpack.c.l.b16 %v582
        %v1428 = vunpack.c.h.b16 %v582
        %v1429 = vunpack.c.l.b16 %v583
        %v1430 = vunpack.c.h.b16 %v583
        %v1431 = vunpack.c.l.b16 %v584
        %v1432 = vunpack.c.h.b16 %v584
        %v1433 = vunpack.c.l.b16 %v585
        %v1434 = vunpack.c.l.b16 %v586
        %v1435 = vunpack.c.h.b16 %v586
        %v1436 = vunpack.c.l.b16 %v587
        %v1437 = vunpack.c.h.b16 %v587
        %v1438 = vunpack.c.l.b16 %v588
        %v1439 = vunpack.c.h.b16 %v588
        %v1440 = vunpack.c.l.b16 %v589
        %v1441 = vunpack.c.h.b16 %v589
        %v1442 = vunpack.c.l.b16 %v590
        %v1443 = vunpack.c.l.b16 %v591
        %v1444 = vunpack.c.h.b16 %v591
        %v1445 = vunpack.c.l.b16 %v592
        %v1446 = vunpack.c.h.b16 %v592
        %v1447 = vunpack.c.l.b16 %v593
        %v1448 = vunpack.c.h.b16 %v593
        %v1449 = vunpack.c.l.b16 %v594
        %v1450 = vunpack.c.h.b16 %v594
        %v1451 = vunpack.c.l.b16 %v595
        %v1452 = vunpack.c.l.b16 %v596
        %v1453 = vunpack.c.h.b16 %v596
        %v1454 = vunpack.c.l.b16 %v597
        %v1455 = vunpack.c.h.b16 %v597
        %v1456 = vunpack.c.l.b16 %v598
        %v1457 = vunpack.c.h.b16 %v598
        %v1458 = vunpack.c.l.b16 %v599
        %v1459 = vunpack.c.h.b16 %v599
        %v1460 = vunpack.c.l.b16 %v600
        %v1461 = vunpack.c.l.b16 %v601
        %v1462 = vunpack.c.h.b16 %v601
        %v1463 = vunpack.c.l.b16 %v602
        %v1464 = vunpack.c.h.b16 %v602
        %v1465 = vunpack.c.l.b16 %v603
        %v1466 = vunpack.c.h.b16 %v603
        %v1467 = vunpack.c.l.b16 %v604
        %v1468 = vunpack.c.h.b16 %v604
        %v1469 = vunpack.c.l.b16 %v605
        %v1470 = vunpack.c.l.b16 %v606
        %v1471 = vunpack.c.h.b16 %v606
        %v1472 = vunpack.c.l.b16 %v607
        %v1473 = vunpack.c.h.b16 %v607
        %v1474 = vunpack.c.l.b16 %v608
        %v1475 = vunpack.c.h.b16 %v608
        %v1476 = vunpack.c.l.b16 %v609
        %v1477 = vunpack.c.h.b16 %v609
        %v1478 = vunpack.c.l.b16 %v610
        %v1479 = vunpack.c.l.b16 %v611
        %v1480 = vunpack.c.h.b16 %v611
        %v1481 = vunpack.c.l.b16 %v612
        %v1482 = vunpack.c.h.b16 %v612
        %v1483 = vunpack.c.l.b16 %v613
        %v1484 = vunpack.c.h.b16 %v613
        %v1485 = vunpack.c.l.b16 %v614
        %v1486 = vunpack.c.h.b16 %v614
        %v1487 = vunpack.c.l.b16 %v615
        %v1488 = vunpack.c.l.b16 %v616
        %v1489 = vunpack.c.h.b16 %v616
        %v1490 = vunpack.c.l.b16 %v617
        %v1491 = vunpack.c.h.b16 %v617
        %v1492 = vunpack.c.l.b16 %v618
        %v1493 = vunpack.c.h.b16 %v618
        %v1494 = vunpack.c.l.b16 %v619
        %v1495 = vunpack.c.h.b16 %v619
        %v1496 = vunpack.c.l.b16 %v620
        %v1497 = vunpack.c.l.b16 %v621
        %v1498 = vunpack.c.h.b16 %v621
        %v1499 = vunpack.c.l.b16 %v622
        %v1500 = vunpack.c.h.b16 %v622
        %v1501 = vunpack.c.l.b16 %v623
        %v1502 = vunpack.c.h.b16 %v623
        %v1503 = vunpack.c.l.b16 %v624
        %v1504 = vunpack.c.h.b16 %v624
        %v1505 = vunpack.c.l.b16 %v625
        %v1506 = vunpack.c.l.b16 %v626
        %v1507 = vunpack.c.h.b16 %v626
        %v1508 = vunpack.c.l.b16 %v627
        %v1509 = vunpack.c.h.b16 %v627
        %v1510 = vunpack.c.l.b16 %v628
        %v1511 = vunpack.c.h.b16 %v628
        %v1512 = vunpack.c.l.b16 %v629
        %v1513 = vunpack.c.h.b16 %v629
        %v1514 = vunpack.c.l.b16 %v630
        %v1515 = vunpack.c.l.b16 %v631
        %v1516 = vunpack.c.h.b16 %v631
        %v1517 = vunpack.c.l.b16 %v632
        %v1518 = vunpack.c.h.b16 %v632
        %v1519 = vunpack.c.l.b16 %v633
        %v1520 = vunpack.c.h.b16 %v633
        %v1521 = vunpack.c.l.b16 %v634
        %v1522 = vunpack.c.h.b16 %v634
        %v1523 = vunpack.c.l.b16 %v635
        %v1524 = vunpack.c.l.b16 %v636
        %v1525 = vunpack.c.h.b16 %v636
        %v1526 = vunpack.c.l.b16 %v637
        %v1527 = vunpack.c.h.b16 %v637
        %v1528 = vunpack.c.l.b16 %v638
        %v1529 = vunpack.c.h.b16 %v638
        %v1530 = vunpack.c.l.b16 %v639
        %v1531 = vunpack.c.h.b16 %v639
        %v1532 = vunpack.c.l.b16 %v640
        %v1533 = vunpack.c.l.b16 %v641
        %v1534 = vunpack.c.h.b16 %v641
        %v1535 = vunpack.c.l.b16 %v642
        %v1536 = vunpack.c.h.b16 %v642
        %v1537 = vunpack.c.l.b16 %v643
        %v1538 = vunpack.c.h.b16 %v643
        %v1539 = vunpack.c.l.b16 %v644
        %v1540 = vunpack.c.h.b16 %v644
        %v1541 = vunpack.c.l.b16 %v645
        %v1542 = vunpack.c.l.b16 %v646
        %v1543 = vunpack.c.h.b16 %v646
        %v1544 = vunpack.c.l.b16 %v647
        %v1545 = vunpack.c.h.b16 %v647
        %v1546 = vunpack.c.l.b16 %v648
        %v1547 = vunpack.c.h.b16 %v648
        %v1548 = vunpack.c.l.b16 %v649
        %v1549 = vunpack.c.h.b16 %v649
        %v1550 = vunpack.c.l.b16 %v650
        %v1551 = vunpack.c.l.b16 %v651
        %v1552 = vunpack.c.h.b16 %v651
        %v1553 = vunpack.c.l.b16 %v652
        %v1554 = vunpack.c.h.b16 %v652
        %v1555 = vunpack.c.l.b16 %v653
        %v1556 = vunpack.c.h.b16 %v653
        %v1557 = vunpack.c.l.b16 %v654
        %v1558 = vunpack.c.h.b16 %v654
        %v1559 = vunpack.c.l.b16 %v655
        %v1560 = vunpack.c.l.b16 %v656
        %v1561 = vunpack.c.h.b16 %v656
        %v1562 = vunpack.c.l.b16 %v657
        %v1563 = vunpack.c.h.b16 %v657
        %v1564 = vunpack.c.l.b16 %v658
        %v1565 = vunpack.c.h.b16 %v658
        %v1566 = vunpack.c.l.b16 %v659
        %v1567 = vunpack.c.h.b16 %v659
        %v1568 = vunpack.c.l.b16 %v660
        %v1569 = vunpack.c.l.b16 %v661
        %v1570 = vunpack.c.h.b16 %v661
        %v1571 = vunpack.c.l.b16 %v662
        %v1572 = vunpack.c.h.b16 %v662
        %v1573 = vunpack.c.l.b16 %v663
        %v1574 = vunpack.c.h.b16 %v663
        %v1575 = vunpack.c.l.b16 %v664
        %v1576 = vunpack.c.h.b16 %v664
        %v1577 = vunpack.c.l.b16 %v665
        %v1578 = vunpack.c.l.b16 %v666
        %v1579 = vunpack.c.h.b16 %v666
        %v1580 = vunpack.c.l.b16 %v667
        %v1581 = vunpack.c.h.b16 %v667
        %v1582 = vunpack.c.l.b16 %v668
        %v1583 = vunpack.c.h.b16 %v668
        %v1584 = vunpack.c.l.b16 %v669
        %v1585 = vunpack.c.h.b16 %v669
        %v1586 = vunpack.c.l.b16 %v670
        %v1587 = vpack.c.b16 %v1020, %v1011
        %v1588 = vpack.c.b16 %v1021, %v1012
        %v1589 = vpack.c.b16 %v1022, %v1013
        %v1590 = vpack.c.b16 %v1023, %v1014
        %v1591 = vpack.c.b16 %v1024, %v1015
        %v1592 = vpack.c.b16 %v1025, %v1016
        %v1593 = vpack.c.b16 %v1026, %v1017
        %v1594 = vpack.c.b16 %v1027, %v1018
        %v1595 = vpack.c.b16 %v1028, %v1019
        %v1596 = vpack.c.b16 %v1038, %v1029
        %v1597 = vpack.c.b16 %v1039, %v1030
        %v1598 = vpack.c.b16 %v1040, %v1031
        %v1599 = vpack.c.b16 %v1041, %v1032
        %v1600 = vpack.c.b16 %v1042, %v1033
        %v1601 = vpack.c.b16 %v1043, %v1034
        %v1602 = vpack.c.b16 %v1044, %v1035
        %v1603 = vpack.c.b16 %v1045, %v1036
        %v1604 = vpack.c.b16 %v1046, %v1037
        %v1605 = vpack.c.b16 %v1056, %v1047
        %v1606 = vpack.c.b16 %v1057, %v1048
        %v1607 = vpack.c.b16 %v1058, %v1049
        %v1608 = vpack.c.b16 %v1059, %v1050
        %v1609 = vpack.c.b16 %v1060, %v1051
        %v1610 = vpack.c.b16 %v1061, %v1052
        %v1611 = vpack.c.b16 %v1062, %v1053
        %v1612 = vpack.c.b16 %v1063, %v1054
        %v1613 = vpack.c.b16 %v1064, %v1055
        %v1614 = vpack.c.b16 %v1074, %v1065
        %v1615 = vpack.c.b16 %v1075, %v1066
        %v1616 = vpack.c.b16 %v1076, %v1067
        %v1617 = vpack.c.b16 %v1077, %v1068
        %v1618 = vpack.c.b16 %v1078, %v1069
        %v1619 = vpack.c.b16 %v1079, %v1070
        %v1620 = vpack.c.b16 %v1080, %v1071
        %v1621 = vpack.c.b16 %v1081, %v1072
        %v1622 = vpack.c.b16 %v1082, %v1073
        %v1623 = vpack.c.b16 %v1092, %v1083
        %v1624 = vpack.c.b16 %v1093, %v1084
        %v1625 = vpack.c.b16 %v1094, %v1085
        %v1626 = vpack.c.b16 %v1095, %v1086
        %v1627 = vpack.c.b16 %v1096, %v1087
        %v1628 = vpack.c.b16 %v1097, %v1088
        %v1629 = vpack.c.b16 %v1098, %v1089
        %v1630 = vpack.c.b16 %v1099, %v1090
        %v1631 = vpack.c.b16 %v1100, %v1091
        %v1632 = vpack.c.b16 %v1110, %v1101
        %v1633 = vpack.c.b16 %v1111, %v1102
        %v1634 = vpack.c.b16 %v1112, %v1103
        %v1635 = vpack.c.b16 %v1113, %v1104
        %v1636 = vpack.c.b16 %v1114, %v1105
        %v1637 = vpack.c.b16 %v1115, %v1106
        %v1638 = vpack.c.b16 %v1116, %v1107
        %v1639 = vpack.c.b16 %v1117, %v1108
        %v1640 = vpack.c.b16 %v1118, %v1109
        %v1641 = vpack.c.b16 %v1128, %v1119
        %v1642 = vpack.c.b16 %v1129, %v1120
        %v1643 = vpack.c.b16 %v1130, %v1121
        %v1644 = vpack.c.b16 %v1131, %v1122
        %v1645 = vpack.c.b16 %v1132, %v1123
        %v1646 = vpack.c.b16 %v1133, %v1124
        %v1647 = vpack.c.b16 %v1134, %v1125
        %v1648 = vpack.c.b16 %v1135, %v1126
        %v1649 = vpack.c.b16 %v1136, %v1127
        %v1650 = vpack.c.b16 %v1146, %v1137
        %v1651 = vpack.c.b16 %v1147, %v1138
        %v1652 = vpack.c.b16 %v1148, %v1139
        %v1653 = vpack.c.b16 %v1149, %v1140
        %v1654 = vpack.c.b16 %v1150, %v1141
        %v1655 = vpack.c.b16 %v1151, %v1142
        %v1656 = vpack.c.b16 %v1152, %v1143
        %v1657 = vpack.c.b16 %v1153, %v1144
        %v1658 = vpack.c.b16 %v1154, %v1145
        %v1659 = vpack.c.b16 %v1164, %v1155
        %v1660 = vpack.c.b16 %v1165, %v1156
        %v1661 = vpack.c.b16 %v1166, %v1157
        %v1662 = vpack.c.b16 %v1167, %v1158
        %v1663 = vpack.c.b16 %v1168, %v1159
        %v1664 = vpack.c.b16 %v1169, %v1160
        %v1665 = vpack.c.b16 %v1170, %v1161
        %v1666 = vpack.c.b16 %v1171, %v1162
        %v1667 = vpack.c.b16 %v1172, %v1163
        %v1668 = vpack.c.b16 %v1182, %v1173
        %v1669 = vpack.c.b16 %v1183, %v1174
        %v1670 = vpack.c.b16 %v1184, %v1175
        %v1671 = vpack.c.b16 %v1185, %v1176
        %v1672 = vpack.c.b16 %v1186, %v1177
        %v1673 = vpack.c.b16 %v1187, %v1178
        %v1674 = vpack.c.b16 %v1188, %v1179
        %v1675 = vpack.c.b16 %v1189, %v1180
        %v1676 = vpack.c.b16 %v1190, %v1181
        %v1677 = vpack.c.b16 %v1200, %v1191
        %v1678 = vpack.c.b16 %v1201, %v1192
        %v1679 = vpack.c.b16 %v1202, %v1193
        %v1680 = vpack.c.b16 %v1203, %v1194
        %v1681 = vpack.c.b16 %v1204, %v1195
        %v1682 = vpack.c.b16 %v1205, %v1196
        %v1683 = vpack.c.b16 %v1206, %v1197
        %v1684 = vpack.c.b16 %v1207, %v1198
        %v1685 = vpack.c.b16 %v1208, %v1199
        %v1686 = vpack.c.b16 %v1218, %v1209
        %v1687 = vpack.c.b16 %v1219, %v1210
        %v1688 = vpack.c.b16 %v1220, %v1211
        %v1689 = vpack.c.b16 %v1221, %v1212
        %v1690 = vpack.c.b16 %v1222, %v1213
        %v1691 = vpack.c.b16 %v1223, %v1214
        %v1692 = vpack.c.b16 %v1224, %v1215
        %v1693 = vpack.c.b16 %v1225, %v1216
        %v1694 = vpack.c.b16 %v1226, %v1217
        %v1695 = vpack.c.b16 %v1236, %v1227
        %v1696 = vpack.c.b16 %v1237, %v1228
        %v1697 = vpack.c.b16 %v1238, %v1229
        %v1698 = vpack.c.b16 %v1239, %v1230
        %v1699 = vpack.c.b16 %v1240, %v1231
        %v1700 = vpack.c.b16 %v1241, %v1232
        %v1701 = vpack.c.b16 %v1242, %v1233
        %v1702 = vpack.c.b16 %v1243, %v1234
        %v1703 = vpack.c.b16 %v1244, %v1235
        %v1704 = vpack.c.b16 %v1254, %v1245
        %v1705 = vpack.c.b16 %v1255, %v1246
        %v1706 = vpack.c.b16 %v1256, %v1247
        %v1707 = vpack.c.b16 %v1257, %v1248
        %v1708 = vpack.c.b16 %v1258, %v1249
        %v1709 = vpack.c.b16 %v1259, %v1250
        %v1710 = vpack.c.b16 %v1260, %v1251
        %v1711 = vpack.c.b16 %v1261, %v1252
        %v1712 = vpack.c.b16 %v1262, %v1253
        %v1713 = vpack.c.b16 %v1272, %v1263
        %v1714 = vpack.c.b16 %v1273, %v1264
        %v1715 = vpack.c.b16 %v1274, %v1265
        %v1716 = vpack.c.b16 %v1275, %v1266
        %v1717 = vpack.c.b16 %v1276, %v1267
        %v1718 = vpack.c.b16 %v1277, %v1268
        %v1719 = vpack.c.b16 %v1278, %v1269
        %v1720 = vpack.c.b16 %v1279, %v1270
        %v1721 = vpack.c.b16 %v1280, %v1271
        %v1722 = vpack.c.b16 %v1290, %v1281
        %v1723 = vpack.c.b16 %v1291, %v1282
        %v1724 = vpack.c.b16 %v1292, %v1283
        %v1725 = vpack.c.b16 %v1293, %v1284
        %v1726 = vpack.c.b16 %v1294, %v1285
        %v1727 = vpack.c.b16 %v1295, %v1286
        %v1728 = vpack.c.b16 %v1296, %v1287
        %v1729 = vpack.c.b16 %v1297, %v1288
        %v1730 = vpack.c.b16 %v1298, %v1289
        %v1731 = vpack.c.b16 %v1308, %v1299
        %v1732 = vpack.c.b16 %v1309, %v1300
        %v1733 = vpack.c.b16 %v1310, %v1301
        %v1734 = vpack.c.b16 %v1311, %v1302
        %v1735 = vpack.c.b16 %v1312, %v1303
        %v1736 = vpack.c.b16 %v1313, %v1304
        %v1737 = vpack.c.b16 %v1314, %v1305
        %v1738 = vpack.c.b16 %v1315, %v1306
        %v1739 = vpack.c.b16 %v1316, %v1307
        %v1740 = vpack.c.b16 %v1326, %v1317
        %v1741 = vpack.c.b16 %v1327, %v1318
        %v1742 = vpack.c.b16 %v1328, %v1319
        %v1743 = vpack.c.b16 %v1329, %v1320
        %v1744 = vpack.c.b16 %v1330, %v1321
        %v1745 = vpack.c.b16 %v1331, %v1322
        %v1746 = vpack.c.b16 %v1332, %v1323
        %v1747 = vpack.c.b16 %v1333, %v1324
        %v1748 = vpack.c.b16 %v1334, %v1325
        %v1749 = vpack.c.b16 %v1344, %v1335
        %v1750 = vpack.c.b16 %v1345, %v1336
        %v1751 = vpack.c.b16 %v1346, %v1337
        %v1752 = vpack.c.b16 %v1347, %v1338
        %v1753 = vpack.c.b16 %v1348, %v1339
        %v1754 = vpack.c.b16 %v1349, %v1340
        %v1755 = vpack.c.b16 %v1350, %v1341
        %v1756 = vpack.c.b16 %v1351, %v1342
        %v1757 = vpack.c.b16 %v1352, %v1343
        %v1758 = vpack.c.b16 %v1362, %v1353
        %v1759 = vpack.c.b16 %v1363, %v1354
        %v1760 = vpack.c.b16 %v1364, %v1355
        %v1761 = vpack.c.b16 %v1365, %v1356
        %v1762 = vpack.c.b16 %v1366, %v1357
        %v1763 = vpack.c.b16 %v1367, %v1358
        %v1764 = vpack.c.b16 %v1368, %v1359
        %v1765 = vpack.c.b16 %v1369, %v1360
        %v1766 = vpack.c.b16 %v1370, %v1361
        %v1767 = vpack.c.b16 %v1380, %v1371
        %v1768 = vpack.c.b16 %v1381, %v1372
        %v1769 = vpack.c.b16 %v1382, %v1373
        %v1770 = vpack.c.b16 %v1383, %v1374
        %v1771 = vpack.c.b16 %v1384, %v1375
        %v1772 = vpack.c.b16 %v1385, %v1376
        %v1773 = vpack.c.b16 %v1386, %v1377
        %v1774 = vpack.c.b16 %v1387, %v1378
        %v1775 = vpack.c.b16 %v1388, %v1379
        %v1776 = vpack.c.b16 %v1398, %v1389
        %v1777 = vpack.c.b16 %v1399, %v1390
        %v1778 = vpack.c.b16 %v1400, %v1391
        %v1779 = vpack.c.b16 %v1401, %v1392
        %v1780 = vpack.c.b16 %v1402, %v1393
        %v1781 = vpack.c.b16 %v1403, %v1394
        %v1782 = vpack.c.b16 %v1404, %v1395
        %v1783 = vpack.c.b16 %v1405, %v1396
        %v1784 = vpack.c.b16 %v1406, %v1397
        %v1785 = vpack.c.b16 %v1416, %v1407
        %v1786 = vpack.c.b16 %v1417, %v1408
        %v1787 = vpack.c.b16 %v1418, %v1409
        %v1788 = vpack.c.b16 %v1419, %v1410
        %v1789 = vpack.c.b16 %v1420, %v1411
        %v1790 = vpack.c.b16 %v1421, %v1412
        %v1791 = vpack.c.b16 %v1422, %v1413
        %v1792 = vpack.c.b16 %v1423, %v1414
        %v1793 = vpack.c.b16 %v1424, %v1415
        %v1794 = vpack.c.b16 %v1434, %v1425
        %v1795 = vpack.c.b16 %v1435, %v1426
        %v1796 = vpack.c.b16 %v1436, %v1427
        %v1797 = vpack.c.b16 %v1437, %v1428
        %v1798 = vpack.c.b16 %v1438, %v1429
        %v1799 = vpack.c.b16 %v1439, %v1430
        %v1800 = vpack.c.b16 %v1440, %v1431
        %v1801 = vpack.c.b16 %v1441, %v1432
        %v1802 = vpack.c.b16 %v1442, %v1433
        %v1803 = vpack.c.b16 %v1452, %v1443
        %v1804 = vpack.c.b16 %v1453, %v1444
        %v1805 = vpack.c.b16 %v1454, %v1445
        %v1806 = vpack.c.b16 %v1455, %v1446
        %v1807 = vpack.c.b16 %v1456, %v1447
        %v1808 = vpack.c.b16 %v1457, %v1448
        %v1809 = vpack.c.b16 %v1458, %v1449
        %v1810 = vpack.c.b16 %v1459, %v1450
        %v1811 = vpack.c.b16 %v1460, %v1451
        %v1812 = vpack.c.b16 %v1470, %v1461
        %v1813 = vpack.c.b16 %v1471, %v1462
        %v1814 = vpack.c.b16 %v1472, %v1463
        %v1815 = vpack.c.b16 %v1473, %v1464
        %v1816 = vpack.c.b16 %v1474, %v1465
        %v1817 = vpack.c.b16 %v1475, %v1466
        %v1818 = vpack.c.b16 %v1476, %v1467
        %v1819 = vpack.c.b16 %v1477, %v1468
        %v1820 = vpack.c.b16 %v1478, %v1469
        %v1821 = vpack.c.b16 %v1488, %v1479
        %v1822 = vpack.c.b16 %v1489, %v1480
        %v1823 = vpack.c.b16 %v1490, %v1481
        %v1824 = vpack.c.b16 %v1491, %v1482
        %v1825 = vpack.c.b16 %v1492, %v1483
        %v1826 = vpack.c.b16 %v1493, %v1484
        %v1827 = vpack.c.b16 %v1494, %v1485
        %v1828 = vpack.c.b16 %v1495, %v1486
        %v1829 = vpack.c.b16 %v1496, %v1487
        %v1830 = vpack.c.b16 %v1506, %v1497
        %v1831 = vpack.c.b16 %v1507, %v1498
        %v1832 = vpack.c.b16 %v1508, %v1499
        %v1833 = vpack.c.b16 %v1509, %v1500
        %v1834 = vpack.c.b16 %v1510, %v1501
        %v1835 = vpack.c.b16 %v1511, %v1502
        %v1836 = vpack.c.b16 %v1512, %v1503
        %v1837 = vpack.c.b16 %v1513, %v1504
        %v1838 = vpack.c.b16 %v1514, %v1505
        %v1839 = vpack.c.b16 %v1524, %v1515
        %v1840 = vpack.c.b16 %v1525, %v1516
        %v1841 = vpack.c.b16 %v1526, %v1517
        %v1842 = vpack.c.b16 %v1527, %v1518
        %v1843 = vpack.c.b16 %v1528, %v1519
        %v1844 = vpack.c.b16 %v1529, %v1520
        %v1845 = vpack.c.b16 %v1530, %v1521
        %v1846 = vpack.c.b16 %v1531, %v1522
        %v1847 = vpack.c.b16 %v1532, %v1523
        %v1848 = vpack.c.b16 %v1542, %v1533
        %v1849 = vpack.c.b16 %v1543, %v1534
        %v1850 = vpack.c.b16 %v1544, %v1535
        %v1851 = vpack.c.b16 %v1545, %v1536
        %v1852 = vpack.c.b16 %v1546, %v1537
        %v1853 = vpack.c.b16 %v1547, %v1538
        %v1854 = vpack.c.b16 %v1548, %v1539
        %v1855 = vpack.c.b16 %v1549, %v1540
        %v1856 = vpack.c.b16 %v1550, %v1541
        %v1857 = vpack.c.b16 %v1560, %v1551
        %v1858 = vpack.c.b16 %v1561, %v1552
        %v1859 = vpack.c.b16 %v1562, %v1553
        %v1860 = vpack.c.b16 %v1563, %v1554
        %v1861 = vpack.c.b16 %v1564, %v1555
        %v1862 = vpack.c.b16 %v1565, %v1556
        %v1863 = vpack.c.b16 %v1566, %v1557
        %v1864 = vpack.c.b16 %v1567, %v1558
        %v1865 = vpack.c.b16 %v1568, %v1559
        %v1866 = vpack.c.b16 %v1578, %v1569
        %v1867 = vpack.c.b16 %v1579, %v1570
        %v1868 = vpack.c.b16 %v1580, %v1571
        %v1869 = vpack.c.b16 %v1581, %v1572
        %v1870 = vpack.c.b16 %v1582, %v1573
        %v1871 = vpack.c.b16 %v1583, %v1574
        %v1872 = vpack.c.b16 %v1584, %v1575
        %v1873 = vpack.c.b16 %v1585, %v1576
        %v1874 = vpack.c.b16 %v1586, %v1577
        %2163 = vmatprep.subr.bf16.mxu0 %v1588
        %2164 = vmatpush1.bf16.msra.mxu0 %v1587
        %2165 = vmatprep.subr.bf16.mxu0 %v1597
        %2166 = vmatpush1.bf16.msra.mxu0 %v1596
        %2167 = vmatprep.subr.bf16.mxu0 %v1606
        %2168 = vmatpush1.bf16.msra.mxu0 %v1605
        %2169 = vmatprep.subr.bf16.mxu0 %v1615
        %2170 = vmatpush1.bf16.msra.mxu0 %v1614
        %2171 = vmatprep.subr.bf16.mxu0 %v1624
        %2172 = vmatpush1.bf16.msra.mxu0 %v1623
        %2173 = vmatprep.subr.bf16.mxu0 %v1633
        %2174 = vmatpush1.bf16.msra.mxu0 %v1632
        %2175 = vmatprep.subr.bf16.mxu0 %v1642
        %2176 = vmatpush1.bf16.msra.mxu0 %v1641
        %2177 = vmatprep.subr.bf16.mxu0 %v1651
        %2178 = vmatpush1.bf16.msra.mxu0 %v1650
        %2179 = vmatprep.subr.bf16.mxu0 %v1660
        %2180 = vmatpush1.bf16.msra.mxu0 %v1659
        %2181 = vmatprep.subr.bf16.mxu0 %v1669
        %2182 = vmatpush1.bf16.msra.mxu0 %v1668
        %2183 = vmatprep.subr.bf16.mxu0 %v1678
        %2184 = vmatpush1.bf16.msra.mxu0 %v1677
        %2185 = vmatprep.subr.bf16.mxu0 %v1687
        %2186 = vmatpush1.bf16.msra.mxu0 %v1686
        %2187 = vmatprep.subr.bf16.mxu0 %v1696
        %2188 = vmatpush1.bf16.msra.mxu0 %v1695
        %2189 = vmatprep.subr.bf16.mxu0 %v1705
        %2190 = vmatpush1.bf16.msra.mxu0 %v1704
        %2191 = vmatprep.subr.bf16.mxu0 %v1714
        %2192 = vmatpush1.bf16.msra.mxu0 %v1713
        %2193 = vmatprep.subr.bf16.mxu0 %v1723
        %2194 = vmatpush1.bf16.msra.mxu0 %v1722
        %2195 = vmatprep.mubr.bf16.mxu0 %v684
        %2196 = vmatmul.mubr.bf16.gmra.mrb[0].mxu0 %v683
        %v2197 = vpop.f32.mrb[0].mxu0
        %v2198 = vadd.f32 0.0, %v2197
        %v2199 = vpop.f32.mrb[0].mxu0
        %v2200 = vadd.f32 0.0, %v2199
        %v2201 = vpop.f32.mrb[0].mxu0
        %v2202 = vadd.f32 0.0, %v2201
        %v2203 = vpop.f32.mrb[0].mxu0
        %v2204 = vadd.f32 0.0, %v2203
        %2205 = vdwg.mxu0
        %2206 = vmatprep.subr.bf16.mxu0 %v1732
        %2207 = vmatpush1.bf16.msra.mxu0 %v1731
        %2208 = vmatprep.subr.bf16.mxu0 %v1741
        %2209 = vmatpush1.bf16.msra.mxu0 %v1740
        %2210 = vmatprep.subr.bf16.mxu0 %v1750
        %2211 = vmatpush1.bf16.msra.mxu0 %v1749
        %2212 = vmatprep.subr.bf16.mxu0 %v1759
        %2213 = vmatpush1.bf16.msra.mxu0 %v1758
        %2214 = vmatprep.subr.bf16.mxu0 %v1768
        %2215 = vmatpush1.bf16.msra.mxu0 %v1767
        %2216 = vmatprep.subr.bf16.mxu0 %v1777
        %2217 = vmatpush1.bf16.msra.mxu0 %v1776
        %2218 = vmatprep.subr.bf16.mxu0 %v1786
        %2219 = vmatpush1.bf16.msra.mxu0 %v1785
        %2220 = vmatprep.subr.bf16.mxu0 %v1795
        %2221 = vmatpush1.bf16.msra.mxu0 %v1794
        %2222 = vmatprep.subr.bf16.mxu0 %v1804
        %2223 = vmatpush1.bf16.msra.mxu0 %v1803
        %2224 = vmatprep.subr.bf16.mxu0 %v1813
        %2225 = vmatpush1.bf16.msra.mxu0 %v1812
        %2226 = vmatprep.subr.bf16.mxu0 %v1822
        %2227 = vmatpush1.bf16.msra.mxu0 %v1821
        %2228 = vmatprep.subr.bf16.mxu0 %v1831
        %2229 = vmatpush1.bf16.msra.mxu0 %v1830
        %2230 = vmatprep.subr.bf16.mxu0 %v1840
        %2231 = vmatpush1.bf16.msra.mxu0 %v1839
        %2232 = vmatprep.subr.bf16.mxu0 %v1849
        %2233 = vmatpush1.bf16.msra.mxu0 %v1848
        %2234 = vmatprep.subr.bf16.mxu0 %v1858
        %2235 = vmatpush1.bf16.msra.mxu0 %v1857
        %2236 = vmatprep.subr.bf16.mxu0 %v1867
        %2237 = vmatpush1.bf16.msra.mxu0 %v1866
        %2238 = vmatprep.mubr.bf16.mxu0 %v686
        %2239 = vmatmul.mubr.bf16.gmra.mrb[0].mxu0 %v685
        %v2240 = vpop.f32.mrb[0].mxu0
        %v2241 = vadd.f32 %v2198, %v2240
        %v2242 = vpop.f32.mrb[0].mxu0
        %v2243 = vadd.f32 %v2200, %v2242
        %v2244 = vpop.f32.mrb[0].mxu0
        %v2245 = vadd.f32 %v2202, %v2244
        %v2246 = vpop.f32.mrb[0].mxu0
        %v2247 = vadd.f32 %v2204, %v2246
        %2248 = vdwg.mxu0
        %2249 = vmatprep.subr.bf16.mxu0 %v1590
        %2250 = vmatpush1.bf16.msra.mxu0 %v1589
        %2251 = vmatprep.subr.bf16.mxu0 %v1599
        %2252 = vmatpush1.bf16.msra.mxu0 %v1598
        %2253 = vmatprep.subr.bf16.mxu0 %v1608
        %2254 = vmatpush1.bf16.msra.mxu0 %v1607
        %2255 = vmatprep.subr.bf16.mxu0 %v1617
        %2256 = vmatpush1.bf16.msra.mxu0 %v1616
        %2257 = vmatprep.subr.bf16.mxu0 %v1626
        %2258 = vmatpush1.bf16.msra.mxu0 %v1625
        %2259 = vmatprep.subr.bf16.mxu0 %v1635
        %2260 = vmatpush1.bf16.msra.mxu0 %v1634
        %2261 = vmatprep.subr.bf16.mxu0 %v1644
        %2262 = vmatpush1.bf16.msra.mxu0 %v1643
        %2263 = vmatprep.subr.bf16.mxu0 %v1653
        %2264 = vmatpush1.bf16.msra.mxu0 %v1652
        %2265 = vmatprep.subr.bf16.mxu0 %v1662
        %2266 = vmatpush1.bf16.msra.mxu0 %v1661
        %2267 = vmatprep.subr.bf16.mxu0 %v1671
        %2268 = vmatpush1.bf16.msra.mxu0 %v1670
        %2269 = vmatprep.subr.bf16.mxu0 %v1680
        %2270 = vmatpush1.bf16.msra.mxu0 %v1679
        %2271 = vmatprep.subr.bf16.mxu0 %v1689
        %2272 = vmatpush1.bf16.msra.mxu0 %v1688
        %2273 = vmatprep.subr.bf16.mxu0 %v1698
        %2274 = vmatpush1.bf16.msra.mxu0 %v1697
        %2275 = vmatprep.subr.bf16.mxu0 %v1707
        %2276 = vmatpush1.bf16.msra.mxu0 %v1706
        %2277 = vmatprep.subr.bf16.mxu0 %v1716
        %2278 = vmatpush1.bf16.msra.mxu0 %v1715
        %2279 = vmatprep.subr.bf16.mxu0 %v1725
        %2280 = vmatpush1.bf16.msra.mxu0 %v1724
        %2281 = vmatprep.mubr.bf16.mxu0 %v684
        %2282 = vmatmul.mubr.bf16.gmra.mrb[0].mxu0 %v683
        %v2283 = vpop.f32.mrb[0].mxu0
        %v2284 = vadd.f32 0.0, %v2283
        %v2285 = vpop.f32.mrb[0].mxu0
        %v2286 = vadd.f32 0.0, %v2285
        %v2287 = vpop.f32.mrb[0].mxu0
        %v2288 = vadd.f32 0.0, %v2287
        %v2289 = vpop.f32.mrb[0].mxu0
        %v2290 = vadd.f32 0.0, %v2289
        %2291 = vdwg.mxu0
        %2292 = vmatprep.subr.bf16.mxu0 %v1734
        %2293 = vmatpush1.bf16.msra.mxu0 %v1733
        %2294 = vmatprep.subr.bf16.mxu0 %v1743
        %2295 = vmatpush1.bf16.msra.mxu0 %v1742
        %2296 = vmatprep.subr.bf16.mxu0 %v1752
        %2297 = vmatpush1.bf16.msra.mxu0 %v1751
        %2298 = vmatprep.subr.bf16.mxu0 %v1761
        %2299 = vmatpush1.bf16.msra.mxu0 %v1760
        %2300 = vmatprep.subr.bf16.mxu0 %v1770
        %2301 = vmatpush1.bf16.msra.mxu0 %v1769
        %2302 = vmatprep.subr.bf16.mxu0 %v1779
        %2303 = vmatpush1.bf16.msra.mxu0 %v1778
        %2304 = vmatprep.subr.bf16.mxu0 %v1788
        %2305 = vmatpush1.bf16.msra.mxu0 %v1787
        %2306 = vmatprep.subr.bf16.mxu0 %v1797
        %2307 = vmatpush1.bf16.msra.mxu0 %v1796
        %2308 = vmatprep.subr.bf16.mxu0 %v1806
        %2309 = vmatpush1.bf16.msra.mxu0 %v1805
        %2310 = vmatprep.subr.bf16.mxu0 %v1815
        %2311 = vmatpush1.bf16.msra.mxu0 %v1814
        %2312 = vmatprep.subr.bf16.mxu0 %v1824
        %2313 = vmatpush1.bf16.msra.mxu0 %v1823
        %2314 = vmatprep.subr.bf16.mxu0 %v1833
        %2315 = vmatpush1.bf16.msra.mxu0 %v1832
        %2316 = vmatprep.subr.bf16.mxu0 %v1842
        %2317 = vmatpush1.bf16.msra.mxu0 %v1841
        %2318 = vmatprep.subr.bf16.mxu0 %v1851
        %2319 = vmatpush1.bf16.msra.mxu0 %v1850
        %2320 = vmatprep.subr.bf16.mxu0 %v1860
        %2321 = vmatpush1.bf16.msra.mxu0 %v1859
        %2322 = vmatprep.subr.bf16.mxu0 %v1869
        %2323 = vmatpush1.bf16.msra.mxu0 %v1868
        %2324 = vmatprep.mubr.bf16.mxu0 %v686
        %2325 = vmatmul.mubr.bf16.gmra.mrb[0].mxu0 %v685
        %v2326 = vpop.f32.mrb[0].mxu0
        %v2327 = vadd.f32 %v2284, %v2326
        %v2328 = vpop.f32.mrb[0].mxu0
        %v2329 = vadd.f32 %v2286, %v2328
        %v2330 = vpop.f32.mrb[0].mxu0
        %v2331 = vadd.f32 %v2288, %v2330
        %v2332 = vpop.f32.mrb[0].mxu0
        %v2333 = vadd.f32 %v2290, %v2332
        %2334 = vdwg.mxu0
        %2335 = vmatprep.subr.bf16.mxu0 %v1592
        %2336 = vmatpush1.bf16.msra.mxu0 %v1591
        %2337 = vmatprep.subr.bf16.mxu0 %v1601
        %2338 = vmatpush1.bf16.msra.mxu0 %v1600
        %2339 = vmatprep.subr.bf16.mxu0 %v1610
        %2340 = vmatpush1.bf16.msra.mxu0 %v1609
        %2341 = vmatprep.subr.bf16.mxu0 %v1619
        %2342 = vmatpush1.bf16.msra.mxu0 %v1618
        %2343 = vmatprep.subr.bf16.mxu0 %v1628
        %2344 = vmatpush1.bf16.msra.mxu0 %v1627
        %2345 = vmatprep.subr.bf16.mxu0 %v1637
        %2346 = vmatpush1.bf16.msra.mxu0 %v1636
        %2347 = vmatprep.subr.bf16.mxu0 %v1646
        %2348 = vmatpush1.bf16.msra.mxu0 %v1645
        %2349 = vmatprep.subr.bf16.mxu0 %v1655
        %2350 = vmatpush1.bf16.msra.mxu0 %v1654
        %2351 = vmatprep.subr.bf16.mxu0 %v1664
        %2352 = vmatpush1.bf16.msra.mxu0 %v1663
        %2353 = vmatprep.subr.bf16.mxu0 %v1673
        %2354 = vmatpush1.bf16.msra.mxu0 %v1672
        %2355 = vmatprep.subr.bf16.mxu0 %v1682
        %2356 = vmatpush1.bf16.msra.mxu0 %v1681
        %2357 = vmatprep.subr.bf16.mxu0 %v1691
        %2358 = vmatpush1.bf16.msra.mxu0 %v1690
        %2359 = vmatprep.subr.bf16.mxu0 %v1700
        %2360 = vmatpush1.bf16.msra.mxu0 %v1699
        %2361 = vmatprep.subr.bf16.mxu0 %v1709
        %2362 = vmatpush1.bf16.msra.mxu0 %v1708
        %2363 = vmatprep.subr.bf16.mxu0 %v1718
        %2364 = vmatpush1.bf16.msra.mxu0 %v1717
        %2365 = vmatprep.subr.bf16.mxu0 %v1727
        %2366 = vmatpush1.bf16.msra.mxu0 %v1726
        %2367 = vmatprep.mubr.bf16.mxu0 %v684
        %2368 = vmatmul.mubr.bf16.gmra.mrb[0].mxu0 %v683
        %v2369 = vpop.f32.mrb[0].mxu0
        %v2370 = vadd.f32 0.0, %v2369
        %v2371 = vpop.f32.mrb[0].mxu0
        %v2372 = vadd.f32 0.0, %v2371
        %v2373 = vpop.f32.mrb[0].mxu0
        %v2374 = vadd.f32 0.0, %v2373
        %v2375 = vpop.f32.mrb[0].mxu0
        %v2376 = vadd.f32 0.0, %v2375
        %2377 = vdwg.mxu0
        %2378 = vmatprep.subr.bf16.mxu0 %v1736
        %2379 = vmatpush1.bf16.msra.mxu0 %v1735
        %2380 = vmatprep.subr.bf16.mxu0 %v1745
        %2381 = vmatpush1.bf16.msra.mxu0 %v1744
        %2382 = vmatprep.subr.bf16.mxu0 %v1754
        %2383 = vmatpush1.bf16.msra.mxu0 %v1753
        %2384 = vmatprep.subr.bf16.mxu0 %v1763
        %2385 = vmatpush1.bf16.msra.mxu0 %v1762
        %2386 = vmatprep.subr.bf16.mxu0 %v1772
        %2387 = vmatpush1.bf16.msra.mxu0 %v1771
        %2388 = vmatprep.subr.bf16.mxu0 %v1781
        %2389 = vmatpush1.bf16.msra.mxu0 %v1780
        %2390 = vmatprep.subr.bf16.mxu0 %v1790
        %2391 = vmatpush1.bf16.msra.mxu0 %v1789
        %2392 = vmatprep.subr.bf16.mxu0 %v1799
        %2393 = vmatpush1.bf16.msra.mxu0 %v1798
        %2394 = vmatprep.subr.bf16.mxu0 %v1808
        %2395 = vmatpush1.bf16.msra.mxu0 %v1807
        %2396 = vmatprep.subr.bf16.mxu0 %v1817
        %2397 = vmatpush1.bf16.msra.mxu0 %v1816
        %2398 = vmatprep.subr.bf16.mxu0 %v1826
        %2399 = vmatpush1.bf16.msra.mxu0 %v1825
        %2400 = vmatprep.subr.bf16.mxu0 %v1835
        %2401 = vmatpush1.bf16.msra.mxu0 %v1834
        %2402 = vmatprep.subr.bf16.mxu0 %v1844
        %2403 = vmatpush1.bf16.msra.mxu0 %v1843
        %2404 = vmatprep.subr.bf16.mxu0 %v1853
        %2405 = vmatpush1.bf16.msra.mxu0 %v1852
        %2406 = vmatprep.subr.bf16.mxu0 %v1862
        %2407 = vmatpush1.bf16.msra.mxu0 %v1861
        %2408 = vmatprep.subr.bf16.mxu0 %v1871
        %2409 = vmatpush1.bf16.msra.mxu0 %v1870
        %2410 = vmatprep.mubr.bf16.mxu0 %v686
        %2411 = vmatmul.mubr.bf16.gmra.mrb[0].mxu0 %v685
        %v2412 = vpop.f32.mrb[0].mxu0
        %v2413 = vadd.f32 %v2370, %v2412
        %v2414 = vpop.f32.mrb[0].mxu0
        %v2415 = vadd.f32 %v2372, %v2414
        %v2416 = vpop.f32.mrb[0].mxu0
        %v2417 = vadd.f32 %v2374, %v2416
        %v2418 = vpop.f32.mrb[0].mxu0
        %v2419 = vadd.f32 %v2376, %v2418
        %2420 = vdwg.mxu0
        %2421 = vmatprep.subr.bf16.mxu0 %v1594
        %2422 = vmatpush1.bf16.msra.mxu0 %v1593
        %2423 = vmatprep.subr.bf16.mxu0 %v1603
        %2424 = vmatpush1.bf16.msra.mxu0 %v1602
        %2425 = vmatprep.subr.bf16.mxu0 %v1612
        %2426 = vmatpush1.bf16.msra.mxu0 %v1611
        %2427 = vmatprep.subr.bf16.mxu0 %v1621
        %2428 = vmatpush1.bf16.msra.mxu0 %v1620
        %2429 = vmatprep.subr.bf16.mxu0 %v1630
        %2430 = vmatpush1.bf16.msra.mxu0 %v1629
        %2431 = vmatprep.subr.bf16.mxu0 %v1639
        %2432 = vmatpush1.bf16.msra.mxu0 %v1638
        %2433 = vmatprep.subr.bf16.mxu0 %v1648
        %2434 = vmatpush1.bf16.msra.mxu0 %v1647
        %2435 = vmatprep.subr.bf16.mxu0 %v1657
        %2436 = vmatpush1.bf16.msra.mxu0 %v1656
        %2437 = vmatprep.subr.bf16.mxu0 %v1666
        %2438 = vmatpush1.bf16.msra.mxu0 %v1665
        %2439 = vmatprep.subr.bf16.mxu0 %v1675
        %2440 = vmatpush1.bf16.msra.mxu0 %v1674
        %2441 = vmatprep.subr.bf16.mxu0 %v1684
        %2442 = vmatpush1.bf16.msra.mxu0 %v1683
        %2443 = vmatprep.subr.bf16.mxu0 %v1693
        %2444 = vmatpush1.bf16.msra.mxu0 %v1692
        %2445 = vmatprep.subr.bf16.mxu0 %v1702
        %2446 = vmatpush1.bf16.msra.mxu0 %v1701
        %2447 = vmatprep.subr.bf16.mxu0 %v1711
        %2448 = vmatpush1.bf16.msra.mxu0 %v1710
        %2449 = vmatprep.subr.bf16.mxu0 %v1720
        %2450 = vmatpush1.bf16.msra.mxu0 %v1719
        %2451 = vmatprep.subr.bf16.mxu0 %v1729
        %2452 = vmatpush1.bf16.msra.mxu0 %v1728
        %2453 = vmatprep.mubr.bf16.mxu0 %v684
        %2454 = vmatmul.mubr.bf16.gmra.mrb[0].mxu0 %v683
        %v2455 = vpop.f32.mrb[0].mxu0
        %v2456 = vadd.f32 0.0, %v2455
        %v2457 = vpop.f32.mrb[0].mxu0
        %v2458 = vadd.f32 0.0, %v2457
        %v2459 = vpop.f32.mrb[0].mxu0
        %v2460 = vadd.f32 0.0, %v2459
        %v2461 = vpop.f32.mrb[0].mxu0
        %v2462 = vadd.f32 0.0, %v2461
        %2463 = vdwg.mxu0
        %2464 = vmatprep.subr.bf16.mxu0 %v1738
        %2465 = vmatpush1.bf16.msra.mxu0 %v1737
        %2466 = vmatprep.subr.bf16.mxu0 %v1747
        %2467 = vmatpush1.bf16.msra.mxu0 %v1746
        %2468 = vmatprep.subr.bf16.mxu0 %v1756
        %2469 = vmatpush1.bf16.msra.mxu0 %v1755
        %2470 = vmatprep.subr.bf16.mxu0 %v1765
        %2471 = vmatpush1.bf16.msra.mxu0 %v1764
        %2472 = vmatprep.subr.bf16.mxu0 %v1774
        %2473 = vmatpush1.bf16.msra.mxu0 %v1773
        %2474 = vmatprep.subr.bf16.mxu0 %v1783
        %2475 = vmatpush1.bf16.msra.mxu0 %v1782
        %2476 = vmatprep.subr.bf16.mxu0 %v1792
        %2477 = vmatpush1.bf16.msra.mxu0 %v1791
        %2478 = vmatprep.subr.bf16.mxu0 %v1801
        %2479 = vmatpush1.bf16.msra.mxu0 %v1800
        %2480 = vmatprep.subr.bf16.mxu0 %v1810
        %2481 = vmatpush1.bf16.msra.mxu0 %v1809
        %2482 = vmatprep.subr.bf16.mxu0 %v1819
        %2483 = vmatpush1.bf16.msra.mxu0 %v1818
        %2484 = vmatprep.subr.bf16.mxu0 %v1828
        %2485 = vmatpush1.bf16.msra.mxu0 %v1827
        %2486 = vmatprep.subr.bf16.mxu0 %v1837
        %2487 = vmatpush1.bf16.msra.mxu0 %v1836
        %2488 = vmatprep.subr.bf16.mxu0 %v1846
        %2489 = vmatpush1.bf16.msra.mxu0 %v1845
        %2490 = vmatprep.subr.bf16.mxu0 %v1855
        %2491 = vmatpush1.bf16.msra.mxu0 %v1854
        %2492 = vmatprep.subr.bf16.mxu0 %v1864
        %2493 = vmatpush1.bf16.msra.mxu0 %v1863
        %2494 = vmatprep.subr.bf16.mxu0 %v1873
        %2495 = vmatpush1.bf16.msra.mxu0 %v1872
        %2496 = vmatprep.mubr.bf16.mxu0 %v686
        %2497 = vmatmul.mubr.bf16.gmra.mrb[0].mxu0 %v685
        %v2498 = vpop.f32.mrb[0].mxu0
        %v2499 = vadd.f32 %v2456, %v2498
        %v2500 = vpop.f32.mrb[0].mxu0
        %v2501 = vadd.f32 %v2458, %v2500
        %v2502 = vpop.f32.mrb[0].mxu0
        %v2503 = vadd.f32 %v2460, %v2502
        %v2504 = vpop.f32.mrb[0].mxu0
        %v2505 = vadd.f32 %v2462, %v2504
        %2506 = vdwg.mxu0
        %2507 = vmatprep.subr.bf16.mxu0 0
        %2508 = vmatpush1.bf16.msra.mxu0 %v1595
        %2509 = vmatprep.subr.bf16.mxu0 0
        %2510 = vmatpush1.bf16.msra.mxu0 %v1604
        %2511 = vmatprep.subr.bf16.mxu0 0
        %2512 = vmatpush1.bf16.msra.mxu0 %v1613
        %2513 = vmatprep.subr.bf16.mxu0 0
        %2514 = vmatpush1.bf16.msra.mxu0 %v1622
        %2515 = vmatprep.subr.bf16.mxu0 0
        %2516 = vmatpush1.bf16.msra.mxu0 %v1631
        %2517 = vmatprep.subr.bf16.mxu0 0
        %2518 = vmatpush1.bf16.msra.mxu0 %v1640
        %2519 = vmatprep.subr.bf16.mxu0 0
        %2520 = vmatpush1.bf16.msra.mxu0 %v1649
        %2521 = vmatprep.subr.bf16.mxu0 0
        %2522 = vmatpush1.bf16.msra.mxu0 %v1658
        %2523 = vmatprep.subr.bf16.mxu0 0
        %2524 = vmatpush1.bf16.msra.mxu0 %v1667
        %2525 = vmatprep.subr.bf16.mxu0 0
        %2526 = vmatpush1.bf16.msra.mxu0 %v1676
        %2527 = vmatprep.subr.bf16.mxu0 0
        %2528 = vmatpush1.bf16.msra.mxu0 %v1685
        %2529 = vmatprep.subr.bf16.mxu0 0
        %2530 = vmatpush1.bf16.msra.mxu0 %v1694
        %2531 = vmatprep.subr.bf16.mxu0 0
        %2532 = vmatpush1.bf16.msra.mxu0 %v1703
        %2533 = vmatprep.subr.bf16.mxu0 0
        %2534 = vmatpush1.bf16.msra.mxu0 %v1712
        %2535 = vmatprep.subr.bf16.mxu0 0
        %2536 = vmatpush1.bf16.msra.mxu0 %v1721
        %2537 = vmatprep.subr.bf16.mxu0 0
        %2538 = vmatpush1.bf16.msra.mxu0 %v1730
        %2539 = vmatprep.mubr.bf16.mxu0 %v684
        %2540 = vmatmul.mubr.bf16.gmra.mrb[0].mxu0 %v683
        %v2541 = vpop.f32.mrb[0].mxu0
        %v2542 = vadd.f32 0.0, %v2541
        %v2543 = vpop.f32.mrb[0].mxu0
        %v2544 = vpop.f32.mrb[0].mxu0
        %v2545 = vadd.f32 0.0, %v2544
        %v2546 = vpop.f32.mrb[0].mxu0
        %2547 = vdwg.mxu0
        %2548 = vmatprep.subr.bf16.mxu0 0
        %2549 = vmatpush1.bf16.msra.mxu0 %v1739
        %2550 = vmatprep.subr.bf16.mxu0 0
        %2551 = vmatpush1.bf16.msra.mxu0 %v1748
        %2552 = vmatprep.subr.bf16.mxu0 0
        %2553 = vmatpush1.bf16.msra.mxu0 %v1757
        %2554 = vmatprep.subr.bf16.mxu0 0
        %2555 = vmatpush1.bf16.msra.mxu0 %v1766
        %2556 = vmatprep.subr.bf16.mxu0 0
        %2557 = vmatpush1.bf16.msra.mxu0 %v1775
        %2558 = vmatprep.subr.bf16.mxu0 0
        %2559 = vmatpush1.bf16.msra.mxu0 %v1784
        %2560 = vmatprep.subr.bf16.mxu0 0
        %2561 = vmatpush1.bf16.msra.mxu0 %v1793
        %2562 = vmatprep.subr.bf16.mxu0 0
        %2563 = vmatpush1.bf16.msra.mxu0 %v1802
        %2564 = vmatprep.subr.bf16.mxu0 0
        %2565 = vmatpush1.bf16.msra.mxu0 %v1811
        %2566 = vmatprep.subr.bf16.mxu0 0
        %2567 = vmatpush1.bf16.msra.mxu0 %v1820
        %2568 = vmatprep.subr.bf16.mxu0 0
        %2569 = vmatpush1.bf16.msra.mxu0 %v1829
        %2570 = vmatprep.subr.bf16.mxu0 0
        %2571 = vmatpush1.bf16.msra.mxu0 %v1838
        %2572 = vmatprep.subr.bf16.mxu0 0
        %2573 = vmatpush1.bf16.msra.mxu0 %v1847
        %2574 = vmatprep.subr.bf16.mxu0 0
        %2575 = vmatpush1.bf16.msra.mxu0 %v1856
        %2576 = vmatprep.subr.bf16.mxu0 0
        %2577 = vmatpush1.bf16.msra.mxu0 %v1865
        %2578 = vmatprep.subr.bf16.mxu0 0
        %2579 = vmatpush1.bf16.msra.mxu0 %v1874
        %2580 = vmatprep.mubr.bf16.mxu0 %v686
        %2581 = vmatmul.mubr.bf16.gmra.mrb[0].mxu0 %v685
        %v2582 = vpop.f32.mrb[0].mxu0
        %v2583 = vadd.f32 %v2542, %v2582
        %v2584 = vpop.f32.mrb[0].mxu0
        %v2585 = vpop.f32.mrb[0].mxu0
        %v2586 = vadd.f32 %v2545, %v2585
        %v2587 = vpop.f32.mrb[0].mxu0
        %2588 = vdwg.mxu0
        %v2589 = vadd.f32 %v329, %v2241
        %v2590 = vadd.f32 %v330, %v2243
        %v2591 = vadd.f32 %v331, %v2327
        %v2592 = vadd.f32 %v332, %v2329
        %v2593 = vadd.f32 %v333, %v2413
        %v2594 = vadd.f32 %v334, %v2415
        %v2595 = vadd.f32 %v335, %v2499
        %v2596 = vadd.f32 %v336, %v2501
        %v2597 = vadd.f32 %v337, %v2583
        %v2598 = vadd.f32 %v338, %v2245
        %v2599 = vadd.f32 %v339, %v2247
        %v2600 = vadd.f32 %v340, %v2331
        %v2601 = vadd.f32 %v341, %v2333
        %v2602 = vadd.f32 %v342, %v2417
        %v2603 = vadd.f32 %v343, %v2419
        %v2604 = vadd.f32 %v344, %v2503
        %v2605 = vadd.f32 %v345, %v2505
        %v2606 = vadd.f32 %v346, %v2586
        %2607 = vst [vmem:[#allocation2] sm:$0xff] %v2589
        %2608 = vst [vmem:[#allocation2 + $0x8] sm:$0xff] %v2590
        %2609 = vst [vmem:[#allocation2 + $0x10] sm:$0xff] %v2591
        %2610 = vst [vmem:[#allocation2 + $0x18] sm:$0xff] %v2592
        %2611 = vst [vmem:[#allocation2 + $0x20] sm:$0xff] %v2593
        %2612 = vst [vmem:[#allocation2 + $0x28] sm:$0xff] %v2594
        %2613 = vst [vmem:[#allocation2 + $0x30] sm:$0xff] %v2595
        %2614 = vst [vmem:[#allocation2 + $0x38] sm:$0xff] %v2596
        %2615 = vst [vmem:[#allocation2 + $0x40] sm:$0xff] %v2597
        %2616 = vst [vmem:[#allocation2 + $0x48] sm:$0xff] %v2598
        %2617 = vst [vmem:[#allocation2 + $0x50] sm:$0xff] %v2599
        %2618 = vst [vmem:[#allocation2 + $0x58] sm:$0xff] %v2600
        %2619 = vst [vmem:[#allocation2 + $0x60] sm:$0xff] %v2601
        %2620 = vst [vmem:[#allocation2 + $0x68] sm:$0xff] %v2602
        %2621 = vst [vmem:[#allocation2 + $0x70] sm:$0xff] %v2603
        %2622 = vst [vmem:[#allocation2 + $0x78] sm:$0xff] %v2604
        %2623 = vst [vmem:[#allocation2 + $0x80] sm:$0xff] %v2605
        %2624 = vst [vmem:[#allocation2 + $0x88] sm:$0xff] %v2606
        %p2625 = scmp.eq.s32.totalorder %s25, 10
        // Predicated region
        $region68: #{qdiscriminator_p_forward.9} parent=50 // pred_check
          %p2626 = pneg %p2625
        $region69: #{qdiscriminator_p_forward.9} parent=50 // pred_check_branch
          %2628 = sbr.rel (%p2626) target = $region71
        $region70: #{qdiscriminator_p_forward.9} parent=50 // pred_region
          %v2629 = vld [vmem:[#allocation2] sm:$0xff]
          %v2630 = vld [vmem:[#allocation2 + $0x8] sm:$0xff]
          %v2631 = vld [vmem:[#allocation2 + $0x10] sm:$0xff]
          %v2632 = vld [vmem:[#allocation2 + $0x18] sm:$0xff]
          %v2633 = vld [vmem:[#allocation2 + $0x20] sm:$0xff]
          %v2634 = vld [vmem:[#allocation2 + $0x28] sm:$0xff]
          %v2635 = vld [vmem:[#allocation2 + $0x30] sm:$0xff]
          %v2636 = vld [vmem:[#allocation2 + $0x38] sm:$0xff]
          %v2637 = vld [vmem:[#allocation2 + $0x40] sm:$0xff]
          %v2638 = vld [vmem:[#allocation2 + $0x48] sm:$0xff]
          %v2639 = vld [vmem:[#allocation2 + $0x50] sm:$0xff]
          %v2640 = vld [vmem:[#allocation2 + $0x58] sm:$0xff]
          %v2641 = vld [vmem:[#allocation2 + $0x60] sm:$0xff]
          %v2642 = vld [vmem:[#allocation2 + $0x68] sm:$0xff]
          %v2643 = vld [vmem:[#allocation2 + $0x70] sm:$0xff]
          %v2644 = vld [vmem:[#allocation2 + $0x78] sm:$0xff]
          %v2645 = vld [vmem:[#allocation2 + $0x80] sm:$0xff]
          %v2646 = vld [vmem:[#allocation2 + $0x88] sm:$0xff]
          %v2647 = vld [vmem:[#allocation6] sm:$0xff]
          %v2648 = vld [vmem:[#allocation6 + $0x8] sm:$0x1]
          %v2651 = vlaneseq
          %v2652 = vshrl.u32 %v2651, 7
          %v2653 = vsub.s32 0, %v2652
          %v2654 = vrot.slane %v2647, %v2653
          %v2655 = vlaneseq
          %v2656 = vshrl.u32 %v2655, 7
          %v2657 = vsub.s32 1, %v2656
          %v2658 = vrot.slane %v2647, %v2657
          %v2659 = vlaneseq
          %v2660 = vshrl.u32 %v2659, 7
          %v2661 = vsub.s32 2, %v2660
          %v2662 = vrot.slane %v2647, %v2661
          %v2663 = vlaneseq
          %v2664 = vshrl.u32 %v2663, 7
          %v2665 = vsub.s32 3, %v2664
          %v2666 = vrot.slane %v2647, %v2665
          %v2667 = vlaneseq
          %v2668 = vshrl.u32 %v2667, 7
          %v2669 = vsub.s32 4, %v2668
          %v2670 = vrot.slane %v2647, %v2669
          %v2671 = vlaneseq
          %v2672 = vshrl.u32 %v2671, 7
          %v2673 = vsub.s32 5, %v2672
          %v2674 = vrot.slane %v2647, %v2673
          %v2675 = vlaneseq
          %v2676 = vshrl.u32 %v2675, 7
          %v2677 = vsub.s32 6, %v2676
          %v2678 = vrot.slane %v2647, %v2677
          %v2679 = vlaneseq
          %v2680 = vshrl.u32 %v2679, 7
          %v2681 = vsub.s32 7, %v2680
          %v2682 = vrot.slane %v2647, %v2681
          %v2683 = vlaneseq
          %v2684 = vshrl.u32 %v2683, 7
          %v2685 = vsub.s32 0, %v2684
          %v2686 = vrot.slane %v2648, %v2685
          %v2696 = vadd.f32 %v2629, %v2654
          %v2697 = vadd.f32 %v2630, %v2658
          %v2698 = vadd.f32 %v2631, %v2662
          %v2699 = vadd.f32 %v2632, %v2666
          %v2700 = vadd.f32 %v2633, %v2670
          %v2701 = vadd.f32 %v2634, %v2674
          %v2702 = vadd.f32 %v2635, %v2678
          %v2703 = vadd.f32 %v2636, %v2682
          %v2704 = vadd.f32 %v2637, %v2686
          %v2705 = vadd.f32 %v2638, %v2654
          %v2706 = vadd.f32 %v2639, %v2658
          %v2707 = vadd.f32 %v2640, %v2662
          %v2708 = vadd.f32 %v2641, %v2666
          %v2709 = vadd.f32 %v2642, %v2670
          %v2710 = vadd.f32 %v2643, %v2674
          %v2711 = vadd.f32 %v2644, %v2678
          %v2712 = vadd.f32 %v2645, %v2682
          %v2713 = vadd.f32 %v2646, %v2686
          %vm2714 = vcmp.ge.f32.partialorder %v2696, 0.0
          %vm2715 = vcmp.ge.f32.partialorder %v2697, 0.0
          %vm2716 = vcmp.ge.f32.partialorder %v2698, 0.0
          %vm2717 = vcmp.ge.f32.partialorder %v2699, 0.0
          %vm2718 = vcmp.ge.f32.partialorder %v2700, 0.0
          %vm2719 = vcmp.ge.f32.partialorder %v2701, 0.0
          %vm2720 = vcmp.ge.f32.partialorder %v2702, 0.0
          %vm2721 = vcmp.ge.f32.partialorder %v2703, 0.0
          %vm2722 = vcmp.ge.f32.partialorder %v2704, 0.0
          %vm2723 = vcmp.ge.f32.partialorder %v2705, 0.0
          %vm2724 = vcmp.ge.f32.partialorder %v2706, 0.0
          %vm2725 = vcmp.ge.f32.partialorder %v2707, 0.0
          %vm2726 = vcmp.ge.f32.partialorder %v2708, 0.0
          %vm2727 = vcmp.ge.f32.partialorder %v2709, 0.0
          %vm2728 = vcmp.ge.f32.partialorder %v2710, 0.0
          %vm2729 = vcmp.ge.f32.partialorder %v2711, 0.0
          %vm2730 = vcmp.ge.f32.partialorder %v2712, 0.0
          %vm2731 = vcmp.ge.f32.partialorder %v2713, 0.0
          %v2732 = vmul.f32 %v2696, 0.1
          %v2733 = vmul.f32 %v2697, 0.1
          %v2734 = vmul.f32 %v2698, 0.1
          %v2735 = vmul.f32 %v2699, 0.1
          %v2736 = vmul.f32 %v2700, 0.1
          %v2737 = vmul.f32 %v2701, 0.1
          %v2738 = vmul.f32 %v2702, 0.1
          %v2739 = vmul.f32 %v2703, 0.1
          %v2740 = vmul.f32 %v2704, 0.1
          %v2741 = vmul.f32 %v2705, 0.1
          %v2742 = vmul.f32 %v2706, 0.1
          %v2743 = vmul.f32 %v2707, 0.1
          %v2744 = vmul.f32 %v2708, 0.1
          %v2745 = vmul.f32 %v2709, 0.1
          %v2746 = vmul.f32 %v2710, 0.1
          %v2747 = vmul.f32 %v2711, 0.1
          %v2748 = vmul.f32 %v2712, 0.1
          %v2749 = vmul.f32 %v2713, 0.1
          %v2750 = vsel %vm2714, %v2696, %v2732
          %v2751 = vsel %vm2715, %v2697, %v2733
          %v2752 = vsel %vm2716, %v2698, %v2734
          %v2753 = vsel %vm2717, %v2699, %v2735
          %v2754 = vsel %vm2718, %v2700, %v2736
          %v2755 = vsel %vm2719, %v2701, %v2737
          %v2756 = vsel %vm2720, %v2702, %v2738
          %v2757 = vsel %vm2721, %v2703, %v2739
          %v2758 = vsel %vm2722, %v2704, %v2740
          %v2759 = vsel %vm2723, %v2705, %v2741
          %v2760 = vsel %vm2724, %v2706, %v2742
          %v2761 = vsel %vm2725, %v2707, %v2743
          %v2762 = vsel %vm2726, %v2708, %v2744
          %v2763 = vsel %vm2727, %v2709, %v2745
          %v2764 = vsel %vm2728, %v2710, %v2746
          %v2765 = vsel %vm2729, %v2711, %v2747
          %v2766 = vsel %vm2730, %v2712, %v2748
          %v2767 = vsel %vm2731, %v2713, %v2749
          %2768 = vst [vmem:[%s303] sm:$0xff] %v2750
          %2769 = vst [vmem:[%s303 + $0x8] sm:$0xff] %v2751
          %2770 = vst [vmem:[%s303 + $0x10] sm:$0xff] %v2752
          %2771 = vst [vmem:[%s303 + $0x18] sm:$0xff] %v2753
          %2772 = vst [vmem:[%s303 + $0x20] sm:$0xff] %v2754
          %2773 = vst [vmem:[%s303 + $0x28] sm:$0xff] %v2755
          %2774 = vst [vmem:[%s303 + $0x30] sm:$0xff] %v2756
          %2775 = vst [vmem:[%s303 + $0x38] sm:$0xff] %v2757
          %2776 = vst [vmem:[%s303 + $0x40] sm:$0xff] %v2758
          %2777 = vst [vmem:[%s303 + $0x48] sm:$0xff] %v2759
          %2778 = vst [vmem:[%s303 + $0x50] sm:$0xff] %v2760
          %2779 = vst [vmem:[%s303 + $0x58] sm:$0xff] %v2761
          %2780 = vst [vmem:[%s303 + $0x60] sm:$0xff] %v2762
          %2781 = vst [vmem:[%s303 + $0x68] sm:$0xff] %v2763
          %2782 = vst [vmem:[%s303 + $0x70] sm:$0xff] %v2764
          %2783 = vst [vmem:[%s303 + $0x78] sm:$0xff] %v2765
          %2784 = vst [vmem:[%s303 + $0x80] sm:$0xff] %v2766
          %2785 = vst [vmem:[%s303 + $0x88] sm:$0xff] %v2767
        $region71: #{qdiscriminator_p_forward.9} parent=50 // pred_fallthru
          _
        %s2786 = smul.u32 2, %s23
        %s2787 = smul.u32 9, %s24
        %p2788 = scmp.lt.s32.totalorder %s2786, 1
        %s2789 = scalar_select %p2788, %s2786, 1
        %p2790 = scmp.lt.s32.totalorder %s2787, 8
        %s2791 = scalar_select %p2790, %s2787, 8
        %s2792 = smul.addr %s2789, 9
        %s2793 = sadd.s32 %s2791, %s2792
        %s2794 = smul.addr %s2793, 8
        %s2795 = scalar_lea.vmem %s3, %s2794
        // Predicated region
        $region72: #{qdiscriminator_p_forward.9} parent=50 // pred_check
          %p2796 = pneg %p139
        $region73: #{qdiscriminator_p_forward.9} parent=50 // pred_check_branch
          %2798 = sbr.rel (%p2796) target = $region75
        $region74: #{qdiscriminator_p_forward.9} parent=50 // pred_region
          %s2799 = smul.u32 2, %s23
          %s2800 = smul.u32 9, %s24
        $region75: #{qdiscriminator_p_forward.9} parent=50 // pred_fallthru
          _
        // Predicated region
        $region76: #{qdiscriminator_p_forward.9} parent=50 // pred_check
          %p2801 = pneg %p139
        $region77: #{qdiscriminator_p_forward.9} parent=50 // pred_check_branch
          %2803 = sbr.rel (%p2801) target = $region79
        $region78: #{qdiscriminator_p_forward.9} parent=50 // pred_region
          %s2804 = smul.u32 2, %s23
          %s2805 = smul.u32 9, %s24
          %p2806 = scmp.lt.s32.totalorder %s2804, 1
          %s2807 = scalar_select %p2806, %s2804, 1
          %p2808 = scmp.lt.s32.totalorder %s2805, 8
          %s2809 = scalar_select %p2808, %s2805, 8
          %s2810 = smul.addr %s2807, 9
          %s2811 = sadd.s32 %s2809, %s2810
          %s2812 = smul.addr %s2811, 8
          %s2813 = scalar_lea.vmem %s3, %s2812
        $region79: #{qdiscriminator_p_forward.9} parent=50 // pred_fallthru
          _
      $region51: #{qdiscriminator_p_forward.9} parent=5 // pred_fallthru
        _
      %p2814 = scmp.le.s32.totalorder 2, %s13
      // Predicated region
      $region80: #{qdiscriminator_p_forward.9} parent=5 // pred_check
        %p2815 = pneg %p2814
      $region81: #{qdiscriminator_p_forward.9} parent=5 // pred_check_branch
        %2817 = sbr.rel (%p2815) target = $region83
      $region82: #{qdiscriminator_p_forward.9} parent=5 // pred_region
        %s2818 = ssub.s32 %s13, 2
      $region83: #{qdiscriminator_p_forward.9} parent=5 // pred_fallthru
        _
    $region6: #{qdiscriminator_p_forward.9} parent=1 // loop_footer
      %s17 = sadd.s32 1, %s13
    $region7: #{qdiscriminator_p_forward.9} parent=1 // loop_footer_branch
      %12 = sbr.rel target = $region3
    $region8: #{qdiscriminator_p_forward.9} parent=1 // loop_exit
      _
    %2819 = vsyncpa [#allocation5], 1
    %s2820 = scalar_lea.sflag [#allocation5], 1
    %2821 = vsyncpa %s2820, 1
    %2822 = vsyncpa [#allocation7], 1

</llo_original>
